<compile_context>
chip_gen: v6e
topology: v6e:2x2x1
jax: 0.10.0
libtpu: 0.0.40
codegen_flags: <defaults>
</compile_context>

<pallas_src>
import math

import numpy as np

import jax
import jax.numpy as jnp
from jax.experimental import pallas as pl
from jax.experimental.pallas import tpu as pltpu

LATENT = 100          # Linear(256, 2*100)
H_IN = 28             # only spatial size for which the module's .view(B, C) works
C1_OUT = 26 * 32      # conv1 output row width  (832)
P1_OUT = 13 * 32      # pool1 output row width  (416)
C2_OUT = 11 * 64      # conv2 output row width  (704)
P2_OUT = 5 * 64       # pool2 output row width  (320)
RS1 = 32              # rows / batch for conv1-stage slabs (26 valid + 6 zero)
RS2 = 16              # rows / batch for conv2-stage slabs (13 valid + 3 zero)
PAD2 = 8              # zero pad rows at the end of the pool1 scratch


# ------------------------------ Pallas kernel -------------------------------

def _elu(v):
    # ELU(alpha=1): x>0 -> x, else exp(x)-1 (min() keeps exp() finite).
    return jnp.where(v > 0.0, v, jnp.exp(jnp.minimum(v, 0.0)) - 1.0)


def _encoder_kernel(x_ref, m1_ref, b1_ref, pc1_ref, r1_ref,
                    m2_ref, b2_ref, pc2_ref, r2_ref,
                    m3_ref, b3_ref, wl_ref, bl_ref, e_ref,
                    z_ref, mean_ref, ls_ref,
                    a1p_ref, lhs2_ref, flat3_ref):
    tb = flat3_ref.shape[0]           # batch elements in this grid block
    nr2 = lhs2_ref.shape[0]           # tb * RS2

    # ---- Conv2d(1,32,3) + ELU : host K-stacked LHS, single matmul ----------
    s1 = jnp.dot(x_ref[...], m1_ref[...], preferred_element_type=jnp.float32)
    a1 = _elu(s1 + b1_ref[...]).astype(jnp.bfloat16)            # (tb*32, 832)

    # ---- AvgPool2d(2,2): width pairs via pc1, height pairs via r1 ----------
    q1 = jnp.dot(a1, pc1_ref[...], preferred_element_type=jnp.float32)
    a1p_ref[...] = jnp.dot(r1_ref[...], q1.astype(jnp.bfloat16),
                           preferred_element_type=jnp.float32
                           ).astype(jnp.bfloat16)               # (tb*16+8, 416)

    # ---- Conv2d(32,64,3) + ELU : K-stack 3 row-shifted slabs, one matmul ---
    # Valid output rows h<11 only read valid pool rows (h+2 <= 12 < 13); the
    # discarded rows h=14,15 of each batch read zero-pad / next-batch rows but
    # are never consumed downstream (r2 selects h<=9 only).
    for i in range(3):
        lhs2_ref[:, i * P1_OUT:(i + 1) * P1_OUT] = a1p_ref[i:i + nr2, :]
    s2 = jnp.dot(lhs2_ref[...], m2_ref[...], preferred_element_type=jnp.float32)
    a2 = _elu(s2 + b2_ref[...]).astype(jnp.bfloat16)             # (tb*16, 704)

    # ---- AvgPool2d(2,2) rows+cols, fused with conv3's per-batch row gather -
    q2 = jnp.dot(a2, pc2_ref[...], preferred_element_type=jnp.float32)
    sel = jnp.dot(r2_ref[...], q2.astype(jnp.bfloat16),
                  preferred_element_type=jnp.float32
                  ).astype(jnp.bfloat16)                         # (5*tb, 320)
    for ho in range(5):                                          # flatten 5x5x64
        flat3_ref[:, ho * P2_OUT:(ho + 1) * P2_OUT] = sel[ho * tb:(ho + 1) * tb, :]

    # ---- Conv2d(64,256,5) + ELU : one (tb,1600)@(1600,256) matmul ----------
    h3 = _elu(jnp.dot(flat3_ref[...], m3_ref[...],
                      preferred_element_type=jnp.float32) + b3_ref[...])
    h3 = h3.astype(jnp.bfloat16)                                 # (tb, 256)

    # ---- Linear(256,200) + reparameterization ------------------------------
    lin = jnp.dot(h3, wl_ref[...], preferred_element_type=jnp.float32) + bl_ref[...]
    mean = lin[:, 0:128]             # cols [0,100) real, rest exact zeros
    log_sigma = lin[:, 128:256]      # cols [128,228) real, rest exact zeros
    mean_ref[...] = mean
    ls_ref[...] = log_sigma
    z_ref[...] = mean + jnp.exp(log_sigma) * e_ref[...]


# -------------------------- weight packing (host) ---------------------------

def init_raw_params(key):
    """PyTorch-layout parameters (Oc, Ic, Kh, Kw) / (Out, In)."""
    ks = jax.random.split(key, 8)

    def uinit(k, shape, fan_in):
        bound = 1.0 / math.sqrt(fan_in)
        return jax.random.uniform(k, shape, jnp.float32, -bound, bound)

    return {
        "w1": uinit(ks[0], (32, 1, 3, 3), 9),    "b1": uinit(ks[1], (32,), 9),
        "w2": uinit(ks[2], (64, 32, 3, 3), 288), "b2": uinit(ks[3], (64,), 288),
        "w3": uinit(ks[4], (256, 64, 5, 5), 1600), "b3": uinit(ks[5], (256,), 1600),
        "wl": uinit(ks[6], (2 * LATENT, 256), 256), "bl": uinit(ks[7], (2 * LATENT,), 256),
    }


def _pool_cols(w_in, c):
    """Column half of AvgPool2d(2,2) acting on a (.., W*C) row: (W*C, (W//2)*C)."""
    wo_n = w_in // 2
    p = np.zeros((w_in * c, wo_n * c), np.float32)
    eye = 0.25 * np.eye(c, dtype=np.float32)
    for wo in range(wo_n):
        p[(2 * wo) * c:(2 * wo + 1) * c, wo * c:(wo + 1) * c] = eye
        p[(2 * wo + 1) * c:(2 * wo + 2) * c, wo * c:(wo + 1) * c] = eye
    return p


def pack_params(raw, tb):
    """Pack PyTorch-layout weights into the kernel's banded / K-stacked form."""
    w1 = np.asarray(raw["w1"], np.float32); b1 = np.asarray(raw["b1"], np.float32)
    w2 = np.asarray(raw["w2"], np.float32); b2 = np.asarray(raw["b2"], np.float32)
    w3 = np.asarray(raw["w3"], np.float32); b3 = np.asarray(raw["b3"], np.float32)
    wl = np.asarray(raw["wl"], np.float32); bl = np.asarray(raw["bl"], np.float32)

    # conv1 K-stacked weight: lane = i*28 + wi, out col = wo*32 + co.
    m1 = np.zeros((3 * 28, C1_OUT), np.float32)
    for i in range(3):
        for wo in range(26):
            for j in range(3):
                m1[i * 28 + wo + j, wo * 32:(wo + 1) * 32] = w1[:, 0, i, j]

    # conv2 K-stacked weight: lane = i*416 + wi*32 + ci, out col = wo*64 + co.
    m2 = np.zeros((3 * P1_OUT, C2_OUT), np.float32)
    for i in range(3):
        for wo in range(11):
            for j in range(3):
                wi = wo + j
                m2[i * P1_OUT + wi * 32:i * P1_OUT + (wi + 1) * 32,
                   wo * 64:(wo + 1) * 64] = w2[:, :, i, j].T

    # conv3 K-stacked weight: lane = i*320 + j*64 + ci, out col = co.
    m3 = np.zeros((5 * P2_OUT, 256), np.float32)
    for i in range(5):
        for j in range(5):
            m3[i * P2_OUT + j * 64:i * P2_OUT + (j + 1) * 64, :] = w3[:, :, i, j].T

    # pool1 row matrix: (tb*16+8, tb*32); rows 13..15 of each block + pad rows
    # are exactly zero so the scratch pad stays zero.
    r1 = np.zeros((tb * RS2 + PAD2, tb * RS1), np.float32)
    for b in range(tb):
        for ho in range(13):
            r1[b * RS2 + ho, b * RS1 + 2 * ho] = 1.0
            r1[b * RS2 + ho, b * RS1 + 2 * ho + 1] = 1.0

    # pool2 row matrix fused with conv3 row gather: out row = ho*tb + b.
    r2 = np.zeros((5 * tb, tb * RS2), np.float32)
    for b in range(tb):
        for ho in range(5):
            r2[ho * tb + b, b * RS2 + 2 * ho] = 1.0
            r2[ho * tb + b, b * RS2 + 2 * ho + 1] = 1.0

    # Packed Linear: cols [0,100)=mean, [128,228)=log_sigma, rest zero.
    wlp = np.zeros((256, 256), np.float32)
    blp = np.zeros((1, 256), np.float32)
    wlp[:, :LATENT] = wl[:LATENT].T
    wlp[:, 128:128 + LATENT] = wl[LATENT:].T
    blp[0, :LATENT] = bl[:LATENT]
    blp[0, 128:128 + LATENT] = bl[LATENT:]

    bf = jnp.bfloat16
    # TODO(synk): m1/m2 and pc1/pc2 are mostly structural zeros (~60%); a
    # dense-block variant would shrink the one-shot weight DMA for tiny-batch
    # latency on v5e at the cost of more, smaller matmuls.
    return {
        "m1": jnp.asarray(m1, bf),
        "b1": jnp.asarray(np.tile(b1, 26)[None, :], jnp.float32),
        "pc1": jnp.asarray(_pool_cols(26, 32), bf),
        "r1": jnp.asarray(r1, bf),
        "m2": jnp.asarray(m2, bf),
        "b2": jnp.asarray(np.tile(b2, 11)[None, :], jnp.float32),
        "pc2": jnp.asarray(_pool_cols(11, 64), bf),
        "r2": jnp.asarray(r2, bf),
        "m3": jnp.asarray(m3, bf),
        "b3": jnp.asarray(b3[None, :], jnp.float32),
        "wl": jnp.asarray(wlp, bf),
        "bl": jnp.asarray(blp, jnp.float32),
    }


# --------------------------------- forward ----------------------------------

def encoder_forward(params, x_nchw, e, *, tb=2):
    # x_nchw: (B, 1, 28, 28) float32 (PyTorch NCHW); e: (B, 100) ~ N(0, 1).
    # TODO(synk): torch.randn noise is taken as explicit input `e` instead of
    # being generated in-kernel (pltpu.prng_random_bits) to keep determinism.
    B = x_nchw.shape[0]
    assert x_nchw.shape[1:] == (1, H_IN, H_IN), "Encoder requires 28x28 input"
    assert B % tb == 0, "batch must be divisible by the batch-block size"
    nb = B // tb

    # Host-side K-stacking of the conv1 LHS: row = b*32 + h (h<26; rows 26..31
    # zero), lane = i*28 + wi holds x[b, 0, h+i, wi].  bf16 to halve input DMA.
    x2 = x_nchw[:, 0].astype(jnp.float32)                         # (B, 28, 28)
    xc = jnp.concatenate([x2[:, i:i + 26, :] for i in range(3)], axis=2)
    xc = jnp.pad(xc, ((0, 0), (0, RS1 - 26), (0, 0)))             # (B, 32, 84)
    xc = xc.reshape(nb, tb * RS1, 3 * H_IN).astype(jnp.bfloat16)

    # Noise padded with zeros to 128 lanes (padded lanes of z stay exactly 0).
    e_pad = jnp.pad(e.astype(jnp.float32), ((0, 0), (0, 128 - LATENT)))
    e_pad = e_pad.reshape(nb, tb, 128)

    def block3(rows, cols):
        return pl.BlockSpec((None, rows, cols), lambda i: (i, 0, 0))

    def resident(arr):   # whole array stays in VMEM for every grid step
        return pl.BlockSpec(arr.shape, lambda i, nd=arr.ndim: (0,) * nd)

    in_specs = [
        block3(tb * RS1, 3 * H_IN),                     # x (per batch block)
        resident(params["m1"]), resident(params["b1"]),
        resident(params["pc1"]), resident(params["r1"]),
        resident(params["m2"]), resident(params["b2"]),
        resident(params["pc2"]), resident(params["r2"]),
        resident(params["m3"]), resident(params["b3"]),
        resident(params["wl"]), resident(params["bl"]),
        block3(tb, 128),                                # e (per batch block)
    ]
    out_specs = (block3(tb, 128), block3(tb, 128), block3(tb, 128))
    out_shape = tuple(jax.ShapeDtypeStruct((nb, tb, 128), jnp.float32)
                      for _ in range(3))

    z, mean, ls = pl.pallas_call(
        _encoder_kernel,
        grid=(nb,),
        out_shape=out_shape,
        in_specs=in_specs,
        out_specs=out_specs,
        scratch_shapes=[
            pltpu.VMEM((tb * RS2 + PAD2, P1_OUT), jnp.bfloat16),  # pooled conv1 map
            pltpu.VMEM((tb * RS2, 3 * P1_OUT), jnp.bfloat16),     # conv2 K-stacked LHS
            pltpu.VMEM((tb, 5 * P2_OUT), jnp.bfloat16),           # conv3 K-stacked LHS
        ],
        compiler_params=pltpu.CompilerParams(
            dimension_semantics=("parallel",),
            vmem_limit_bytes=48 * 1024 * 1024),
    )(xc, params["m1"], params["b1"], params["pc1"], params["r1"],
      params["m2"], params["b2"], params["pc2"], params["r2"],
      params["m3"], params["b3"], params["wl"], params["bl"], e_pad)

    z = z.reshape(B, 128)[:, :LATENT]
    mean = mean.reshape(B, 128)[:, :LATENT]
    ls = ls.reshape(B, 128)[:, :LATENT]
    return z, mean, ls


# ------------------------- pure-JAX reference (f32) -------------------------

def encoder_reference(raw, x, e):
    def conv(v, w, b):
        y = jax.lax.conv_general_dilated(
            v, w, (1, 1), "VALID", dimension_numbers=("NCHW", "OIHW", "NCHW"))
        return y + b[None, :, None, None]

    def avgpool(v):
        return jax.lax.reduce_window(
            v, 0.0, jax.lax.add, (1, 1, 2, 2), (1, 1, 2, 2), "VALID") * 0.25

    y = _elu(conv(x, raw["w1"], raw["b1"]))
    y = avgpool(y)
    y = _elu(conv(y, raw["w2"], raw["b2"]))
    y = avgpool(y)
    y = _elu(conv(y, raw["w3"], raw["b3"]))
    h = y.reshape(y.shape[0], 256)
    lin = h @ raw["wl"].T + raw["bl"]
    mean, log_sigma = lin[:, :LATENT], lin[:, LATENT:]
    z = mean + jnp.exp(log_sigma) * e
    return z, mean, log_sigma


if __name__ == "__main__":
    key = jax.random.PRNGKey(0)
    kp, kx, ke = jax.random.split(key, 3)

    B, TB = 4, 2                         # 2 batch blocks -> grid=(2,), parallel
    raw = init_raw_params(kp)
    params = pack_params(raw, TB)
    x = jax.random.normal(kx, (B, 1, H_IN, H_IN), jnp.float32)   # NCHW like torch
    e = jax.random.normal(ke, (B, LATENT), jnp.float32)          # torch.randn(B,100)

    fwd = jax.jit(lambda p, xx, ee: encoder_forward(p, xx, ee, tb=TB))
    z, mean, log_sigma = fwd(params, x, e)
    jax.block_until_ready((z, mean, log_sigma))

    assert z.shape == (B, LATENT)
    assert mean.shape == (B, LATENT)
    assert log_sigma.shape == (B, LATENT)
    assert bool(jnp.all(jnp.isfinite(z)))
    assert bool(jnp.all(jnp.isfinite(mean)))
    assert bool(jnp.all(jnp.isfinite(log_sigma)))

    # Reparameterization identity: z == mean + exp(log_sigma) * e.
    recon = mean + jnp.exp(log_sigma) * e
    assert bool(jnp.allclose(z, recon, atol=1e-3, rtol=1e-3))

    # Pure-JAX f32 reference; kernel uses bf16 matmul operands -> loose tol.
    z_r, mean_r, ls_r = encoder_reference(raw, x, e)
    assert bool(jnp.allclose(mean, mean_r, atol=5e-2, rtol=5e-2))
    assert bool(jnp.allclose(log_sigma, ls_r, atol=5e-2, rtol=5e-2))
    assert bool(jnp.allclose(z, z_r, atol=1e-1, rtol=1e-1))

    print("KERNEL_OK")
</pallas_src>

<mosaic_0001>
module attributes {stable_mosaic.version = 11 : i64} {
  func.func @_encoder_kernel(%arg0: i32, %arg1: memref<1x64x84xbf16, #tpu.memory_space<vmem>>, %arg2: memref<84x832xbf16, #tpu.memory_space<vmem>>, %arg3: memref<1x832xf32, #tpu.memory_space<vmem>>, %arg4: memref<832x416xbf16, #tpu.memory_space<vmem>>, %arg5: memref<40x64xbf16, #tpu.memory_space<vmem>>, %arg6: memref<1248x704xbf16, #tpu.memory_space<vmem>>, %arg7: memref<1x704xf32, #tpu.memory_space<vmem>>, %arg8: memref<704x320xbf16, #tpu.memory_space<vmem>>, %arg9: memref<10x32xbf16, #tpu.memory_space<vmem>>, %arg10: memref<1600x256xbf16, #tpu.memory_space<vmem>>, %arg11: memref<1x256xf32, #tpu.memory_space<vmem>>, %arg12: memref<256x256xbf16, #tpu.memory_space<vmem>>, %arg13: memref<1x256xf32, #tpu.memory_space<vmem>>, %arg14: memref<1x2x128xf32, #tpu.memory_space<vmem>>, %arg15: memref<1x2x128xf32, #tpu.memory_space<vmem>>, %arg16: memref<1x2x128xf32, #tpu.memory_space<vmem>>, %arg17: memref<1x2x128xf32, #tpu.memory_space<vmem>>, %arg18: memref<40x416xbf16, #tpu.memory_space<vmem>>, %arg19: memref<32x1248xbf16, #tpu.memory_space<vmem>>, %arg20: memref<2x1600xbf16, #tpu.memory_space<vmem>>) attributes {dimension_semantics = [#tpu.dimension_semantics<parallel>], iteration_bounds = array<i64: 2>, scalar_prefetch = 0 : i64, scratch_operands = 3 : i64, tpu.core_type = #tpu.core_type<tc>, window_params = [{transform_indices = @transform_0, window_bounds = array<i64: 1, 64, 84>}, {pipeline_mode = #tpu.pipeline_mode<synchronous>, transform_indices = @transform_1, window_bounds = array<i64: 84, 832>}, {pipeline_mode = #tpu.pipeline_mode<synchronous>, transform_indices = @transform_2, window_bounds = array<i64: 1, 832>}, {pipeline_mode = #tpu.pipeline_mode<synchronous>, transform_indices = @transform_3, window_bounds = array<i64: 832, 416>}, {pipeline_mode = #tpu.pipeline_mode<synchronous>, transform_indices = @transform_4, window_bounds = array<i64: 40, 64>}, {pipeline_mode = #tpu.pipeline_mode<synchronous>, transform_indices = @transform_5, window_bounds = array<i64: 1248, 704>}, {pipeline_mode = #tpu.pipeline_mode<synchronous>, transform_indices = @transform_6, window_bounds = array<i64: 1, 704>}, {pipeline_mode = #tpu.pipeline_mode<synchronous>, transform_indices = @transform_7, window_bounds = array<i64: 704, 320>}, {pipeline_mode = #tpu.pipeline_mode<synchronous>, transform_indices = @transform_8, window_bounds = array<i64: 10, 32>}, {pipeline_mode = #tpu.pipeline_mode<synchronous>, transform_indices = @transform_9, window_bounds = array<i64: 1600, 256>}, {pipeline_mode = #tpu.pipeline_mode<synchronous>, transform_indices = @transform_10, window_bounds = array<i64: 1, 256>}, {pipeline_mode = #tpu.pipeline_mode<synchronous>, transform_indices = @transform_11, window_bounds = array<i64: 256, 256>}, {pipeline_mode = #tpu.pipeline_mode<synchronous>, transform_indices = @transform_12, window_bounds = array<i64: 1, 256>}, {transform_indices = @transform_13, window_bounds = array<i64: 1, 2, 128>}, {transform_indices = @transform_14, window_bounds = array<i64: 1, 2, 128>}, {transform_indices = @transform_15, window_bounds = array<i64: 1, 2, 128>}, {transform_indices = @transform_16, window_bounds = array<i64: 1, 2, 128>}]} {
    %c0 = arith.constant 0 : index
    %c0_0 = arith.constant 0 : index
    %c0_1 = arith.constant 0 : index
    %0 = vector.load %arg1[%c0, %c0_0, %c0_1] : memref<1x64x84xbf16, #tpu.memory_space<vmem>>, vector<1x64x84xbf16>
    %1 = vector.shape_cast %0 : vector<1x64x84xbf16> to vector<64x84xbf16>
    %c0_2 = arith.constant 0 : index
    %c0_3 = arith.constant 0 : index
    %2 = vector.load %arg2[%c0_2, %c0_3] : memref<84x832xbf16, #tpu.memory_space<vmem>>, vector<84x832xbf16>
    %cst = arith.constant dense<0.000000e+00> : vector<64x832xf32>
    %3 = tpu.matmul %1, %2, %cst {dimension_numbers = #tpu.dot_dimension_numbers<[1], [0], [0], [1], [0, 0, 1, 1], [], []>} : vector<64x84xbf16>, vector<84x832xbf16>, vector<64x832xf32> -> vector<64x832xf32>
    %c0_4 = arith.constant 0 : index
    %c0_5 = arith.constant 0 : index
    %4 = vector.load %arg3[%c0_4, %c0_5] : memref<1x832xf32, #tpu.memory_space<vmem>>, vector<1x832xf32>
    %5 = vector.broadcast %4 : vector<1x832xf32> to vector<64x832xf32>
    %6 = arith.addf %3, %5 : vector<64x832xf32>
    %cst_6 = arith.constant 0.000000e+00 : f32
    %7 = vector.broadcast %cst_6 : f32 to vector<64x832xf32>
    %8 = arith.cmpf ogt, %6, %7 : vector<64x832xf32>
    %cst_7 = arith.constant 0.000000e+00 : f32
    %9 = vector.broadcast %cst_7 : f32 to vector<64x832xf32>
    %10 = arith.minimumf %6, %9 : vector<64x832xf32>
    %11 = math.exp %10 : vector<64x832xf32>
    %cst_8 = arith.constant 1.000000e+00 : f32
    %12 = vector.broadcast %cst_8 : f32 to vector<64x832xf32>
    %13 = arith.subf %11, %12 : vector<64x832xf32>
    %14 = arith.select %8, %6, %13 : vector<64x832xi1>, vector<64x832xf32>
    %15 = arith.truncf %14 : vector<64x832xf32> to vector<64x832xbf16>
    %c0_9 = arith.constant 0 : index
    %c0_10 = arith.constant 0 : index
    %16 = vector.load %arg4[%c0_9, %c0_10] : memref<832x416xbf16, #tpu.memory_space<vmem>>, vector<832x416xbf16>
    %cst_11 = arith.constant dense<0.000000e+00> : vector<64x416xf32>
    %17 = tpu.matmul %15, %16, %cst_11 {dimension_numbers = #tpu.dot_dimension_numbers<[1], [0], [0], [1], [0, 0, 1, 1], [], []>} : vector<64x832xbf16>, vector<832x416xbf16>, vector<64x416xf32> -> vector<64x416xf32>
    %c0_12 = arith.constant 0 : index
    %c0_13 = arith.constant 0 : index
    %18 = vector.load %arg5[%c0_12, %c0_13] : memref<40x64xbf16, #tpu.memory_space<vmem>>, vector<40x64xbf16>
    %19 = arith.truncf %17 : vector<64x416xf32> to vector<64x416xbf16>
    %cst_14 = arith.constant dense<0.000000e+00> : vector<40x416xf32>
    %20 = tpu.matmul %18, %19, %cst_14 {dimension_numbers = #tpu.dot_dimension_numbers<[1], [0], [0], [1], [0, 0, 1, 1], [], []>} : vector<40x64xbf16>, vector<64x416xbf16>, vector<40x416xf32> -> vector<40x416xf32>
    %21 = arith.truncf %20 : vector<40x416xf32> to vector<40x416xbf16>
    %c0_15 = arith.constant 0 : index
    %c0_16 = arith.constant 0 : index
    %22 = vector.load %arg18[%c0_15, %c0_16] : memref<40x416xbf16, #tpu.memory_space<vmem>>, vector<40x416xbf16>
    tpu.vector_store %arg18[%c0_15, %c0_16], %21 {strides = array<i32>} : memref<40x416xbf16, #tpu.memory_space<vmem>>, vector<40x416xbf16>,
    %c0_17 = arith.constant 0 : index
    %c0_18 = arith.constant 0 : index
    %23 = vector.load %arg18[%c0_17, %c0_18] : memref<40x416xbf16, #tpu.memory_space<vmem>>, vector<32x416xbf16>
    %c0_19 = arith.constant 0 : index
    %c0_20 = arith.constant 0 : index
    %24 = vector.load %arg19[%c0_19, %c0_20] : memref<32x1248xbf16, #tpu.memory_space<vmem>>, vector<32x416xbf16>
    tpu.vector_store %arg19[%c0_19, %c0_20], %23 {strides = array<i32>} : memref<32x1248xbf16, #tpu.memory_space<vmem>>, vector<32x416xbf16>,
    %c1 = arith.constant 1 : index
    %c0_21 = arith.constant 0 : index
    %25 = vector.load %arg18[%c1, %c0_21] : memref<40x416xbf16, #tpu.memory_space<vmem>>, vector<32x416xbf16>
    %c0_22 = arith.constant 0 : index
    %c416 = arith.constant 416 : index
    %26 = vector.load %arg19[%c0_22, %c416] : memref<32x1248xbf16, #tpu.memory_space<vmem>>, vector<32x416xbf16>
    tpu.vector_store %arg19[%c0_22, %c416], %25 {strides = array<i32>} : memref<32x1248xbf16, #tpu.memory_space<vmem>>, vector<32x416xbf16>,
    %c2 = arith.constant 2 : index
    %c0_23 = arith.constant 0 : index
    %27 = vector.load %arg18[%c2, %c0_23] : memref<40x416xbf16, #tpu.memory_space<vmem>>, vector<32x416xbf16>
    %c0_24 = arith.constant 0 : index
    %c832 = arith.constant 832 : index
    %28 = vector.load %arg19[%c0_24, %c832] : memref<32x1248xbf16, #tpu.memory_space<vmem>>, vector<32x416xbf16>
    tpu.vector_store %arg19[%c0_24, %c832], %27 {strides = array<i32>} : memref<32x1248xbf16, #tpu.memory_space<vmem>>, vector<32x416xbf16>,
    %c0_25 = arith.constant 0 : index
    %c0_26 = arith.constant 0 : index
    %29 = vector.load %arg19[%c0_25, %c0_26] : memref<32x1248xbf16, #tpu.memory_space<vmem>>, vector<32x1248xbf16>
    %c0_27 = arith.constant 0 : index
    %c0_28 = arith.constant 0 : index
    %30 = vector.load %arg6[%c0_27, %c0_28] : memref<1248x704xbf16, #tpu.memory_space<vmem>>, vector<1248x704xbf16>
    %cst_29 = arith.constant dense<0.000000e+00> : vector<32x704xf32>
    %31 = tpu.matmul %29, %30, %cst_29 {dimension_numbers = #tpu.dot_dimension_numbers<[1], [0], [0], [1], [0, 0, 1, 1], [], []>} : vector<32x1248xbf16>, vector<1248x704xbf16>, vector<32x704xf32> -> vector<32x704xf32>
    %c0_30 = arith.constant 0 : index
    %c0_31 = arith.constant 0 : index
    %32 = vector.load %arg7[%c0_30, %c0_31] : memref<1x704xf32, #tpu.memory_space<vmem>>, vector<1x704xf32>
    %33 = vector.broadcast %32 : vector<1x704xf32> to vector<32x704xf32>
    %34 = arith.addf %31, %33 : vector<32x704xf32>
    %cst_32 = arith.constant 0.000000e+00 : f32
    %35 = vector.broadcast %cst_32 : f32 to vector<32x704xf32>
    %36 = arith.cmpf ogt, %34, %35 : vector<32x704xf32>
    %cst_33 = arith.constant 0.000000e+00 : f32
    %37 = vector.broadcast %cst_33 : f32 to vector<32x704xf32>
    %38 = arith.minimumf %34, %37 : vector<32x704xf32>
    %39 = math.exp %38 : vector<32x704xf32>
    %cst_34 = arith.constant 1.000000e+00 : f32
    %40 = vector.broadcast %cst_34 : f32 to vector<32x704xf32>
    %41 = arith.subf %39, %40 : vector<32x704xf32>
    %42 = arith.select %36, %34, %41 : vector<32x704xi1>, vector<32x704xf32>
    %43 = arith.truncf %42 : vector<32x704xf32> to vector<32x704xbf16>
    %c0_35 = arith.constant 0 : index
    %c0_36 = arith.constant 0 : index
    %44 = vector.load %arg8[%c0_35, %c0_36] : memref<704x320xbf16, #tpu.memory_space<vmem>>, vector<704x320xbf16>
    %cst_37 = arith.constant dense<0.000000e+00> : vector<32x320xf32>
    %45 = tpu.matmul %43, %44, %cst_37 {dimension_numbers = #tpu.dot_dimension_numbers<[1], [0], [0], [1], [0, 0, 1, 1], [], []>} : vector<32x704xbf16>, vector<704x320xbf16>, vector<32x320xf32> -> vector<32x320xf32>
    %c0_38 = arith.constant 0 : index
    %c0_39 = arith.constant 0 : index
    %46 = vector.load %arg9[%c0_38, %c0_39] : memref<10x32xbf16, #tpu.memory_space<vmem>>, vector<10x32xbf16>
    %47 = arith.truncf %45 : vector<32x320xf32> to vector<32x320xbf16>
    %cst_40 = arith.constant dense<0.000000e+00> : vector<10x320xf32>
    %48 = tpu.matmul %46, %47, %cst_40 {dimension_numbers = #tpu.dot_dimension_numbers<[1], [0], [0], [1], [0, 0, 1, 1], [], []>} : vector<10x32xbf16>, vector<32x320xbf16>, vector<10x320xf32> -> vector<10x320xf32>
    %49 = arith.truncf %48 : vector<10x320xf32> to vector<10x320xbf16>
    %50 = vector.extract_strided_slice %49 {offsets = [0, 0], sizes = [2, 320], strides = [1, 1]} : vector<10x320xbf16> to vector<2x320xbf16>
    %c0_41 = arith.constant 0 : index
    %c0_42 = arith.constant 0 : index
    %51 = vector.load %arg20[%c0_41, %c0_42] : memref<2x1600xbf16, #tpu.memory_space<vmem>>, vector<2x320xbf16>
    tpu.vector_store %arg20[%c0_41, %c0_42], %50 {strides = array<i32>} : memref<2x1600xbf16, #tpu.memory_space<vmem>>, vector<2x320xbf16>,
    %52 = vector.extract_strided_slice %49 {offsets = [2, 0], sizes = [2, 320], strides = [1, 1]} : vector<10x320xbf16> to vector<2x320xbf16>
    %c0_43 = arith.constant 0 : index
    %c320 = arith.constant 320 : index
    %53 = vector.load %arg20[%c0_43, %c320] : memref<2x1600xbf16, #tpu.memory_space<vmem>>, vector<2x320xbf16>
    tpu.vector_store %arg20[%c0_43, %c320], %52 {strides = array<i32>} : memref<2x1600xbf16, #tpu.memory_space<vmem>>, vector<2x320xbf16>,
    %54 = vector.extract_strided_slice %49 {offsets = [4, 0], sizes = [2, 320], strides = [1, 1]} : vector<10x320xbf16> to vector<2x320xbf16>
    %c0_44 = arith.constant 0 : index
    %c640 = arith.constant 640 : index
    %55 = vector.load %arg20[%c0_44, %c640] : memref<2x1600xbf16, #tpu.memory_space<vmem>>, vector<2x320xbf16>
    tpu.vector_store %arg20[%c0_44, %c640], %54 {strides = array<i32>} : memref<2x1600xbf16, #tpu.memory_space<vmem>>, vector<2x320xbf16>,
    %56 = vector.extract_strided_slice %49 {offsets = [6, 0], sizes = [2, 320], strides = [1, 1]} : vector<10x320xbf16> to vector<2x320xbf16>
    %c0_45 = arith.constant 0 : index
    %c960 = arith.constant 960 : index
    %57 = vector.load %arg20[%c0_45, %c960] : memref<2x1600xbf16, #tpu.memory_space<vmem>>, vector<2x320xbf16>
    tpu.vector_store %arg20[%c0_45, %c960], %56 {strides = array<i32>} : memref<2x1600xbf16, #tpu.memory_space<vmem>>, vector<2x320xbf16>,
    %58 = vector.extract_strided_slice %49 {offsets = [8, 0], sizes = [2, 320], strides = [1, 1]} : vector<10x320xbf16> to vector<2x320xbf16>
    %c0_46 = arith.constant 0 : index
    %c1280 = arith.constant 1280 : index
    %59 = vector.load %arg20[%c0_46, %c1280] : memref<2x1600xbf16, #tpu.memory_space<vmem>>, vector<2x320xbf16>
    tpu.vector_store %arg20[%c0_46, %c1280], %58 {strides = array<i32>} : memref<2x1600xbf16, #tpu.memory_space<vmem>>, vector<2x320xbf16>,
    %c0_47 = arith.constant 0 : index
    %c0_48 = arith.constant 0 : index
    %60 = vector.load %arg20[%c0_47, %c0_48] : memref<2x1600xbf16, #tpu.memory_space<vmem>>, vector<2x1600xbf16>
    %c0_49 = arith.constant 0 : index
    %c0_50 = arith.constant 0 : index
    %61 = vector.load %arg10[%c0_49, %c0_50] : memref<1600x256xbf16, #tpu.memory_space<vmem>>, vector<1600x256xbf16>
    %cst_51 = arith.constant dense<0.000000e+00> : vector<2x256xf32>
    %62 = tpu.matmul %60, %61, %cst_51 {dimension_numbers = #tpu.dot_dimension_numbers<[1], [0], [0], [1], [0, 0, 1, 1], [], []>} : vector<2x1600xbf16>, vector<1600x256xbf16>, vector<2x256xf32> -> vector<2x256xf32>
    %c0_52 = arith.constant 0 : index
    %c0_53 = arith.constant 0 : index
    %63 = vector.load %arg11[%c0_52, %c0_53] : memref<1x256xf32, #tpu.memory_space<vmem>>, vector<1x256xf32>
    %64 = vector.broadcast %63 : vector<1x256xf32> to vector<2x256xf32>
    %65 = arith.addf %62, %64 : vector<2x256xf32>
    %cst_54 = arith.constant 0.000000e+00 : f32
    %66 = vector.broadcast %cst_54 : f32 to vector<2x256xf32>
    %67 = arith.cmpf ogt, %65, %66 : vector<2x256xf32>
    %cst_55 = arith.constant 0.000000e+00 : f32
    %68 = vector.broadcast %cst_55 : f32 to vector<2x256xf32>
    %69 = arith.minimumf %65, %68 : vector<2x256xf32>
    %70 = math.exp %69 : vector<2x256xf32>
    %cst_56 = arith.constant 1.000000e+00 : f32
    %71 = vector.broadcast %cst_56 : f32 to vector<2x256xf32>
    %72 = arith.subf %70, %71 : vector<2x256xf32>
    %73 = arith.select %67, %65, %72 : vector<2x256xi1>, vector<2x256xf32>
    %74 = arith.truncf %73 : vector<2x256xf32> to vector<2x256xbf16>
    %c0_57 = arith.constant 0 : index
    %c0_58 = arith.constant 0 : index
    %75 = vector.load %arg12[%c0_57, %c0_58] : memref<256x256xbf16, #tpu.memory_space<vmem>>, vector<256x256xbf16>
    %cst_59 = arith.constant dense<0.000000e+00> : vector<2x256xf32>
    %76 = tpu.matmul %74, %75, %cst_59 {dimension_numbers = #tpu.dot_dimension_numbers<[1], [0], [0], [1], [0, 0, 1, 1], [], []>} : vector<2x256xbf16>, vector<256x256xbf16>, vector<2x256xf32> -> vector<2x256xf32>
    %c0_60 = arith.constant 0 : index
    %c0_61 = arith.constant 0 : index
    %77 = vector.load %arg13[%c0_60, %c0_61] : memref<1x256xf32, #tpu.memory_space<vmem>>, vector<1x256xf32>
    %78 = vector.broadcast %77 : vector<1x256xf32> to vector<2x256xf32>
    %79 = arith.addf %76, %78 : vector<2x256xf32>
    %80 = vector.extract_strided_slice %79 {offsets = [0, 0], sizes = [2, 128], strides = [1, 1]} : vector<2x256xf32> to vector<2x128xf32>
    %81 = vector.extract_strided_slice %79 {offsets = [0, 128], sizes = [2, 128], strides = [1, 1]} : vector<2x256xf32> to vector<2x128xf32>
    %c0_62 = arith.constant 0 : index
    %c0_63 = arith.constant 0 : index
    %c0_64 = arith.constant 0 : index
    %82 = vector.load %arg16[%c0_62, %c0_63, %c0_64] : memref<1x2x128xf32, #tpu.memory_space<vmem>>, vector<1x2x128xf32>
    %83 = vector.shape_cast %82 : vector<1x2x128xf32> to vector<2x128xf32>
    %84 = vector.shape_cast %80 : vector<2x128xf32> to vector<1x2x128xf32>
    tpu.vector_store %arg16[%c0_62, %c0_63, %c0_64], %84 {strides = array<i32>} : memref<1x2x128xf32, #tpu.memory_space<vmem>>, vector<1x2x128xf32>,
    %c0_65 = arith.constant 0 : index
    %c0_66 = arith.constant 0 : index
    %c0_67 = arith.constant 0 : index
    %85 = vector.load %arg17[%c0_65, %c0_66, %c0_67] : memref<1x2x128xf32, #tpu.memory_space<vmem>>, vector<1x2x128xf32>
    %86 = vector.shape_cast %85 : vector<1x2x128xf32> to vector<2x128xf32>
    %87 = vector.shape_cast %81 : vector<2x128xf32> to vector<1x2x128xf32>
    tpu.vector_store %arg17[%c0_65, %c0_66, %c0_67], %87 {strides = array<i32>} : memref<1x2x128xf32, #tpu.memory_space<vmem>>, vector<1x2x128xf32>,
    %88 = math.exp %81 : vector<2x128xf32>
    %c0_68 = arith.constant 0 : index
    %c0_69 = arith.constant 0 : index
    %c0_70 = arith.constant 0 : index
    %89 = vector.load %arg14[%c0_68, %c0_69, %c0_70] : memref<1x2x128xf32, #tpu.memory_space<vmem>>, vector<1x2x128xf32>
    %90 = vector.shape_cast %89 : vector<1x2x128xf32> to vector<2x128xf32>
    %91 = arith.mulf %88, %90 : vector<2x128xf32>
    %92 = arith.addf %80, %91 : vector<2x128xf32>
    %c0_71 = arith.constant 0 : index
    %c0_72 = arith.constant 0 : index
    %c0_73 = arith.constant 0 : index
    %93 = vector.load %arg15[%c0_71, %c0_72, %c0_73] : memref<1x2x128xf32, #tpu.memory_space<vmem>>, vector<1x2x128xf32>
    %94 = vector.shape_cast %93 : vector<1x2x128xf32> to vector<2x128xf32>
    %95 = vector.shape_cast %92 : vector<2x128xf32> to vector<1x2x128xf32>
    tpu.vector_store %arg15[%c0_71, %c0_72, %c0_73], %95 {strides = array<i32>} : memref<1x2x128xf32, #tpu.memory_space<vmem>>, vector<1x2x128xf32>,
    return
  }
  func.func @transform_0(%arg0: i32) -> (i32, i32, i32) {
    %c0_i32 = arith.constant 0 : i32
    %c0_i32_0 = arith.constant 0 : i32
    %c0_i32_1 = arith.constant 0 : i32
    return %arg0, %c0_i32, %c0_i32_0 : i32, i32, i32
  }
  func.func @transform_1(%arg0: i32) -> (i32, i32) {
    %c0_i32 = arith.constant 0 : i32
    %c0_i32_0 = arith.constant 0 : i32
    %c0_i32_1 = arith.constant 0 : i32
    return %c0_i32, %c0_i32_0 : i32, i32
  }
  func.func @transform_2(%arg0: i32) -> (i32, i32) {
    %c0_i32 = arith.constant 0 : i32
    %c0_i32_0 = arith.constant 0 : i32
    %c0_i32_1 = arith.constant 0 : i32
    return %c0_i32, %c0_i32_0 : i32, i32
  }
  func.func @transform_3(%arg0: i32) -> (i32, i32) {
    %c0_i32 = arith.constant 0 : i32
    %c0_i32_0 = arith.constant 0 : i32
    %c0_i32_1 = arith.constant 0 : i32
    return %c0_i32, %c0_i32_0 : i32, i32
  }
  func.func @transform_4(%arg0: i32) -> (i32, i32) {
    %c0_i32 = arith.constant 0 : i32
    %c0_i32_0 = arith.constant 0 : i32
    %c0_i32_1 = arith.constant 0 : i32
    return %c0_i32, %c0_i32_0 : i32, i32
  }
  func.func @transform_5(%arg0: i32) -> (i32, i32) {
    %c0_i32 = arith.constant 0 : i32
    %c0_i32_0 = arith.constant 0 : i32
    %c0_i32_1 = arith.constant 0 : i32
    return %c0_i32, %c0_i32_0 : i32, i32
  }
  func.func @transform_6(%arg0: i32) -> (i32, i32) {
    %c0_i32 = arith.constant 0 : i32
    %c0_i32_0 = arith.constant 0 : i32
    %c0_i32_1 = arith.constant 0 : i32
    return %c0_i32, %c0_i32_0 : i32, i32
  }
  func.func @transform_7(%arg0: i32) -> (i32, i32) {
    %c0_i32 = arith.constant 0 : i32
    %c0_i32_0 = arith.constant 0 : i32
    %c0_i32_1 = arith.constant 0 : i32
    return %c0_i32, %c0_i32_0 : i32, i32
  }
  func.func @transform_8(%arg0: i32) -> (i32, i32) {
    %c0_i32 = arith.constant 0 : i32
    %c0_i32_0 = arith.constant 0 : i32
    %c0_i32_1 = arith.constant 0 : i32
    return %c0_i32, %c0_i32_0 : i32, i32
  }
  func.func @transform_9(%arg0: i32) -> (i32, i32) {
    %c0_i32 = arith.constant 0 : i32
    %c0_i32_0 = arith.constant 0 : i32
    %c0_i32_1 = arith.constant 0 : i32
    return %c0_i32, %c0_i32_0 : i32, i32
  }
  func.func @transform_10(%arg0: i32) -> (i32, i32) {
    %c0_i32 = arith.constant 0 : i32
    %c0_i32_0 = arith.constant 0 : i32
    %c0_i32_1 = arith.constant 0 : i32
    return %c0_i32, %c0_i32_0 : i32, i32
  }
  func.func @transform_11(%arg0: i32) -> (i32, i32) {
    %c0_i32 = arith.constant 0 : i32
    %c0_i32_0 = arith.constant 0 : i32
    %c0_i32_1 = arith.constant 0 : i32
    return %c0_i32, %c0_i32_0 : i32, i32
  }
  func.func @transform_12(%arg0: i32) -> (i32, i32) {
    %c0_i32 = arith.constant 0 : i32
    %c0_i32_0 = arith.constant 0 : i32
    %c0_i32_1 = arith.constant 0 : i32
    return %c0_i32, %c0_i32_0 : i32, i32
  }
  func.func @transform_13(%arg0: i32) -> (i32, i32, i32) {
    %c0_i32 = arith.constant 0 : i32
    %c0_i32_0 = arith.constant 0 : i32
    %c0_i32_1 = arith.constant 0 : i32
    return %arg0, %c0_i32, %c0_i32_0 : i32, i32, i32
  }
  func.func @transform_14(%arg0: i32) -> (i32, i32, i32) {
    %c0_i32 = arith.constant 0 : i32
    %c0_i32_0 = arith.constant 0 : i32
    %c0_i32_1 = arith.constant 0 : i32
    return %arg0, %c0_i32, %c0_i32_0 : i32, i32, i32
  }
  func.func @transform_15(%arg0: i32) -> (i32, i32, i32) {
    %c0_i32 = arith.constant 0 : i32
    %c0_i32_0 = arith.constant 0 : i32
    %c0_i32_1 = arith.constant 0 : i32
    return %arg0, %c0_i32, %c0_i32_0 : i32, i32, i32
  }
  func.func @transform_16(%arg0: i32) -> (i32, i32, i32) {
    %c0_i32 = arith.constant 0 : i32
    %c0_i32_0 = arith.constant 0 : i32
    %c0_i32_1 = arith.constant 0 : i32
    return %arg0, %c0_i32, %c0_i32_0 : i32, i32, i32
  }
}

</mosaic_0001>

<llo_original>
// kernel: _lambda_.1
$region0: #{_lambda_.1}
  #allocation0 [shape = 'u32[]', space=smem, size = 0x4, offset = 0x4, fixed_abs, tag = 'smem constant byte address 0x4 - core index']
  #allocation1 [shape = 'u32[144,128]{1,0:T(1,128)}', space=vmem, size = 0x12000, scoped, tag = 'internal scratch']
  #allocation2 [shape = 'bf16[40,416]{1,0:T(8,128)(2,1)}', space=vmem, size = 0xa000, scoped, tag = 'scratch operand']
  #allocation3 [shape = 'bf16[32,1248]{1,0:T(8,128)(2,1)}', space=vmem, size = 0x14000, scoped, tag = 'scratch operand']
  #allocation4 [shape = 'bf16[2,1600]{1,0:T(2,128)(2,1)}', space=vmem, size = 0x1a00, scoped, tag = 'scratch operand']
  %s0 = inlined_call_operand.vmem [shape: bf16[2,64,84], index: 0, kind: input, shape index: {}]
  %s1 = inlined_call_operand.vmem [shape: bf16[84,832], index: 1, kind: input, shape index: {}]
  %s2 = inlined_call_operand.vmem [shape: f32[1,832], index: 2, kind: input, shape index: {}]
  %s3 = inlined_call_operand.vmem [shape: bf16[832,416], index: 3, kind: input, shape index: {}]
  %s4 = inlined_call_operand.vmem [shape: bf16[40,64], index: 4, kind: input, shape index: {}]
  %s5 = inlined_call_operand.vmem [shape: bf16[1248,704], index: 5, kind: input, shape index: {}]
  %s6 = inlined_call_operand.vmem [shape: f32[1,704], index: 6, kind: input, shape index: {}]
  %s7 = inlined_call_operand.vmem [shape: bf16[704,320], index: 7, kind: input, shape index: {}]
  %s8 = inlined_call_operand.vmem [shape: bf16[10,32], index: 8, kind: input, shape index: {}]
  %s9 = inlined_call_operand.vmem [shape: bf16[1600,256], index: 9, kind: input, shape index: {}]
  %s10 = inlined_call_operand.vmem [shape: f32[1,256], index: 10, kind: input, shape index: {}]
  %s11 = inlined_call_operand.vmem [shape: bf16[256,256], index: 11, kind: input, shape index: {}]
  %s12 = inlined_call_operand.vmem [shape: f32[1,256], index: 12, kind: input, shape index: {}]
  %s13 = inlined_call_operand.vmem [shape: f32[2,2,128], index: 13, kind: input, shape index: {}]
  %s14 = inlined_call_operand.hbm [shape: f32[2,2,128], index: 14, kind: output, shape index: {0}]
  %s15 = inlined_call_operand.hbm [shape: f32[2,2,128], index: 15, kind: output, shape index: {1}]
  %s16 = inlined_call_operand.hbm [shape: f32[2,2,128], index: 16, kind: output, shape index: {2}]
  %17 = xla_tuple %s14, %s15, %s16
  %s18 = sld [smem:[#allocation0]]
  $region105: #{_lambda_.1} parent=0
    _
  %s20 = ssub.s32 1, %s18
  %s21 = scalar_select 0, %s20, %s18
  $region1: #{_lambda_.1} parent=0
    #allocation5 [shape = 'u8[2048]{0}', space=vmem, size = 0x800, scoped, tag = 'output window, operand 0']
    #allocation6 [shape = 's32[2]{0}', space=sflag, size = 0x8, scoped, tag = 'scoped memory for _lambda_.1']
    #allocation7 [shape = 'u8[2048]{0}', space=vmem, size = 0x800, scoped, tag = 'output window, operand 1']
    #allocation8 [shape = 's32[2]{0}', space=sflag, size = 0x8, scoped, tag = 'scoped memory for _lambda_.1']
    #allocation9 [shape = 'u8[2048]{0}', space=vmem, size = 0x800, scoped, tag = 'output window, operand 2']
    %22 = vsyncpa [#allocation6], 0
    %s23 = scalar_lea.sflag [#allocation6], 1
    %24 = vsyncpa %s23, 0
    %25 = vsyncpa [#allocation8], 0
    %s26 = scalar_lea.sflag [#allocation8], 1
    %27 = vsyncpa %s26, 0
    loop: start=0, step=1, limit=4
    $region2: #{_lambda_.1} parent=1 // loop_pre_header
      _
    $region3: #{_lambda_.1} parent=1 // loop_header
      %s29 = sphi 0, %s33
      %p30 = scmp.ge.s32.totalorder %s29, 4
      %s39 = sphi 0, %s41
      %s42 = sphi 0, %s39
      %s43 = sphi 0, %s42
      %s59 = sphi 0, %s43
      %s63 = sphi 0, %s63
      %s65 = sphi 0, %s63
      %s66 = sphi 0, %s65
      %s80 = sphi 0, %s66
      %s84 = sphi 0, %s84
      %s86 = sphi 0, %s84
      %s87 = sphi 0, %s86
      %s101 = sphi 0, %s87
      %s105 = sphi 0, %s105
      %s107 = sphi 0, %s105
      %s108 = sphi 0, %s107
      %s122 = sphi 0, %s108
      %s126 = sphi 0, %s126
      %s128 = sphi 0, %s126
      %s129 = sphi 0, %s128
      %s143 = sphi 0, %s129
      %s147 = sphi 0, %s147
      %s149 = sphi 0, %s147
      %s150 = sphi 0, %s149
      %s164 = sphi 0, %s150
      %s168 = sphi 0, %s168
      %s170 = sphi 0, %s168
      %s171 = sphi 0, %s170
      %s185 = sphi 0, %s171
      %s189 = sphi 0, %s189
      %s191 = sphi 0, %s189
      %s192 = sphi 0, %s191
      %s206 = sphi 0, %s192
      %s210 = sphi 0, %s210
      %s212 = sphi 0, %s210
      %s213 = sphi 0, %s212
      %s227 = sphi 0, %s213
      %s231 = sphi 0, %s231
      %s233 = sphi 0, %s231
      %s234 = sphi 0, %s233
      %s248 = sphi 0, %s234
      %s252 = sphi 0, %s252
      %s254 = sphi 0, %s252
      %s255 = sphi 0, %s254
      %s269 = sphi 0, %s255
      %s273 = sphi 0, %s273
      %s275 = sphi 0, %s273
      %s276 = sphi 0, %s275
      %s290 = sphi 0, %s276
      %s294 = sphi 0, %s294
      %s296 = sphi 0, %s294
      %s297 = sphi 0, %s296
      %s311 = sphi 0, %s297
      %s317 = sphi 0, %s319
      %s320 = sphi 0, %s317
      %s321 = sphi 0, %s320
      %s337 = sphi 0, %s321
      %s343 = sphi 0, %s345
      %s346 = sphi 0, %s343
      %s347 = sphi 0, %s346
      %s363 = sphi 0, %s347
      %s369 = sphi 0, %s371
      %s372 = sphi 0, %s369
      %s373 = sphi 0, %s372
      %s389 = sphi 0, %s373
      %s395 = sphi 0, %s397
      %s398 = sphi 0, %s395
      %s399 = sphi 0, %s398
      %s415 = sphi 0, %s399
    $region4: #{_lambda_.1} parent=1 // loop_header_branch
      %32 = sbr.rel (%p30) target = $region8
    $region5: #{_lambda_.1} parent=1 // loop_body
      %s34 = ssub.s32 %s29, 1
      %s35 = ssub.s32 %s29, 2
      %s36 = sadd.s32 %s29, 1
      %s37 = ssub.s32 %s29, %s36
      %p38 = scmp.eq.s32.totalorder %s37, 0
      %s40 = sadd.s32 %s39, 1
      %s41 = scalar_select %p38, %s39, %s40
      %p44 = pneg %p38
      %p45 = scmp.eq.s32.totalorder %s29, 1
      %p46 = por %p44, %p45
      %p47 = scmp.ne.s32.totalorder %s39, %s42
      %p48 = scmp.eq.s32.totalorder %s29, 0
      %p49 = por %p47, %p48
      %p50 = scmp.ne.s32.totalorder %s39, %s42
      %p51 = scmp.eq.s32.totalorder %s34, 1
      %p52 = por %p50, %p51
      %p53 = scmp.ne.s32.totalorder %s42, %s43
      %p54 = scmp.eq.s32.totalorder %s34, 0
      %p55 = por %p53, %p54
      %p56 = scmp.ne.s32.totalorder %s42, %s43
      %p57 = scmp.eq.s32.totalorder %s35, 1
      %p58 = por %p56, %p57
      %p60 = scmp.ne.s32.totalorder %s43, %s59
      %p61 = scmp.eq.s32.totalorder %s35, 0
      %p62 = por %p60, %p61
      %s64 = sadd.s32 %s63, 1
      %p67 = scmp.eq.s32.totalorder %s29, 1
      %p68 = scmp.ne.s32.totalorder %s63, %s65
      %p69 = scmp.eq.s32.totalorder %s29, 0
      %p70 = por %p68, %p69
      %p71 = scmp.ne.s32.totalorder %s63, %s65
      %p72 = scmp.eq.s32.totalorder %s34, 1
      %p73 = por %p71, %p72
      %p74 = scmp.ne.s32.totalorder %s65, %s66
      %p75 = scmp.eq.s32.totalorder %s34, 0
      %p76 = por %p74, %p75
      %p77 = scmp.ne.s32.totalorder %s65, %s66
      %p78 = scmp.eq.s32.totalorder %s35, 1
      %p79 = por %p77, %p78
      %p81 = scmp.ne.s32.totalorder %s66, %s80
      %p82 = scmp.eq.s32.totalorder %s35, 0
      %p83 = por %p81, %p82
      %s85 = sadd.s32 %s84, 1
      %p88 = scmp.eq.s32.totalorder %s29, 1
      %p89 = scmp.ne.s32.totalorder %s84, %s86
      %p90 = scmp.eq.s32.totalorder %s29, 0
      %p91 = por %p89, %p90
      %p92 = scmp.ne.s32.totalorder %s84, %s86
      %p93 = scmp.eq.s32.totalorder %s34, 1
      %p94 = por %p92, %p93
      %p95 = scmp.ne.s32.totalorder %s86, %s87
      %p96 = scmp.eq.s32.totalorder %s34, 0
      %p97 = por %p95, %p96
      %p98 = scmp.ne.s32.totalorder %s86, %s87
      %p99 = scmp.eq.s32.totalorder %s35, 1
      %p100 = por %p98, %p99
      %p102 = scmp.ne.s32.totalorder %s87, %s101
      %p103 = scmp.eq.s32.totalorder %s35, 0
      %p104 = por %p102, %p103
      %s106 = sadd.s32 %s105, 1
      %p109 = scmp.eq.s32.totalorder %s29, 1
      %p110 = scmp.ne.s32.totalorder %s105, %s107
      %p111 = scmp.eq.s32.totalorder %s29, 0
      %p112 = por %p110, %p111
      %p113 = scmp.ne.s32.totalorder %s105, %s107
      %p114 = scmp.eq.s32.totalorder %s34, 1
      %p115 = por %p113, %p114
      %p116 = scmp.ne.s32.totalorder %s107, %s108
      %p117 = scmp.eq.s32.totalorder %s34, 0
      %p118 = por %p116, %p117
      %p119 = scmp.ne.s32.totalorder %s107, %s108
      %p120 = scmp.eq.s32.totalorder %s35, 1
      %p121 = por %p119, %p120
      %p123 = scmp.ne.s32.totalorder %s108, %s122
      %p124 = scmp.eq.s32.totalorder %s35, 0
      %p125 = por %p123, %p124
      %s127 = sadd.s32 %s126, 1
      %p130 = scmp.eq.s32.totalorder %s29, 1
      %p131 = scmp.ne.s32.totalorder %s126, %s128
      %p132 = scmp.eq.s32.totalorder %s29, 0
      %p133 = por %p131, %p132
      %p134 = scmp.ne.s32.totalorder %s126, %s128
      %p135 = scmp.eq.s32.totalorder %s34, 1
      %p136 = por %p134, %p135
      %p137 = scmp.ne.s32.totalorder %s128, %s129
      %p138 = scmp.eq.s32.totalorder %s34, 0
      %p139 = por %p137, %p138
      %p140 = scmp.ne.s32.totalorder %s128, %s129
      %p141 = scmp.eq.s32.totalorder %s35, 1
      %p142 = por %p140, %p141
      %p144 = scmp.ne.s32.totalorder %s129, %s143
      %p145 = scmp.eq.s32.totalorder %s35, 0
      %p146 = por %p144, %p145
      %s148 = sadd.s32 %s147, 1
      %p151 = scmp.eq.s32.totalorder %s29, 1
      %p152 = scmp.ne.s32.totalorder %s147, %s149
      %p153 = scmp.eq.s32.totalorder %s29, 0
      %p154 = por %p152, %p153
      %p155 = scmp.ne.s32.totalorder %s147, %s149
      %p156 = scmp.eq.s32.totalorder %s34, 1
      %p157 = por %p155, %p156
      %p158 = scmp.ne.s32.totalorder %s149, %s150
      %p159 = scmp.eq.s32.totalorder %s34, 0
      %p160 = por %p158, %p159
      %p161 = scmp.ne.s32.totalorder %s149, %s150
      %p162 = scmp.eq.s32.totalorder %s35, 1
      %p163 = por %p161, %p162
      %p165 = scmp.ne.s32.totalorder %s150, %s164
      %p166 = scmp.eq.s32.totalorder %s35, 0
      %p167 = por %p165, %p166
      %s169 = sadd.s32 %s168, 1
      %p172 = scmp.eq.s32.totalorder %s29, 1
      %p173 = scmp.ne.s32.totalorder %s168, %s170
      %p174 = scmp.eq.s32.totalorder %s29, 0
      %p175 = por %p173, %p174
      %p176 = scmp.ne.s32.totalorder %s168, %s170
      %p177 = scmp.eq.s32.totalorder %s34, 1
      %p178 = por %p176, %p177
      %p179 = scmp.ne.s32.totalorder %s170, %s171
      %p180 = scmp.eq.s32.totalorder %s34, 0
      %p181 = por %p179, %p180
      %p182 = scmp.ne.s32.totalorder %s170, %s171
      %p183 = scmp.eq.s32.totalorder %s35, 1
      %p184 = por %p182, %p183
      %p186 = scmp.ne.s32.totalorder %s171, %s185
      %p187 = scmp.eq.s32.totalorder %s35, 0
      %p188 = por %p186, %p187
      %s190 = sadd.s32 %s189, 1
      %p193 = scmp.eq.s32.totalorder %s29, 1
      %p194 = scmp.ne.s32.totalorder %s189, %s191
      %p195 = scmp.eq.s32.totalorder %s29, 0
      %p196 = por %p194, %p195
      %p197 = scmp.ne.s32.totalorder %s189, %s191
      %p198 = scmp.eq.s32.totalorder %s34, 1
      %p199 = por %p197, %p198
      %p200 = scmp.ne.s32.totalorder %s191, %s192
      %p201 = scmp.eq.s32.totalorder %s34, 0
      %p202 = por %p200, %p201
      %p203 = scmp.ne.s32.totalorder %s191, %s192
      %p204 = scmp.eq.s32.totalorder %s35, 1
      %p205 = por %p203, %p204
      %p207 = scmp.ne.s32.totalorder %s192, %s206
      %p208 = scmp.eq.s32.totalorder %s35, 0
      %p209 = por %p207, %p208
      %s211 = sadd.s32 %s210, 1
      %p214 = scmp.eq.s32.totalorder %s29, 1
      %p215 = scmp.ne.s32.totalorder %s210, %s212
      %p216 = scmp.eq.s32.totalorder %s29, 0
      %p217 = por %p215, %p216
      %p218 = scmp.ne.s32.totalorder %s210, %s212
      %p219 = scmp.eq.s32.totalorder %s34, 1
      %p220 = por %p218, %p219
      %p221 = scmp.ne.s32.totalorder %s212, %s213
      %p222 = scmp.eq.s32.totalorder %s34, 0
      %p223 = por %p221, %p222
      %p224 = scmp.ne.s32.totalorder %s212, %s213
      %p225 = scmp.eq.s32.totalorder %s35, 1
      %p226 = por %p224, %p225
      %p228 = scmp.ne.s32.totalorder %s213, %s227
      %p229 = scmp.eq.s32.totalorder %s35, 0
      %p230 = por %p228, %p229
      %s232 = sadd.s32 %s231, 1
      %p235 = scmp.eq.s32.totalorder %s29, 1
      %p236 = scmp.ne.s32.totalorder %s231, %s233
      %p237 = scmp.eq.s32.totalorder %s29, 0
      %p238 = por %p236, %p237
      %p239 = scmp.ne.s32.totalorder %s231, %s233
      %p240 = scmp.eq.s32.totalorder %s34, 1
      %p241 = por %p239, %p240
      %p242 = scmp.ne.s32.totalorder %s233, %s234
      %p243 = scmp.eq.s32.totalorder %s34, 0
      %p244 = por %p242, %p243
      %p245 = scmp.ne.s32.totalorder %s233, %s234
      %p246 = scmp.eq.s32.totalorder %s35, 1
      %p247 = por %p245, %p246
      %p249 = scmp.ne.s32.totalorder %s234, %s248
      %p250 = scmp.eq.s32.totalorder %s35, 0
      %p251 = por %p249, %p250
      %s253 = sadd.s32 %s252, 1
      %p256 = scmp.eq.s32.totalorder %s29, 1
      %p257 = scmp.ne.s32.totalorder %s252, %s254
      %p258 = scmp.eq.s32.totalorder %s29, 0
      %p259 = por %p257, %p258
      %p260 = scmp.ne.s32.totalorder %s252, %s254
      %p261 = scmp.eq.s32.totalorder %s34, 1
      %p262 = por %p260, %p261
      %p263 = scmp.ne.s32.totalorder %s254, %s255
      %p264 = scmp.eq.s32.totalorder %s34, 0
      %p265 = por %p263, %p264
      %p266 = scmp.ne.s32.totalorder %s254, %s255
      %p267 = scmp.eq.s32.totalorder %s35, 1
      %p268 = por %p266, %p267
      %p270 = scmp.ne.s32.totalorder %s255, %s269
      %p271 = scmp.eq.s32.totalorder %s35, 0
      %p272 = por %p270, %p271
      %s274 = sadd.s32 %s273, 1
      %p277 = scmp.eq.s32.totalorder %s29, 1
      %p278 = scmp.ne.s32.totalorder %s273, %s275
      %p279 = scmp.eq.s32.totalorder %s29, 0
      %p280 = por %p278, %p279
      %p281 = scmp.ne.s32.totalorder %s273, %s275
      %p282 = scmp.eq.s32.totalorder %s34, 1
      %p283 = por %p281, %p282
      %p284 = scmp.ne.s32.totalorder %s275, %s276
      %p285 = scmp.eq.s32.totalorder %s34, 0
      %p286 = por %p284, %p285
      %p287 = scmp.ne.s32.totalorder %s275, %s276
      %p288 = scmp.eq.s32.totalorder %s35, 1
      %p289 = por %p287, %p288
      %p291 = scmp.ne.s32.totalorder %s276, %s290
      %p292 = scmp.eq.s32.totalorder %s35, 0
      %p293 = por %p291, %p292
      %s295 = sadd.s32 %s294, 1
      %p298 = scmp.eq.s32.totalorder %s29, 1
      %p299 = scmp.ne.s32.totalorder %s294, %s296
      %p300 = scmp.eq.s32.totalorder %s29, 0
      %p301 = por %p299, %p300
      %p302 = scmp.ne.s32.totalorder %s294, %s296
      %p303 = scmp.eq.s32.totalorder %s34, 1
      %p304 = por %p302, %p303
      %p305 = scmp.ne.s32.totalorder %s296, %s297
      %p306 = scmp.eq.s32.totalorder %s34, 0
      %p307 = por %p305, %p306
      %p308 = scmp.ne.s32.totalorder %s296, %s297
      %p309 = scmp.eq.s32.totalorder %s35, 1
      %p310 = por %p308, %p309
      %p312 = scmp.ne.s32.totalorder %s297, %s311
      %p313 = scmp.eq.s32.totalorder %s35, 0
      %p314 = por %p312, %p313
      %s315 = ssub.s32 %s29, %s36
      %p316 = scmp.eq.s32.totalorder %s315, 0
      %s318 = sadd.s32 %s317, 1
      %s319 = scalar_select %p316, %s317, %s318
      %p322 = pneg %p316
      %p323 = scmp.eq.s32.totalorder %s29, 1
      %p324 = por %p322, %p323
      %p325 = scmp.ne.s32.totalorder %s317, %s320
      %p326 = scmp.eq.s32.totalorder %s29, 0
      %p327 = por %p325, %p326
      %p328 = scmp.ne.s32.totalorder %s317, %s320
      %p329 = scmp.eq.s32.totalorder %s34, 1
      %p330 = por %p328, %p329
      %p331 = scmp.ne.s32.totalorder %s320, %s321
      %p332 = scmp.eq.s32.totalorder %s34, 0
      %p333 = por %p331, %p332
      %p334 = scmp.ne.s32.totalorder %s320, %s321
      %p335 = scmp.eq.s32.totalorder %s35, 1
      %p336 = por %p334, %p335
      %p338 = scmp.ne.s32.totalorder %s321, %s337
      %p339 = scmp.eq.s32.totalorder %s35, 0
      %p340 = por %p338, %p339
      %s341 = ssub.s32 %s29, %s36
      %p342 = scmp.eq.s32.totalorder %s341, 0
      %s344 = sadd.s32 %s343, 1
      %s345 = scalar_select %p342, %s343, %s344
      %p348 = pneg %p342
      %p349 = scmp.eq.s32.totalorder %s29, 1
      %p350 = por %p348, %p349
      %p351 = scmp.ne.s32.totalorder %s343, %s346
      %p352 = scmp.eq.s32.totalorder %s29, 0
      %p353 = por %p351, %p352
      %p354 = scmp.ne.s32.totalorder %s343, %s346
      %p355 = scmp.eq.s32.totalorder %s34, 1
      %p356 = por %p354, %p355
      %p357 = scmp.ne.s32.totalorder %s346, %s347
      %p358 = scmp.eq.s32.totalorder %s34, 0
      %p359 = por %p357, %p358
      %p360 = scmp.ne.s32.totalorder %s346, %s347
      %p361 = scmp.eq.s32.totalorder %s35, 1
      %p362 = por %p360, %p361
      %p364 = scmp.ne.s32.totalorder %s347, %s363
      %p365 = scmp.eq.s32.totalorder %s35, 0
      %p366 = por %p364, %p365
      %s367 = ssub.s32 %s29, %s36
      %p368 = scmp.eq.s32.totalorder %s367, 0
      %s370 = sadd.s32 %s369, 1
      %s371 = scalar_select %p368, %s369, %s370
      %p374 = pneg %p368
      %p375 = scmp.eq.s32.totalorder %s29, 1
      %p376 = por %p374, %p375
      %p377 = scmp.ne.s32.totalorder %s369, %s372
      %p378 = scmp.eq.s32.totalorder %s29, 0
      %p379 = por %p377, %p378
      %p380 = scmp.ne.s32.totalorder %s369, %s372
      %p381 = scmp.eq.s32.totalorder %s34, 1
      %p382 = por %p380, %p381
      %p383 = scmp.ne.s32.totalorder %s372, %s373
      %p384 = scmp.eq.s32.totalorder %s34, 0
      %p385 = por %p383, %p384
      %p386 = scmp.ne.s32.totalorder %s372, %s373
      %p387 = scmp.eq.s32.totalorder %s35, 1
      %p388 = por %p386, %p387
      %p390 = scmp.ne.s32.totalorder %s373, %s389
      %p391 = scmp.eq.s32.totalorder %s35, 0
      %p392 = por %p390, %p391
      %s393 = ssub.s32 %s29, %s36
      %p394 = scmp.eq.s32.totalorder %s393, 0
      %s396 = sadd.s32 %s395, 1
      %s397 = scalar_select %p394, %s395, %s396
      %p400 = pneg %p394
      %p401 = scmp.eq.s32.totalorder %s29, 1
      %p402 = por %p400, %p401
      %p403 = scmp.ne.s32.totalorder %s395, %s398
      %p404 = scmp.eq.s32.totalorder %s29, 0
      %p405 = por %p403, %p404
      %p406 = scmp.ne.s32.totalorder %s395, %s398
      %p407 = scmp.eq.s32.totalorder %s34, 1
      %p408 = por %p406, %p407
      %p409 = scmp.ne.s32.totalorder %s398, %s399
      %p410 = scmp.eq.s32.totalorder %s34, 0
      %p411 = por %p409, %p410
      %p412 = scmp.ne.s32.totalorder %s398, %s399
      %p413 = scmp.eq.s32.totalorder %s35, 1
      %p414 = por %p412, %p413
      %p416 = scmp.ne.s32.totalorder %s399, %s415
      %p417 = scmp.eq.s32.totalorder %s35, 0
      %p418 = por %p416, %p417
      %p419 = scmp.le.s32.totalorder 1, %s29
      %p420 = scmp.lt.s32.totalorder %s29, 3
      %p421 = pnand %p419, %p420
      %p422 = pneg %p421
      // Predicated region
      $region9: #{_lambda_.1} parent=5 // pred_check
        _
      $region10: #{_lambda_.1} parent=5 // pred_check_branch
        %424 = sbr.rel (%p421) target = $region12
      $region11: #{_lambda_.1} parent=5 // pred_region
        %s425 = ssub.s32 %s29, 1
        // Predicated region
        $region13: #{_lambda_.1} parent=11 // pred_check
          %p426 = pneg %p76
        $region14: #{_lambda_.1} parent=11 // pred_check_branch
          %428 = sbr.rel (%p426) target = $region16
        $region15: #{_lambda_.1} parent=11 // pred_region
          _
        $region16: #{_lambda_.1} parent=11 // pred_fallthru
          _
        // Predicated region
        $region17: #{_lambda_.1} parent=11 // pred_check
          %p429 = pneg %p97
        $region18: #{_lambda_.1} parent=11 // pred_check_branch
          %431 = sbr.rel (%p429) target = $region20
        $region19: #{_lambda_.1} parent=11 // pred_region
          _
        $region20: #{_lambda_.1} parent=11 // pred_fallthru
          _
        // Predicated region
        $region21: #{_lambda_.1} parent=11 // pred_check
          %p432 = pneg %p118
        $region22: #{_lambda_.1} parent=11 // pred_check_branch
          %434 = sbr.rel (%p432) target = $region24
        $region23: #{_lambda_.1} parent=11 // pred_region
          _
        $region24: #{_lambda_.1} parent=11 // pred_fallthru
          _
        // Predicated region
        $region25: #{_lambda_.1} parent=11 // pred_check
          %p435 = pneg %p139
        $region26: #{_lambda_.1} parent=11 // pred_check_branch
          %437 = sbr.rel (%p435) target = $region28
        $region27: #{_lambda_.1} parent=11 // pred_region
          _
        $region28: #{_lambda_.1} parent=11 // pred_fallthru
          _
        // Predicated region
        $region29: #{_lambda_.1} parent=11 // pred_check
          %p438 = pneg %p160
        $region30: #{_lambda_.1} parent=11 // pred_check_branch
          %440 = sbr.rel (%p438) target = $region32
        $region31: #{_lambda_.1} parent=11 // pred_region
          _
        $region32: #{_lambda_.1} parent=11 // pred_fallthru
          _
        // Predicated region
        $region33: #{_lambda_.1} parent=11 // pred_check
          %p441 = pneg %p181
        $region34: #{_lambda_.1} parent=11 // pred_check_branch
          %443 = sbr.rel (%p441) target = $region36
        $region35: #{_lambda_.1} parent=11 // pred_region
          _
        $region36: #{_lambda_.1} parent=11 // pred_fallthru
          _
        // Predicated region
        $region37: #{_lambda_.1} parent=11 // pred_check
          %p444 = pneg %p202
        $region38: #{_lambda_.1} parent=11 // pred_check_branch
          %446 = sbr.rel (%p444) target = $region40
        $region39: #{_lambda_.1} parent=11 // pred_region
          _
        $region40: #{_lambda_.1} parent=11 // pred_fallthru
          _
        // Predicated region
        $region41: #{_lambda_.1} parent=11 // pred_check
          %p447 = pneg %p223
        $region42: #{_lambda_.1} parent=11 // pred_check_branch
          %449 = sbr.rel (%p447) target = $region44
        $region43: #{_lambda_.1} parent=11 // pred_region
          _
        $region44: #{_lambda_.1} parent=11 // pred_fallthru
          _
        // Predicated region
        $region45: #{_lambda_.1} parent=11 // pred_check
          %p450 = pneg %p244
        $region46: #{_lambda_.1} parent=11 // pred_check_branch
          %452 = sbr.rel (%p450) target = $region48
        $region47: #{_lambda_.1} parent=11 // pred_region
          _
        $region48: #{_lambda_.1} parent=11 // pred_fallthru
          _
        // Predicated region
        $region49: #{_lambda_.1} parent=11 // pred_check
          %p453 = pneg %p265
        $region50: #{_lambda_.1} parent=11 // pred_check_branch
          %455 = sbr.rel (%p453) target = $region52
        $region51: #{_lambda_.1} parent=11 // pred_region
          _
        $region52: #{_lambda_.1} parent=11 // pred_fallthru
          _
        // Predicated region
        $region53: #{_lambda_.1} parent=11 // pred_check
          %p456 = pneg %p286
        $region54: #{_lambda_.1} parent=11 // pred_check_branch
          %458 = sbr.rel (%p456) target = $region56
        $region55: #{_lambda_.1} parent=11 // pred_region
          _
        $region56: #{_lambda_.1} parent=11 // pred_fallthru
          _
        // Predicated region
        $region57: #{_lambda_.1} parent=11 // pred_check
          %p459 = pneg %p307
        $region58: #{_lambda_.1} parent=11 // pred_check_branch
          %461 = sbr.rel (%p459) target = $region60
        $region59: #{_lambda_.1} parent=11 // pred_region
          _
        $region60: #{_lambda_.1} parent=11 // pred_fallthru
          _
      $region12: #{_lambda_.1} parent=5 // pred_fallthru
        _
      %p462 = scmp.lt.s32.totalorder %s29, 2
      // Predicated region
      $region61: #{_lambda_.1} parent=5 // pred_check
        %p463 = pneg %p462
      $region62: #{_lambda_.1} parent=5 // pred_check_branch
        %465 = sbr.rel (%p463) target = $region64
      $region63: #{_lambda_.1} parent=5 // pred_region
        // Predicated region
        $region65: #{_lambda_.1} parent=63 // pred_check
          %p466 = pneg %p49
        $region66: #{_lambda_.1} parent=63 // pred_check_branch
          %468 = sbr.rel (%p466) target = $region68
        $region67: #{_lambda_.1} parent=63 // pred_region
          %p469 = scmp.lt.s32.totalorder %s29, 1
          %s470 = scalar_select %p469, %s29, 1
          %s471 = smul.addr %s470, 8
          %s472 = smul.addr %s471, 4
          %s473 = scalar_lea.vmem %s0, %s472
        $region68: #{_lambda_.1} parent=63 // pred_fallthru
          _
        // Predicated region
        $region69: #{_lambda_.1} parent=63 // pred_check
          %p474 = pneg %p327
        $region70: #{_lambda_.1} parent=63 // pred_check_branch
          %476 = sbr.rel (%p474) target = $region72
        $region71: #{_lambda_.1} parent=63 // pred_region
          %p477 = scmp.lt.s32.totalorder %s29, 1
          %s478 = scalar_select %p477, %s29, 1
          %s479 = smul.addr %s478, 2
          %s480 = scalar_lea.vmem %s13, %s479
        $region72: #{_lambda_.1} parent=63 // pred_fallthru
          _
      $region64: #{_lambda_.1} parent=5 // pred_fallthru
        _
      %p481 = scmp.le.s32.totalorder 1, %s29
      %p482 = scmp.lt.s32.totalorder %s29, 3
      %p483 = pnand %p481, %p482
      %p484 = pneg %p483
      // Predicated region
      $region73: #{_lambda_.1} parent=5 // pred_check
        _
      $region74: #{_lambda_.1} parent=5 // pred_check_branch
        %486 = sbr.rel (%p483) target = $region76
      $region75: #{_lambda_.1} parent=5 // pred_region
        %s487 = ssub.s32 %s29, 1
        %p488 = scmp.lt.s32.totalorder %s34, 1
        %s489 = scalar_select %p488, %s34, 1
        %s490 = smul.addr %s489, 8
        %s491 = smul.addr %s490, 4
        %s492 = scalar_lea.vmem %s0, %s491
        %p493 = pneg %p55
        %p494 = pneg %p52
        %p495 = pneg %p76
        %p496 = pneg %p73
        %p497 = pneg %p97
        %p498 = pneg %p94
        %p499 = pneg %p118
        %p500 = pneg %p115
        %p501 = pneg %p139
        %p502 = pneg %p136
        %p503 = pneg %p160
        %p504 = pneg %p157
        %p505 = pneg %p181
        %p506 = pneg %p178
        %p507 = pneg %p202
        %p508 = pneg %p199
        %p509 = pneg %p223
        %p510 = pneg %p220
        %p511 = pneg %p244
        %p512 = pneg %p241
        %p513 = pneg %p265
        %p514 = pneg %p262
        %p515 = pneg %p286
        %p516 = pneg %p283
        %p517 = pneg %p307
        %p518 = pneg %p304
        %p519 = scmp.lt.s32.totalorder %s34, 1
        %s520 = scalar_select %p519, %s34, 1
        %s521 = smul.addr %s520, 2
        %s522 = scalar_lea.vmem %s13, %s521
        %p523 = pneg %p333
        %p524 = pneg %p330
        %p525 = pneg %p359
        %p526 = pneg %p356
        %s527 = sand.u32 %s346, 1
        %s528 = scalar_lea.sflag [#allocation6], %s527
        %s529 = sand.u32 %s346, 1
        %s530 = smul.addr %s529, 2
        %s531 = scalar_lea.vmem [#allocation5], %s530
        %p532 = pneg %p385
        %p533 = pneg %p382
        %s534 = sand.u32 %s34, 1
        %s535 = scalar_lea.sflag [#allocation8], %s534
        %s536 = sand.u32 %s372, 1
        %s537 = smul.addr %s536, 2
        %s538 = scalar_lea.vmem [#allocation7], %s537
        %p539 = pneg %p411
        %p540 = pneg %p408
        %s541 = sand.u32 %s34, 1
        %s542 = scalar_lea.sflag [#allocation8], %s541
        %s543 = sand.u32 %s398, 1
        %s544 = smul.addr %s543, 2
        %s545 = scalar_lea.vmem [#allocation9], %s544
        %p546 = scmp.lt.s32.totalorder %s34, 1
        %s547 = scalar_select %p546, %s34, 1
        %s548 = smul.addr %s547, 8
        %s549 = smul.addr %s548, 4
        %s550 = scalar_lea.vmem %s0, %s549
        %p551 = scmp.lt.s32.totalorder %s34, 1
        %s552 = scalar_select %p551, %s34, 1
        %s553 = smul.addr %s552, 2
        %s554 = scalar_lea.vmem %s13, %s553
        %v556 = vld [vmem:[%s550] sm:$0xf]
        %v557 = vld [vmem:[%s550 + $0x4] sm:$0xf]
        %v558 = vld [vmem:[%s550 + $0x8] sm:$0xf]
        %v559 = vld [vmem:[%s550 + $0xc] sm:$0xf]
        %v560 = vld [vmem:[%s550 + $0x10] sm:$0xf]
        %v561 = vld [vmem:[%s550 + $0x14] sm:$0xf]
        %v562 = vld [vmem:[%s550 + $0x18] sm:$0xf]
        %v563 = vld [vmem:[%s550 + $0x1c] sm:$0xf]
        %v564 = vld [vmem:[%s1] sm:$0xff]
        %v565 = vld [vmem:[%s1 + $0x8] sm:$0xff]
        %v566 = vld [vmem:[%s1 + $0x10] sm:$0xff]
        %v567 = vld [vmem:[%s1 + $0x18] sm:$0xf]
        %v568 = vld [vmem:[%s1 + $0x1c] sm:$0xff]
        %v569 = vld [vmem:[%s1 + $0x24] sm:$0xff]
        %v570 = vld [vmem:[%s1 + $0x2c] sm:$0xff]
        %v571 = vld [vmem:[%s1 + $0x34] sm:$0xf]
        %v572 = vld [vmem:[%s1 + $0x38] sm:$0xff]
        %v573 = vld [vmem:[%s1 + $0x40] sm:$0xff]
        %v574 = vld [vmem:[%s1 + $0x48] sm:$0xff]
        %v575 = vld [vmem:[%s1 + $0x50] sm:$0xf]
        %v576 = vld [vmem:[%s1 + $0x54] sm:$0xff]
        %v577 = vld [vmem:[%s1 + $0x5c] sm:$0xff]
        %v578 = vld [vmem:[%s1 + $0x64] sm:$0xff]
        %v579 = vld [vmem:[%s1 + $0x6c] sm:$0xf]
        %v580 = vld [vmem:[%s1 + $0x70] sm:$0xff]
        %v581 = vld [vmem:[%s1 + $0x78] sm:$0xff]
        %v582 = vld [vmem:[%s1 + $0x80] sm:$0xff]
        %v583 = vld [vmem:[%s1 + $0x88] sm:$0xf]
        %v584 = vld [vmem:[%s1 + $0x8c] sm:$0xff]
        %v585 = vld [vmem:[%s1 + $0x94] sm:$0xff]
        %v586 = vld [vmem:[%s1 + $0x9c] sm:$0xff]
        %v587 = vld [vmem:[%s1 + $0xa4] sm:$0xf]
        %v588 = vld [vmem:[%s1 + $0xa8] sm:$0xff]
        %v589 = vld [vmem:[%s1 + $0xb0] sm:$0xff]
        %v590 = vld [vmem:[%s1 + $0xb8] sm:$0xff]
        %v591 = vld [vmem:[%s1 + $0xc0] sm:$0xf]
        %v592 = vld [vmem:[%s1 + $0xc4] sm:$0xff]
        %v593 = vld [vmem:[%s1 + $0xcc] sm:$0xff]
        %v594 = vld [vmem:[%s1 + $0xd4] sm:$0xff]
        %v595 = vld [vmem:[%s1 + $0xdc] sm:$0xf]
        %v596 = vld [vmem:[%s1 + $0xe0] sm:$0xff]
        %v597 = vld [vmem:[%s1 + $0xe8] sm:$0xff]
        %v598 = vld [vmem:[%s1 + $0xf0] sm:$0xff]
        %v599 = vld [vmem:[%s1 + $0xf8] sm:$0xf]
        %v600 = vld [vmem:[%s1 + $0xfc] sm:$0xff]
        %v601 = vld [vmem:[%s1 + $0x104] sm:$0xff]
        %v602 = vld [vmem:[%s1 + $0x10c] sm:$0xff]
        %v603 = vld [vmem:[%s1 + $0x114] sm:$0xf]
        %v604 = vld [vmem:[%s1 + $0x118] sm:$0x33]
        %v605 = vld [vmem:[%s1 + $0x120] sm:$0x33]
        %v606 = vld [vmem:[%s1 + $0x128] sm:$0x33]
        %v607 = vld [vmem:[%s1 + $0x130] sm:$0x3]
        %v608 = vld [vmem:[%s2] sm:$0x7f]
        %v610 = vlaneseq
        %v611 = vshrl.u32 %v610, 7
        %v612 = vsub.s32 0, %v611
        %v613 = vrot.slane %v608, %v612
        %v614 = vlaneseq
        %v615 = vshrl.u32 %v614, 7
        %v616 = vsub.s32 1, %v615
        %v617 = vrot.slane %v608, %v616
        %v618 = vlaneseq
        %v619 = vshrl.u32 %v618, 7
        %v620 = vsub.s32 2, %v619
        %v621 = vrot.slane %v608, %v620
        %v622 = vlaneseq
        %v623 = vshrl.u32 %v622, 7
        %v624 = vsub.s32 3, %v623
        %v625 = vrot.slane %v608, %v624
        %v626 = vlaneseq
        %v627 = vshrl.u32 %v626, 7
        %v628 = vsub.s32 4, %v627
        %v629 = vrot.slane %v608, %v628
        %v630 = vlaneseq
        %v631 = vshrl.u32 %v630, 7
        %v632 = vsub.s32 5, %v631
        %v633 = vrot.slane %v608, %v632
        %v634 = vlaneseq
        %v635 = vshrl.u32 %v634, 7
        %v636 = vsub.s32 6, %v635
        %v637 = vrot.slane %v608, %v636
        %v653 = vunpack.c.l.b16 %v556
        %v654 = vunpack.c.l.b16 %v557
        %v655 = vunpack.c.l.b16 %v558
        %v656 = vunpack.c.l.b16 %v559
        %v657 = vunpack.c.l.b16 %v560
        %v658 = vunpack.c.l.b16 %v561
        %v659 = vunpack.c.l.b16 %v562
        %v660 = vunpack.c.l.b16 %v563
        %v661 = vpack.c.b16 %v654, %v653
        %v662 = vpack.c.b16 %v656, %v655
        %v663 = vpack.c.b16 %v658, %v657
        %v664 = vpack.c.b16 %v660, %v659
        %v709 = vunpack.c.l.b16 %v564
        %v710 = vunpack.c.h.b16 %v564
        %v711 = vunpack.c.l.b16 %v565
        %v712 = vunpack.c.h.b16 %v565
        %v713 = vunpack.c.l.b16 %v566
        %v714 = vunpack.c.h.b16 %v566
        %v715 = vunpack.c.l.b16 %v567
        %v716 = vunpack.c.l.b16 %v568
        %v717 = vunpack.c.h.b16 %v568
        %v718 = vunpack.c.l.b16 %v569
        %v719 = vunpack.c.h.b16 %v569
        %v720 = vunpack.c.l.b16 %v570
        %v721 = vunpack.c.h.b16 %v570
        %v722 = vunpack.c.l.b16 %v571
        %v723 = vunpack.c.l.b16 %v572
        %v724 = vunpack.c.h.b16 %v572
        %v725 = vunpack.c.l.b16 %v573
        %v726 = vunpack.c.h.b16 %v573
        %v727 = vunpack.c.l.b16 %v574
        %v728 = vunpack.c.h.b16 %v574
        %v729 = vunpack.c.l.b16 %v575
        %v730 = vunpack.c.l.b16 %v576
        %v731 = vunpack.c.h.b16 %v576
        %v732 = vunpack.c.l.b16 %v577
        %v733 = vunpack.c.h.b16 %v577
        %v734 = vunpack.c.l.b16 %v578
        %v735 = vunpack.c.h.b16 %v578
        %v736 = vunpack.c.l.b16 %v579
        %v737 = vunpack.c.l.b16 %v580
        %v738 = vunpack.c.h.b16 %v580
        %v739 = vunpack.c.l.b16 %v581
        %v740 = vunpack.c.h.b16 %v581
        %v741 = vunpack.c.l.b16 %v582
        %v742 = vunpack.c.h.b16 %v582
        %v743 = vunpack.c.l.b16 %v583
        %v744 = vunpack.c.l.b16 %v584
        %v745 = vunpack.c.h.b16 %v584
        %v746 = vunpack.c.l.b16 %v585
        %v747 = vunpack.c.h.b16 %v585
        %v748 = vunpack.c.l.b16 %v586
        %v749 = vunpack.c.h.b16 %v586
        %v750 = vunpack.c.l.b16 %v587
        %v751 = vunpack.c.l.b16 %v588
        %v752 = vunpack.c.h.b16 %v588
        %v753 = vunpack.c.l.b16 %v589
        %v754 = vunpack.c.h.b16 %v589
        %v755 = vunpack.c.l.b16 %v590
        %v756 = vunpack.c.h.b16 %v590
        %v757 = vunpack.c.l.b16 %v591
        %v758 = vunpack.c.l.b16 %v592
        %v759 = vunpack.c.h.b16 %v592
        %v760 = vunpack.c.l.b16 %v593
        %v761 = vunpack.c.h.b16 %v593
        %v762 = vunpack.c.l.b16 %v594
        %v763 = vunpack.c.h.b16 %v594
        %v764 = vunpack.c.l.b16 %v595
        %v765 = vunpack.c.l.b16 %v596
        %v766 = vunpack.c.h.b16 %v596
        %v767 = vunpack.c.l.b16 %v597
        %v768 = vunpack.c.h.b16 %v597
        %v769 = vunpack.c.l.b16 %v598
        %v770 = vunpack.c.h.b16 %v598
        %v771 = vunpack.c.l.b16 %v599
        %v772 = vunpack.c.l.b16 %v600
        %v773 = vunpack.c.h.b16 %v600
        %v774 = vunpack.c.l.b16 %v601
        %v775 = vunpack.c.h.b16 %v601
        %v776 = vunpack.c.l.b16 %v602
        %v777 = vunpack.c.h.b16 %v602
        %v778 = vunpack.c.l.b16 %v603
        %v779 = vunpack.c.l.b16 %v604
        %v780 = vunpack.c.h.b16 %v604
        %v781 = vunpack.c.l.b16 %v605
        %v782 = vunpack.c.h.b16 %v605
        %v783 = vunpack.c.l.b16 %v606
        %v784 = vunpack.c.h.b16 %v606
        %v785 = vunpack.c.l.b16 %v607
        %v786 = vpack.c.b16 %v716, %v709
        %v787 = vpack.c.b16 %v717, %v710
        %v788 = vpack.c.b16 %v718, %v711
        %v789 = vpack.c.b16 %v719, %v712
        %v790 = vpack.c.b16 %v720, %v713
        %v791 = vpack.c.b16 %v721, %v714
        %v792 = vpack.c.b16 %v722, %v715
        %v793 = vpack.c.b16 %v730, %v723
        %v794 = vpack.c.b16 %v731, %v724
        %v795 = vpack.c.b16 %v732, %v725
        %v796 = vpack.c.b16 %v733, %v726
        %v797 = vpack.c.b16 %v734, %v727
        %v798 = vpack.c.b16 %v735, %v728
        %v799 = vpack.c.b16 %v736, %v729
        %v800 = vpack.c.b16 %v744, %v737
        %v801 = vpack.c.b16 %v745, %v738
        %v802 = vpack.c.b16 %v746, %v739
        %v803 = vpack.c.b16 %v747, %v740
        %v804 = vpack.c.b16 %v748, %v741
        %v805 = vpack.c.b16 %v749, %v742
        %v806 = vpack.c.b16 %v750, %v743
        %v807 = vpack.c.b16 %v758, %v751
        %v808 = vpack.c.b16 %v759, %v752
        %v809 = vpack.c.b16 %v760, %v753
        %v810 = vpack.c.b16 %v761, %v754
        %v811 = vpack.c.b16 %v762, %v755
        %v812 = vpack.c.b16 %v763, %v756
        %v813 = vpack.c.b16 %v764, %v757
        %v814 = vpack.c.b16 %v772, %v765
        %v815 = vpack.c.b16 %v773, %v766
        %v816 = vpack.c.b16 %v774, %v767
        %v817 = vpack.c.b16 %v775, %v768
        %v818 = vpack.c.b16 %v776, %v769
        %v819 = vpack.c.b16 %v777, %v770
        %v820 = vpack.c.b16 %v778, %v771
        %v821 = vpack.c.b16 %v779, %v779
        %v822 = vpack.c.b16 %v780, %v780
        %v823 = vpack.c.b16 %v781, %v781
        %v824 = vpack.c.b16 %v782, %v782
        %v825 = vpack.c.b16 %v783, %v783
        %v826 = vpack.c.b16 %v784, %v784
        %v827 = vpack.c.b16 %v785, %v785
        %vm863 = vcmask 687104
        %v865 = vsel %vm863, %v661, 0
        %v868 = vsel %vm863, %v662, 0
        %v871 = vsel %vm863, %v663, 0
        %v874 = vsel %vm863, %v664, 0
        %vm876 = vcmask 1041408
        %v878 = vsel %vm876, %v821, 0
        %v881 = vsel %vm876, %v822, 0
        %v884 = vsel %vm876, %v823, 0
        %v887 = vsel %vm876, %v824, 0
        %v890 = vsel %vm876, %v825, 0
        %v893 = vsel %vm876, %v826, 0
        %v896 = vsel %vm876, %v827, 0
        %898 = vmatprep.subr.bf16.mxu0 0
        %899 = vmatpush1.bf16.msra.mxu0 0
        %900 = vmatprep.subr.bf16.mxu0 0
        %901 = vmatpush1.bf16.msra.mxu0 0
        %902 = vmatprep.subr.bf16.mxu0 %v881
        %903 = vmatpush1.bf16.msra.mxu0 %v878
        %904 = vmatprep.subr.bf16.mxu0 %v815
        %905 = vmatpush1.bf16.msra.mxu0 %v814
        %906 = vmatprep.subr.bf16.mxu0 %v808
        %907 = vmatpush1.bf16.msra.mxu0 %v807
        %908 = vmatprep.subr.bf16.mxu0 %v801
        %909 = vmatpush1.bf16.msra.mxu0 %v800
        %910 = vmatprep.subr.bf16.mxu0 %v794
        %911 = vmatpush1.bf16.msra.mxu0 %v793
        %912 = vmatprep.subr.bf16.mxu0 %v787
        %913 = vmatpush1.bf16.msra.mxu0 %v786
        %914 = vmatprep.subr.bf16.mxu0 0
        %915 = vmatpush2.bf16.msra.mxu0 0
        %916 = vmatprep.subr.bf16.mxu0 0
        %917 = vmatpush2.bf16.msra.mxu0 0
        %918 = vmatprep.subr.bf16.mxu0 0
        %919 = vmatpush2.bf16.msra.mxu0 0
        %920 = vmatprep.subr.bf16.mxu0 0
        %921 = vmatpush2.bf16.msra.mxu0 0
        %922 = vmatprep.subr.bf16.mxu0 0
        %923 = vmatpush2.bf16.msra.mxu0 0
        %924 = vmatprep.subr.bf16.mxu0 0
        %925 = vmatpush2.bf16.msra.mxu0 0
        %926 = vmatprep.subr.bf16.mxu0 0
        %927 = vmatpush2.bf16.msra.mxu0 0
        %928 = vmatprep.subr.bf16.mxu0 0
        %929 = vmatpush2.bf16.msra.mxu0 0
        %930 = vmatprep.mubr.bf16.mxu0 0
        %931 = vmatmul.mubr.bf16.gmra.mxu0 %v865
        %v932 = vpop.f32.mrf.mxu0
        %v933 = vadd.f32 %v613, %v932
        %v934 = vpop.f32.mrf.mxu0
        %v935 = vadd.f32 %v617, %v934
        %v936 = vpop.f32.mrf.mxu0
        %v937 = vadd.f32 %v613, %v936
        %v938 = vpop.f32.mrf.mxu0
        %v939 = vadd.f32 %v617, %v938
        %940 = vmatprep.mubr.bf16.mxu0 0
        %941 = vmatmul.mubr.bf16.gmra.mxu0 %v868
        %v942 = vpop.f32.mrf.mxu0
        %v943 = vadd.f32 %v613, %v942
        %v944 = vpop.f32.mrf.mxu0
        %v945 = vadd.f32 %v617, %v944
        %v946 = vpop.f32.mrf.mxu0
        %v947 = vadd.f32 %v613, %v946
        %v948 = vpop.f32.mrf.mxu0
        %v949 = vadd.f32 %v617, %v948
        %950 = vmatprep.mubr.bf16.mxu0 0
        %951 = vmatmul.mubr.bf16.gmra.mxu0 %v871
        %v952 = vpop.f32.mrf.mxu0
        %v953 = vadd.f32 %v613, %v952
        %v954 = vpop.f32.mrf.mxu0
        %v955 = vadd.f32 %v617, %v954
        %v956 = vpop.f32.mrf.mxu0
        %v957 = vadd.f32 %v613, %v956
        %v958 = vpop.f32.mrf.mxu0
        %v959 = vadd.f32 %v617, %v958
        %960 = vmatprep.mubr.bf16.mxu0 0
        %961 = vmatmul.mubr.bf16.gmra.mxu0 %v874
        %v962 = vpop.f32.mrf.mxu0
        %v963 = vadd.f32 %v613, %v962
        %v964 = vpop.f32.mrf.mxu0
        %v965 = vadd.f32 %v617, %v964
        %v966 = vpop.f32.mrf.mxu0
        %v967 = vadd.f32 %v613, %v966
        %v968 = vpop.f32.mrf.mxu0
        %v969 = vadd.f32 %v617, %v968
        %970 = vdwg.mxu0
        %971 = vmatprep.subr.bf16.mxu0 0
        %972 = vmatpush1.bf16.msra.mxu0 0
        %973 = vmatprep.subr.bf16.mxu0 0
        %974 = vmatpush1.bf16.msra.mxu0 0
        %975 = vmatprep.subr.bf16.mxu0 %v887
        %976 = vmatpush1.bf16.msra.mxu0 %v884
        %977 = vmatprep.subr.bf16.mxu0 %v817
        %978 = vmatpush1.bf16.msra.mxu0 %v816
        %979 = vmatprep.subr.bf16.mxu0 %v810
        %980 = vmatpush1.bf16.msra.mxu0 %v809
        %981 = vmatprep.subr.bf16.mxu0 %v803
        %982 = vmatpush1.bf16.msra.mxu0 %v802
        %983 = vmatprep.subr.bf16.mxu0 %v796
        %984 = vmatpush1.bf16.msra.mxu0 %v795
        %985 = vmatprep.subr.bf16.mxu0 %v789
        %986 = vmatpush1.bf16.msra.mxu0 %v788
        %987 = vmatprep.subr.bf16.mxu0 0
        %988 = vmatpush2.bf16.msra.mxu0 0
        %989 = vmatprep.subr.bf16.mxu0 0
        %990 = vmatpush2.bf16.msra.mxu0 0
        %991 = vmatprep.subr.bf16.mxu0 0
        %992 = vmatpush2.bf16.msra.mxu0 0
        %993 = vmatprep.subr.bf16.mxu0 0
        %994 = vmatpush2.bf16.msra.mxu0 0
        %995 = vmatprep.subr.bf16.mxu0 0
        %996 = vmatpush2.bf16.msra.mxu0 0
        %997 = vmatprep.subr.bf16.mxu0 0
        %998 = vmatpush2.bf16.msra.mxu0 0
        %999 = vmatprep.subr.bf16.mxu0 0
        %1000 = vmatpush2.bf16.msra.mxu0 0
        %1001 = vmatprep.subr.bf16.mxu0 0
        %1002 = vmatpush2.bf16.msra.mxu0 0
        %1003 = vmatprep.mubr.bf16.mxu0 0
        %1004 = vmatmul.mubr.bf16.gmra.mxu0 %v865
        %v1005 = vpop.f32.mrf.mxu0
        %v1006 = vadd.f32 %v621, %v1005
        %v1007 = vpop.f32.mrf.mxu0
        %v1008 = vadd.f32 %v625, %v1007
        %v1009 = vpop.f32.mrf.mxu0
        %v1010 = vadd.f32 %v621, %v1009
        %v1011 = vpop.f32.mrf.mxu0
        %v1012 = vadd.f32 %v625, %v1011
        %1013 = vmatprep.mubr.bf16.mxu0 0
        %1014 = vmatmul.mubr.bf16.gmra.mxu0 %v868
        %v1015 = vpop.f32.mrf.mxu0
        %v1016 = vadd.f32 %v621, %v1015
        %v1017 = vpop.f32.mrf.mxu0
        %v1018 = vadd.f32 %v625, %v1017
        %v1019 = vpop.f32.mrf.mxu0
        %v1020 = vadd.f32 %v621, %v1019
        %v1021 = vpop.f32.mrf.mxu0
        %v1022 = vadd.f32 %v625, %v1021
        %1023 = vmatprep.mubr.bf16.mxu0 0
        %1024 = vmatmul.mubr.bf16.gmra.mxu0 %v871
        %v1025 = vpop.f32.mrf.mxu0
        %v1026 = vadd.f32 %v621, %v1025
        %v1027 = vpop.f32.mrf.mxu0
        %v1028 = vadd.f32 %v625, %v1027
        %v1029 = vpop.f32.mrf.mxu0
        %v1030 = vadd.f32 %v621, %v1029
        %v1031 = vpop.f32.mrf.mxu0
        %v1032 = vadd.f32 %v625, %v1031
        %1033 = vmatprep.mubr.bf16.mxu0 0
        %1034 = vmatmul.mubr.bf16.gmra.mxu0 %v874
        %v1035 = vpop.f32.mrf.mxu0
        %v1036 = vadd.f32 %v621, %v1035
        %v1037 = vpop.f32.mrf.mxu0
        %v1038 = vadd.f32 %v625, %v1037
        %v1039 = vpop.f32.mrf.mxu0
        %v1040 = vadd.f32 %v621, %v1039
        %v1041 = vpop.f32.mrf.mxu0
        %v1042 = vadd.f32 %v625, %v1041
        %1043 = vdwg.mxu0
        %1044 = vmatprep.subr.bf16.mxu0 0
        %1045 = vmatpush1.bf16.msra.mxu0 0
        %1046 = vmatprep.subr.bf16.mxu0 0
        %1047 = vmatpush1.bf16.msra.mxu0 0
        %1048 = vmatprep.subr.bf16.mxu0 %v893
        %1049 = vmatpush1.bf16.msra.mxu0 %v890
        %1050 = vmatprep.subr.bf16.mxu0 %v819
        %1051 = vmatpush1.bf16.msra.mxu0 %v818
        %1052 = vmatprep.subr.bf16.mxu0 %v812
        %1053 = vmatpush1.bf16.msra.mxu0 %v811
        %1054 = vmatprep.subr.bf16.mxu0 %v805
        %1055 = vmatpush1.bf16.msra.mxu0 %v804
        %1056 = vmatprep.subr.bf16.mxu0 %v798
        %1057 = vmatpush1.bf16.msra.mxu0 %v797
        %1058 = vmatprep.subr.bf16.mxu0 %v791
        %1059 = vmatpush1.bf16.msra.mxu0 %v790
        %1060 = vmatprep.subr.bf16.mxu0 0
        %1061 = vmatpush2.bf16.msra.mxu0 0
        %1062 = vmatprep.subr.bf16.mxu0 0
        %1063 = vmatpush2.bf16.msra.mxu0 0
        %1064 = vmatprep.subr.bf16.mxu0 0
        %1065 = vmatpush2.bf16.msra.mxu0 0
        %1066 = vmatprep.subr.bf16.mxu0 0
        %1067 = vmatpush2.bf16.msra.mxu0 0
        %1068 = vmatprep.subr.bf16.mxu0 0
        %1069 = vmatpush2.bf16.msra.mxu0 0
        %1070 = vmatprep.subr.bf16.mxu0 0
        %1071 = vmatpush2.bf16.msra.mxu0 0
        %1072 = vmatprep.subr.bf16.mxu0 0
        %1073 = vmatpush2.bf16.msra.mxu0 0
        %1074 = vmatprep.subr.bf16.mxu0 0
        %1075 = vmatpush2.bf16.msra.mxu0 0
        %1076 = vmatprep.mubr.bf16.mxu0 0
        %1077 = vmatmul.mubr.bf16.gmra.mxu0 %v865
        %v1078 = vpop.f32.mrf.mxu0
        %v1079 = vadd.f32 %v629, %v1078
        %v1080 = vpop.f32.mrf.mxu0
        %v1081 = vadd.f32 %v633, %v1080
        %v1082 = vpop.f32.mrf.mxu0
        %v1083 = vadd.f32 %v629, %v1082
        %v1084 = vpop.f32.mrf.mxu0
        %v1085 = vadd.f32 %v633, %v1084
        %1086 = vmatprep.mubr.bf16.mxu0 0
        %1087 = vmatmul.mubr.bf16.gmra.mxu0 %v868
        %v1088 = vpop.f32.mrf.mxu0
        %v1089 = vadd.f32 %v629, %v1088
        %v1090 = vpop.f32.mrf.mxu0
        %v1091 = vadd.f32 %v633, %v1090
        %v1092 = vpop.f32.mrf.mxu0
        %v1093 = vadd.f32 %v629, %v1092
        %v1094 = vpop.f32.mrf.mxu0
        %v1095 = vadd.f32 %v633, %v1094
        %1096 = vmatprep.mubr.bf16.mxu0 0
        %1097 = vmatmul.mubr.bf16.gmra.mxu0 %v871
        %v1098 = vpop.f32.mrf.mxu0
        %v1099 = vadd.f32 %v629, %v1098
        %v1100 = vpop.f32.mrf.mxu0
        %v1101 = vadd.f32 %v633, %v1100
        %v1102 = vpop.f32.mrf.mxu0
        %v1103 = vadd.f32 %v629, %v1102
        %v1104 = vpop.f32.mrf.mxu0
        %v1105 = vadd.f32 %v633, %v1104
        %1106 = vmatprep.mubr.bf16.mxu0 0
        %1107 = vmatmul.mubr.bf16.gmra.mxu0 %v874
        %v1108 = vpop.f32.mrf.mxu0
        %v1109 = vadd.f32 %v629, %v1108
        %v1110 = vpop.f32.mrf.mxu0
        %v1111 = vadd.f32 %v633, %v1110
        %v1112 = vpop.f32.mrf.mxu0
        %v1113 = vadd.f32 %v629, %v1112
        %v1114 = vpop.f32.mrf.mxu0
        %v1115 = vadd.f32 %v633, %v1114
        %1116 = vdwg.mxu0
        %1117 = vmatprep.subr.bf16.mxu0 0
        %1118 = vmatpush1.bf16.msra.mxu0 0
        %1119 = vmatprep.subr.bf16.mxu0 0
        %1120 = vmatpush1.bf16.msra.mxu0 0
        %1121 = vmatprep.subr.bf16.mxu0 0
        %1122 = vmatpush1.bf16.msra.mxu0 %v896
        %1123 = vmatprep.subr.bf16.mxu0 0
        %1124 = vmatpush1.bf16.msra.mxu0 %v820
        %1125 = vmatprep.subr.bf16.mxu0 0
        %1126 = vmatpush1.bf16.msra.mxu0 %v813
        %1127 = vmatprep.subr.bf16.mxu0 0
        %1128 = vmatpush1.bf16.msra.mxu0 %v806
        %1129 = vmatprep.subr.bf16.mxu0 0
        %1130 = vmatpush1.bf16.msra.mxu0 %v799
        %1131 = vmatprep.subr.bf16.mxu0 0
        %1132 = vmatpush1.bf16.msra.mxu0 %v792
        %1133 = vmatprep.subr.bf16.mxu0 0
        %1134 = vmatpush2.bf16.msra.mxu0 0
        %1135 = vmatprep.subr.bf16.mxu0 0
        %1136 = vmatpush2.bf16.msra.mxu0 0
        %1137 = vmatprep.subr.bf16.mxu0 0
        %1138 = vmatpush2.bf16.msra.mxu0 0
        %1139 = vmatprep.subr.bf16.mxu0 0
        %1140 = vmatpush2.bf16.msra.mxu0 0
        %1141 = vmatprep.subr.bf16.mxu0 0
        %1142 = vmatpush2.bf16.msra.mxu0 0
        %1143 = vmatprep.subr.bf16.mxu0 0
        %1144 = vmatpush2.bf16.msra.mxu0 0
        %1145 = vmatprep.subr.bf16.mxu0 0
        %1146 = vmatpush2.bf16.msra.mxu0 0
        %1147 = vmatprep.subr.bf16.mxu0 0
        %1148 = vmatpush2.bf16.msra.mxu0 0
        %1149 = vmatprep.mubr.bf16.mxu0 0
        %1150 = vmatmul.mubr.bf16.gmra.mxu0 %v865
        %v1151 = vpop.f32.mrf.mxu0
        %v1152 = vadd.f32 %v637, %v1151
        %v1153 = vpop.f32.mrf.mxu0
        %v1154 = vpop.f32.mrf.mxu0
        %v1155 = vadd.f32 %v637, %v1154
        %v1156 = vpop.f32.mrf.mxu0
        %1157 = vmatprep.mubr.bf16.mxu0 0
        %1158 = vmatmul.mubr.bf16.gmra.mxu0 %v868
        %v1159 = vpop.f32.mrf.mxu0
        %v1160 = vadd.f32 %v637, %v1159
        %v1161 = vpop.f32.mrf.mxu0
        %v1162 = vpop.f32.mrf.mxu0
        %v1163 = vadd.f32 %v637, %v1162
        %v1164 = vpop.f32.mrf.mxu0
        %1165 = vmatprep.mubr.bf16.mxu0 0
        %1166 = vmatmul.mubr.bf16.gmra.mxu0 %v871
        %v1167 = vpop.f32.mrf.mxu0
        %v1168 = vadd.f32 %v637, %v1167
        %v1169 = vpop.f32.mrf.mxu0
        %v1170 = vpop.f32.mrf.mxu0
        %v1171 = vadd.f32 %v637, %v1170
        %v1172 = vpop.f32.mrf.mxu0
        %1173 = vmatprep.mubr.bf16.mxu0 0
        %1174 = vmatmul.mubr.bf16.gmra.mxu0 %v874
        %v1175 = vpop.f32.mrf.mxu0
        %v1176 = vadd.f32 %v637, %v1175
        %v1177 = vpop.f32.mrf.mxu0
        %v1178 = vpop.f32.mrf.mxu0
        %v1179 = vadd.f32 %v637, %v1178
        %v1180 = vpop.f32.mrf.mxu0
        %1181 = vdwg.mxu0
        %vm1182 = vcmp.gt.f32.partialorder %v933, 0.0
        %vm1183 = vcmp.gt.f32.partialorder %v935, 0.0
        %vm1184 = vcmp.gt.f32.partialorder %v1006, 0.0
        %vm1185 = vcmp.gt.f32.partialorder %v1008, 0.0
        %vm1186 = vcmp.gt.f32.partialorder %v1079, 0.0
        %vm1187 = vcmp.gt.f32.partialorder %v1081, 0.0
        %vm1188 = vcmp.gt.f32.partialorder %v1152, 0.0
        %vm1189 = vcmp.gt.f32.partialorder %v937, 0.0
        %vm1190 = vcmp.gt.f32.partialorder %v939, 0.0
        %vm1191 = vcmp.gt.f32.partialorder %v1010, 0.0
        %vm1192 = vcmp.gt.f32.partialorder %v1012, 0.0
        %vm1193 = vcmp.gt.f32.partialorder %v1083, 0.0
        %vm1194 = vcmp.gt.f32.partialorder %v1085, 0.0
        %vm1195 = vcmp.gt.f32.partialorder %v1155, 0.0
        %vm1196 = vcmp.gt.f32.partialorder %v943, 0.0
        %vm1197 = vcmp.gt.f32.partialorder %v945, 0.0
        %vm1198 = vcmp.gt.f32.partialorder %v1016, 0.0
        %vm1199 = vcmp.gt.f32.partialorder %v1018, 0.0
        %vm1200 = vcmp.gt.f32.partialorder %v1089, 0.0
        %vm1201 = vcmp.gt.f32.partialorder %v1091, 0.0
        %vm1202 = vcmp.gt.f32.partialorder %v1160, 0.0
        %vm1203 = vcmp.gt.f32.partialorder %v947, 0.0
        %vm1204 = vcmp.gt.f32.partialorder %v949, 0.0
        %vm1205 = vcmp.gt.f32.partialorder %v1020, 0.0
        %vm1206 = vcmp.gt.f32.partialorder %v1022, 0.0
        %vm1207 = vcmp.gt.f32.partialorder %v1093, 0.0
        %vm1208 = vcmp.gt.f32.partialorder %v1095, 0.0
        %vm1209 = vcmp.gt.f32.partialorder %v1163, 0.0
        %vm1210 = vcmp.gt.f32.partialorder %v953, 0.0
        %vm1211 = vcmp.gt.f32.partialorder %v955, 0.0
        %vm1212 = vcmp.gt.f32.partialorder %v1026, 0.0
        %vm1213 = vcmp.gt.f32.partialorder %v1028, 0.0
        %vm1214 = vcmp.gt.f32.partialorder %v1099, 0.0
        %vm1215 = vcmp.gt.f32.partialorder %v1101, 0.0
        %vm1216 = vcmp.gt.f32.partialorder %v1168, 0.0
        %vm1217 = vcmp.gt.f32.partialorder %v957, 0.0
        %vm1218 = vcmp.gt.f32.partialorder %v959, 0.0
        %vm1219 = vcmp.gt.f32.partialorder %v1030, 0.0
        %vm1220 = vcmp.gt.f32.partialorder %v1032, 0.0
        %vm1221 = vcmp.gt.f32.partialorder %v1103, 0.0
        %vm1222 = vcmp.gt.f32.partialorder %v1105, 0.0
        %vm1223 = vcmp.gt.f32.partialorder %v1171, 0.0
        %vm1224 = vcmp.gt.f32.partialorder %v963, 0.0
        %vm1225 = vcmp.gt.f32.partialorder %v965, 0.0
        %vm1226 = vcmp.gt.f32.partialorder %v1036, 0.0
        %vm1227 = vcmp.gt.f32.partialorder %v1038, 0.0
        %vm1228 = vcmp.gt.f32.partialorder %v1109, 0.0
        %vm1229 = vcmp.gt.f32.partialorder %v1111, 0.0
        %vm1230 = vcmp.gt.f32.partialorder %v1176, 0.0
        %vm1231 = vcmp.gt.f32.partialorder %v967, 0.0
        %vm1232 = vcmp.gt.f32.partialorder %v969, 0.0
        %vm1233 = vcmp.gt.f32.partialorder %v1040, 0.0
        %vm1234 = vcmp.gt.f32.partialorder %v1042, 0.0
        %vm1235 = vcmp.gt.f32.partialorder %v1113, 0.0
        %vm1236 = vcmp.gt.f32.partialorder %v1115, 0.0
        %vm1237 = vcmp.gt.f32.partialorder %v1179, 0.0
        %v1238 = vmin.f32 %v933, 0.0
        %v1239 = vmin.f32 %v935, 0.0
        %v1240 = vmin.f32 %v1006, 0.0
        %v1241 = vmin.f32 %v1008, 0.0
        %v1242 = vmin.f32 %v1079, 0.0
        %v1243 = vmin.f32 %v1081, 0.0
        %v1244 = vmin.f32 %v1152, 0.0
        %v1245 = vmin.f32 %v937, 0.0
        %v1246 = vmin.f32 %v939, 0.0
        %v1247 = vmin.f32 %v1010, 0.0
        %v1248 = vmin.f32 %v1012, 0.0
        %v1249 = vmin.f32 %v1083, 0.0
        %v1250 = vmin.f32 %v1085, 0.0
        %v1251 = vmin.f32 %v1155, 0.0
        %v1252 = vmin.f32 %v943, 0.0
        %v1253 = vmin.f32 %v945, 0.0
        %v1254 = vmin.f32 %v1016, 0.0
        %v1255 = vmin.f32 %v1018, 0.0
        %v1256 = vmin.f32 %v1089, 0.0
        %v1257 = vmin.f32 %v1091, 0.0
        %v1258 = vmin.f32 %v1160, 0.0
        %v1259 = vmin.f32 %v947, 0.0
        %v1260 = vmin.f32 %v949, 0.0
        %v1261 = vmin.f32 %v1020, 0.0
        %v1262 = vmin.f32 %v1022, 0.0
        %v1263 = vmin.f32 %v1093, 0.0
        %v1264 = vmin.f32 %v1095, 0.0
        %v1265 = vmin.f32 %v1163, 0.0
        %v1266 = vmin.f32 %v953, 0.0
        %v1267 = vmin.f32 %v955, 0.0
        %v1268 = vmin.f32 %v1026, 0.0
        %v1269 = vmin.f32 %v1028, 0.0
        %v1270 = vmin.f32 %v1099, 0.0
        %v1271 = vmin.f32 %v1101, 0.0
        %v1272 = vmin.f32 %v1168, 0.0
        %v1273 = vmin.f32 %v957, 0.0
        %v1274 = vmin.f32 %v959, 0.0
        %v1275 = vmin.f32 %v1030, 0.0
        %v1276 = vmin.f32 %v1032, 0.0
        %v1277 = vmin.f32 %v1103, 0.0
        %v1278 = vmin.f32 %v1105, 0.0
        %v1279 = vmin.f32 %v1171, 0.0
        %v1280 = vmin.f32 %v963, 0.0
        %v1281 = vmin.f32 %v965, 0.0
        %v1282 = vmin.f32 %v1036, 0.0
        %v1283 = vmin.f32 %v1038, 0.0
        %v1284 = vmin.f32 %v1109, 0.0
        %v1285 = vmin.f32 %v1111, 0.0
        %v1286 = vmin.f32 %v1176, 0.0
        %v1287 = vmin.f32 %v967, 0.0
        %v1288 = vmin.f32 %v969, 0.0
        %v1289 = vmin.f32 %v1040, 0.0
        %v1290 = vmin.f32 %v1042, 0.0
        %v1291 = vmin.f32 %v1113, 0.0
        %v1292 = vmin.f32 %v1115, 0.0
        %v1293 = vmin.f32 %v1179, 0.0
        %v1294 = vmul.f32 %v1238, 1.442695
        %v1295 = vpow.pop %v1294
        %v1296 = vmul.f32 %v1239, 1.442695
        %v1297 = vpow.pop %v1296
        %v1298 = vmul.f32 %v1240, 1.442695
        %v1299 = vpow.pop %v1298
        %v1300 = vmul.f32 %v1241, 1.442695
        %v1301 = vpow.pop %v1300
        %v1302 = vmul.f32 %v1242, 1.442695
        %v1303 = vpow.pop %v1302
        %v1304 = vmul.f32 %v1243, 1.442695
        %v1305 = vpow.pop %v1304
        %v1306 = vmul.f32 %v1244, 1.442695
        %v1307 = vpow.pop %v1306
        %v1308 = vmul.f32 %v1245, 1.442695
        %v1309 = vpow.pop %v1308
        %v1310 = vmul.f32 %v1246, 1.442695
        %v1311 = vpow.pop %v1310
        %v1312 = vmul.f32 %v1247, 1.442695
        %v1313 = vpow.pop %v1312
        %v1314 = vmul.f32 %v1248, 1.442695
        %v1315 = vpow.pop %v1314
        %v1316 = vmul.f32 %v1249, 1.442695
        %v1317 = vpow.pop %v1316
        %v1318 = vmul.f32 %v1250, 1.442695
        %v1319 = vpow.pop %v1318
        %v1320 = vmul.f32 %v1251, 1.442695
        %v1321 = vpow.pop %v1320
        %v1322 = vmul.f32 %v1252, 1.442695
        %v1323 = vpow.pop %v1322
        %v1324 = vmul.f32 %v1253, 1.442695
        %v1325 = vpow.pop %v1324
        %v1326 = vmul.f32 %v1254, 1.442695
        %v1327 = vpow.pop %v1326
        %v1328 = vmul.f32 %v1255, 1.442695
        %v1329 = vpow.pop %v1328
        %v1330 = vmul.f32 %v1256, 1.442695
        %v1331 = vpow.pop %v1330
        %v1332 = vmul.f32 %v1257, 1.442695
        %v1333 = vpow.pop %v1332
        %v1334 = vmul.f32 %v1258, 1.442695
        %v1335 = vpow.pop %v1334
        %v1336 = vmul.f32 %v1259, 1.442695
        %v1337 = vpow.pop %v1336
        %v1338 = vmul.f32 %v1260, 1.442695
        %v1339 = vpow.pop %v1338
        %v1340 = vmul.f32 %v1261, 1.442695
        %v1341 = vpow.pop %v1340
        %v1342 = vmul.f32 %v1262, 1.442695
        %v1343 = vpow.pop %v1342
        %v1344 = vmul.f32 %v1263, 1.442695
        %v1345 = vpow.pop %v1344
        %v1346 = vmul.f32 %v1264, 1.442695
        %v1347 = vpow.pop %v1346
        %v1348 = vmul.f32 %v1265, 1.442695
        %v1349 = vpow.pop %v1348
        %v1350 = vmul.f32 %v1266, 1.442695
        %v1351 = vpow.pop %v1350
        %v1352 = vmul.f32 %v1267, 1.442695
        %v1353 = vpow.pop %v1352
        %v1354 = vmul.f32 %v1268, 1.442695
        %v1355 = vpow.pop %v1354
        %v1356 = vmul.f32 %v1269, 1.442695
        %v1357 = vpow.pop %v1356
        %v1358 = vmul.f32 %v1270, 1.442695
        %v1359 = vpow.pop %v1358
        %v1360 = vmul.f32 %v1271, 1.442695
        %v1361 = vpow.pop %v1360
        %v1362 = vmul.f32 %v1272, 1.442695
        %v1363 = vpow.pop %v1362
        %v1364 = vmul.f32 %v1273, 1.442695
        %v1365 = vpow.pop %v1364
        %v1366 = vmul.f32 %v1274, 1.442695
        %v1367 = vpow.pop %v1366
        %v1368 = vmul.f32 %v1275, 1.442695
        %v1369 = vpow.pop %v1368
        %v1370 = vmul.f32 %v1276, 1.442695
        %v1371 = vpow.pop %v1370
        %v1372 = vmul.f32 %v1277, 1.442695
        %v1373 = vpow.pop %v1372
        %v1374 = vmul.f32 %v1278, 1.442695
        %v1375 = vpow.pop %v1374
        %v1376 = vmul.f32 %v1279, 1.442695
        %v1377 = vpow.pop %v1376
        %v1378 = vmul.f32 %v1280, 1.442695
        %v1379 = vpow.pop %v1378
        %v1380 = vmul.f32 %v1281, 1.442695
        %v1381 = vpow.pop %v1380
        %v1382 = vmul.f32 %v1282, 1.442695
        %v1383 = vpow.pop %v1382
        %v1384 = vmul.f32 %v1283, 1.442695
        %v1385 = vpow.pop %v1384
        %v1386 = vmul.f32 %v1284, 1.442695
        %v1387 = vpow.pop %v1386
        %v1388 = vmul.f32 %v1285, 1.442695
        %v1389 = vpow.pop %v1388
        %v1390 = vmul.f32 %v1286, 1.442695
        %v1391 = vpow.pop %v1390
        %v1392 = vmul.f32 %v1287, 1.442695
        %v1393 = vpow.pop %v1392
        %v1394 = vmul.f32 %v1288, 1.442695
        %v1395 = vpow.pop %v1394
        %v1396 = vmul.f32 %v1289, 1.442695
        %v1397 = vpow.pop %v1396
        %v1398 = vmul.f32 %v1290, 1.442695
        %v1399 = vpow.pop %v1398
        %v1400 = vmul.f32 %v1291, 1.442695
        %v1401 = vpow.pop %v1400
        %v1402 = vmul.f32 %v1292, 1.442695
        %v1403 = vpow.pop %v1402
        %v1404 = vmul.f32 %v1293, 1.442695
        %v1405 = vpow.pop %v1404
        %v1406 = vsub.f32 %v1295, 1.0
        %v1407 = vsub.f32 %v1297, 1.0
        %v1408 = vsub.f32 %v1299, 1.0
        %v1409 = vsub.f32 %v1301, 1.0
        %v1410 = vsub.f32 %v1303, 1.0
        %v1411 = vsub.f32 %v1305, 1.0
        %v1412 = vsub.f32 %v1307, 1.0
        %v1413 = vsub.f32 %v1309, 1.0
        %v1414 = vsub.f32 %v1311, 1.0
        %v1415 = vsub.f32 %v1313, 1.0
        %v1416 = vsub.f32 %v1315, 1.0
        %v1417 = vsub.f32 %v1317, 1.0
        %v1418 = vsub.f32 %v1319, 1.0
        %v1419 = vsub.f32 %v1321, 1.0
        %v1420 = vsub.f32 %v1323, 1.0
        %v1421 = vsub.f32 %v1325, 1.0
        %v1422 = vsub.f32 %v1327, 1.0
        %v1423 = vsub.f32 %v1329, 1.0
        %v1424 = vsub.f32 %v1331, 1.0
        %v1425 = vsub.f32 %v1333, 1.0
        %v1426 = vsub.f32 %v1335, 1.0
        %v1427 = vsub.f32 %v1337, 1.0
        %v1428 = vsub.f32 %v1339, 1.0
        %v1429 = vsub.f32 %v1341, 1.0
        %v1430 = vsub.f32 %v1343, 1.0
        %v1431 = vsub.f32 %v1345, 1.0
        %v1432 = vsub.f32 %v1347, 1.0
        %v1433 = vsub.f32 %v1349, 1.0
        %v1434 = vsub.f32 %v1351, 1.0
        %v1435 = vsub.f32 %v1353, 1.0
        %v1436 = vsub.f32 %v1355, 1.0
        %v1437 = vsub.f32 %v1357, 1.0
        %v1438 = vsub.f32 %v1359, 1.0
        %v1439 = vsub.f32 %v1361, 1.0
        %v1440 = vsub.f32 %v1363, 1.0
        %v1441 = vsub.f32 %v1365, 1.0
        %v1442 = vsub.f32 %v1367, 1.0
        %v1443 = vsub.f32 %v1369, 1.0
        %v1444 = vsub.f32 %v1371, 1.0
        %v1445 = vsub.f32 %v1373, 1.0
        %v1446 = vsub.f32 %v1375, 1.0
        %v1447 = vsub.f32 %v1377, 1.0
        %v1448 = vsub.f32 %v1379, 1.0
        %v1449 = vsub.f32 %v1381, 1.0
        %v1450 = vsub.f32 %v1383, 1.0
        %v1451 = vsub.f32 %v1385, 1.0
        %v1452 = vsub.f32 %v1387, 1.0
        %v1453 = vsub.f32 %v1389, 1.0
        %v1454 = vsub.f32 %v1391, 1.0
        %v1455 = vsub.f32 %v1393, 1.0
        %v1456 = vsub.f32 %v1395, 1.0
        %v1457 = vsub.f32 %v1397, 1.0
        %v1458 = vsub.f32 %v1399, 1.0
        %v1459 = vsub.f32 %v1401, 1.0
        %v1460 = vsub.f32 %v1403, 1.0
        %v1461 = vsub.f32 %v1405, 1.0
        %v1462 = vsel %vm1182, %v933, %v1406
        %v1463 = vsel %vm1183, %v935, %v1407
        %v1464 = vsel %vm1184, %v1006, %v1408
        %v1465 = vsel %vm1185, %v1008, %v1409
        %v1466 = vsel %vm1186, %v1079, %v1410
        %v1467 = vsel %vm1187, %v1081, %v1411
        %v1468 = vsel %vm1188, %v1152, %v1412
        %v1469 = vsel %vm1189, %v937, %v1413
        %v1470 = vsel %vm1190, %v939, %v1414
        %v1471 = vsel %vm1191, %v1010, %v1415
        %v1472 = vsel %vm1192, %v1012, %v1416
        %v1473 = vsel %vm1193, %v1083, %v1417
        %v1474 = vsel %vm1194, %v1085, %v1418
        %v1475 = vsel %vm1195, %v1155, %v1419
        %v1476 = vsel %vm1196, %v943, %v1420
        %v1477 = vsel %vm1197, %v945, %v1421
        %v1478 = vsel %vm1198, %v1016, %v1422
        %v1479 = vsel %vm1199, %v1018, %v1423
        %v1480 = vsel %vm1200, %v1089, %v1424
        %v1481 = vsel %vm1201, %v1091, %v1425
        %v1482 = vsel %vm1202, %v1160, %v1426
        %v1483 = vsel %vm1203, %v947, %v1427
        %v1484 = vsel %vm1204, %v949, %v1428
        %v1485 = vsel %vm1205, %v1020, %v1429
        %v1486 = vsel %vm1206, %v1022, %v1430
        %v1487 = vsel %vm1207, %v1093, %v1431
        %v1488 = vsel %vm1208, %v1095, %v1432
        %v1489 = vsel %vm1209, %v1163, %v1433
        %v1490 = vsel %vm1210, %v953, %v1434
        %v1491 = vsel %vm1211, %v955, %v1435
        %v1492 = vsel %vm1212, %v1026, %v1436
        %v1493 = vsel %vm1213, %v1028, %v1437
        %v1494 = vsel %vm1214, %v1099, %v1438
        %v1495 = vsel %vm1215, %v1101, %v1439
        %v1496 = vsel %vm1216, %v1168, %v1440
        %v1497 = vsel %vm1217, %v957, %v1441
        %v1498 = vsel %vm1218, %v959, %v1442
        %v1499 = vsel %vm1219, %v1030, %v1443
        %v1500 = vsel %vm1220, %v1032, %v1444
        %v1501 = vsel %vm1221, %v1103, %v1445
        %v1502 = vsel %vm1222, %v1105, %v1446
        %v1503 = vsel %vm1223, %v1171, %v1447
        %v1504 = vsel %vm1224, %v963, %v1448
        %v1505 = vsel %vm1225, %v965, %v1449
        %v1506 = vsel %vm1226, %v1036, %v1450
        %v1507 = vsel %vm1227, %v1038, %v1451
        %v1508 = vsel %vm1228, %v1109, %v1452
        %v1509 = vsel %vm1229, %v1111, %v1453
        %v1510 = vsel %vm1230, %v1176, %v1454
        %v1511 = vsel %vm1231, %v967, %v1455
        %v1512 = vsel %vm1232, %v969, %v1456
        %v1513 = vsel %vm1233, %v1040, %v1457
        %v1514 = vsel %vm1234, %v1042, %v1458
        %v1515 = vsel %vm1235, %v1113, %v1459
        %v1516 = vsel %vm1236, %v1115, %v1460
        %v1517 = vsel %vm1237, %v1179, %v1461
        %v1518 = vpack.c.bf16 %v1469, %v1462
        %v1519 = vpack.c.bf16 %v1470, %v1463
        %v1520 = vpack.c.bf16 %v1471, %v1464
        %v1521 = vpack.c.bf16 %v1472, %v1465
        %v1522 = vpack.c.bf16 %v1473, %v1466
        %v1523 = vpack.c.bf16 %v1474, %v1467
        %v1524 = vpack.c.bf16 %v1475, %v1468
        %v1525 = vpack.c.bf16 %v1483, %v1476
        %v1526 = vpack.c.bf16 %v1484, %v1477
        %v1527 = vpack.c.bf16 %v1485, %v1478
        %v1528 = vpack.c.bf16 %v1486, %v1479
        %v1529 = vpack.c.bf16 %v1487, %v1480
        %v1530 = vpack.c.bf16 %v1488, %v1481
        %v1531 = vpack.c.bf16 %v1489, %v1482
        %v1532 = vpack.c.bf16 %v1497, %v1490
        %v1533 = vpack.c.bf16 %v1498, %v1491
        %v1534 = vpack.c.bf16 %v1499, %v1492
        %v1535 = vpack.c.bf16 %v1500, %v1493
        %v1536 = vpack.c.bf16 %v1501, %v1494
        %v1537 = vpack.c.bf16 %v1502, %v1495
        %v1538 = vpack.c.bf16 %v1503, %v1496
        %v1539 = vpack.c.bf16 %v1511, %v1504
        %v1540 = vpack.c.bf16 %v1512, %v1505
        %v1541 = vpack.c.bf16 %v1513, %v1506
        %v1542 = vpack.c.bf16 %v1514, %v1507
        %v1543 = vpack.c.bf16 %v1515, %v1508
        %v1544 = vpack.c.bf16 %v1516, %v1509
        %v1545 = vpack.c.bf16 %v1517, %v1510
        %v1546 = vld [vmem:[%s3] sm:$0xff]
        %v1547 = vld [vmem:[%s3 + $0x8] sm:$0xff]
        %v1548 = vld [vmem:[%s3 + $0x10] sm:$0xff]
        %v1549 = vld [vmem:[%s3 + $0x18] sm:$0xff]
        %v1550 = vld [vmem:[%s3 + $0x20] sm:$0xff]
        %v1551 = vld [vmem:[%s3 + $0x28] sm:$0xff]
        %v1552 = vld [vmem:[%s3 + $0x30] sm:$0xff]
        %v1553 = vld [vmem:[%s3 + $0x38] sm:$0xff]
        %v1554 = vld [vmem:[%s3 + $0x40] sm:$0xff]
        %v1555 = vld [vmem:[%s3 + $0x48] sm:$0xff]
        %v1556 = vld [vmem:[%s3 + $0x50] sm:$0xff]
        %v1557 = vld [vmem:[%s3 + $0x58] sm:$0xff]
        %v1558 = vld [vmem:[%s3 + $0x60] sm:$0xff]
        %v1559 = vld [vmem:[%s3 + $0x68] sm:$0xff]
        %v1560 = vld [vmem:[%s3 + $0x70] sm:$0xff]
        %v1561 = vld [vmem:[%s3 + $0x78] sm:$0xff]
        %v1562 = vld [vmem:[%s3 + $0x80] sm:$0xff]
        %v1563 = vld [vmem:[%s3 + $0x88] sm:$0xff]
        %v1564 = vld [vmem:[%s3 + $0x90] sm:$0xff]
        %v1565 = vld [vmem:[%s3 + $0x98] sm:$0xff]
        %v1566 = vld [vmem:[%s3 + $0xa0] sm:$0xff]
        %v1567 = vld [vmem:[%s3 + $0xa8] sm:$0xff]
        %v1568 = vld [vmem:[%s3 + $0xb0] sm:$0xff]
        %v1569 = vld [vmem:[%s3 + $0xb8] sm:$0xff]
        %v1570 = vld [vmem:[%s3 + $0xc0] sm:$0xff]
        %v1571 = vld [vmem:[%s3 + $0xc8] sm:$0xff]
        %v1572 = vld [vmem:[%s3 + $0xd0] sm:$0xff]
        %v1573 = vld [vmem:[%s3 + $0xd8] sm:$0xff]
        %v1574 = vld [vmem:[%s3 + $0xe0] sm:$0xff]
        %v1575 = vld [vmem:[%s3 + $0xe8] sm:$0xff]
        %v1576 = vld [vmem:[%s3 + $0xf0] sm:$0xff]
        %v1577 = vld [vmem:[%s3 + $0xf8] sm:$0xff]
        %v1578 = vld [vmem:[%s3 + $0x100] sm:$0xff]
        %v1579 = vld [vmem:[%s3 + $0x108] sm:$0xff]
        %v1580 = vld [vmem:[%s3 + $0x110] sm:$0xff]
        %v1581 = vld [vmem:[%s3 + $0x118] sm:$0xff]
        %v1582 = vld [vmem:[%s3 + $0x120] sm:$0xff]
        %v1583 = vld [vmem:[%s3 + $0x128] sm:$0xff]
        %v1584 = vld [vmem:[%s3 + $0x130] sm:$0xff]
        %v1585 = vld [vmem:[%s3 + $0x138] sm:$0xff]
        %v1586 = vld [vmem:[%s3 + $0x140] sm:$0xff]
        %v1587 = vld [vmem:[%s3 + $0x148] sm:$0xff]
        %v1588 = vld [vmem:[%s3 + $0x150] sm:$0xff]
        %v1589 = vld [vmem:[%s3 + $0x158] sm:$0xff]
        %v1590 = vld [vmem:[%s3 + $0x160] sm:$0xff]
        %v1591 = vld [vmem:[%s3 + $0x168] sm:$0xff]
        %v1592 = vld [vmem:[%s3 + $0x170] sm:$0xff]
        %v1593 = vld [vmem:[%s3 + $0x178] sm:$0xff]
        %v1594 = vld [vmem:[%s3 + $0x180] sm:$0xff]
        %v1595 = vld [vmem:[%s3 + $0x188] sm:$0xff]
        %v1596 = vld [vmem:[%s3 + $0x190] sm:$0xff]
        %v1597 = vld [vmem:[%s3 + $0x198] sm:$0xff]
        %v1598 = vld [vmem:[%s3 + $0x1a0] sm:$0xff]
        %v1599 = vld [vmem:[%s3 + $0x1a8] sm:$0xff]
        %v1600 = vld [vmem:[%s3 + $0x1b0] sm:$0xff]
        %v1601 = vld [vmem:[%s3 + $0x1b8] sm:$0xff]
        %v1602 = vld [vmem:[%s3 + $0x1c0] sm:$0xff]
        %v1603 = vld [vmem:[%s3 + $0x1c8] sm:$0xff]
        %v1604 = vld [vmem:[%s3 + $0x1d0] sm:$0xff]
        %v1605 = vld [vmem:[%s3 + $0x1d8] sm:$0xff]
        %v1606 = vld [vmem:[%s3 + $0x1e0] sm:$0xff]
        %v1607 = vld [vmem:[%s3 + $0x1e8] sm:$0xff]
        %v1608 = vld [vmem:[%s3 + $0x1f0] sm:$0xff]
        %v1609 = vld [vmem:[%s3 + $0x1f8] sm:$0xff]
        %v1610 = vld [vmem:[%s3 + $0x200] sm:$0xff]
        %v1611 = vld [vmem:[%s3 + $0x208] sm:$0xff]
        %v1612 = vld [vmem:[%s3 + $0x210] sm:$0xff]
        %v1613 = vld [vmem:[%s3 + $0x218] sm:$0xff]
        %v1614 = vld [vmem:[%s3 + $0x220] sm:$0xff]
        %v1615 = vld [vmem:[%s3 + $0x228] sm:$0xff]
        %v1616 = vld [vmem:[%s3 + $0x230] sm:$0xff]
        %v1617 = vld [vmem:[%s3 + $0x238] sm:$0xff]
        %v1618 = vld [vmem:[%s3 + $0x240] sm:$0xff]
        %v1619 = vld [vmem:[%s3 + $0x248] sm:$0xff]
        %v1620 = vld [vmem:[%s3 + $0x250] sm:$0xff]
        %v1621 = vld [vmem:[%s3 + $0x258] sm:$0xff]
        %v1622 = vld [vmem:[%s3 + $0x260] sm:$0xff]
        %v1623 = vld [vmem:[%s3 + $0x268] sm:$0xff]
        %v1624 = vld [vmem:[%s3 + $0x270] sm:$0xff]
        %v1625 = vld [vmem:[%s3 + $0x278] sm:$0xff]
        %v1626 = vld [vmem:[%s3 + $0x280] sm:$0xff]
        %v1627 = vld [vmem:[%s3 + $0x288] sm:$0xff]
        %v1628 = vld [vmem:[%s3 + $0x290] sm:$0xff]
        %v1629 = vld [vmem:[%s3 + $0x298] sm:$0xff]
        %v1630 = vld [vmem:[%s3 + $0x2a0] sm:$0xff]
        %v1631 = vld [vmem:[%s3 + $0x2a8] sm:$0xff]
        %v1632 = vld [vmem:[%s3 + $0x2b0] sm:$0xff]
        %v1633 = vld [vmem:[%s3 + $0x2b8] sm:$0xff]
        %v1634 = vld [vmem:[%s3 + $0x2c0] sm:$0xff]
        %v1635 = vld [vmem:[%s3 + $0x2c8] sm:$0xff]
        %v1636 = vld [vmem:[%s3 + $0x2d0] sm:$0xff]
        %v1637 = vld [vmem:[%s3 + $0x2d8] sm:$0xff]
        %v1638 = vld [vmem:[%s3 + $0x2e0] sm:$0xff]
        %v1639 = vld [vmem:[%s3 + $0x2e8] sm:$0xff]
        %v1640 = vld [vmem:[%s3 + $0x2f0] sm:$0xff]
        %v1641 = vld [vmem:[%s3 + $0x2f8] sm:$0xff]
        %v1642 = vld [vmem:[%s3 + $0x300] sm:$0xff]
        %v1643 = vld [vmem:[%s3 + $0x308] sm:$0xff]
        %v1644 = vld [vmem:[%s3 + $0x310] sm:$0xff]
        %v1645 = vld [vmem:[%s3 + $0x318] sm:$0xff]
        %v1646 = vld [vmem:[%s3 + $0x320] sm:$0xff]
        %v1647 = vld [vmem:[%s3 + $0x328] sm:$0xff]
        %v1648 = vld [vmem:[%s3 + $0x330] sm:$0xff]
        %v1649 = vld [vmem:[%s3 + $0x338] sm:$0xff]
        %v1650 = vld [vmem:[%s3 + $0x340] sm:$0xff]
        %v1651 = vld [vmem:[%s3 + $0x348] sm:$0xff]
        %v1652 = vld [vmem:[%s3 + $0x350] sm:$0xff]
        %v1653 = vld [vmem:[%s3 + $0x358] sm:$0xff]
        %v1654 = vld [vmem:[%s3 + $0x360] sm:$0xff]
        %v1655 = vld [vmem:[%s3 + $0x368] sm:$0xff]
        %v1656 = vld [vmem:[%s3 + $0x370] sm:$0xff]
        %v1657 = vld [vmem:[%s3 + $0x378] sm:$0xff]
        %v1658 = vld [vmem:[%s3 + $0x380] sm:$0xff]
        %v1659 = vld [vmem:[%s3 + $0x388] sm:$0xff]
        %v1660 = vld [vmem:[%s3 + $0x390] sm:$0xff]
        %v1661 = vld [vmem:[%s3 + $0x398] sm:$0xff]
        %v1662 = vld [vmem:[%s3 + $0x3a0] sm:$0xff]
        %v1663 = vld [vmem:[%s3 + $0x3a8] sm:$0xff]
        %v1664 = vld [vmem:[%s3 + $0x3b0] sm:$0xff]
        %v1665 = vld [vmem:[%s3 + $0x3b8] sm:$0xff]
        %v1666 = vld [vmem:[%s3 + $0x3c0] sm:$0xff]
        %v1667 = vld [vmem:[%s3 + $0x3c8] sm:$0xff]
        %v1668 = vld [vmem:[%s3 + $0x3d0] sm:$0xff]
        %v1669 = vld [vmem:[%s3 + $0x3d8] sm:$0xff]
        %v1670 = vld [vmem:[%s3 + $0x3e0] sm:$0xff]
        %v1671 = vld [vmem:[%s3 + $0x3e8] sm:$0xff]
        %v1672 = vld [vmem:[%s3 + $0x3f0] sm:$0xff]
        %v1673 = vld [vmem:[%s3 + $0x3f8] sm:$0xff]
        %v1674 = vld [vmem:[%s3 + $0x400] sm:$0xff]
        %v1675 = vld [vmem:[%s3 + $0x408] sm:$0xff]
        %v1676 = vld [vmem:[%s3 + $0x410] sm:$0xff]
        %v1677 = vld [vmem:[%s3 + $0x418] sm:$0xff]
        %v1678 = vld [vmem:[%s3 + $0x420] sm:$0xff]
        %v1679 = vld [vmem:[%s3 + $0x428] sm:$0xff]
        %v1680 = vld [vmem:[%s3 + $0x430] sm:$0xff]
        %v1681 = vld [vmem:[%s3 + $0x438] sm:$0xff]
        %v1682 = vld [vmem:[%s3 + $0x440] sm:$0xff]
        %v1683 = vld [vmem:[%s3 + $0x448] sm:$0xff]
        %v1684 = vld [vmem:[%s3 + $0x450] sm:$0xff]
        %v1685 = vld [vmem:[%s3 + $0x458] sm:$0xff]
        %v1686 = vld [vmem:[%s3 + $0x460] sm:$0xff]
        %v1687 = vld [vmem:[%s3 + $0x468] sm:$0xff]
        %v1688 = vld [vmem:[%s3 + $0x470] sm:$0xff]
        %v1689 = vld [vmem:[%s3 + $0x478] sm:$0xff]
        %v1690 = vld [vmem:[%s3 + $0x480] sm:$0xff]
        %v1691 = vld [vmem:[%s3 + $0x488] sm:$0xff]
        %v1692 = vld [vmem:[%s3 + $0x490] sm:$0xff]
        %v1693 = vld [vmem:[%s3 + $0x498] sm:$0xff]
        %v1694 = vld [vmem:[%s3 + $0x4a0] sm:$0xff]
        %v1695 = vld [vmem:[%s3 + $0x4a8] sm:$0xff]
        %v1696 = vld [vmem:[%s3 + $0x4b0] sm:$0xff]
        %v1697 = vld [vmem:[%s3 + $0x4b8] sm:$0xff]
        %v1698 = vld [vmem:[%s3 + $0x4c0] sm:$0xff]
        %v1699 = vld [vmem:[%s3 + $0x4c8] sm:$0xff]
        %v1700 = vld [vmem:[%s3 + $0x4d0] sm:$0xff]
        %v1701 = vld [vmem:[%s3 + $0x4d8] sm:$0xff]
        %v1702 = vld [vmem:[%s3 + $0x4e0] sm:$0xff]
        %v1703 = vld [vmem:[%s3 + $0x4e8] sm:$0xff]
        %v1704 = vld [vmem:[%s3 + $0x4f0] sm:$0xff]
        %v1705 = vld [vmem:[%s3 + $0x4f8] sm:$0xff]
        %v1706 = vld [vmem:[%s3 + $0x500] sm:$0xff]
        %v1707 = vld [vmem:[%s3 + $0x508] sm:$0xff]
        %v1708 = vld [vmem:[%s3 + $0x510] sm:$0xff]
        %v1709 = vld [vmem:[%s3 + $0x518] sm:$0xff]
        %v1710 = vld [vmem:[%s3 + $0x520] sm:$0xff]
        %v1711 = vld [vmem:[%s3 + $0x528] sm:$0xff]
        %v1712 = vld [vmem:[%s3 + $0x530] sm:$0xff]
        %v1713 = vld [vmem:[%s3 + $0x538] sm:$0xff]
        %v1714 = vld [vmem:[%s3 + $0x540] sm:$0xff]
        %v1715 = vld [vmem:[%s3 + $0x548] sm:$0xff]
        %v1716 = vld [vmem:[%s3 + $0x550] sm:$0xff]
        %v1717 = vld [vmem:[%s3 + $0x558] sm:$0xff]
        %v1718 = vld [vmem:[%s3 + $0x560] sm:$0xff]
        %v1719 = vld [vmem:[%s3 + $0x568] sm:$0xff]
        %v1720 = vld [vmem:[%s3 + $0x570] sm:$0xff]
        %v1721 = vld [vmem:[%s3 + $0x578] sm:$0xff]
        %v1722 = vld [vmem:[%s3 + $0x580] sm:$0xff]
        %v1723 = vld [vmem:[%s3 + $0x588] sm:$0xff]
        %v1724 = vld [vmem:[%s3 + $0x590] sm:$0xff]
        %v1725 = vld [vmem:[%s3 + $0x598] sm:$0xff]
        %v1726 = vld [vmem:[%s3 + $0x5a0] sm:$0xff]
        %v1727 = vld [vmem:[%s3 + $0x5a8] sm:$0xff]
        %v1728 = vld [vmem:[%s3 + $0x5b0] sm:$0xff]
        %v1729 = vld [vmem:[%s3 + $0x5b8] sm:$0xff]
        %v1730 = vld [vmem:[%s3 + $0x5c0] sm:$0xff]
        %v1731 = vld [vmem:[%s3 + $0x5c8] sm:$0xff]
        %v1732 = vld [vmem:[%s3 + $0x5d0] sm:$0xff]
        %v1733 = vld [vmem:[%s3 + $0x5d8] sm:$0xff]
        %v1734 = vld [vmem:[%s3 + $0x5e0] sm:$0xff]
        %v1735 = vld [vmem:[%s3 + $0x5e8] sm:$0xff]
        %v1736 = vld [vmem:[%s3 + $0x5f0] sm:$0xff]
        %v1737 = vld [vmem:[%s3 + $0x5f8] sm:$0xff]
        %v1738 = vld [vmem:[%s3 + $0x600] sm:$0xff]
        %v1739 = vld [vmem:[%s3 + $0x608] sm:$0xff]
        %v1740 = vld [vmem:[%s3 + $0x610] sm:$0xff]
        %v1741 = vld [vmem:[%s3 + $0x618] sm:$0xff]
        %v1742 = vld [vmem:[%s3 + $0x620] sm:$0xff]
        %v1743 = vld [vmem:[%s3 + $0x628] sm:$0xff]
        %v1744 = vld [vmem:[%s3 + $0x630] sm:$0xff]
        %v1745 = vld [vmem:[%s3 + $0x638] sm:$0xff]
        %v1746 = vld [vmem:[%s3 + $0x640] sm:$0xff]
        %v1747 = vld [vmem:[%s3 + $0x648] sm:$0xff]
        %v1748 = vld [vmem:[%s3 + $0x650] sm:$0xff]
        %v1749 = vld [vmem:[%s3 + $0x658] sm:$0xff]
        %v1750 = vld [vmem:[%s3 + $0x660] sm:$0xff]
        %v1751 = vld [vmem:[%s3 + $0x668] sm:$0xff]
        %v1752 = vld [vmem:[%s3 + $0x670] sm:$0xff]
        %v1753 = vld [vmem:[%s3 + $0x678] sm:$0xff]
        %v1962 = vunpack.c.l.b16 %v1546
        %v1963 = vunpack.c.h.b16 %v1546
        %v1964 = vunpack.c.l.b16 %v1547
        %v1965 = vunpack.c.h.b16 %v1547
        %v1966 = vunpack.c.l.b16 %v1548
        %v1967 = vunpack.c.h.b16 %v1548
        %v1968 = vunpack.c.l.b16 %v1549
        %v1969 = vunpack.c.h.b16 %v1549
        %v1970 = vunpack.c.l.b16 %v1550
        %v1971 = vunpack.c.h.b16 %v1550
        %v1972 = vunpack.c.l.b16 %v1551
        %v1973 = vunpack.c.h.b16 %v1551
        %v1974 = vunpack.c.l.b16 %v1552
        %v1975 = vunpack.c.h.b16 %v1552
        %v1976 = vunpack.c.l.b16 %v1553
        %v1977 = vunpack.c.h.b16 %v1553
        %v1978 = vunpack.c.l.b16 %v1554
        %v1979 = vunpack.c.h.b16 %v1554
        %v1980 = vunpack.c.l.b16 %v1555
        %v1981 = vunpack.c.h.b16 %v1555
        %v1982 = vunpack.c.l.b16 %v1556
        %v1983 = vunpack.c.h.b16 %v1556
        %v1984 = vunpack.c.l.b16 %v1557
        %v1985 = vunpack.c.h.b16 %v1557
        %v1986 = vunpack.c.l.b16 %v1558
        %v1987 = vunpack.c.h.b16 %v1558
        %v1988 = vunpack.c.l.b16 %v1559
        %v1989 = vunpack.c.h.b16 %v1559
        %v1990 = vunpack.c.l.b16 %v1560
        %v1991 = vunpack.c.h.b16 %v1560
        %v1992 = vunpack.c.l.b16 %v1561
        %v1993 = vunpack.c.h.b16 %v1561
        %v1994 = vunpack.c.l.b16 %v1562
        %v1995 = vunpack.c.h.b16 %v1562
        %v1996 = vunpack.c.l.b16 %v1563
        %v1997 = vunpack.c.h.b16 %v1563
        %v1998 = vunpack.c.l.b16 %v1564
        %v1999 = vunpack.c.h.b16 %v1564
        %v2000 = vunpack.c.l.b16 %v1565
        %v2001 = vunpack.c.h.b16 %v1565
        %v2002 = vunpack.c.l.b16 %v1566
        %v2003 = vunpack.c.h.b16 %v1566
        %v2004 = vunpack.c.l.b16 %v1567
        %v2005 = vunpack.c.h.b16 %v1567
        %v2006 = vunpack.c.l.b16 %v1568
        %v2007 = vunpack.c.h.b16 %v1568
        %v2008 = vunpack.c.l.b16 %v1569
        %v2009 = vunpack.c.h.b16 %v1569
        %v2010 = vunpack.c.l.b16 %v1570
        %v2011 = vunpack.c.h.b16 %v1570
        %v2012 = vunpack.c.l.b16 %v1571
        %v2013 = vunpack.c.h.b16 %v1571
        %v2014 = vunpack.c.l.b16 %v1572
        %v2015 = vunpack.c.h.b16 %v1572
        %v2016 = vunpack.c.l.b16 %v1573
        %v2017 = vunpack.c.h.b16 %v1573
        %v2018 = vunpack.c.l.b16 %v1574
        %v2019 = vunpack.c.h.b16 %v1574
        %v2020 = vunpack.c.l.b16 %v1575
        %v2021 = vunpack.c.h.b16 %v1575
        %v2022 = vunpack.c.l.b16 %v1576
        %v2023 = vunpack.c.h.b16 %v1576
        %v2024 = vunpack.c.l.b16 %v1577
        %v2025 = vunpack.c.h.b16 %v1577
        %v2026 = vunpack.c.l.b16 %v1578
        %v2027 = vunpack.c.h.b16 %v1578
        %v2028 = vunpack.c.l.b16 %v1579
        %v2029 = vunpack.c.h.b16 %v1579
        %v2030 = vunpack.c.l.b16 %v1580
        %v2031 = vunpack.c.h.b16 %v1580
        %v2032 = vunpack.c.l.b16 %v1581
        %v2033 = vunpack.c.h.b16 %v1581
        %v2034 = vunpack.c.l.b16 %v1582
        %v2035 = vunpack.c.h.b16 %v1582
        %v2036 = vunpack.c.l.b16 %v1583
        %v2037 = vunpack.c.h.b16 %v1583
        %v2038 = vunpack.c.l.b16 %v1584
        %v2039 = vunpack.c.h.b16 %v1584
        %v2040 = vunpack.c.l.b16 %v1585
        %v2041 = vunpack.c.h.b16 %v1585
        %v2042 = vunpack.c.l.b16 %v1586
        %v2043 = vunpack.c.h.b16 %v1586
        %v2044 = vunpack.c.l.b16 %v1587
        %v2045 = vunpack.c.h.b16 %v1587
        %v2046 = vunpack.c.l.b16 %v1588
        %v2047 = vunpack.c.h.b16 %v1588
        %v2048 = vunpack.c.l.b16 %v1589
        %v2049 = vunpack.c.h.b16 %v1589
        %v2050 = vunpack.c.l.b16 %v1590
        %v2051 = vunpack.c.h.b16 %v1590
        %v2052 = vunpack.c.l.b16 %v1591
        %v2053 = vunpack.c.h.b16 %v1591
        %v2054 = vunpack.c.l.b16 %v1592
        %v2055 = vunpack.c.h.b16 %v1592
        %v2056 = vunpack.c.l.b16 %v1593
        %v2057 = vunpack.c.h.b16 %v1593
        %v2058 = vunpack.c.l.b16 %v1594
        %v2059 = vunpack.c.h.b16 %v1594
        %v2060 = vunpack.c.l.b16 %v1595
        %v2061 = vunpack.c.h.b16 %v1595
        %v2062 = vunpack.c.l.b16 %v1596
        %v2063 = vunpack.c.h.b16 %v1596
        %v2064 = vunpack.c.l.b16 %v1597
        %v2065 = vunpack.c.h.b16 %v1597
        %v2066 = vunpack.c.l.b16 %v1598
        %v2067 = vunpack.c.h.b16 %v1598
        %v2068 = vunpack.c.l.b16 %v1599
        %v2069 = vunpack.c.h.b16 %v1599
        %v2070 = vunpack.c.l.b16 %v1600
        %v2071 = vunpack.c.h.b16 %v1600
        %v2072 = vunpack.c.l.b16 %v1601
        %v2073 = vunpack.c.h.b16 %v1601
        %v2074 = vunpack.c.l.b16 %v1602
        %v2075 = vunpack.c.h.b16 %v1602
        %v2076 = vunpack.c.l.b16 %v1603
        %v2077 = vunpack.c.h.b16 %v1603
        %v2078 = vunpack.c.l.b16 %v1604
        %v2079 = vunpack.c.h.b16 %v1604
        %v2080 = vunpack.c.l.b16 %v1605
        %v2081 = vunpack.c.h.b16 %v1605
        %v2082 = vunpack.c.l.b16 %v1606
        %v2083 = vunpack.c.h.b16 %v1606
        %v2084 = vunpack.c.l.b16 %v1607
        %v2085 = vunpack.c.h.b16 %v1607
        %v2086 = vunpack.c.l.b16 %v1608
        %v2087 = vunpack.c.h.b16 %v1608
        %v2088 = vunpack.c.l.b16 %v1609
        %v2089 = vunpack.c.h.b16 %v1609
        %v2090 = vunpack.c.l.b16 %v1610
        %v2091 = vunpack.c.h.b16 %v1610
        %v2092 = vunpack.c.l.b16 %v1611
        %v2093 = vunpack.c.h.b16 %v1611
        %v2094 = vunpack.c.l.b16 %v1612
        %v2095 = vunpack.c.h.b16 %v1612
        %v2096 = vunpack.c.l.b16 %v1613
        %v2097 = vunpack.c.h.b16 %v1613
        %v2098 = vunpack.c.l.b16 %v1614
        %v2099 = vunpack.c.h.b16 %v1614
        %v2100 = vunpack.c.l.b16 %v1615
        %v2101 = vunpack.c.h.b16 %v1615
        %v2102 = vunpack.c.l.b16 %v1616
        %v2103 = vunpack.c.h.b16 %v1616
        %v2104 = vunpack.c.l.b16 %v1617
        %v2105 = vunpack.c.h.b16 %v1617
        %v2106 = vunpack.c.l.b16 %v1618
        %v2107 = vunpack.c.h.b16 %v1618
        %v2108 = vunpack.c.l.b16 %v1619
        %v2109 = vunpack.c.h.b16 %v1619
        %v2110 = vunpack.c.l.b16 %v1620
        %v2111 = vunpack.c.h.b16 %v1620
        %v2112 = vunpack.c.l.b16 %v1621
        %v2113 = vunpack.c.h.b16 %v1621
        %v2114 = vunpack.c.l.b16 %v1622
        %v2115 = vunpack.c.h.b16 %v1622
        %v2116 = vunpack.c.l.b16 %v1623
        %v2117 = vunpack.c.h.b16 %v1623
        %v2118 = vunpack.c.l.b16 %v1624
        %v2119 = vunpack.c.h.b16 %v1624
        %v2120 = vunpack.c.l.b16 %v1625
        %v2121 = vunpack.c.h.b16 %v1625
        %v2122 = vunpack.c.l.b16 %v1626
        %v2123 = vunpack.c.h.b16 %v1626
        %v2124 = vunpack.c.l.b16 %v1627
        %v2125 = vunpack.c.h.b16 %v1627
        %v2126 = vunpack.c.l.b16 %v1628
        %v2127 = vunpack.c.h.b16 %v1628
        %v2128 = vunpack.c.l.b16 %v1629
        %v2129 = vunpack.c.h.b16 %v1629
        %v2130 = vunpack.c.l.b16 %v1630
        %v2131 = vunpack.c.h.b16 %v1630
        %v2132 = vunpack.c.l.b16 %v1631
        %v2133 = vunpack.c.h.b16 %v1631
        %v2134 = vunpack.c.l.b16 %v1632
        %v2135 = vunpack.c.h.b16 %v1632
        %v2136 = vunpack.c.l.b16 %v1633
        %v2137 = vunpack.c.h.b16 %v1633
        %v2138 = vunpack.c.l.b16 %v1634
        %v2139 = vunpack.c.h.b16 %v1634
        %v2140 = vunpack.c.l.b16 %v1635
        %v2141 = vunpack.c.h.b16 %v1635
        %v2142 = vunpack.c.l.b16 %v1636
        %v2143 = vunpack.c.h.b16 %v1636
        %v2144 = vunpack.c.l.b16 %v1637
        %v2145 = vunpack.c.h.b16 %v1637
        %v2146 = vunpack.c.l.b16 %v1638
        %v2147 = vunpack.c.h.b16 %v1638
        %v2148 = vunpack.c.l.b16 %v1639
        %v2149 = vunpack.c.h.b16 %v1639
        %v2150 = vunpack.c.l.b16 %v1640
        %v2151 = vunpack.c.h.b16 %v1640
        %v2152 = vunpack.c.l.b16 %v1641
        %v2153 = vunpack.c.h.b16 %v1641
        %v2154 = vunpack.c.l.b16 %v1642
        %v2155 = vunpack.c.h.b16 %v1642
        %v2156 = vunpack.c.l.b16 %v1643
        %v2157 = vunpack.c.h.b16 %v1643
        %v2158 = vunpack.c.l.b16 %v1644
        %v2159 = vunpack.c.h.b16 %v1644
        %v2160 = vunpack.c.l.b16 %v1645
        %v2161 = vunpack.c.h.b16 %v1645
        %v2162 = vunpack.c.l.b16 %v1646
        %v2163 = vunpack.c.h.b16 %v1646
        %v2164 = vunpack.c.l.b16 %v1647
        %v2165 = vunpack.c.h.b16 %v1647
        %v2166 = vunpack.c.l.b16 %v1648
        %v2167 = vunpack.c.h.b16 %v1648
        %v2168 = vunpack.c.l.b16 %v1649
        %v2169 = vunpack.c.h.b16 %v1649
        %v2170 = vunpack.c.l.b16 %v1650
        %v2171 = vunpack.c.h.b16 %v1650
        %v2172 = vunpack.c.l.b16 %v1651
        %v2173 = vunpack.c.h.b16 %v1651
        %v2174 = vunpack.c.l.b16 %v1652
        %v2175 = vunpack.c.h.b16 %v1652
        %v2176 = vunpack.c.l.b16 %v1653
        %v2177 = vunpack.c.h.b16 %v1653
        %v2178 = vunpack.c.l.b16 %v1654
        %v2179 = vunpack.c.h.b16 %v1654
        %v2180 = vunpack.c.l.b16 %v1655
        %v2181 = vunpack.c.h.b16 %v1655
        %v2182 = vunpack.c.l.b16 %v1656
        %v2183 = vunpack.c.h.b16 %v1656
        %v2184 = vunpack.c.l.b16 %v1657
        %v2185 = vunpack.c.h.b16 %v1657
        %v2186 = vunpack.c.l.b16 %v1658
        %v2187 = vunpack.c.h.b16 %v1658
        %v2188 = vunpack.c.l.b16 %v1659
        %v2189 = vunpack.c.h.b16 %v1659
        %v2190 = vunpack.c.l.b16 %v1660
        %v2191 = vunpack.c.h.b16 %v1660
        %v2192 = vunpack.c.l.b16 %v1661
        %v2193 = vunpack.c.h.b16 %v1661
        %v2194 = vunpack.c.l.b16 %v1662
        %v2195 = vunpack.c.h.b16 %v1662
        %v2196 = vunpack.c.l.b16 %v1663
        %v2197 = vunpack.c.h.b16 %v1663
        %v2198 = vunpack.c.l.b16 %v1664
        %v2199 = vunpack.c.h.b16 %v1664
        %v2200 = vunpack.c.l.b16 %v1665
        %v2201 = vunpack.c.h.b16 %v1665
        %v2202 = vunpack.c.l.b16 %v1666
        %v2203 = vunpack.c.h.b16 %v1666
        %v2204 = vunpack.c.l.b16 %v1667
        %v2205 = vunpack.c.h.b16 %v1667
        %v2206 = vunpack.c.l.b16 %v1668
        %v2207 = vunpack.c.h.b16 %v1668
        %v2208 = vunpack.c.l.b16 %v1669
        %v2209 = vunpack.c.h.b16 %v1669
        %v2210 = vunpack.c.l.b16 %v1670
        %v2211 = vunpack.c.h.b16 %v1670
        %v2212 = vunpack.c.l.b16 %v1671
        %v2213 = vunpack.c.h.b16 %v1671
        %v2214 = vunpack.c.l.b16 %v1672
        %v2215 = vunpack.c.h.b16 %v1672
        %v2216 = vunpack.c.l.b16 %v1673
        %v2217 = vunpack.c.h.b16 %v1673
        %v2218 = vunpack.c.l.b16 %v1674
        %v2219 = vunpack.c.h.b16 %v1674
        %v2220 = vunpack.c.l.b16 %v1675
        %v2221 = vunpack.c.h.b16 %v1675
        %v2222 = vunpack.c.l.b16 %v1676
        %v2223 = vunpack.c.h.b16 %v1676
        %v2224 = vunpack.c.l.b16 %v1677
        %v2225 = vunpack.c.h.b16 %v1677
        %v2226 = vunpack.c.l.b16 %v1678
        %v2227 = vunpack.c.h.b16 %v1678
        %v2228 = vunpack.c.l.b16 %v1679
        %v2229 = vunpack.c.h.b16 %v1679
        %v2230 = vunpack.c.l.b16 %v1680
        %v2231 = vunpack.c.h.b16 %v1680
        %v2232 = vunpack.c.l.b16 %v1681
        %v2233 = vunpack.c.h.b16 %v1681
        %v2234 = vunpack.c.l.b16 %v1682
        %v2235 = vunpack.c.h.b16 %v1682
        %v2236 = vunpack.c.l.b16 %v1683
        %v2237 = vunpack.c.h.b16 %v1683
        %v2238 = vunpack.c.l.b16 %v1684
        %v2239 = vunpack.c.h.b16 %v1684
        %v2240 = vunpack.c.l.b16 %v1685
        %v2241 = vunpack.c.h.b16 %v1685
        %v2242 = vunpack.c.l.b16 %v1686
        %v2243 = vunpack.c.h.b16 %v1686
        %v2244 = vunpack.c.l.b16 %v1687
        %v2245 = vunpack.c.h.b16 %v1687
        %v2246 = vunpack.c.l.b16 %v1688
        %v2247 = vunpack.c.h.b16 %v1688
        %v2248 = vunpack.c.l.b16 %v1689
        %v2249 = vunpack.c.h.b16 %v1689
        %v2250 = vunpack.c.l.b16 %v1690
        %v2251 = vunpack.c.h.b16 %v1690
        %v2252 = vunpack.c.l.b16 %v1691
        %v2253 = vunpack.c.h.b16 %v1691
        %v2254 = vunpack.c.l.b16 %v1692
        %v2255 = vunpack.c.h.b16 %v1692
        %v2256 = vunpack.c.l.b16 %v1693
        %v2257 = vunpack.c.h.b16 %v1693
        %v2258 = vunpack.c.l.b16 %v1694
        %v2259 = vunpack.c.h.b16 %v1694
        %v2260 = vunpack.c.l.b16 %v1695
        %v2261 = vunpack.c.h.b16 %v1695
        %v2262 = vunpack.c.l.b16 %v1696
        %v2263 = vunpack.c.h.b16 %v1696
        %v2264 = vunpack.c.l.b16 %v1697
        %v2265 = vunpack.c.h.b16 %v1697
        %v2266 = vunpack.c.l.b16 %v1698
        %v2267 = vunpack.c.h.b16 %v1698
        %v2268 = vunpack.c.l.b16 %v1699
        %v2269 = vunpack.c.h.b16 %v1699
        %v2270 = vunpack.c.l.b16 %v1700
        %v2271 = vunpack.c.h.b16 %v1700
        %v2272 = vunpack.c.l.b16 %v1701
        %v2273 = vunpack.c.h.b16 %v1701
        %v2274 = vunpack.c.l.b16 %v1702
        %v2275 = vunpack.c.h.b16 %v1702
        %v2276 = vunpack.c.l.b16 %v1703
        %v2277 = vunpack.c.h.b16 %v1703
        %v2278 = vunpack.c.l.b16 %v1704
        %v2279 = vunpack.c.h.b16 %v1704
        %v2280 = vunpack.c.l.b16 %v1705
        %v2281 = vunpack.c.h.b16 %v1705
        %v2282 = vunpack.c.l.b16 %v1706
        %v2283 = vunpack.c.h.b16 %v1706
        %v2284 = vunpack.c.l.b16 %v1707
        %v2285 = vunpack.c.h.b16 %v1707
        %v2286 = vunpack.c.l.b16 %v1708
        %v2287 = vunpack.c.h.b16 %v1708
        %v2288 = vunpack.c.l.b16 %v1709
        %v2289 = vunpack.c.h.b16 %v1709
        %v2290 = vunpack.c.l.b16 %v1710
        %v2291 = vunpack.c.h.b16 %v1710
        %v2292 = vunpack.c.l.b16 %v1711
        %v2293 = vunpack.c.h.b16 %v1711
        %v2294 = vunpack.c.l.b16 %v1712
        %v2295 = vunpack.c.h.b16 %v1712
        %v2296 = vunpack.c.l.b16 %v1713
        %v2297 = vunpack.c.h.b16 %v1713
        %v2298 = vunpack.c.l.b16 %v1714
        %v2299 = vunpack.c.h.b16 %v1714
        %v2300 = vunpack.c.l.b16 %v1715
        %v2301 = vunpack.c.h.b16 %v1715
        %v2302 = vunpack.c.l.b16 %v1716
        %v2303 = vunpack.c.h.b16 %v1716
        %v2304 = vunpack.c.l.b16 %v1717
        %v2305 = vunpack.c.h.b16 %v1717
        %v2306 = vunpack.c.l.b16 %v1718
        %v2307 = vunpack.c.h.b16 %v1718
        %v2308 = vunpack.c.l.b16 %v1719
        %v2309 = vunpack.c.h.b16 %v1719
        %v2310 = vunpack.c.l.b16 %v1720
        %v2311 = vunpack.c.h.b16 %v1720
        %v2312 = vunpack.c.l.b16 %v1721
        %v2313 = vunpack.c.h.b16 %v1721
        %v2314 = vunpack.c.l.b16 %v1722
        %v2315 = vunpack.c.h.b16 %v1722
        %v2316 = vunpack.c.l.b16 %v1723
        %v2317 = vunpack.c.h.b16 %v1723
        %v2318 = vunpack.c.l.b16 %v1724
        %v2319 = vunpack.c.h.b16 %v1724
        %v2320 = vunpack.c.l.b16 %v1725
        %v2321 = vunpack.c.h.b16 %v1725
        %v2322 = vunpack.c.l.b16 %v1726
        %v2323 = vunpack.c.h.b16 %v1726
        %v2324 = vunpack.c.l.b16 %v1727
        %v2325 = vunpack.c.h.b16 %v1727
        %v2326 = vunpack.c.l.b16 %v1728
        %v2327 = vunpack.c.h.b16 %v1728
        %v2328 = vunpack.c.l.b16 %v1729
        %v2329 = vunpack.c.h.b16 %v1729
        %v2330 = vunpack.c.l.b16 %v1730
        %v2331 = vunpack.c.h.b16 %v1730
        %v2332 = vunpack.c.l.b16 %v1731
        %v2333 = vunpack.c.h.b16 %v1731
        %v2334 = vunpack.c.l.b16 %v1732
        %v2335 = vunpack.c.h.b16 %v1732
        %v2336 = vunpack.c.l.b16 %v1733
        %v2337 = vunpack.c.h.b16 %v1733
        %v2338 = vunpack.c.l.b16 %v1734
        %v2339 = vunpack.c.h.b16 %v1734
        %v2340 = vunpack.c.l.b16 %v1735
        %v2341 = vunpack.c.h.b16 %v1735
        %v2342 = vunpack.c.l.b16 %v1736
        %v2343 = vunpack.c.h.b16 %v1736
        %v2344 = vunpack.c.l.b16 %v1737
        %v2345 = vunpack.c.h.b16 %v1737
        %v2346 = vunpack.c.l.b16 %v1738
        %v2347 = vunpack.c.h.b16 %v1738
        %v2348 = vunpack.c.l.b16 %v1739
        %v2349 = vunpack.c.h.b16 %v1739
        %v2350 = vunpack.c.l.b16 %v1740
        %v2351 = vunpack.c.h.b16 %v1740
        %v2352 = vunpack.c.l.b16 %v1741
        %v2353 = vunpack.c.h.b16 %v1741
        %v2354 = vunpack.c.l.b16 %v1742
        %v2355 = vunpack.c.h.b16 %v1742
        %v2356 = vunpack.c.l.b16 %v1743
        %v2357 = vunpack.c.h.b16 %v1743
        %v2358 = vunpack.c.l.b16 %v1744
        %v2359 = vunpack.c.h.b16 %v1744
        %v2360 = vunpack.c.l.b16 %v1745
        %v2361 = vunpack.c.h.b16 %v1745
        %v2362 = vunpack.c.l.b16 %v1746
        %v2363 = vunpack.c.h.b16 %v1746
        %v2364 = vunpack.c.l.b16 %v1747
        %v2365 = vunpack.c.h.b16 %v1747
        %v2366 = vunpack.c.l.b16 %v1748
        %v2367 = vunpack.c.h.b16 %v1748
        %v2368 = vunpack.c.l.b16 %v1749
        %v2369 = vunpack.c.h.b16 %v1749
        %v2370 = vunpack.c.l.b16 %v1750
        %v2371 = vunpack.c.h.b16 %v1750
        %v2372 = vunpack.c.l.b16 %v1751
        %v2373 = vunpack.c.h.b16 %v1751
        %v2374 = vunpack.c.l.b16 %v1752
        %v2375 = vunpack.c.h.b16 %v1752
        %v2376 = vunpack.c.l.b16 %v1753
        %v2377 = vunpack.c.h.b16 %v1753
        %v2378 = vpack.c.b16 %v1966, %v1962
        %v2379 = vpack.c.b16 %v1967, %v1963
        %v2380 = vpack.c.b16 %v1968, %v1964
        %v2381 = vpack.c.b16 %v1969, %v1965
        %v2382 = vpack.c.b16 %v1974, %v1970
        %v2383 = vpack.c.b16 %v1975, %v1971
        %v2384 = vpack.c.b16 %v1976, %v1972
        %v2385 = vpack.c.b16 %v1977, %v1973
        %v2386 = vpack.c.b16 %v1982, %v1978
        %v2387 = vpack.c.b16 %v1983, %v1979
        %v2388 = vpack.c.b16 %v1984, %v1980
        %v2389 = vpack.c.b16 %v1985, %v1981
        %v2390 = vpack.c.b16 %v1990, %v1986
        %v2391 = vpack.c.b16 %v1991, %v1987
        %v2392 = vpack.c.b16 %v1992, %v1988
        %v2393 = vpack.c.b16 %v1993, %v1989
        %v2394 = vpack.c.b16 %v1998, %v1994
        %v2395 = vpack.c.b16 %v1999, %v1995
        %v2396 = vpack.c.b16 %v2000, %v1996
        %v2397 = vpack.c.b16 %v2001, %v1997
        %v2398 = vpack.c.b16 %v2006, %v2002
        %v2399 = vpack.c.b16 %v2007, %v2003
        %v2400 = vpack.c.b16 %v2008, %v2004
        %v2401 = vpack.c.b16 %v2009, %v2005
        %v2402 = vpack.c.b16 %v2014, %v2010
        %v2403 = vpack.c.b16 %v2015, %v2011
        %v2404 = vpack.c.b16 %v2016, %v2012
        %v2405 = vpack.c.b16 %v2017, %v2013
        %v2406 = vpack.c.b16 %v2022, %v2018
        %v2407 = vpack.c.b16 %v2023, %v2019
        %v2408 = vpack.c.b16 %v2024, %v2020
        %v2409 = vpack.c.b16 %v2025, %v2021
        %v2410 = vpack.c.b16 %v2030, %v2026
        %v2411 = vpack.c.b16 %v2031, %v2027
        %v2412 = vpack.c.b16 %v2032, %v2028
        %v2413 = vpack.c.b16 %v2033, %v2029
        %v2414 = vpack.c.b16 %v2038, %v2034
        %v2415 = vpack.c.b16 %v2039, %v2035
        %v2416 = vpack.c.b16 %v2040, %v2036
        %v2417 = vpack.c.b16 %v2041, %v2037
        %v2418 = vpack.c.b16 %v2046, %v2042
        %v2419 = vpack.c.b16 %v2047, %v2043
        %v2420 = vpack.c.b16 %v2048, %v2044
        %v2421 = vpack.c.b16 %v2049, %v2045
        %v2422 = vpack.c.b16 %v2054, %v2050
        %v2423 = vpack.c.b16 %v2055, %v2051
        %v2424 = vpack.c.b16 %v2056, %v2052
        %v2425 = vpack.c.b16 %v2057, %v2053
        %v2426 = vpack.c.b16 %v2062, %v2058
        %v2427 = vpack.c.b16 %v2063, %v2059
        %v2428 = vpack.c.b16 %v2064, %v2060
        %v2429 = vpack.c.b16 %v2065, %v2061
        %v2430 = vpack.c.b16 %v2070, %v2066
        %v2431 = vpack.c.b16 %v2071, %v2067
        %v2432 = vpack.c.b16 %v2072, %v2068
        %v2433 = vpack.c.b16 %v2073, %v2069
        %v2434 = vpack.c.b16 %v2078, %v2074
        %v2435 = vpack.c.b16 %v2079, %v2075
        %v2436 = vpack.c.b16 %v2080, %v2076
        %v2437 = vpack.c.b16 %v2081, %v2077
        %v2438 = vpack.c.b16 %v2086, %v2082
        %v2439 = vpack.c.b16 %v2087, %v2083
        %v2440 = vpack.c.b16 %v2088, %v2084
        %v2441 = vpack.c.b16 %v2089, %v2085
        %v2442 = vpack.c.b16 %v2094, %v2090
        %v2443 = vpack.c.b16 %v2095, %v2091
        %v2444 = vpack.c.b16 %v2096, %v2092
        %v2445 = vpack.c.b16 %v2097, %v2093
        %v2446 = vpack.c.b16 %v2102, %v2098
        %v2447 = vpack.c.b16 %v2103, %v2099
        %v2448 = vpack.c.b16 %v2104, %v2100
        %v2449 = vpack.c.b16 %v2105, %v2101
        %v2450 = vpack.c.b16 %v2110, %v2106
        %v2451 = vpack.c.b16 %v2111, %v2107
        %v2452 = vpack.c.b16 %v2112, %v2108
        %v2453 = vpack.c.b16 %v2113, %v2109
        %v2454 = vpack.c.b16 %v2118, %v2114
        %v2455 = vpack.c.b16 %v2119, %v2115
        %v2456 = vpack.c.b16 %v2120, %v2116
        %v2457 = vpack.c.b16 %v2121, %v2117
        %v2458 = vpack.c.b16 %v2126, %v2122
        %v2459 = vpack.c.b16 %v2127, %v2123
        %v2460 = vpack.c.b16 %v2128, %v2124
        %v2461 = vpack.c.b16 %v2129, %v2125
        %v2462 = vpack.c.b16 %v2134, %v2130
        %v2463 = vpack.c.b16 %v2135, %v2131
        %v2464 = vpack.c.b16 %v2136, %v2132
        %v2465 = vpack.c.b16 %v2137, %v2133
        %v2466 = vpack.c.b16 %v2142, %v2138
        %v2467 = vpack.c.b16 %v2143, %v2139
        %v2468 = vpack.c.b16 %v2144, %v2140
        %v2469 = vpack.c.b16 %v2145, %v2141
        %v2470 = vpack.c.b16 %v2150, %v2146
        %v2471 = vpack.c.b16 %v2151, %v2147
        %v2472 = vpack.c.b16 %v2152, %v2148
        %v2473 = vpack.c.b16 %v2153, %v2149
        %v2474 = vpack.c.b16 %v2158, %v2154
        %v2475 = vpack.c.b16 %v2159, %v2155
        %v2476 = vpack.c.b16 %v2160, %v2156
        %v2477 = vpack.c.b16 %v2161, %v2157
        %v2478 = vpack.c.b16 %v2166, %v2162
        %v2479 = vpack.c.b16 %v2167, %v2163
        %v2480 = vpack.c.b16 %v2168, %v2164
        %v2481 = vpack.c.b16 %v2169, %v2165
        %v2482 = vpack.c.b16 %v2174, %v2170
        %v2483 = vpack.c.b16 %v2175, %v2171
        %v2484 = vpack.c.b16 %v2176, %v2172
        %v2485 = vpack.c.b16 %v2177, %v2173
        %v2486 = vpack.c.b16 %v2182, %v2178
        %v2487 = vpack.c.b16 %v2183, %v2179
        %v2488 = vpack.c.b16 %v2184, %v2180
        %v2489 = vpack.c.b16 %v2185, %v2181
        %v2490 = vpack.c.b16 %v2190, %v2186
        %v2491 = vpack.c.b16 %v2191, %v2187
        %v2492 = vpack.c.b16 %v2192, %v2188
        %v2493 = vpack.c.b16 %v2193, %v2189
        %v2494 = vpack.c.b16 %v2198, %v2194
        %v2495 = vpack.c.b16 %v2199, %v2195
        %v2496 = vpack.c.b16 %v2200, %v2196
        %v2497 = vpack.c.b16 %v2201, %v2197
        %v2498 = vpack.c.b16 %v2206, %v2202
        %v2499 = vpack.c.b16 %v2207, %v2203
        %v2500 = vpack.c.b16 %v2208, %v2204
        %v2501 = vpack.c.b16 %v2209, %v2205
        %v2502 = vpack.c.b16 %v2214, %v2210
        %v2503 = vpack.c.b16 %v2215, %v2211
        %v2504 = vpack.c.b16 %v2216, %v2212
        %v2505 = vpack.c.b16 %v2217, %v2213
        %v2506 = vpack.c.b16 %v2222, %v2218
        %v2507 = vpack.c.b16 %v2223, %v2219
        %v2508 = vpack.c.b16 %v2224, %v2220
        %v2509 = vpack.c.b16 %v2225, %v2221
        %v2510 = vpack.c.b16 %v2230, %v2226
        %v2511 = vpack.c.b16 %v2231, %v2227
        %v2512 = vpack.c.b16 %v2232, %v2228
        %v2513 = vpack.c.b16 %v2233, %v2229
        %v2514 = vpack.c.b16 %v2238, %v2234
        %v2515 = vpack.c.b16 %v2239, %v2235
        %v2516 = vpack.c.b16 %v2240, %v2236
        %v2517 = vpack.c.b16 %v2241, %v2237
        %v2518 = vpack.c.b16 %v2246, %v2242
        %v2519 = vpack.c.b16 %v2247, %v2243
        %v2520 = vpack.c.b16 %v2248, %v2244
        %v2521 = vpack.c.b16 %v2249, %v2245
        %v2522 = vpack.c.b16 %v2254, %v2250
        %v2523 = vpack.c.b16 %v2255, %v2251
        %v2524 = vpack.c.b16 %v2256, %v2252
        %v2525 = vpack.c.b16 %v2257, %v2253
        %v2526 = vpack.c.b16 %v2262, %v2258
        %v2527 = vpack.c.b16 %v2263, %v2259
        %v2528 = vpack.c.b16 %v2264, %v2260
        %v2529 = vpack.c.b16 %v2265, %v2261
        %v2530 = vpack.c.b16 %v2270, %v2266
        %v2531 = vpack.c.b16 %v2271, %v2267
        %v2532 = vpack.c.b16 %v2272, %v2268
        %v2533 = vpack.c.b16 %v2273, %v2269
        %v2534 = vpack.c.b16 %v2278, %v2274
        %v2535 = vpack.c.b16 %v2279, %v2275
        %v2536 = vpack.c.b16 %v2280, %v2276
        %v2537 = vpack.c.b16 %v2281, %v2277
        %v2538 = vpack.c.b16 %v2286, %v2282
        %v2539 = vpack.c.b16 %v2287, %v2283
        %v2540 = vpack.c.b16 %v2288, %v2284
        %v2541 = vpack.c.b16 %v2289, %v2285
        %v2542 = vpack.c.b16 %v2294, %v2290
        %v2543 = vpack.c.b16 %v2295, %v2291
        %v2544 = vpack.c.b16 %v2296, %v2292
        %v2545 = vpack.c.b16 %v2297, %v2293
        %v2546 = vpack.c.b16 %v2302, %v2298
        %v2547 = vpack.c.b16 %v2303, %v2299
        %v2548 = vpack.c.b16 %v2304, %v2300
        %v2549 = vpack.c.b16 %v2305, %v2301
        %v2550 = vpack.c.b16 %v2310, %v2306
        %v2551 = vpack.c.b16 %v2311, %v2307
        %v2552 = vpack.c.b16 %v2312, %v2308
        %v2553 = vpack.c.b16 %v2313, %v2309
        %v2554 = vpack.c.b16 %v2318, %v2314
        %v2555 = vpack.c.b16 %v2319, %v2315
        %v2556 = vpack.c.b16 %v2320, %v2316
        %v2557 = vpack.c.b16 %v2321, %v2317
        %v2558 = vpack.c.b16 %v2326, %v2322
        %v2559 = vpack.c.b16 %v2327, %v2323
        %v2560 = vpack.c.b16 %v2328, %v2324
        %v2561 = vpack.c.b16 %v2329, %v2325
        %v2562 = vpack.c.b16 %v2334, %v2330
        %v2563 = vpack.c.b16 %v2335, %v2331
        %v2564 = vpack.c.b16 %v2336, %v2332
        %v2565 = vpack.c.b16 %v2337, %v2333
        %v2566 = vpack.c.b16 %v2342, %v2338
        %v2567 = vpack.c.b16 %v2343, %v2339
        %v2568 = vpack.c.b16 %v2344, %v2340
        %v2569 = vpack.c.b16 %v2345, %v2341
        %v2570 = vpack.c.b16 %v2350, %v2346
        %v2571 = vpack.c.b16 %v2351, %v2347
        %v2572 = vpack.c.b16 %v2352, %v2348
        %v2573 = vpack.c.b16 %v2353, %v2349
        %v2574 = vpack.c.b16 %v2358, %v2354
        %v2575 = vpack.c.b16 %v2359, %v2355
        %v2576 = vpack.c.b16 %v2360, %v2356
        %v2577 = vpack.c.b16 %v2361, %v2357
        %v2578 = vpack.c.b16 %v2366, %v2362
        %v2579 = vpack.c.b16 %v2367, %v2363
        %v2580 = vpack.c.b16 %v2368, %v2364
        %v2581 = vpack.c.b16 %v2369, %v2365
        %v2582 = vpack.c.b16 %v2374, %v2370
        %v2583 = vpack.c.b16 %v2375, %v2371
        %v2584 = vpack.c.b16 %v2376, %v2372
        %v2585 = vpack.c.b16 %v2377, %v2373
        %vm2794 = vcmask 523264
        %v2796 = vsel %vm2794, %v1524, 0
        %v2799 = vsel %vm2794, %v1531, 0
        %v2802 = vsel %vm2794, %v1538, 0
        %v2805 = vsel %vm2794, %v1545, 0
        %2807 = vmatprep.subr.bf16.mxu0 %v2407
        %2808 = vmatpush1.bf16.msra.mxu0 %v2406
        %2809 = vmatprep.subr.bf16.mxu0 %v2403
        %2810 = vmatpush1.bf16.msra.mxu0 %v2402
        %2811 = vmatprep.subr.bf16.mxu0 %v2399
        %2812 = vmatpush1.bf16.msra.mxu0 %v2398
        %2813 = vmatprep.subr.bf16.mxu0 %v2395
        %2814 = vmatpush1.bf16.msra.mxu0 %v2394
        %2815 = vmatprep.subr.bf16.mxu0 %v2391
        %2816 = vmatpush1.bf16.msra.mxu0 %v2390
        %2817 = vmatprep.subr.bf16.mxu0 %v2387
        %2818 = vmatpush1.bf16.msra.mxu0 %v2386
        %2819 = vmatprep.subr.bf16.mxu0 %v2383
        %2820 = vmatpush1.bf16.msra.mxu0 %v2382
        %2821 = vmatprep.subr.bf16.mxu0 %v2379
        %2822 = vmatpush1.bf16.msra.mxu0 %v2378
        %2823 = vmatprep.subr.bf16.mxu0 %v2439
        %2824 = vmatpush2.bf16.msra.mxu0 %v2438
        %2825 = vmatprep.subr.bf16.mxu0 %v2435
        %2826 = vmatpush2.bf16.msra.mxu0 %v2434
        %2827 = vmatprep.subr.bf16.mxu0 %v2431
        %2828 = vmatpush2.bf16.msra.mxu0 %v2430
        %2829 = vmatprep.subr.bf16.mxu0 %v2427
        %2830 = vmatpush2.bf16.msra.mxu0 %v2426
        %2831 = vmatprep.subr.bf16.mxu0 %v2423
        %2832 = vmatpush2.bf16.msra.mxu0 %v2422
        %2833 = vmatprep.subr.bf16.mxu0 %v2419
        %2834 = vmatpush2.bf16.msra.mxu0 %v2418
        %2835 = vmatprep.subr.bf16.mxu0 %v2415
        %2836 = vmatpush2.bf16.msra.mxu0 %v2414
        %2837 = vmatprep.subr.bf16.mxu0 %v2411
        %2838 = vmatpush2.bf16.msra.mxu0 %v2410
        %2839 = vmatprep.mubr.bf16.mxu0 %v1519
        %2840 = vmatmul.mubr.bf16.gmra.mxu0 %v1518
        %v2841 = vpop.f32.mrf.mxu0
        %v2842 = vadd.f32 0.0, %v2841
        %v2843 = vpop.f32.mrf.mxu0
        %v2844 = vadd.f32 0.0, %v2843
        %v2845 = vpop.f32.mrf.mxu0
        %v2846 = vadd.f32 0.0, %v2845
        %v2847 = vpop.f32.mrf.mxu0
        %v2848 = vadd.f32 0.0, %v2847
        %2849 = vmatprep.mubr.bf16.mxu0 %v1526
        %2850 = vmatmul.mubr.bf16.gmra.mxu0 %v1525
        %v2851 = vpop.f32.mrf.mxu0
        %v2852 = vadd.f32 0.0, %v2851
        %v2853 = vpop.f32.mrf.mxu0
        %v2854 = vadd.f32 0.0, %v2853
        %v2855 = vpop.f32.mrf.mxu0
        %v2856 = vadd.f32 0.0, %v2855
        %v2857 = vpop.f32.mrf.mxu0
        %v2858 = vadd.f32 0.0, %v2857
        %2859 = vmatprep.mubr.bf16.mxu0 %v1533
        %2860 = vmatmul.mubr.bf16.gmra.mxu0 %v1532
        %v2861 = vpop.f32.mrf.mxu0
        %v2862 = vadd.f32 0.0, %v2861
        %v2863 = vpop.f32.mrf.mxu0
        %v2864 = vadd.f32 0.0, %v2863
        %v2865 = vpop.f32.mrf.mxu0
        %v2866 = vadd.f32 0.0, %v2865
        %v2867 = vpop.f32.mrf.mxu0
        %v2868 = vadd.f32 0.0, %v2867
        %2869 = vmatprep.mubr.bf16.mxu0 %v1540
        %2870 = vmatmul.mubr.bf16.gmra.mxu0 %v1539
        %v2871 = vpop.f32.mrf.mxu0
        %v2872 = vadd.f32 0.0, %v2871
        %v2873 = vpop.f32.mrf.mxu0
        %v2874 = vadd.f32 0.0, %v2873
        %v2875 = vpop.f32.mrf.mxu0
        %v2876 = vadd.f32 0.0, %v2875
        %v2877 = vpop.f32.mrf.mxu0
        %v2878 = vadd.f32 0.0, %v2877
        %2879 = vdwg.mxu0
        %2880 = vmatprep.subr.bf16.mxu0 %v2471
        %2881 = vmatpush1.bf16.msra.mxu0 %v2470
        %2882 = vmatprep.subr.bf16.mxu0 %v2467
        %2883 = vmatpush1.bf16.msra.mxu0 %v2466
        %2884 = vmatprep.subr.bf16.mxu0 %v2463
        %2885 = vmatpush1.bf16.msra.mxu0 %v2462
        %2886 = vmatprep.subr.bf16.mxu0 %v2459
        %2887 = vmatpush1.bf16.msra.mxu0 %v2458
        %2888 = vmatprep.subr.bf16.mxu0 %v2455
        %2889 = vmatpush1.bf16.msra.mxu0 %v2454
        %2890 = vmatprep.subr.bf16.mxu0 %v2451
        %2891 = vmatpush1.bf16.msra.mxu0 %v2450
        %2892 = vmatprep.subr.bf16.mxu0 %v2447
        %2893 = vmatpush1.bf16.msra.mxu0 %v2446
        %2894 = vmatprep.subr.bf16.mxu0 %v2443
        %2895 = vmatpush1.bf16.msra.mxu0 %v2442
        %2896 = vmatprep.subr.bf16.mxu0 %v2503
        %2897 = vmatpush2.bf16.msra.mxu0 %v2502
        %2898 = vmatprep.subr.bf16.mxu0 %v2499
        %2899 = vmatpush2.bf16.msra.mxu0 %v2498
        %2900 = vmatprep.subr.bf16.mxu0 %v2495
        %2901 = vmatpush2.bf16.msra.mxu0 %v2494
        %2902 = vmatprep.subr.bf16.mxu0 %v2491
        %2903 = vmatpush2.bf16.msra.mxu0 %v2490
        %2904 = vmatprep.subr.bf16.mxu0 %v2487
        %2905 = vmatpush2.bf16.msra.mxu0 %v2486
        %2906 = vmatprep.subr.bf16.mxu0 %v2483
        %2907 = vmatpush2.bf16.msra.mxu0 %v2482
        %2908 = vmatprep.subr.bf16.mxu0 %v2479
        %2909 = vmatpush2.bf16.msra.mxu0 %v2478
        %2910 = vmatprep.subr.bf16.mxu0 %v2475
        %2911 = vmatpush2.bf16.msra.mxu0 %v2474
        %2912 = vmatprep.mubr.bf16.mxu0 %v1521
        %2913 = vmatmul.mubr.bf16.gmra.mxu0 %v1520
        %v2914 = vpop.f32.mrf.mxu0
        %v2915 = vadd.f32 %v2842, %v2914
        %v2916 = vpop.f32.mrf.mxu0
        %v2917 = vadd.f32 %v2844, %v2916
        %v2918 = vpop.f32.mrf.mxu0
        %v2919 = vadd.f32 %v2846, %v2918
        %v2920 = vpop.f32.mrf.mxu0
        %v2921 = vadd.f32 %v2848, %v2920
        %2922 = vmatprep.mubr.bf16.mxu0 %v1528
        %2923 = vmatmul.mubr.bf16.gmra.mxu0 %v1527
        %v2924 = vpop.f32.mrf.mxu0
        %v2925 = vadd.f32 %v2852, %v2924
        %v2926 = vpop.f32.mrf.mxu0
        %v2927 = vadd.f32 %v2854, %v2926
        %v2928 = vpop.f32.mrf.mxu0
        %v2929 = vadd.f32 %v2856, %v2928
        %v2930 = vpop.f32.mrf.mxu0
        %v2931 = vadd.f32 %v2858, %v2930
        %2932 = vmatprep.mubr.bf16.mxu0 %v1535
        %2933 = vmatmul.mubr.bf16.gmra.mxu0 %v1534
        %v2934 = vpop.f32.mrf.mxu0
        %v2935 = vadd.f32 %v2862, %v2934
        %v2936 = vpop.f32.mrf.mxu0
        %v2937 = vadd.f32 %v2864, %v2936
        %v2938 = vpop.f32.mrf.mxu0
        %v2939 = vadd.f32 %v2866, %v2938
        %v2940 = vpop.f32.mrf.mxu0
        %v2941 = vadd.f32 %v2868, %v2940
        %2942 = vmatprep.mubr.bf16.mxu0 %v1542
        %2943 = vmatmul.mubr.bf16.gmra.mxu0 %v1541
        %v2944 = vpop.f32.mrf.mxu0
        %v2945 = vadd.f32 %v2872, %v2944
        %v2946 = vpop.f32.mrf.mxu0
        %v2947 = vadd.f32 %v2874, %v2946
        %v2948 = vpop.f32.mrf.mxu0
        %v2949 = vadd.f32 %v2876, %v2948
        %v2950 = vpop.f32.mrf.mxu0
        %v2951 = vadd.f32 %v2878, %v2950
        %2952 = vdwg.mxu0
        %2953 = vmatprep.subr.bf16.mxu0 %v2535
        %2954 = vmatpush1.bf16.msra.mxu0 %v2534
        %2955 = vmatprep.subr.bf16.mxu0 %v2531
        %2956 = vmatpush1.bf16.msra.mxu0 %v2530
        %2957 = vmatprep.subr.bf16.mxu0 %v2527
        %2958 = vmatpush1.bf16.msra.mxu0 %v2526
        %2959 = vmatprep.subr.bf16.mxu0 %v2523
        %2960 = vmatpush1.bf16.msra.mxu0 %v2522
        %2961 = vmatprep.subr.bf16.mxu0 %v2519
        %2962 = vmatpush1.bf16.msra.mxu0 %v2518
        %2963 = vmatprep.subr.bf16.mxu0 %v2515
        %2964 = vmatpush1.bf16.msra.mxu0 %v2514
        %2965 = vmatprep.subr.bf16.mxu0 %v2511
        %2966 = vmatpush1.bf16.msra.mxu0 %v2510
        %2967 = vmatprep.subr.bf16.mxu0 %v2507
        %2968 = vmatpush1.bf16.msra.mxu0 %v2506
        %2969 = vmatprep.subr.bf16.mxu0 %v2567
        %2970 = vmatpush2.bf16.msra.mxu0 %v2566
        %2971 = vmatprep.subr.bf16.mxu0 %v2563
        %2972 = vmatpush2.bf16.msra.mxu0 %v2562
        %2973 = vmatprep.subr.bf16.mxu0 %v2559
        %2974 = vmatpush2.bf16.msra.mxu0 %v2558
        %2975 = vmatprep.subr.bf16.mxu0 %v2555
        %2976 = vmatpush2.bf16.msra.mxu0 %v2554
        %2977 = vmatprep.subr.bf16.mxu0 %v2551
        %2978 = vmatpush2.bf16.msra.mxu0 %v2550
        %2979 = vmatprep.subr.bf16.mxu0 %v2547
        %2980 = vmatpush2.bf16.msra.mxu0 %v2546
        %2981 = vmatprep.subr.bf16.mxu0 %v2543
        %2982 = vmatpush2.bf16.msra.mxu0 %v2542
        %2983 = vmatprep.subr.bf16.mxu0 %v2539
        %2984 = vmatpush2.bf16.msra.mxu0 %v2538
        %2985 = vmatprep.mubr.bf16.mxu0 %v1523
        %2986 = vmatmul.mubr.bf16.gmra.mxu0 %v1522
        %v2987 = vpop.f32.mrf.mxu0
        %v2988 = vadd.f32 %v2915, %v2987
        %v2989 = vpop.f32.mrf.mxu0
        %v2990 = vadd.f32 %v2917, %v2989
        %v2991 = vpop.f32.mrf.mxu0
        %v2992 = vadd.f32 %v2919, %v2991
        %v2993 = vpop.f32.mrf.mxu0
        %v2994 = vadd.f32 %v2921, %v2993
        %2995 = vmatprep.mubr.bf16.mxu0 %v1530
        %2996 = vmatmul.mubr.bf16.gmra.mxu0 %v1529
        %v2997 = vpop.f32.mrf.mxu0
        %v2998 = vadd.f32 %v2925, %v2997
        %v2999 = vpop.f32.mrf.mxu0
        %v3000 = vadd.f32 %v2927, %v2999
        %v3001 = vpop.f32.mrf.mxu0
        %v3002 = vadd.f32 %v2929, %v3001
        %v3003 = vpop.f32.mrf.mxu0
        %v3004 = vadd.f32 %v2931, %v3003
        %3005 = vmatprep.mubr.bf16.mxu0 %v1537
        %3006 = vmatmul.mubr.bf16.gmra.mxu0 %v1536
        %v3007 = vpop.f32.mrf.mxu0
        %v3008 = vadd.f32 %v2935, %v3007
        %v3009 = vpop.f32.mrf.mxu0
        %v3010 = vadd.f32 %v2937, %v3009
        %v3011 = vpop.f32.mrf.mxu0
        %v3012 = vadd.f32 %v2939, %v3011
        %v3013 = vpop.f32.mrf.mxu0
        %v3014 = vadd.f32 %v2941, %v3013
        %3015 = vmatprep.mubr.bf16.mxu0 %v1544
        %3016 = vmatmul.mubr.bf16.gmra.mxu0 %v1543
        %v3017 = vpop.f32.mrf.mxu0
        %v3018 = vadd.f32 %v2945, %v3017
        %v3019 = vpop.f32.mrf.mxu0
        %v3020 = vadd.f32 %v2947, %v3019
        %v3021 = vpop.f32.mrf.mxu0
        %v3022 = vadd.f32 %v2949, %v3021
        %v3023 = vpop.f32.mrf.mxu0
        %v3024 = vadd.f32 %v2951, %v3023
        %3025 = vdwg.mxu0
        %3026 = vmatprep.subr.bf16.mxu0 0
        %3027 = vmatpush1.bf16.msra.mxu0 0
        %3028 = vmatprep.subr.bf16.mxu0 0
        %3029 = vmatpush1.bf16.msra.mxu0 0
        %3030 = vmatprep.subr.bf16.mxu0 0
        %3031 = vmatpush1.bf16.msra.mxu0 0
        %3032 = vmatprep.subr.bf16.mxu0 0
        %3033 = vmatpush1.bf16.msra.mxu0 0
        %3034 = vmatprep.subr.bf16.mxu0 %v2583
        %3035 = vmatpush1.bf16.msra.mxu0 %v2582
        %3036 = vmatprep.subr.bf16.mxu0 %v2579
        %3037 = vmatpush1.bf16.msra.mxu0 %v2578
        %3038 = vmatprep.subr.bf16.mxu0 %v2575
        %3039 = vmatpush1.bf16.msra.mxu0 %v2574
        %3040 = vmatprep.subr.bf16.mxu0 %v2571
        %3041 = vmatpush1.bf16.msra.mxu0 %v2570
        %3042 = vmatprep.subr.bf16.mxu0 0
        %3043 = vmatpush2.bf16.msra.mxu0 0
        %3044 = vmatprep.subr.bf16.mxu0 0
        %3045 = vmatpush2.bf16.msra.mxu0 0
        %3046 = vmatprep.subr.bf16.mxu0 0
        %3047 = vmatpush2.bf16.msra.mxu0 0
        %3048 = vmatprep.subr.bf16.mxu0 0
        %3049 = vmatpush2.bf16.msra.mxu0 0
        %3050 = vmatprep.subr.bf16.mxu0 0
        %3051 = vmatpush2.bf16.msra.mxu0 0
        %3052 = vmatprep.subr.bf16.mxu0 0
        %3053 = vmatpush2.bf16.msra.mxu0 0
        %3054 = vmatprep.subr.bf16.mxu0 0
        %3055 = vmatpush2.bf16.msra.mxu0 0
        %3056 = vmatprep.subr.bf16.mxu0 0
        %3057 = vmatpush2.bf16.msra.mxu0 0
        %3058 = vmatprep.mubr.bf16.mxu0 0
        %3059 = vmatmul.mubr.bf16.gmra.mxu0 %v2796
        %v3060 = vpop.f32.mrf.mxu0
        %v3061 = vadd.f32 %v2988, %v3060
        %v3062 = vpop.f32.mrf.mxu0
        %v3063 = vadd.f32 %v2990, %v3062
        %v3064 = vpop.f32.mrf.mxu0
        %v3065 = vadd.f32 %v2992, %v3064
        %v3066 = vpop.f32.mrf.mxu0
        %v3067 = vadd.f32 %v2994, %v3066
        %3068 = vmatprep.mubr.bf16.mxu0 0
        %3069 = vmatmul.mubr.bf16.gmra.mxu0 %v2799
        %v3070 = vpop.f32.mrf.mxu0
        %v3071 = vadd.f32 %v2998, %v3070
        %v3072 = vpop.f32.mrf.mxu0
        %v3073 = vadd.f32 %v3000, %v3072
        %v3074 = vpop.f32.mrf.mxu0
        %v3075 = vadd.f32 %v3002, %v3074
        %v3076 = vpop.f32.mrf.mxu0
        %v3077 = vadd.f32 %v3004, %v3076
        %3078 = vmatprep.mubr.bf16.mxu0 0
        %3079 = vmatmul.mubr.bf16.gmra.mxu0 %v2802
        %v3080 = vpop.f32.mrf.mxu0
        %v3081 = vadd.f32 %v3008, %v3080
        %v3082 = vpop.f32.mrf.mxu0
        %v3083 = vadd.f32 %v3010, %v3082
        %v3084 = vpop.f32.mrf.mxu0
        %v3085 = vadd.f32 %v3012, %v3084
        %v3086 = vpop.f32.mrf.mxu0
        %v3087 = vadd.f32 %v3014, %v3086
        %3088 = vmatprep.mubr.bf16.mxu0 0
        %3089 = vmatmul.mubr.bf16.gmra.mxu0 %v2805
        %v3090 = vpop.f32.mrf.mxu0
        %v3091 = vadd.f32 %v3018, %v3090
        %v3092 = vpop.f32.mrf.mxu0
        %v3093 = vadd.f32 %v3020, %v3092
        %v3094 = vpop.f32.mrf.mxu0
        %v3095 = vadd.f32 %v3022, %v3094
        %v3096 = vpop.f32.mrf.mxu0
        %v3097 = vadd.f32 %v3024, %v3096
        %3098 = vdwg.mxu0
        %3099 = vmatprep.subr.bf16.mxu0 %v2409
        %3100 = vmatpush1.bf16.msra.mxu0 %v2408
        %3101 = vmatprep.subr.bf16.mxu0 %v2405
        %3102 = vmatpush1.bf16.msra.mxu0 %v2404
        %3103 = vmatprep.subr.bf16.mxu0 %v2401
        %3104 = vmatpush1.bf16.msra.mxu0 %v2400
        %3105 = vmatprep.subr.bf16.mxu0 %v2397
        %3106 = vmatpush1.bf16.msra.mxu0 %v2396
        %3107 = vmatprep.subr.bf16.mxu0 %v2393
        %3108 = vmatpush1.bf16.msra.mxu0 %v2392
        %3109 = vmatprep.subr.bf16.mxu0 %v2389
        %3110 = vmatpush1.bf16.msra.mxu0 %v2388
        %3111 = vmatprep.subr.bf16.mxu0 %v2385
        %3112 = vmatpush1.bf16.msra.mxu0 %v2384
        %3113 = vmatprep.subr.bf16.mxu0 %v2381
        %3114 = vmatpush1.bf16.msra.mxu0 %v2380
        %3115 = vmatprep.subr.bf16.mxu0 %v2441
        %3116 = vmatpush2.bf16.msra.mxu0 %v2440
        %3117 = vmatprep.subr.bf16.mxu0 %v2437
        %3118 = vmatpush2.bf16.msra.mxu0 %v2436
        %3119 = vmatprep.subr.bf16.mxu0 %v2433
        %3120 = vmatpush2.bf16.msra.mxu0 %v2432
        %3121 = vmatprep.subr.bf16.mxu0 %v2429
        %3122 = vmatpush2.bf16.msra.mxu0 %v2428
        %3123 = vmatprep.subr.bf16.mxu0 %v2425
        %3124 = vmatpush2.bf16.msra.mxu0 %v2424
        %3125 = vmatprep.subr.bf16.mxu0 %v2421
        %3126 = vmatpush2.bf16.msra.mxu0 %v2420
        %3127 = vmatprep.subr.bf16.mxu0 %v2417
        %3128 = vmatpush2.bf16.msra.mxu0 %v2416
        %3129 = vmatprep.subr.bf16.mxu0 %v2413
        %3130 = vmatpush2.bf16.msra.mxu0 %v2412
        %3131 = vmatprep.mubr.bf16.mxu0 %v1519
        %3132 = vmatmul.mubr.bf16.gmra.mxu0 %v1518
        %v3133 = vpop.f32.mrf.mxu0
        %v3134 = vadd.f32 0.0, %v3133
        %v3135 = vpop.f32.mrf.mxu0
        %v3136 = vadd.f32 0.0, %v3135
        %v3137 = vpop.f32.mrf.mxu0
        %v3138 = vadd.f32 0.0, %v3137
        %v3139 = vpop.f32.mrf.mxu0
        %v3140 = vadd.f32 0.0, %v3139
        %3141 = vmatprep.mubr.bf16.mxu0 %v1526
        %3142 = vmatmul.mubr.bf16.gmra.mxu0 %v1525
        %v3143 = vpop.f32.mrf.mxu0
        %v3144 = vadd.f32 0.0, %v3143
        %v3145 = vpop.f32.mrf.mxu0
        %v3146 = vadd.f32 0.0, %v3145
        %v3147 = vpop.f32.mrf.mxu0
        %v3148 = vadd.f32 0.0, %v3147
        %v3149 = vpop.f32.mrf.mxu0
        %v3150 = vadd.f32 0.0, %v3149
        %3151 = vmatprep.mubr.bf16.mxu0 %v1533
        %3152 = vmatmul.mubr.bf16.gmra.mxu0 %v1532
        %v3153 = vpop.f32.mrf.mxu0
        %v3154 = vadd.f32 0.0, %v3153
        %v3155 = vpop.f32.mrf.mxu0
        %v3156 = vadd.f32 0.0, %v3155
        %v3157 = vpop.f32.mrf.mxu0
        %v3158 = vadd.f32 0.0, %v3157
        %v3159 = vpop.f32.mrf.mxu0
        %v3160 = vadd.f32 0.0, %v3159
        %3161 = vmatprep.mubr.bf16.mxu0 %v1540
        %3162 = vmatmul.mubr.bf16.gmra.mxu0 %v1539
        %v3163 = vpop.f32.mrf.mxu0
        %v3164 = vadd.f32 0.0, %v3163
        %v3165 = vpop.f32.mrf.mxu0
        %v3166 = vadd.f32 0.0, %v3165
        %v3167 = vpop.f32.mrf.mxu0
        %v3168 = vadd.f32 0.0, %v3167
        %v3169 = vpop.f32.mrf.mxu0
        %v3170 = vadd.f32 0.0, %v3169
        %3171 = vdwg.mxu0
        %3172 = vmatprep.subr.bf16.mxu0 %v2473
        %3173 = vmatpush1.bf16.msra.mxu0 %v2472
        %3174 = vmatprep.subr.bf16.mxu0 %v2469
        %3175 = vmatpush1.bf16.msra.mxu0 %v2468
        %3176 = vmatprep.subr.bf16.mxu0 %v2465
        %3177 = vmatpush1.bf16.msra.mxu0 %v2464
        %3178 = vmatprep.subr.bf16.mxu0 %v2461
        %3179 = vmatpush1.bf16.msra.mxu0 %v2460
        %3180 = vmatprep.subr.bf16.mxu0 %v2457
        %3181 = vmatpush1.bf16.msra.mxu0 %v2456
        %3182 = vmatprep.subr.bf16.mxu0 %v2453
        %3183 = vmatpush1.bf16.msra.mxu0 %v2452
        %3184 = vmatprep.subr.bf16.mxu0 %v2449
        %3185 = vmatpush1.bf16.msra.mxu0 %v2448
        %3186 = vmatprep.subr.bf16.mxu0 %v2445
        %3187 = vmatpush1.bf16.msra.mxu0 %v2444
        %3188 = vmatprep.subr.bf16.mxu0 %v2505
        %3189 = vmatpush2.bf16.msra.mxu0 %v2504
        %3190 = vmatprep.subr.bf16.mxu0 %v2501
        %3191 = vmatpush2.bf16.msra.mxu0 %v2500
        %3192 = vmatprep.subr.bf16.mxu0 %v2497
        %3193 = vmatpush2.bf16.msra.mxu0 %v2496
        %3194 = vmatprep.subr.bf16.mxu0 %v2493
        %3195 = vmatpush2.bf16.msra.mxu0 %v2492
        %3196 = vmatprep.subr.bf16.mxu0 %v2489
        %3197 = vmatpush2.bf16.msra.mxu0 %v2488
        %3198 = vmatprep.subr.bf16.mxu0 %v2485
        %3199 = vmatpush2.bf16.msra.mxu0 %v2484
        %3200 = vmatprep.subr.bf16.mxu0 %v2481
        %3201 = vmatpush2.bf16.msra.mxu0 %v2480
        %3202 = vmatprep.subr.bf16.mxu0 %v2477
        %3203 = vmatpush2.bf16.msra.mxu0 %v2476
        %3204 = vmatprep.mubr.bf16.mxu0 %v1521
        %3205 = vmatmul.mubr.bf16.gmra.mxu0 %v1520
        %v3206 = vpop.f32.mrf.mxu0
        %v3207 = vadd.f32 %v3134, %v3206
        %v3208 = vpop.f32.mrf.mxu0
        %v3209 = vadd.f32 %v3136, %v3208
        %v3210 = vpop.f32.mrf.mxu0
        %v3211 = vadd.f32 %v3138, %v3210
        %v3212 = vpop.f32.mrf.mxu0
        %v3213 = vadd.f32 %v3140, %v3212
        %3214 = vmatprep.mubr.bf16.mxu0 %v1528
        %3215 = vmatmul.mubr.bf16.gmra.mxu0 %v1527
        %v3216 = vpop.f32.mrf.mxu0
        %v3217 = vadd.f32 %v3144, %v3216
        %v3218 = vpop.f32.mrf.mxu0
        %v3219 = vadd.f32 %v3146, %v3218
        %v3220 = vpop.f32.mrf.mxu0
        %v3221 = vadd.f32 %v3148, %v3220
        %v3222 = vpop.f32.mrf.mxu0
        %v3223 = vadd.f32 %v3150, %v3222
        %3224 = vmatprep.mubr.bf16.mxu0 %v1535
        %3225 = vmatmul.mubr.bf16.gmra.mxu0 %v1534
        %v3226 = vpop.f32.mrf.mxu0
        %v3227 = vadd.f32 %v3154, %v3226
        %v3228 = vpop.f32.mrf.mxu0
        %v3229 = vadd.f32 %v3156, %v3228
        %v3230 = vpop.f32.mrf.mxu0
        %v3231 = vadd.f32 %v3158, %v3230
        %v3232 = vpop.f32.mrf.mxu0
        %v3233 = vadd.f32 %v3160, %v3232
        %3234 = vmatprep.mubr.bf16.mxu0 %v1542
        %3235 = vmatmul.mubr.bf16.gmra.mxu0 %v1541
        %v3236 = vpop.f32.mrf.mxu0
        %v3237 = vadd.f32 %v3164, %v3236
        %v3238 = vpop.f32.mrf.mxu0
        %v3239 = vadd.f32 %v3166, %v3238
        %v3240 = vpop.f32.mrf.mxu0
        %v3241 = vadd.f32 %v3168, %v3240
        %v3242 = vpop.f32.mrf.mxu0
        %v3243 = vadd.f32 %v3170, %v3242
        %3244 = vdwg.mxu0
        %3245 = vmatprep.subr.bf16.mxu0 %v2537
        %3246 = vmatpush1.bf16.msra.mxu0 %v2536
        %3247 = vmatprep.subr.bf16.mxu0 %v2533
        %3248 = vmatpush1.bf16.msra.mxu0 %v2532
        %3249 = vmatprep.subr.bf16.mxu0 %v2529
        %3250 = vmatpush1.bf16.msra.mxu0 %v2528
        %3251 = vmatprep.subr.bf16.mxu0 %v2525
        %3252 = vmatpush1.bf16.msra.mxu0 %v2524
        %3253 = vmatprep.subr.bf16.mxu0 %v2521
        %3254 = vmatpush1.bf16.msra.mxu0 %v2520
        %3255 = vmatprep.subr.bf16.mxu0 %v2517
        %3256 = vmatpush1.bf16.msra.mxu0 %v2516
        %3257 = vmatprep.subr.bf16.mxu0 %v2513
        %3258 = vmatpush1.bf16.msra.mxu0 %v2512
        %3259 = vmatprep.subr.bf16.mxu0 %v2509
        %3260 = vmatpush1.bf16.msra.mxu0 %v2508
        %3261 = vmatprep.subr.bf16.mxu0 %v2569
        %3262 = vmatpush2.bf16.msra.mxu0 %v2568
        %3263 = vmatprep.subr.bf16.mxu0 %v2565
        %3264 = vmatpush2.bf16.msra.mxu0 %v2564
        %3265 = vmatprep.subr.bf16.mxu0 %v2561
        %3266 = vmatpush2.bf16.msra.mxu0 %v2560
        %3267 = vmatprep.subr.bf16.mxu0 %v2557
        %3268 = vmatpush2.bf16.msra.mxu0 %v2556
        %3269 = vmatprep.subr.bf16.mxu0 %v2553
        %3270 = vmatpush2.bf16.msra.mxu0 %v2552
        %3271 = vmatprep.subr.bf16.mxu0 %v2549
        %3272 = vmatpush2.bf16.msra.mxu0 %v2548
        %3273 = vmatprep.subr.bf16.mxu0 %v2545
        %3274 = vmatpush2.bf16.msra.mxu0 %v2544
        %3275 = vmatprep.subr.bf16.mxu0 %v2541
        %3276 = vmatpush2.bf16.msra.mxu0 %v2540
        %3277 = vmatprep.mubr.bf16.mxu0 %v1523
        %3278 = vmatmul.mubr.bf16.gmra.mxu0 %v1522
        %v3279 = vpop.f32.mrf.mxu0
        %v3280 = vadd.f32 %v3207, %v3279
        %v3281 = vpop.f32.mrf.mxu0
        %v3282 = vadd.f32 %v3209, %v3281
        %v3283 = vpop.f32.mrf.mxu0
        %v3284 = vadd.f32 %v3211, %v3283
        %v3285 = vpop.f32.mrf.mxu0
        %v3286 = vadd.f32 %v3213, %v3285
        %3287 = vmatprep.mubr.bf16.mxu0 %v1530
        %3288 = vmatmul.mubr.bf16.gmra.mxu0 %v1529
        %v3289 = vpop.f32.mrf.mxu0
        %v3290 = vadd.f32 %v3217, %v3289
        %v3291 = vpop.f32.mrf.mxu0
        %v3292 = vadd.f32 %v3219, %v3291
        %v3293 = vpop.f32.mrf.mxu0
        %v3294 = vadd.f32 %v3221, %v3293
        %v3295 = vpop.f32.mrf.mxu0
        %v3296 = vadd.f32 %v3223, %v3295
        %3297 = vmatprep.mubr.bf16.mxu0 %v1537
        %3298 = vmatmul.mubr.bf16.gmra.mxu0 %v1536
        %v3299 = vpop.f32.mrf.mxu0
        %v3300 = vadd.f32 %v3227, %v3299
        %v3301 = vpop.f32.mrf.mxu0
        %v3302 = vadd.f32 %v3229, %v3301
        %v3303 = vpop.f32.mrf.mxu0
        %v3304 = vadd.f32 %v3231, %v3303
        %v3305 = vpop.f32.mrf.mxu0
        %v3306 = vadd.f32 %v3233, %v3305
        %3307 = vmatprep.mubr.bf16.mxu0 %v1544
        %3308 = vmatmul.mubr.bf16.gmra.mxu0 %v1543
        %v3309 = vpop.f32.mrf.mxu0
        %v3310 = vadd.f32 %v3237, %v3309
        %v3311 = vpop.f32.mrf.mxu0
        %v3312 = vadd.f32 %v3239, %v3311
        %v3313 = vpop.f32.mrf.mxu0
        %v3314 = vadd.f32 %v3241, %v3313
        %v3315 = vpop.f32.mrf.mxu0
        %v3316 = vadd.f32 %v3243, %v3315
        %3317 = vdwg.mxu0
        %3318 = vmatprep.subr.bf16.mxu0 0
        %3319 = vmatpush1.bf16.msra.mxu0 0
        %3320 = vmatprep.subr.bf16.mxu0 0
        %3321 = vmatpush1.bf16.msra.mxu0 0
        %3322 = vmatprep.subr.bf16.mxu0 0
        %3323 = vmatpush1.bf16.msra.mxu0 0
        %3324 = vmatprep.subr.bf16.mxu0 0
        %3325 = vmatpush1.bf16.msra.mxu0 0
        %3326 = vmatprep.subr.bf16.mxu0 %v2585
        %3327 = vmatpush1.bf16.msra.mxu0 %v2584
        %3328 = vmatprep.subr.bf16.mxu0 %v2581
        %3329 = vmatpush1.bf16.msra.mxu0 %v2580
        %3330 = vmatprep.subr.bf16.mxu0 %v2577
        %3331 = vmatpush1.bf16.msra.mxu0 %v2576
        %3332 = vmatprep.subr.bf16.mxu0 %v2573
        %3333 = vmatpush1.bf16.msra.mxu0 %v2572
        %3334 = vmatprep.subr.bf16.mxu0 0
        %3335 = vmatpush2.bf16.msra.mxu0 0
        %3336 = vmatprep.subr.bf16.mxu0 0
        %3337 = vmatpush2.bf16.msra.mxu0 0
        %3338 = vmatprep.subr.bf16.mxu0 0
        %3339 = vmatpush2.bf16.msra.mxu0 0
        %3340 = vmatprep.subr.bf16.mxu0 0
        %3341 = vmatpush2.bf16.msra.mxu0 0
        %3342 = vmatprep.subr.bf16.mxu0 0
        %3343 = vmatpush2.bf16.msra.mxu0 0
        %3344 = vmatprep.subr.bf16.mxu0 0
        %3345 = vmatpush2.bf16.msra.mxu0 0
        %3346 = vmatprep.subr.bf16.mxu0 0
        %3347 = vmatpush2.bf16.msra.mxu0 0
        %3348 = vmatprep.subr.bf16.mxu0 0
        %3349 = vmatpush2.bf16.msra.mxu0 0
        %3350 = vmatprep.mubr.bf16.mxu0 0
        %3351 = vmatmul.mubr.bf16.gmra.mxu0 %v2796
        %v3352 = vpop.f32.mrf.mxu0
        %v3353 = vadd.f32 %v3280, %v3352
        %v3354 = vpop.f32.mrf.mxu0
        %v3355 = vadd.f32 %v3282, %v3354
        %v3356 = vpop.f32.mrf.mxu0
        %v3357 = vadd.f32 %v3284, %v3356
        %v3358 = vpop.f32.mrf.mxu0
        %v3359 = vadd.f32 %v3286, %v3358
        %3360 = vmatprep.mubr.bf16.mxu0 0
        %3361 = vmatmul.mubr.bf16.gmra.mxu0 %v2799
        %v3362 = vpop.f32.mrf.mxu0
        %v3363 = vadd.f32 %v3290, %v3362
        %v3364 = vpop.f32.mrf.mxu0
        %v3365 = vadd.f32 %v3292, %v3364
        %v3366 = vpop.f32.mrf.mxu0
        %v3367 = vadd.f32 %v3294, %v3366
        %v3368 = vpop.f32.mrf.mxu0
        %v3369 = vadd.f32 %v3296, %v3368
        %3370 = vmatprep.mubr.bf16.mxu0 0
        %3371 = vmatmul.mubr.bf16.gmra.mxu0 %v2802
        %v3372 = vpop.f32.mrf.mxu0
        %v3373 = vadd.f32 %v3300, %v3372
        %v3374 = vpop.f32.mrf.mxu0
        %v3375 = vadd.f32 %v3302, %v3374
        %v3376 = vpop.f32.mrf.mxu0
        %v3377 = vadd.f32 %v3304, %v3376
        %v3378 = vpop.f32.mrf.mxu0
        %v3379 = vadd.f32 %v3306, %v3378
        %3380 = vmatprep.mubr.bf16.mxu0 0
        %3381 = vmatmul.mubr.bf16.gmra.mxu0 %v2805
        %v3382 = vpop.f32.mrf.mxu0
        %v3383 = vadd.f32 %v3310, %v3382
        %v3384 = vpop.f32.mrf.mxu0
        %v3385 = vadd.f32 %v3312, %v3384
        %v3386 = vpop.f32.mrf.mxu0
        %v3387 = vadd.f32 %v3314, %v3386
        %v3388 = vpop.f32.mrf.mxu0
        %v3389 = vadd.f32 %v3316, %v3388
        %3390 = vdwg.mxu0
        %v3391 = vld [vmem:[%s4] sm:$0xf]
        %v3392 = vld [vmem:[%s4 + $0x4] sm:$0xf]
        %v3393 = vld [vmem:[%s4 + $0x8] sm:$0xf]
        %v3394 = vld [vmem:[%s4 + $0xc] sm:$0xf]
        %v3395 = vld [vmem:[%s4 + $0x10] sm:$0xf]
        %v3396 = vpack.c.bf16 %v3065, %v3061
        %v3397 = vpack.c.bf16 %v3067, %v3063
        %v3398 = vpack.c.bf16 %v3357, %v3353
        %v3399 = vpack.c.bf16 %v3359, %v3355
        %v3400 = vpack.c.bf16 %v3075, %v3071
        %v3401 = vpack.c.bf16 %v3077, %v3073
        %v3402 = vpack.c.bf16 %v3367, %v3363
        %v3403 = vpack.c.bf16 %v3369, %v3365
        %v3404 = vpack.c.bf16 %v3085, %v3081
        %v3405 = vpack.c.bf16 %v3087, %v3083
        %v3406 = vpack.c.bf16 %v3377, %v3373
        %v3407 = vpack.c.bf16 %v3379, %v3375
        %v3408 = vpack.c.bf16 %v3095, %v3091
        %v3409 = vpack.c.bf16 %v3097, %v3093
        %v3410 = vpack.c.bf16 %v3387, %v3383
        %v3411 = vpack.c.bf16 %v3389, %v3385
        %v3417 = vunpack.c.l.b16 %v3391
        %v3418 = vunpack.c.l.b16 %v3392
        %v3419 = vunpack.c.l.b16 %v3393
        %v3420 = vunpack.c.l.b16 %v3394
        %v3421 = vunpack.c.l.b16 %v3395
        %v3422 = vpack.c.b16 %v3418, %v3417
        %v3423 = vpack.c.b16 %v3420, %v3419
        %v3424 = vpack.c.b16 %v3421, %v3421
        %v3426 = vsel %vm2794, %v3422, 0
        %v3429 = vsel %vm2794, %v3423, 0
        %v3432 = vsel %vm2794, %v3424, 0
        %3434 = vmatprep.subr.bf16.mxu0 0
        %3435 = vmatpush1.bf16.msra.mxu0 0
        %3436 = vmatprep.subr.bf16.mxu0 0
        %3437 = vmatpush1.bf16.msra.mxu0 0
        %3438 = vmatprep.subr.bf16.mxu0 0
        %3439 = vmatpush1.bf16.msra.mxu0 0
        %3440 = vmatprep.subr.bf16.mxu0 0
        %3441 = vmatpush1.bf16.msra.mxu0 0
        %3442 = vmatprep.subr.bf16.mxu0 %v3409
        %3443 = vmatpush1.bf16.msra.mxu0 %v3408
        %3444 = vmatprep.subr.bf16.mxu0 %v3405
        %3445 = vmatpush1.bf16.msra.mxu0 %v3404
        %3446 = vmatprep.subr.bf16.mxu0 %v3401
        %3447 = vmatpush1.bf16.msra.mxu0 %v3400
        %3448 = vmatprep.subr.bf16.mxu0 %v3397
        %3449 = vmatpush1.bf16.msra.mxu0 %v3396
        %3450 = vmatprep.subr.bf16.mxu0 0
        %3451 = vmatpush2.bf16.msra.mxu0 0
        %3452 = vmatprep.subr.bf16.mxu0 0
        %3453 = vmatpush2.bf16.msra.mxu0 0
        %3454 = vmatprep.subr.bf16.mxu0 0
        %3455 = vmatpush2.bf16.msra.mxu0 0
        %3456 = vmatprep.subr.bf16.mxu0 0
        %3457 = vmatpush2.bf16.msra.mxu0 0
        %3458 = vmatprep.subr.bf16.mxu0 0
        %3459 = vmatpush2.bf16.msra.mxu0 0
        %3460 = vmatprep.subr.bf16.mxu0 0
        %3461 = vmatpush2.bf16.msra.mxu0 0
        %3462 = vmatprep.subr.bf16.mxu0 0
        %3463 = vmatpush2.bf16.msra.mxu0 0
        %3464 = vmatprep.subr.bf16.mxu0 0
        %3465 = vmatpush2.bf16.msra.mxu0 0
        %3466 = vmatprep.mubr.bf16.mxu0 0
        %3467 = vmatmul.mubr.bf16.gmra.mxu0 %v3426
        %v3468 = vpop.f32.mrf.mxu0
        %v3469 = vadd.f32 0.0, %v3468
        %v3470 = vpop.f32.mrf.mxu0
        %v3471 = vadd.f32 0.0, %v3470
        %v3472 = vpop.f32.mrf.mxu0
        %v3473 = vadd.f32 0.0, %v3472
        %v3474 = vpop.f32.mrf.mxu0
        %v3475 = vadd.f32 0.0, %v3474
        %3476 = vmatprep.mubr.bf16.mxu0 0
        %3477 = vmatmul.mubr.bf16.gmra.mxu0 %v3429
        %v3478 = vpop.f32.mrf.mxu0
        %v3479 = vadd.f32 0.0, %v3478
        %v3480 = vpop.f32.mrf.mxu0
        %v3481 = vadd.f32 0.0, %v3480
        %v3482 = vpop.f32.mrf.mxu0
        %v3483 = vadd.f32 0.0, %v3482
        %v3484 = vpop.f32.mrf.mxu0
        %v3485 = vadd.f32 0.0, %v3484
        %3486 = vmatprep.mubr.bf16.mxu0 0
        %3487 = vmatmul.mubr.bf16.gmra.mxu0 %v3432
        %v3488 = vpop.f32.mrf.mxu0
        %v3489 = vadd.f32 0.0, %v3488
        %v3490 = vpop.f32.mrf.mxu0
        %v3491 = vadd.f32 0.0, %v3490
        %v3492 = vpop.f32.mrf.mxu0
        %v3493 = vpop.f32.mrf.mxu0
        %3494 = vdwg.mxu0
        %3495 = vmatprep.subr.bf16.mxu0 0
        %3496 = vmatpush1.bf16.msra.mxu0 0
        %3497 = vmatprep.subr.bf16.mxu0 0
        %3498 = vmatpush1.bf16.msra.mxu0 0
        %3499 = vmatprep.subr.bf16.mxu0 0
        %3500 = vmatpush1.bf16.msra.mxu0 0
        %3501 = vmatprep.subr.bf16.mxu0 0
        %3502 = vmatpush1.bf16.msra.mxu0 0
        %3503 = vmatprep.subr.bf16.mxu0 %v3411
        %3504 = vmatpush1.bf16.msra.mxu0 %v3410
        %3505 = vmatprep.subr.bf16.mxu0 %v3407
        %3506 = vmatpush1.bf16.msra.mxu0 %v3406
        %3507 = vmatprep.subr.bf16.mxu0 %v3403
        %3508 = vmatpush1.bf16.msra.mxu0 %v3402
        %3509 = vmatprep.subr.bf16.mxu0 %v3399
        %3510 = vmatpush1.bf16.msra.mxu0 %v3398
        %3511 = vmatprep.subr.bf16.mxu0 0
        %3512 = vmatpush2.bf16.msra.mxu0 0
        %3513 = vmatprep.subr.bf16.mxu0 0
        %3514 = vmatpush2.bf16.msra.mxu0 0
        %3515 = vmatprep.subr.bf16.mxu0 0
        %3516 = vmatpush2.bf16.msra.mxu0 0
        %3517 = vmatprep.subr.bf16.mxu0 0
        %3518 = vmatpush2.bf16.msra.mxu0 0
        %3519 = vmatprep.subr.bf16.mxu0 0
        %3520 = vmatpush2.bf16.msra.mxu0 0
        %3521 = vmatprep.subr.bf16.mxu0 0
        %3522 = vmatpush2.bf16.msra.mxu0 0
        %3523 = vmatprep.subr.bf16.mxu0 0
        %3524 = vmatpush2.bf16.msra.mxu0 0
        %3525 = vmatprep.subr.bf16.mxu0 0
        %3526 = vmatpush2.bf16.msra.mxu0 0
        %3527 = vmatprep.mubr.bf16.mxu0 0
        %3528 = vmatmul.mubr.bf16.gmra.mxu0 %v3426
        %v3529 = vpop.f32.mrf.mxu0
        %v3530 = vadd.f32 0.0, %v3529
        %v3531 = vpop.f32.mrf.mxu0
        %v3532 = vadd.f32 0.0, %v3531
        %v3533 = vpop.f32.mrf.mxu0
        %v3534 = vadd.f32 0.0, %v3533
        %v3535 = vpop.f32.mrf.mxu0
        %v3536 = vadd.f32 0.0, %v3535
        %3537 = vmatprep.mubr.bf16.mxu0 0
        %3538 = vmatmul.mubr.bf16.gmra.mxu0 %v3429
        %v3539 = vpop.f32.mrf.mxu0
        %v3540 = vadd.f32 0.0, %v3539
        %v3541 = vpop.f32.mrf.mxu0
        %v3542 = vadd.f32 0.0, %v3541
        %v3543 = vpop.f32.mrf.mxu0
        %v3544 = vadd.f32 0.0, %v3543
        %v3545 = vpop.f32.mrf.mxu0
        %v3546 = vadd.f32 0.0, %v3545
        %3547 = vmatprep.mubr.bf16.mxu0 0
        %3548 = vmatmul.mubr.bf16.gmra.mxu0 %v3432
        %v3549 = vpop.f32.mrf.mxu0
        %v3550 = vadd.f32 0.0, %v3549
        %v3551 = vpop.f32.mrf.mxu0
        %v3552 = vadd.f32 0.0, %v3551
        %v3553 = vpop.f32.mrf.mxu0
        %v3554 = vpop.f32.mrf.mxu0
        %3555 = vdwg.mxu0
        %v3556 = vpack.c.bf16 %v3473, %v3469
        %v3557 = vpack.c.bf16 %v3475, %v3471
        %v3558 = vpack.c.bf16 %v3534, %v3530
        %v3559 = vpack.c.bf16 %v3536, %v3532
        %v3560 = vpack.c.bf16 %v3483, %v3479
        %v3561 = vpack.c.bf16 %v3485, %v3481
        %v3562 = vpack.c.bf16 %v3544, %v3540
        %v3563 = vpack.c.bf16 %v3546, %v3542
        %v3564 = vpack.c.bf16 %v3489, %v3489
        %v3565 = vpack.c.bf16 %v3491, %v3491
        %v3566 = vpack.c.bf16 %v3550, %v3550
        %v3567 = vpack.c.bf16 %v3552, %v3552
        %v3580 = vunpack.c.l.b16 %v3556
        %v3581 = vunpack.c.l.b16 %v3557
        %v3582 = vunpack.c.l.b16 %v3558
        %v3583 = vunpack.c.l.b16 %v3559
        %v3584 = vunpack.c.h.b16 %v3556
        %v3585 = vunpack.c.h.b16 %v3557
        %v3586 = vunpack.c.h.b16 %v3558
        %v3587 = vunpack.c.h.b16 %v3559
        %v3588 = vunpack.c.l.b16 %v3560
        %v3589 = vunpack.c.l.b16 %v3561
        %v3590 = vunpack.c.l.b16 %v3562
        %v3591 = vunpack.c.l.b16 %v3563
        %v3592 = vunpack.c.h.b16 %v3560
        %v3593 = vunpack.c.h.b16 %v3561
        %v3594 = vunpack.c.h.b16 %v3562
        %v3595 = vunpack.c.h.b16 %v3563
        %v3596 = vunpack.c.l.b16 %v3564
        %v3597 = vunpack.c.l.b16 %v3565
        %v3598 = vunpack.c.l.b16 %v3566
        %v3599 = vunpack.c.l.b16 %v3567
        %v3600 = vpack.c.b16 %v3581, %v3580
        %v3601 = vpack.c.b16 %v3583, %v3582
        %v3602 = vpack.c.b16 %v3585, %v3584
        %v3603 = vpack.c.b16 %v3587, %v3586
        %v3604 = vpack.c.b16 %v3589, %v3588
        %v3605 = vpack.c.b16 %v3591, %v3590
        %v3606 = vpack.c.b16 %v3593, %v3592
        %v3607 = vpack.c.b16 %v3595, %v3594
        %v3608 = vpack.c.b16 %v3597, %v3596
        %v3609 = vpack.c.b16 %v3599, %v3598
        %3620 = vst [vmem:[#allocation2] sm:$0xff] %v3600
        %vm3621 = vcmask 1043456
        %vm3622 = vcmask 261124
        %vm3623 = vmor %vm3622, %vm3621
        %3624 = vst.msk [vmem:[#allocation2 + $0x8] sm:$0xff] %vm3623, %v3601
        %3625 = vst [vmem:[#allocation2 + $0x10] sm:$0xff] %v3602
        %3626 = vst.msk [vmem:[#allocation2 + $0x18] sm:$0xff] %vm3623, %v3603
        %3627 = vst [vmem:[#allocation2 + $0x20] sm:$0xff] %v3604
        %3628 = vst.msk [vmem:[#allocation2 + $0x28] sm:$0xff] %vm3623, %v3605
        %3629 = vst [vmem:[#allocation2 + $0x30] sm:$0xff] %v3606
        %3630 = vst.msk [vmem:[#allocation2 + $0x38] sm:$0xff] %vm3623, %v3607
        %3631 = vst [vmem:[#allocation2 + $0x40] sm:$0xff] %v3608
        %3632 = vst.msk [vmem:[#allocation2 + $0x48] sm:$0xff] %vm3623, %v3609
        %v3633 = vld [vmem:[#allocation2] sm:$0xff]
        %v3634 = vld [vmem:[#allocation2 + $0x8] sm:$0xff]
        %v3635 = vld [vmem:[#allocation2 + $0x10] sm:$0xff]
        %v3636 = vld [vmem:[#allocation2 + $0x18] sm:$0xff]
        %v3637 = vld [vmem:[#allocation2 + $0x20] sm:$0xff]
        %v3638 = vld [vmem:[#allocation2 + $0x28] sm:$0xff]
        %v3639 = vld [vmem:[#allocation2 + $0x30] sm:$0xff]
        %v3640 = vld [vmem:[#allocation2 + $0x38] sm:$0xff]
        %3641 = vst [vmem:[#allocation3] sm:$0xff] %v3633
        %3642 = vst.msk [vmem:[#allocation3 + $0x8] sm:$0xff] %vm3623, %v3634
        %3643 = vst [vmem:[#allocation3 + $0x28] sm:$0xff] %v3635
        %3644 = vst.msk [vmem:[#allocation3 + $0x30] sm:$0xff] %vm3623, %v3636
        %3645 = vst [vmem:[#allocation3 + $0x50] sm:$0xff] %v3637
        %3646 = vst.msk [vmem:[#allocation3 + $0x58] sm:$0xff] %vm3623, %v3638
        %3647 = vst [vmem:[#allocation3 + $0x78] sm:$0xff] %v3639
        %3648 = vst.msk [vmem:[#allocation3 + $0x80] sm:$0xff] %vm3623, %v3640
        %v3649 = vld [vmem:[#allocation2] sm:$0xff]
        %v3650 = vld [vmem:[#allocation2 + $0x8] sm:$0xff]
        %v3651 = vld [vmem:[#allocation2 + $0x10] sm:$0xff]
        %v3652 = vld [vmem:[#allocation2 + $0x18] sm:$0xff]
        %v3653 = vld [vmem:[#allocation2 + $0x20] sm:$0xff]
        %v3654 = vld [vmem:[#allocation2 + $0x28] sm:$0xff]
        %v3655 = vld [vmem:[#allocation2 + $0x30] sm:$0xff]
        %v3656 = vld [vmem:[#allocation2 + $0x38] sm:$0xff]
        %v3657 = vld [vmem:[#allocation2 + $0x40] sm:$0x11]
        %v3658 = vld [vmem:[#allocation2 + $0x48] sm:$0x11]
        %vm3659 = vsmask.f32 3328
        %vm3660 = vsmask.f32 7440
        %vm3661 = vmor %vm3659, %vm3660
        %v3663 = vshrl.u32 %v3649, 16
        %v3665 = vrot.slane %v3663, 4
        %v3666 = vshll.u32 %v3649, 16
        %v3668 = vrot.slane %v3666, 5
        %v3669 = vor.u32 %v3665, %v3668
        %v3670 = vrot.slane %v3669, 4
        %v3672 = vshll.u32 %v3651, 16
        %v3674 = vrot.slane %v3672, 5
        %v3675 = vsel %vm3661, %v3670, %v3674
        %v3677 = vshrl.u32 %v3650, 16
        %v3679 = vrot.slane %v3677, 4
        %v3680 = vshll.u32 %v3650, 16
        %v3682 = vrot.slane %v3680, 5
        %v3683 = vor.u32 %v3679, %v3682
        %v3684 = vrot.slane %v3683, 4
        %v3686 = vshll.u32 %v3652, 16
        %v3688 = vrot.slane %v3686, 5
        %v3689 = vsel %vm3661, %v3684, %v3688
        %v3690 = vshrl.u32 %v3651, 16
        %v3692 = vrot.slane %v3690, 4
        %v3693 = vor.u32 %v3692, %v3674
        %v3694 = vrot.slane %v3693, 4
        %v3696 = vshll.u32 %v3653, 16
        %v3698 = vrot.slane %v3696, 5
        %v3699 = vsel %vm3661, %v3694, %v3698
        %v3700 = vshrl.u32 %v3652, 16
        %v3702 = vrot.slane %v3700, 4
        %v3703 = vor.u32 %v3702, %v3688
        %v3704 = vrot.slane %v3703, 4
        %v3706 = vshll.u32 %v3654, 16
        %v3708 = vrot.slane %v3706, 5
        %v3709 = vsel %vm3661, %v3704, %v3708
        %v3710 = vshrl.u32 %v3653, 16
        %v3712 = vrot.slane %v3710, 4
        %v3713 = vor.u32 %v3712, %v3698
        %v3714 = vrot.slane %v3713, 4
        %v3716 = vshll.u32 %v3655, 16
        %v3718 = vrot.slane %v3716, 5
        %v3719 = vsel %vm3661, %v3714, %v3718
        %v3720 = vshrl.u32 %v3654, 16
        %v3722 = vrot.slane %v3720, 4
        %v3723 = vor.u32 %v3722, %v3708
        %v3724 = vrot.slane %v3723, 4
        %v3726 = vshll.u32 %v3656, 16
        %v3728 = vrot.slane %v3726, 5
        %v3729 = vsel %vm3661, %v3724, %v3728
        %v3730 = vshrl.u32 %v3655, 16
        %v3732 = vrot.slane %v3730, 4
        %v3733 = vor.u32 %v3732, %v3718
        %v3734 = vrot.slane %v3733, 4
        %v3736 = vshll.u32 %v3657, 16
        %v3738 = vrot.slane %v3736, 5
        %v3739 = vsel %vm3661, %v3734, %v3738
        %v3740 = vshrl.u32 %v3656, 16
        %v3742 = vrot.slane %v3740, 4
        %v3743 = vor.u32 %v3742, %v3728
        %v3744 = vrot.slane %v3743, 4
        %v3746 = vshll.u32 %v3658, 16
        %v3748 = vrot.slane %v3746, 5
        %v3749 = vsel %vm3661, %v3744, %v3748
        %3750 = vrot.lane.b32.xlu0 %v3675, 32
        %v3751 = vpop.permute.xlu0 %3750
        %3752 = vrot.lane.b32.xlu0 %v3689, 32
        %v3753 = vpop.permute.xlu0 %3752
        %3754 = vrot.lane.b32.xlu0 %v3699, 32
        %v3755 = vpop.permute.xlu0 %3754
        %3756 = vrot.lane.b32.xlu0 %v3709, 32
        %v3757 = vpop.permute.xlu0 %3756
        %3758 = vrot.lane.b32.xlu0 %v3719, 32
        %v3759 = vpop.permute.xlu0 %3758
        %3760 = vrot.lane.b32.xlu0 %v3729, 32
        %v3761 = vpop.permute.xlu0 %3760
        %3762 = vrot.lane.b32.xlu0 %v3739, 32
        %v3763 = vpop.permute.xlu0 %3762
        %3764 = vrot.lane.b32.xlu0 %v3749, 32
        %v3765 = vpop.permute.xlu0 %3764
        %v3766 = vrot.slane %v3751, 4
        %v3767 = vrot.slane %v3753, 4
        %v3768 = vrot.slane %v3755, 4
        %v3769 = vrot.slane %v3757, 4
        %v3770 = vrot.slane %v3759, 4
        %v3771 = vrot.slane %v3761, 4
        %v3772 = vrot.slane %v3763, 4
        %v3773 = vrot.slane %v3765, 4
        %vm3774 = vcmask 261120
        %v3775 = vsel %vm3774, %v3766, %v3751
        %vm3776 = vcmask 1043456
        %v3777 = vsel %vm3776, %v3766, %v3767
        %v3778 = vsel %vm3774, %v3777, %v3753
        %v3779 = vsel %vm3774, %v3768, %v3755
        %v3780 = vsel %vm3776, %v3768, %v3769
        %v3781 = vsel %vm3774, %v3780, %v3757
        %v3782 = vsel %vm3774, %v3770, %v3759
        %v3783 = vsel %vm3776, %v3770, %v3771
        %v3784 = vsel %vm3774, %v3783, %v3761
        %v3785 = vsel %vm3774, %v3772, %v3763
        %v3786 = vsel %vm3776, %v3772, %v3773
        %v3787 = vsel %vm3774, %v3786, %v3765
        %vm3796 = vcmask 1043712
        %vm3797 = vcmask 1047556
        %vm3798 = vmor %vm3797, %vm3796
        %3799 = vst.msk [vmem:[#allocation3 + $0xc] sm:$0xff] %vm3798, %v3775
        %vm3800 = vcmask 523268
        %vm3801 = vmor %vm3800, %vm3621
        %3802 = vst.msk [vmem:[#allocation3 + $0x14] sm:$0xff] %vm3801, %v3778
        %3803 = vst.msk [vmem:[#allocation3 + $0x34] sm:$0xff] %vm3798, %v3779
        %3804 = vst.msk [vmem:[#allocation3 + $0x3c] sm:$0xff] %vm3801, %v3781
        %3805 = vst.msk [vmem:[#allocation3 + $0x5c] sm:$0xff] %vm3798, %v3782
        %3806 = vst.msk [vmem:[#allocation3 + $0x64] sm:$0xff] %vm3801, %v3784
        %3807 = vst.msk [vmem:[#allocation3 + $0x84] sm:$0xff] %vm3798, %v3785
        %3808 = vst.msk [vmem:[#allocation3 + $0x8c] sm:$0xff] %vm3801, %v3787
        %v3809 = vld [vmem:[#allocation2] sm:$0xee]
        %v3810 = vld [vmem:[#allocation2 + $0x8] sm:$0xee]
        %v3811 = vld [vmem:[#allocation2 + $0x10] sm:$0xff]
        %v3812 = vld [vmem:[#allocation2 + $0x18] sm:$0xff]
        %v3813 = vld [vmem:[#allocation2 + $0x20] sm:$0xff]
        %v3814 = vld [vmem:[#allocation2 + $0x28] sm:$0xff]
        %v3815 = vld [vmem:[#allocation2 + $0x30] sm:$0xff]
        %v3816 = vld [vmem:[#allocation2 + $0x38] sm:$0xff]
        %v3817 = vld [vmem:[#allocation2 + $0x40] sm:$0x11]
        %v3818 = vld [vmem:[#allocation2 + $0x48] sm:$0x11]
        %vm3829 = vcmask 1042432
        %vm3830 = vcmask 1046532
        %vm3831 = vmor %vm3829, %vm3830
        %v3832 = vrot.slane %v3809, 5
        %v3833 = vrot.slane %v3832, 4
        %v3834 = vrot.slane %v3811, 5
        %v3835 = vsel %vm3831, %v3833, %v3834
        %v3836 = vrot.slane %v3810, 5
        %v3837 = vrot.slane %v3836, 4
        %v3838 = vrot.slane %v3812, 5
        %v3839 = vsel %vm3831, %v3837, %v3838
        %v3840 = vrot.slane %v3834, 4
        %v3841 = vrot.slane %v3813, 5
        %v3842 = vsel %vm3831, %v3840, %v3841
        %v3843 = vrot.slane %v3838, 4
        %v3844 = vrot.slane %v3814, 5
        %v3845 = vsel %vm3831, %v3843, %v3844
        %v3846 = vrot.slane %v3841, 4
        %v3847 = vrot.slane %v3815, 5
        %v3848 = vsel %vm3831, %v3846, %v3847
        %v3849 = vrot.slane %v3844, 4
        %v3850 = vrot.slane %v3816, 5
        %v3851 = vsel %vm3831, %v3849, %v3850
        %v3852 = vrot.slane %v3847, 4
        %v3853 = vrot.slane %v3817, 5
        %v3854 = vsel %vm3831, %v3852, %v3853
        %v3855 = vrot.slane %v3850, 4
        %v3856 = vrot.slane %v3818, 5
        %v3857 = vsel %vm3831, %v3855, %v3856
        %3858 = vrot.lane.b32.xlu0 %v3835, 64
        %v3859 = vpop.permute.xlu0 %3858
        %3860 = vrot.lane.b32.xlu0 %v3839, 64
        %v3861 = vpop.permute.xlu0 %3860
        %3862 = vrot.lane.b32.xlu0 %v3842, 64
        %v3863 = vpop.permute.xlu0 %3862
        %3864 = vrot.lane.b32.xlu0 %v3845, 64
        %v3865 = vpop.permute.xlu0 %3864
        %3866 = vrot.lane.b32.xlu0 %v3848, 64
        %v3867 = vpop.permute.xlu0 %3866
        %3868 = vrot.lane.b32.xlu0 %v3851, 64
        %v3869 = vpop.permute.xlu0 %3868
        %3870 = vrot.lane.b32.xlu0 %v3854, 64
        %v3871 = vpop.permute.xlu0 %3870
        %3872 = vrot.lane.b32.xlu0 %v3857, 64
        %v3873 = vpop.permute.xlu0 %3872
        %v3874 = vrot.slane %v3859, 4
        %v3875 = vrot.slane %v3861, 4
        %v3876 = vrot.slane %v3863, 4
        %v3877 = vrot.slane %v3865, 4
        %v3878 = vrot.slane %v3867, 4
        %v3879 = vrot.slane %v3869, 4
        %v3880 = vrot.slane %v3871, 4
        %v3881 = vrot.slane %v3873, 4
        %vm3882 = vcmask 523264
        %v3883 = vsel %vm3882, %v3874, %v3859
        %v3884 = vsel %vm3776, %v3874, %v3875
        %v3885 = vsel %vm3882, %v3884, %v3861
        %v3886 = vsel %vm3882, %v3876, %v3863
        %v3887 = vsel %vm3776, %v3876, %v3877
        %v3888 = vsel %vm3882, %v3887, %v3865
        %v3889 = vsel %vm3882, %v3878, %v3867
        %v3890 = vsel %vm3776, %v3878, %v3879
        %v3891 = vsel %vm3882, %v3890, %v3869
        %v3892 = vsel %vm3882, %v3880, %v3871
        %v3893 = vsel %vm3776, %v3880, %v3881
        %v3894 = vsel %vm3882, %v3893, %v3873
        %vm3903 = vcmask 1043968
        %vm3904 = vmor %vm3797, %vm3903
        %3905 = vst.msk [vmem:[#allocation3 + $0x18] sm:$0xff] %vm3904, %v3883
        %vm3906 = vcmask 785412
        %vm3907 = vmor %vm3906, %vm3621
        %3908 = vst.msk [vmem:[#allocation3 + $0x20] sm:$0xff] %vm3907, %v3885
        %3909 = vst.msk [vmem:[#allocation3 + $0x40] sm:$0xff] %vm3904, %v3886
        %3910 = vst.msk [vmem:[#allocation3 + $0x48] sm:$0xff] %vm3907, %v3888
        %3911 = vst.msk [vmem:[#allocation3 + $0x68] sm:$0xff] %vm3904, %v3889
        %3912 = vst.msk [vmem:[#allocation3 + $0x70] sm:$0xff] %vm3907, %v3891
        %3913 = vst.msk [vmem:[#allocation3 + $0x90] sm:$0xff] %vm3904, %v3892
        %3914 = vst.msk [vmem:[#allocation3 + $0x98] sm:$0xff] %vm3907, %v3894
        %v3915 = vld [vmem:[#allocation3] sm:$0xff]
        %v3916 = vld [vmem:[#allocation3 + $0x8] sm:$0xff]
        %v3917 = vld [vmem:[#allocation3 + $0x10] sm:$0xff]
        %v3918 = vld [vmem:[#allocation3 + $0x18] sm:$0xff]
        %v3919 = vld [vmem:[#allocation3 + $0x20] sm:$0xff]
        %v3920 = vld [vmem:[#allocation3 + $0x28] sm:$0xff]
        %v3921 = vld [vmem:[#allocation3 + $0x30] sm:$0xff]
        %v3922 = vld [vmem:[#allocation3 + $0x38] sm:$0xff]
        %v3923 = vld [vmem:[#allocation3 + $0x40] sm:$0xff]
        %v3924 = vld [vmem:[#allocation3 + $0x48] sm:$0xff]
        %v3925 = vld [vmem:[#allocation3 + $0x50] sm:$0xff]
        %v3926 = vld [vmem:[#allocation3 + $0x58] sm:$0xff]
        %v3927 = vld [vmem:[#allocation3 + $0x60] sm:$0xff]
        %v3928 = vld [vmem:[#allocation3 + $0x68] sm:$0xff]
        %v3929 = vld [vmem:[#allocation3 + $0x70] sm:$0xff]
        %v3930 = vld [vmem:[#allocation3 + $0x78] sm:$0xff]
        %v3931 = vld [vmem:[#allocation3 + $0x80] sm:$0xff]
        %v3932 = vld [vmem:[#allocation3 + $0x88] sm:$0xff]
        %v3933 = vld [vmem:[#allocation3 + $0x90] sm:$0xff]
        %v3934 = vld [vmem:[#allocation3 + $0x98] sm:$0xff]
        %v3935 = vld [vmem:[%s5] sm:$0xff]
        %v3936 = vld [vmem:[%s5 + $0x8] sm:$0xff]
        %v3937 = vld [vmem:[%s5 + $0x10] sm:$0xff]
        %v3938 = vld [vmem:[%s5 + $0x18] sm:$0xff]
        %v3939 = vld [vmem:[%s5 + $0x20] sm:$0xff]
        %v3940 = vld [vmem:[%s5 + $0x28] sm:$0xff]
        %v3941 = vld [vmem:[%s5 + $0x30] sm:$0xff]
        %v3942 = vld [vmem:[%s5 + $0x38] sm:$0xff]
        %v3943 = vld [vmem:[%s5 + $0x40] sm:$0xff]
        %v3944 = vld [vmem:[%s5 + $0x48] sm:$0xff]
        %v3945 = vld [vmem:[%s5 + $0x50] sm:$0xff]
        %v3946 = vld [vmem:[%s5 + $0x58] sm:$0xff]
        %v3947 = vld [vmem:[%s5 + $0x60] sm:$0xff]
        %v3948 = vld [vmem:[%s5 + $0x68] sm:$0xff]
        %v3949 = vld [vmem:[%s5 + $0x70] sm:$0xff]
        %v3950 = vld [vmem:[%s5 + $0x78] sm:$0xff]
        %v3951 = vld [vmem:[%s5 + $0x80] sm:$0xff]
        %v3952 = vld [vmem:[%s5 + $0x88] sm:$0xff]
        %v3953 = vld [vmem:[%s5 + $0x90] sm:$0xff]
        %v3954 = vld [vmem:[%s5 + $0x98] sm:$0xff]
        %v3955 = vld [vmem:[%s5 + $0xa0] sm:$0xff]
        %v3956 = vld [vmem:[%s5 + $0xa8] sm:$0xff]
        %v3957 = vld [vmem:[%s5 + $0xb0] sm:$0xff]
        %v3958 = vld [vmem:[%s5 + $0xb8] sm:$0xff]
        %v3959 = vld [vmem:[%s5 + $0xc0] sm:$0xff]
        %v3960 = vld [vmem:[%s5 + $0xc8] sm:$0xff]
        %v3961 = vld [vmem:[%s5 + $0xd0] sm:$0xff]
        %v3962 = vld [vmem:[%s5 + $0xd8] sm:$0xff]
        %v3963 = vld [vmem:[%s5 + $0xe0] sm:$0xff]
        %v3964 = vld [vmem:[%s5 + $0xe8] sm:$0xff]
        %v3965 = vld [vmem:[%s5 + $0xf0] sm:$0xff]
        %v3966 = vld [vmem:[%s5 + $0xf8] sm:$0xff]
        %v3967 = vld [vmem:[%s5 + $0x100] sm:$0xff]
        %v3968 = vld [vmem:[%s5 + $0x108] sm:$0xff]
        %v3969 = vld [vmem:[%s5 + $0x110] sm:$0xff]
        %v3970 = vld [vmem:[%s5 + $0x118] sm:$0xff]
        %v3971 = vld [vmem:[%s5 + $0x120] sm:$0xff]
        %v3972 = vld [vmem:[%s5 + $0x128] sm:$0xff]
        %v3973 = vld [vmem:[%s5 + $0x130] sm:$0xff]
        %v3974 = vld [vmem:[%s5 + $0x138] sm:$0xff]
        %v3975 = vld [vmem:[%s5 + $0x140] sm:$0xff]
        %v3976 = vld [vmem:[%s5 + $0x148] sm:$0xff]
        %v3977 = vld [vmem:[%s5 + $0x150] sm:$0xff]
        %v3978 = vld [vmem:[%s5 + $0x158] sm:$0xff]
        %v3979 = vld [vmem:[%s5 + $0x160] sm:$0xff]
        %v3980 = vld [vmem:[%s5 + $0x168] sm:$0xff]
        %v3981 = vld [vmem:[%s5 + $0x170] sm:$0xff]
        %v3982 = vld [vmem:[%s5 + $0x178] sm:$0xff]
        %v3983 = vld [vmem:[%s5 + $0x180] sm:$0xff]
        %v3984 = vld [vmem:[%s5 + $0x188] sm:$0xff]
        %v3985 = vld [vmem:[%s5 + $0x190] sm:$0xff]
        %v3986 = vld [vmem:[%s5 + $0x198] sm:$0xff]
        %v3987 = vld [vmem:[%s5 + $0x1a0] sm:$0xff]
        %v3988 = vld [vmem:[%s5 + $0x1a8] sm:$0xff]
        %v3989 = vld [vmem:[%s5 + $0x1b0] sm:$0xff]
        %v3990 = vld [vmem:[%s5 + $0x1b8] sm:$0xff]
        %v3991 = vld [vmem:[%s5 + $0x1c0] sm:$0xff]
        %v3992 = vld [vmem:[%s5 + $0x1c8] sm:$0xff]
        %v3993 = vld [vmem:[%s5 + $0x1d0] sm:$0xff]
        %v3994 = vld [vmem:[%s5 + $0x1d8] sm:$0xff]
        %v3995 = vld [vmem:[%s5 + $0x1e0] sm:$0xff]
        %v3996 = vld [vmem:[%s5 + $0x1e8] sm:$0xff]
        %v3997 = vld [vmem:[%s5 + $0x1f0] sm:$0xff]
        %v3998 = vld [vmem:[%s5 + $0x1f8] sm:$0xff]
        %v3999 = vld [vmem:[%s5 + $0x200] sm:$0xff]
        %v4000 = vld [vmem:[%s5 + $0x208] sm:$0xff]
        %v4001 = vld [vmem:[%s5 + $0x210] sm:$0xff]
        %v4002 = vld [vmem:[%s5 + $0x218] sm:$0xff]
        %v4003 = vld [vmem:[%s5 + $0x220] sm:$0xff]
        %v4004 = vld [vmem:[%s5 + $0x228] sm:$0xff]
        %v4005 = vld [vmem:[%s5 + $0x230] sm:$0xff]
        %v4006 = vld [vmem:[%s5 + $0x238] sm:$0xff]
        %v4007 = vld [vmem:[%s5 + $0x240] sm:$0xff]
        %v4008 = vld [vmem:[%s5 + $0x248] sm:$0xff]
        %v4009 = vld [vmem:[%s5 + $0x250] sm:$0xff]
        %v4010 = vld [vmem:[%s5 + $0x258] sm:$0xff]
        %v4011 = vld [vmem:[%s5 + $0x260] sm:$0xff]
        %v4012 = vld [vmem:[%s5 + $0x268] sm:$0xff]
        %v4013 = vld [vmem:[%s5 + $0x270] sm:$0xff]
        %v4014 = vld [vmem:[%s5 + $0x278] sm:$0xff]
        %v4015 = vld [vmem:[%s5 + $0x280] sm:$0xff]
        %v4016 = vld [vmem:[%s5 + $0x288] sm:$0xff]
        %v4017 = vld [vmem:[%s5 + $0x290] sm:$0xff]
        %v4018 = vld [vmem:[%s5 + $0x298] sm:$0xff]
        %v4019 = vld [vmem:[%s5 + $0x2a0] sm:$0xff]
        %v4020 = vld [vmem:[%s5 + $0x2a8] sm:$0xff]
        %v4021 = vld [vmem:[%s5 + $0x2b0] sm:$0xff]
        %v4022 = vld [vmem:[%s5 + $0x2b8] sm:$0xff]
        %v4023 = vld [vmem:[%s5 + $0x2c0] sm:$0xff]
        %v4024 = vld [vmem:[%s5 + $0x2c8] sm:$0xff]
        %v4025 = vld [vmem:[%s5 + $0x2d0] sm:$0xff]
        %v4026 = vld [vmem:[%s5 + $0x2d8] sm:$0xff]
        %v4027 = vld [vmem:[%s5 + $0x2e0] sm:$0xff]
        %v4028 = vld [vmem:[%s5 + $0x2e8] sm:$0xff]
        %v4029 = vld [vmem:[%s5 + $0x2f0] sm:$0xff]
        %v4030 = vld [vmem:[%s5 + $0x2f8] sm:$0xff]
        %v4031 = vld [vmem:[%s5 + $0x300] sm:$0xff]
        %v4032 = vld [vmem:[%s5 + $0x308] sm:$0xff]
        %v4033 = vld [vmem:[%s5 + $0x310] sm:$0xff]
        %v4034 = vld [vmem:[%s5 + $0x318] sm:$0xff]
        %v4035 = vld [vmem:[%s5 + $0x320] sm:$0xff]
        %v4036 = vld [vmem:[%s5 + $0x328] sm:$0xff]
        %v4037 = vld [vmem:[%s5 + $0x330] sm:$0xff]
        %v4038 = vld [vmem:[%s5 + $0x338] sm:$0xff]
        %v4039 = vld [vmem:[%s5 + $0x340] sm:$0xff]
        %v4040 = vld [vmem:[%s5 + $0x348] sm:$0xff]
        %v4041 = vld [vmem:[%s5 + $0x350] sm:$0xff]
        %v4042 = vld [vmem:[%s5 + $0x358] sm:$0xff]
        %v4043 = vld [vmem:[%s5 + $0x360] sm:$0xff]
        %v4044 = vld [vmem:[%s5 + $0x368] sm:$0xff]
        %v4045 = vld [vmem:[%s5 + $0x370] sm:$0xff]
        %v4046 = vld [vmem:[%s5 + $0x378] sm:$0xff]
        %v4047 = vld [vmem:[%s5 + $0x380] sm:$0xff]
        %v4048 = vld [vmem:[%s5 + $0x388] sm:$0xff]
        %v4049 = vld [vmem:[%s5 + $0x390] sm:$0xff]
        %v4050 = vld [vmem:[%s5 + $0x398] sm:$0xff]
        %v4051 = vld [vmem:[%s5 + $0x3a0] sm:$0xff]
        %v4052 = vld [vmem:[%s5 + $0x3a8] sm:$0xff]
        %v4053 = vld [vmem:[%s5 + $0x3b0] sm:$0xff]
        %v4054 = vld [vmem:[%s5 + $0x3b8] sm:$0xff]
        %v4055 = vld [vmem:[%s5 + $0x3c0] sm:$0xff]
        %v4056 = vld [vmem:[%s5 + $0x3c8] sm:$0xff]
        %v4057 = vld [vmem:[%s5 + $0x3d0] sm:$0xff]
        %v4058 = vld [vmem:[%s5 + $0x3d8] sm:$0xff]
        %v4059 = vld [vmem:[%s5 + $0x3e0] sm:$0xff]
        %v4060 = vld [vmem:[%s5 + $0x3e8] sm:$0xff]
        %v4061 = vld [vmem:[%s5 + $0x3f0] sm:$0xff]
        %v4062 = vld [vmem:[%s5 + $0x3f8] sm:$0xff]
        %v4063 = vld [vmem:[%s5 + $0x400] sm:$0xff]
        %v4064 = vld [vmem:[%s5 + $0x408] sm:$0xff]
        %v4065 = vld [vmem:[%s5 + $0x410] sm:$0xff]
        %v4066 = vld [vmem:[%s5 + $0x418] sm:$0xff]
        %v4067 = vld [vmem:[%s5 + $0x420] sm:$0xff]
        %v4068 = vld [vmem:[%s5 + $0x428] sm:$0xff]
        %v4069 = vld [vmem:[%s5 + $0x430] sm:$0xff]
        %v4070 = vld [vmem:[%s5 + $0x438] sm:$0xff]
        %v4071 = vld [vmem:[%s5 + $0x440] sm:$0xff]
        %v4072 = vld [vmem:[%s5 + $0x448] sm:$0xff]
        %v4073 = vld [vmem:[%s5 + $0x450] sm:$0xff]
        %v4074 = vld [vmem:[%s5 + $0x458] sm:$0xff]
        %v4075 = vld [vmem:[%s5 + $0x460] sm:$0xff]
        %v4076 = vld [vmem:[%s5 + $0x468] sm:$0xff]
        %v4077 = vld [vmem:[%s5 + $0x470] sm:$0xff]
        %v4078 = vld [vmem:[%s5 + $0x478] sm:$0xff]
        %v4079 = vld [vmem:[%s5 + $0x480] sm:$0xff]
        %v4080 = vld [vmem:[%s5 + $0x488] sm:$0xff]
        %v4081 = vld [vmem:[%s5 + $0x490] sm:$0xff]
        %v4082 = vld [vmem:[%s5 + $0x498] sm:$0xff]
        %v4083 = vld [vmem:[%s5 + $0x4a0] sm:$0xff]
        %v4084 = vld [vmem:[%s5 + $0x4a8] sm:$0xff]
        %v4085 = vld [vmem:[%s5 + $0x4b0] sm:$0xff]
        %v4086 = vld [vmem:[%s5 + $0x4b8] sm:$0xff]
        %v4087 = vld [vmem:[%s5 + $0x4c0] sm:$0xff]
        %v4088 = vld [vmem:[%s5 + $0x4c8] sm:$0xff]
        %v4089 = vld [vmem:[%s5 + $0x4d0] sm:$0xff]
        %v4090 = vld [vmem:[%s5 + $0x4d8] sm:$0xff]
        %v4091 = vld [vmem:[%s5 + $0x4e0] sm:$0xff]
        %v4092 = vld [vmem:[%s5 + $0x4e8] sm:$0xff]
        %v4093 = vld [vmem:[%s5 + $0x4f0] sm:$0xff]
        %v4094 = vld [vmem:[%s5 + $0x4f8] sm:$0xff]
        %v4095 = vld [vmem:[%s5 + $0x500] sm:$0xff]
        %v4096 = vld [vmem:[%s5 + $0x508] sm:$0xff]
        %v4097 = vld [vmem:[%s5 + $0x510] sm:$0xff]
        %v4098 = vld [vmem:[%s5 + $0x518] sm:$0xff]
        %v4099 = vld [vmem:[%s5 + $0x520] sm:$0xff]
        %v4100 = vld [vmem:[%s5 + $0x528] sm:$0xff]
        %v4101 = vld [vmem:[%s5 + $0x530] sm:$0xff]
        %v4102 = vld [vmem:[%s5 + $0x538] sm:$0xff]
        %v4103 = vld [vmem:[%s5 + $0x540] sm:$0xff]
        %v4104 = vld [vmem:[%s5 + $0x548] sm:$0xff]
        %v4105 = vld [vmem:[%s5 + $0x550] sm:$0xff]
        %v4106 = vld [vmem:[%s5 + $0x558] sm:$0xff]
        %v4107 = vld [vmem:[%s5 + $0x560] sm:$0xff]
        %v4108 = vld [vmem:[%s5 + $0x568] sm:$0xff]
        %v4109 = vld [vmem:[%s5 + $0x570] sm:$0xff]
        %v4110 = vld [vmem:[%s5 + $0x578] sm:$0xff]
        %v4111 = vld [vmem:[%s5 + $0x580] sm:$0xff]
        %v4112 = vld [vmem:[%s5 + $0x588] sm:$0xff]
        %v4113 = vld [vmem:[%s5 + $0x590] sm:$0xff]
        %v4114 = vld [vmem:[%s5 + $0x598] sm:$0xff]
        %v4115 = vld [vmem:[%s5 + $0x5a0] sm:$0xff]
        %v4116 = vld [vmem:[%s5 + $0x5a8] sm:$0xff]
        %v4117 = vld [vmem:[%s5 + $0x5b0] sm:$0xff]
        %v4118 = vld [vmem:[%s5 + $0x5b8] sm:$0xff]
        %v4119 = vld [vmem:[%s5 + $0x5c0] sm:$0xff]
        %v4120 = vld [vmem:[%s5 + $0x5c8] sm:$0xff]
        %v4121 = vld [vmem:[%s5 + $0x5d0] sm:$0xff]
        %v4122 = vld [vmem:[%s5 + $0x5d8] sm:$0xff]
        %v4123 = vld [vmem:[%s5 + $0x5e0] sm:$0xff]
        %v4124 = vld [vmem:[%s5 + $0x5e8] sm:$0xff]
        %v4125 = vld [vmem:[%s5 + $0x5f0] sm:$0xff]
        %v4126 = vld [vmem:[%s5 + $0x5f8] sm:$0xff]
        %v4127 = vld [vmem:[%s5 + $0x600] sm:$0xff]
        %v4128 = vld [vmem:[%s5 + $0x608] sm:$0xff]
        %v4129 = vld [vmem:[%s5 + $0x610] sm:$0xff]
        %v4130 = vld [vmem:[%s5 + $0x618] sm:$0xff]
        %v4131 = vld [vmem:[%s5 + $0x620] sm:$0xff]
        %v4132 = vld [vmem:[%s5 + $0x628] sm:$0xff]
        %v4133 = vld [vmem:[%s5 + $0x630] sm:$0xff]
        %v4134 = vld [vmem:[%s5 + $0x638] sm:$0xff]
        %v4135 = vld [vmem:[%s5 + $0x640] sm:$0xff]
        %v4136 = vld [vmem:[%s5 + $0x648] sm:$0xff]
        %v4137 = vld [vmem:[%s5 + $0x650] sm:$0xff]
        %v4138 = vld [vmem:[%s5 + $0x658] sm:$0xff]
        %v4139 = vld [vmem:[%s5 + $0x660] sm:$0xff]
        %v4140 = vld [vmem:[%s5 + $0x668] sm:$0xff]
        %v4141 = vld [vmem:[%s5 + $0x670] sm:$0xff]
        %v4142 = vld [vmem:[%s5 + $0x678] sm:$0xff]
        %v4143 = vld [vmem:[%s5 + $0x680] sm:$0xff]
        %v4144 = vld [vmem:[%s5 + $0x688] sm:$0xff]
        %v4145 = vld [vmem:[%s5 + $0x690] sm:$0xff]
        %v4146 = vld [vmem:[%s5 + $0x698] sm:$0xff]
        %v4147 = vld [vmem:[%s5 + $0x6a0] sm:$0xff]
        %v4148 = vld [vmem:[%s5 + $0x6a8] sm:$0xff]
        %v4149 = vld [vmem:[%s5 + $0x6b0] sm:$0xff]
        %v4150 = vld [vmem:[%s5 + $0x6b8] sm:$0xff]
        %v4151 = vld [vmem:[%s5 + $0x6c0] sm:$0xff]
        %v4152 = vld [vmem:[%s5 + $0x6c8] sm:$0xff]
        %v4153 = vld [vmem:[%s5 + $0x6d0] sm:$0xff]
        %v4154 = vld [vmem:[%s5 + $0x6d8] sm:$0xff]
        %v4155 = vld [vmem:[%s5 + $0x6e0] sm:$0xff]
        %v4156 = vld [vmem:[%s5 + $0x6e8] sm:$0xff]
        %v4157 = vld [vmem:[%s5 + $0x6f0] sm:$0xff]
        %v4158 = vld [vmem:[%s5 + $0x6f8] sm:$0xff]
        %v4159 = vld [vmem:[%s5 + $0x700] sm:$0xff]
        %v4160 = vld [vmem:[%s5 + $0x708] sm:$0xff]
        %v4161 = vld [vmem:[%s5 + $0x710] sm:$0xff]
        %v4162 = vld [vmem:[%s5 + $0x718] sm:$0xff]
        %v4163 = vld [vmem:[%s5 + $0x720] sm:$0xff]
        %v4164 = vld [vmem:[%s5 + $0x728] sm:$0xff]
        %v4165 = vld [vmem:[%s5 + $0x730] sm:$0xff]
        %v4166 = vld [vmem:[%s5 + $0x738] sm:$0xff]
        %v4167 = vld [vmem:[%s5 + $0x740] sm:$0xff]
        %v4168 = vld [vmem:[%s5 + $0x748] sm:$0xff]
        %v4169 = vld [vmem:[%s5 + $0x750] sm:$0xff]
        %v4170 = vld [vmem:[%s5 + $0x758] sm:$0xff]
        %v4171 = vld [vmem:[%s5 + $0x760] sm:$0xff]
        %v4172 = vld [vmem:[%s5 + $0x768] sm:$0xff]
        %v4173 = vld [vmem:[%s5 + $0x770] sm:$0xff]
        %v4174 = vld [vmem:[%s5 + $0x778] sm:$0xff]
        %v4175 = vld [vmem:[%s5 + $0x780] sm:$0xff]
        %v4176 = vld [vmem:[%s5 + $0x788] sm:$0xff]
        %v4177 = vld [vmem:[%s5 + $0x790] sm:$0xff]
        %v4178 = vld [vmem:[%s5 + $0x798] sm:$0xff]
        %v4179 = vld [vmem:[%s5 + $0x7a0] sm:$0xff]
        %v4180 = vld [vmem:[%s5 + $0x7a8] sm:$0xff]
        %v4181 = vld [vmem:[%s5 + $0x7b0] sm:$0xff]
        %v4182 = vld [vmem:[%s5 + $0x7b8] sm:$0xff]
        %v4183 = vld [vmem:[%s5 + $0x7c0] sm:$0xff]
        %v4184 = vld [vmem:[%s5 + $0x7c8] sm:$0xff]
        %v4185 = vld [vmem:[%s5 + $0x7d0] sm:$0xff]
        %v4186 = vld [vmem:[%s5 + $0x7d8] sm:$0xff]
        %v4187 = vld [vmem:[%s5 + $0x7e0] sm:$0xff]
        %v4188 = vld [vmem:[%s5 + $0x7e8] sm:$0xff]
        %v4189 = vld [vmem:[%s5 + $0x7f0] sm:$0xff]
        %v4190 = vld [vmem:[%s5 + $0x7f8] sm:$0xff]
        %v4191 = vld [vmem:[%s5 + $0x800] sm:$0xff]
        %v4192 = vld [vmem:[%s5 + $0x808] sm:$0xff]
        %v4193 = vld [vmem:[%s5 + $0x810] sm:$0xff]
        %v4194 = vld [vmem:[%s5 + $0x818] sm:$0xff]
        %v4195 = vld [vmem:[%s5 + $0x820] sm:$0xff]
        %v4196 = vld [vmem:[%s5 + $0x828] sm:$0xff]
        %v4197 = vld [vmem:[%s5 + $0x830] sm:$0xff]
        %v4198 = vld [vmem:[%s5 + $0x838] sm:$0xff]
        %v4199 = vld [vmem:[%s5 + $0x840] sm:$0xff]
        %v4200 = vld [vmem:[%s5 + $0x848] sm:$0xff]
        %v4201 = vld [vmem:[%s5 + $0x850] sm:$0xff]
        %v4202 = vld [vmem:[%s5 + $0x858] sm:$0xff]
        %v4203 = vld [vmem:[%s5 + $0x860] sm:$0xff]
        %v4204 = vld [vmem:[%s5 + $0x868] sm:$0xff]
        %v4205 = vld [vmem:[%s5 + $0x870] sm:$0xff]
        %v4206 = vld [vmem:[%s5 + $0x878] sm:$0xff]
        %v4207 = vld [vmem:[%s5 + $0x880] sm:$0xff]
        %v4208 = vld [vmem:[%s5 + $0x888] sm:$0xff]
        %v4209 = vld [vmem:[%s5 + $0x890] sm:$0xff]
        %v4210 = vld [vmem:[%s5 + $0x898] sm:$0xff]
        %v4211 = vld [vmem:[%s5 + $0x8a0] sm:$0xff]
        %v4212 = vld [vmem:[%s5 + $0x8a8] sm:$0xff]
        %v4213 = vld [vmem:[%s5 + $0x8b0] sm:$0xff]
        %v4214 = vld [vmem:[%s5 + $0x8b8] sm:$0xff]
        %v4215 = vld [vmem:[%s5 + $0x8c0] sm:$0xff]
        %v4216 = vld [vmem:[%s5 + $0x8c8] sm:$0xff]
        %v4217 = vld [vmem:[%s5 + $0x8d0] sm:$0xff]
        %v4218 = vld [vmem:[%s5 + $0x8d8] sm:$0xff]
        %v4219 = vld [vmem:[%s5 + $0x8e0] sm:$0xff]
        %v4220 = vld [vmem:[%s5 + $0x8e8] sm:$0xff]
        %v4221 = vld [vmem:[%s5 + $0x8f0] sm:$0xff]
        %v4222 = vld [vmem:[%s5 + $0x8f8] sm:$0xff]
        %v4223 = vld [vmem:[%s5 + $0x900] sm:$0xff]
        %v4224 = vld [vmem:[%s5 + $0x908] sm:$0xff]
        %v4225 = vld [vmem:[%s5 + $0x910] sm:$0xff]
        %v4226 = vld [vmem:[%s5 + $0x918] sm:$0xff]
        %v4227 = vld [vmem:[%s5 + $0x920] sm:$0xff]
        %v4228 = vld [vmem:[%s5 + $0x928] sm:$0xff]
        %v4229 = vld [vmem:[%s5 + $0x930] sm:$0xff]
        %v4230 = vld [vmem:[%s5 + $0x938] sm:$0xff]
        %v4231 = vld [vmem:[%s5 + $0x940] sm:$0xff]
        %v4232 = vld [vmem:[%s5 + $0x948] sm:$0xff]
        %v4233 = vld [vmem:[%s5 + $0x950] sm:$0xff]
        %v4234 = vld [vmem:[%s5 + $0x958] sm:$0xff]
        %v4235 = vld [vmem:[%s5 + $0x960] sm:$0xff]
        %v4236 = vld [vmem:[%s5 + $0x968] sm:$0xff]
        %v4237 = vld [vmem:[%s5 + $0x970] sm:$0xff]
        %v4238 = vld [vmem:[%s5 + $0x978] sm:$0xff]
        %v4239 = vld [vmem:[%s5 + $0x980] sm:$0xff]
        %v4240 = vld [vmem:[%s5 + $0x988] sm:$0xff]
        %v4241 = vld [vmem:[%s5 + $0x990] sm:$0xff]
        %v4242 = vld [vmem:[%s5 + $0x998] sm:$0xff]
        %v4243 = vld [vmem:[%s5 + $0x9a0] sm:$0xff]
        %v4244 = vld [vmem:[%s5 + $0x9a8] sm:$0xff]
        %v4245 = vld [vmem:[%s5 + $0x9b0] sm:$0xff]
        %v4246 = vld [vmem:[%s5 + $0x9b8] sm:$0xff]
        %v4247 = vld [vmem:[%s5 + $0x9c0] sm:$0xff]
        %v4248 = vld [vmem:[%s5 + $0x9c8] sm:$0xff]
        %v4249 = vld [vmem:[%s5 + $0x9d0] sm:$0xff]
        %v4250 = vld [vmem:[%s5 + $0x9d8] sm:$0xff]
        %v4251 = vld [vmem:[%s5 + $0x9e0] sm:$0xff]
        %v4252 = vld [vmem:[%s5 + $0x9e8] sm:$0xff]
        %v4253 = vld [vmem:[%s5 + $0x9f0] sm:$0xff]
        %v4254 = vld [vmem:[%s5 + $0x9f8] sm:$0xff]
        %v4255 = vld [vmem:[%s5 + $0xa00] sm:$0xff]
        %v4256 = vld [vmem:[%s5 + $0xa08] sm:$0xff]
        %v4257 = vld [vmem:[%s5 + $0xa10] sm:$0xff]
        %v4258 = vld [vmem:[%s5 + $0xa18] sm:$0xff]
        %v4259 = vld [vmem:[%s5 + $0xa20] sm:$0xff]
        %v4260 = vld [vmem:[%s5 + $0xa28] sm:$0xff]
        %v4261 = vld [vmem:[%s5 + $0xa30] sm:$0xff]
        %v4262 = vld [vmem:[%s5 + $0xa38] sm:$0xff]
        %v4263 = vld [vmem:[%s5 + $0xa40] sm:$0xff]
        %v4264 = vld [vmem:[%s5 + $0xa48] sm:$0xff]
        %v4265 = vld [vmem:[%s5 + $0xa50] sm:$0xff]
        %v4266 = vld [vmem:[%s5 + $0xa58] sm:$0xff]
        %v4267 = vld [vmem:[%s5 + $0xa60] sm:$0xff]
        %v4268 = vld [vmem:[%s5 + $0xa68] sm:$0xff]
        %v4269 = vld [vmem:[%s5 + $0xa70] sm:$0xff]
        %v4270 = vld [vmem:[%s5 + $0xa78] sm:$0xff]
        %v4271 = vld [vmem:[%s5 + $0xa80] sm:$0xff]
        %v4272 = vld [vmem:[%s5 + $0xa88] sm:$0xff]
        %v4273 = vld [vmem:[%s5 + $0xa90] sm:$0xff]
        %v4274 = vld [vmem:[%s5 + $0xa98] sm:$0xff]
        %v4275 = vld [vmem:[%s5 + $0xaa0] sm:$0xff]
        %v4276 = vld [vmem:[%s5 + $0xaa8] sm:$0xff]
        %v4277 = vld [vmem:[%s5 + $0xab0] sm:$0xff]
        %v4278 = vld [vmem:[%s5 + $0xab8] sm:$0xff]
        %v4279 = vld [vmem:[%s5 + $0xac0] sm:$0xff]
        %v4280 = vld [vmem:[%s5 + $0xac8] sm:$0xff]
        %v4281 = vld [vmem:[%s5 + $0xad0] sm:$0xff]
        %v4282 = vld [vmem:[%s5 + $0xad8] sm:$0xff]
        %v4283 = vld [vmem:[%s5 + $0xae0] sm:$0xff]
        %v4284 = vld [vmem:[%s5 + $0xae8] sm:$0xff]
        %v4285 = vld [vmem:[%s5 + $0xaf0] sm:$0xff]
        %v4286 = vld [vmem:[%s5 + $0xaf8] sm:$0xff]
        %v4287 = vld [vmem:[%s5 + $0xb00] sm:$0xff]
        %v4288 = vld [vmem:[%s5 + $0xb08] sm:$0xff]
        %v4289 = vld [vmem:[%s5 + $0xb10] sm:$0xff]
        %v4290 = vld [vmem:[%s5 + $0xb18] sm:$0xff]
        %v4291 = vld [vmem:[%s5 + $0xb20] sm:$0xff]
        %v4292 = vld [vmem:[%s5 + $0xb28] sm:$0xff]
        %v4293 = vld [vmem:[%s5 + $0xb30] sm:$0xff]
        %v4294 = vld [vmem:[%s5 + $0xb38] sm:$0xff]
        %v4295 = vld [vmem:[%s5 + $0xb40] sm:$0xff]
        %v4296 = vld [vmem:[%s5 + $0xb48] sm:$0xff]
        %v4297 = vld [vmem:[%s5 + $0xb50] sm:$0xff]
        %v4298 = vld [vmem:[%s5 + $0xb58] sm:$0xff]
        %v4299 = vld [vmem:[%s5 + $0xb60] sm:$0xff]
        %v4300 = vld [vmem:[%s5 + $0xb68] sm:$0xff]
        %v4301 = vld [vmem:[%s5 + $0xb70] sm:$0xff]
        %v4302 = vld [vmem:[%s5 + $0xb78] sm:$0xff]
        %v4303 = vld [vmem:[%s5 + $0xb80] sm:$0xff]
        %v4304 = vld [vmem:[%s5 + $0xb88] sm:$0xff]
        %v4305 = vld [vmem:[%s5 + $0xb90] sm:$0xff]
        %v4306 = vld [vmem:[%s5 + $0xb98] sm:$0xff]
        %v4307 = vld [vmem:[%s5 + $0xba0] sm:$0xff]
        %v4308 = vld [vmem:[%s5 + $0xba8] sm:$0xff]
        %v4309 = vld [vmem:[%s5 + $0xbb0] sm:$0xff]
        %v4310 = vld [vmem:[%s5 + $0xbb8] sm:$0xff]
        %v4311 = vld [vmem:[%s5 + $0xbc0] sm:$0xff]
        %v4312 = vld [vmem:[%s5 + $0xbc8] sm:$0xff]
        %v4313 = vld [vmem:[%s5 + $0xbd0] sm:$0xff]
        %v4314 = vld [vmem:[%s5 + $0xbd8] sm:$0xff]
        %v4315 = vld [vmem:[%s5 + $0xbe0] sm:$0xff]
        %v4316 = vld [vmem:[%s5 + $0xbe8] sm:$0xff]
        %v4317 = vld [vmem:[%s5 + $0xbf0] sm:$0xff]
        %v4318 = vld [vmem:[%s5 + $0xbf8] sm:$0xff]
        %v4319 = vld [vmem:[%s5 + $0xc00] sm:$0xff]
        %v4320 = vld [vmem:[%s5 + $0xc08] sm:$0xff]
        %v4321 = vld [vmem:[%s5 + $0xc10] sm:$0xff]
        %v4322 = vld [vmem:[%s5 + $0xc18] sm:$0xff]
        %v4323 = vld [vmem:[%s5 + $0xc20] sm:$0xff]
        %v4324 = vld [vmem:[%s5 + $0xc28] sm:$0xff]
        %v4325 = vld [vmem:[%s5 + $0xc30] sm:$0xff]
        %v4326 = vld [vmem:[%s5 + $0xc38] sm:$0xff]
        %v4327 = vld [vmem:[%s5 + $0xc40] sm:$0xff]
        %v4328 = vld [vmem:[%s5 + $0xc48] sm:$0xff]
        %v4329 = vld [vmem:[%s5 + $0xc50] sm:$0xff]
        %v4330 = vld [vmem:[%s5 + $0xc58] sm:$0xff]
        %v4331 = vld [vmem:[%s5 + $0xc60] sm:$0xff]
        %v4332 = vld [vmem:[%s5 + $0xc68] sm:$0xff]
        %v4333 = vld [vmem:[%s5 + $0xc70] sm:$0xff]
        %v4334 = vld [vmem:[%s5 + $0xc78] sm:$0xff]
        %v4335 = vld [vmem:[%s5 + $0xc80] sm:$0xff]
        %v4336 = vld [vmem:[%s5 + $0xc88] sm:$0xff]
        %v4337 = vld [vmem:[%s5 + $0xc90] sm:$0xff]
        %v4338 = vld [vmem:[%s5 + $0xc98] sm:$0xff]
        %v4339 = vld [vmem:[%s5 + $0xca0] sm:$0xff]
        %v4340 = vld [vmem:[%s5 + $0xca8] sm:$0xff]
        %v4341 = vld [vmem:[%s5 + $0xcb0] sm:$0xff]
        %v4342 = vld [vmem:[%s5 + $0xcb8] sm:$0xff]
        %v4343 = vld [vmem:[%s5 + $0xcc0] sm:$0xff]
        %v4344 = vld [vmem:[%s5 + $0xcc8] sm:$0xff]
        %v4345 = vld [vmem:[%s5 + $0xcd0] sm:$0xff]
        %v4346 = vld [vmem:[%s5 + $0xcd8] sm:$0xff]
        %v4347 = vld [vmem:[%s5 + $0xce0] sm:$0xff]
        %v4348 = vld [vmem:[%s5 + $0xce8] sm:$0xff]
        %v4349 = vld [vmem:[%s5 + $0xcf0] sm:$0xff]
        %v4350 = vld [vmem:[%s5 + $0xcf8] sm:$0xff]
        %v4351 = vld [vmem:[%s5 + $0xd00] sm:$0xff]
        %v4352 = vld [vmem:[%s5 + $0xd08] sm:$0xff]
        %v4353 = vld [vmem:[%s5 + $0xd10] sm:$0xff]
        %v4354 = vld [vmem:[%s5 + $0xd18] sm:$0xff]
        %v4355 = vld [vmem:[%s5 + $0xd20] sm:$0xff]
        %v4356 = vld [vmem:[%s5 + $0xd28] sm:$0xff]
        %v4357 = vld [vmem:[%s5 + $0xd30] sm:$0xff]
        %v4358 = vld [vmem:[%s5 + $0xd38] sm:$0xff]
        %v4359 = vld [vmem:[%s5 + $0xd40] sm:$0xff]
        %v4360 = vld [vmem:[%s5 + $0xd48] sm:$0xff]
        %v4361 = vld [vmem:[%s5 + $0xd50] sm:$0xff]
        %v4362 = vld [vmem:[%s5 + $0xd58] sm:$0xff]
        %v4363 = vld [vmem:[%s5 + $0xd60] sm:$0xff]
        %v4364 = vld [vmem:[%s5 + $0xd68] sm:$0xff]
        %v4365 = vld [vmem:[%s5 + $0xd70] sm:$0xff]
        %v4366 = vld [vmem:[%s5 + $0xd78] sm:$0xff]
        %v4367 = vld [vmem:[%s5 + $0xd80] sm:$0xff]
        %v4368 = vld [vmem:[%s5 + $0xd88] sm:$0xff]
        %v4369 = vld [vmem:[%s5 + $0xd90] sm:$0xff]
        %v4370 = vld [vmem:[%s5 + $0xd98] sm:$0xff]
        %v4371 = vld [vmem:[%s5 + $0xda0] sm:$0xff]
        %v4372 = vld [vmem:[%s5 + $0xda8] sm:$0xff]
        %v4373 = vld [vmem:[%s5 + $0xdb0] sm:$0xff]
        %v4374 = vld [vmem:[%s5 + $0xdb8] sm:$0xff]
        %v4375 = vld [vmem:[%s5 + $0xdc0] sm:$0xff]
        %v4376 = vld [vmem:[%s5 + $0xdc8] sm:$0xff]
        %v4377 = vld [vmem:[%s5 + $0xdd0] sm:$0xff]
        %v4378 = vld [vmem:[%s5 + $0xdd8] sm:$0xff]
        %v4379 = vld [vmem:[%s5 + $0xde0] sm:$0xff]
        %v4380 = vld [vmem:[%s5 + $0xde8] sm:$0xff]
        %v4381 = vld [vmem:[%s5 + $0xdf0] sm:$0xff]
        %v4382 = vld [vmem:[%s5 + $0xdf8] sm:$0xff]
        %v4383 = vld [vmem:[%s5 + $0xe00] sm:$0xff]
        %v4384 = vld [vmem:[%s5 + $0xe08] sm:$0xff]
        %v4385 = vld [vmem:[%s5 + $0xe10] sm:$0xff]
        %v4386 = vld [vmem:[%s5 + $0xe18] sm:$0xff]
        %v4387 = vld [vmem:[%s5 + $0xe20] sm:$0xff]
        %v4388 = vld [vmem:[%s5 + $0xe28] sm:$0xff]
        %v4389 = vld [vmem:[%s5 + $0xe30] sm:$0xff]
        %v4390 = vld [vmem:[%s5 + $0xe38] sm:$0xff]
        %v4391 = vld [vmem:[%s5 + $0xe40] sm:$0xff]
        %v4392 = vld [vmem:[%s5 + $0xe48] sm:$0xff]
        %v4393 = vld [vmem:[%s5 + $0xe50] sm:$0xff]
        %v4394 = vld [vmem:[%s5 + $0xe58] sm:$0xff]
        %v4395 = vld [vmem:[%s5 + $0xe60] sm:$0xff]
        %v4396 = vld [vmem:[%s5 + $0xe68] sm:$0xff]
        %v4397 = vld [vmem:[%s5 + $0xe70] sm:$0xff]
        %v4398 = vld [vmem:[%s5 + $0xe78] sm:$0xff]
        %v4399 = vld [vmem:[%s5 + $0xe80] sm:$0xff]
        %v4400 = vld [vmem:[%s5 + $0xe88] sm:$0xff]
        %v4401 = vld [vmem:[%s5 + $0xe90] sm:$0xff]
        %v4402 = vld [vmem:[%s5 + $0xe98] sm:$0xff]
        %v4403 = vld [vmem:[%s6] sm:$0x3f]
        %v4405 = vlaneseq
        %v4406 = vshrl.u32 %v4405, 7
        %v4407 = vsub.s32 0, %v4406
        %v4408 = vrot.slane %v4403, %v4407
        %v4409 = vlaneseq
        %v4410 = vshrl.u32 %v4409, 7
        %v4411 = vsub.s32 1, %v4410
        %v4412 = vrot.slane %v4403, %v4411
        %v4413 = vlaneseq
        %v4414 = vshrl.u32 %v4413, 7
        %v4415 = vsub.s32 2, %v4414
        %v4416 = vrot.slane %v4403, %v4415
        %v4417 = vlaneseq
        %v4418 = vshrl.u32 %v4417, 7
        %v4419 = vsub.s32 3, %v4418
        %v4420 = vrot.slane %v4403, %v4419
        %v4421 = vlaneseq
        %v4422 = vshrl.u32 %v4421, 7
        %v4423 = vsub.s32 4, %v4422
        %v4424 = vrot.slane %v4403, %v4423
        %v4425 = vlaneseq
        %v4426 = vshrl.u32 %v4425, 7
        %v4427 = vsub.s32 5, %v4426
        %v4428 = vrot.slane %v4403, %v4427
        %v4455 = vunpack.c.l.b16 %v3915
        %v4456 = vunpack.c.h.b16 %v3915
        %v4457 = vunpack.c.l.b16 %v3916
        %v4458 = vunpack.c.h.b16 %v3916
        %v4459 = vunpack.c.l.b16 %v3917
        %v4460 = vunpack.c.h.b16 %v3917
        %v4461 = vunpack.c.l.b16 %v3918
        %v4462 = vunpack.c.h.b16 %v3918
        %v4463 = vunpack.c.l.b16 %v3919
        %v4464 = vunpack.c.h.b16 %v3919
        %v4465 = vunpack.c.l.b16 %v3920
        %v4466 = vunpack.c.h.b16 %v3920
        %v4467 = vunpack.c.l.b16 %v3921
        %v4468 = vunpack.c.h.b16 %v3921
        %v4469 = vunpack.c.l.b16 %v3922
        %v4470 = vunpack.c.h.b16 %v3922
        %v4471 = vunpack.c.l.b16 %v3923
        %v4472 = vunpack.c.h.b16 %v3923
        %v4473 = vunpack.c.l.b16 %v3924
        %v4474 = vunpack.c.h.b16 %v3924
        %v4475 = vunpack.c.l.b16 %v3925
        %v4476 = vunpack.c.h.b16 %v3925
        %v4477 = vunpack.c.l.b16 %v3926
        %v4478 = vunpack.c.h.b16 %v3926
        %v4479 = vunpack.c.l.b16 %v3927
        %v4480 = vunpack.c.h.b16 %v3927
        %v4481 = vunpack.c.l.b16 %v3928
        %v4482 = vunpack.c.h.b16 %v3928
        %v4483 = vunpack.c.l.b16 %v3929
        %v4484 = vunpack.c.h.b16 %v3929
        %v4485 = vunpack.c.l.b16 %v3930
        %v4486 = vunpack.c.h.b16 %v3930
        %v4487 = vunpack.c.l.b16 %v3931
        %v4488 = vunpack.c.h.b16 %v3931
        %v4489 = vunpack.c.l.b16 %v3932
        %v4490 = vunpack.c.h.b16 %v3932
        %v4491 = vunpack.c.l.b16 %v3933
        %v4492 = vunpack.c.h.b16 %v3933
        %v4493 = vunpack.c.l.b16 %v3934
        %v4494 = vunpack.c.h.b16 %v3934
        %v4495 = vpack.c.b16 %v4465, %v4455
        %v4496 = vpack.c.b16 %v4466, %v4456
        %v4497 = vpack.c.b16 %v4467, %v4457
        %v4498 = vpack.c.b16 %v4468, %v4458
        %v4499 = vpack.c.b16 %v4469, %v4459
        %v4500 = vpack.c.b16 %v4470, %v4460
        %v4501 = vpack.c.b16 %v4471, %v4461
        %v4502 = vpack.c.b16 %v4472, %v4462
        %v4503 = vpack.c.b16 %v4473, %v4463
        %v4504 = vpack.c.b16 %v4474, %v4464
        %v4505 = vpack.c.b16 %v4485, %v4475
        %v4506 = vpack.c.b16 %v4486, %v4476
        %v4507 = vpack.c.b16 %v4487, %v4477
        %v4508 = vpack.c.b16 %v4488, %v4478
        %v4509 = vpack.c.b16 %v4489, %v4479
        %v4510 = vpack.c.b16 %v4490, %v4480
        %v4511 = vpack.c.b16 %v4491, %v4481
        %v4512 = vpack.c.b16 %v4492, %v4482
        %v4513 = vpack.c.b16 %v4493, %v4483
        %v4514 = vpack.c.b16 %v4494, %v4484
        %v5001 = vunpack.c.l.b16 %v3935
        %v5002 = vunpack.c.h.b16 %v3935
        %v5003 = vunpack.c.l.b16 %v3936
        %v5004 = vunpack.c.h.b16 %v3936
        %v5005 = vunpack.c.l.b16 %v3937
        %v5006 = vunpack.c.h.b16 %v3937
        %v5007 = vunpack.c.l.b16 %v3938
        %v5008 = vunpack.c.h.b16 %v3938
        %v5009 = vunpack.c.l.b16 %v3939
        %v5010 = vunpack.c.h.b16 %v3939
        %v5011 = vunpack.c.l.b16 %v3940
        %v5012 = vunpack.c.h.b16 %v3940
        %v5013 = vunpack.c.l.b16 %v3941
        %v5014 = vunpack.c.h.b16 %v3941
        %v5015 = vunpack.c.l.b16 %v3942
        %v5016 = vunpack.c.h.b16 %v3942
        %v5017 = vunpack.c.l.b16 %v3943
        %v5018 = vunpack.c.h.b16 %v3943
        %v5019 = vunpack.c.l.b16 %v3944
        %v5020 = vunpack.c.h.b16 %v3944
        %v5021 = vunpack.c.l.b16 %v3945
        %v5022 = vunpack.c.h.b16 %v3945
        %v5023 = vunpack.c.l.b16 %v3946
        %v5024 = vunpack.c.h.b16 %v3946
        %v5025 = vunpack.c.l.b16 %v3947
        %v5026 = vunpack.c.h.b16 %v3947
        %v5027 = vunpack.c.l.b16 %v3948
        %v5028 = vunpack.c.h.b16 %v3948
        %v5029 = vunpack.c.l.b16 %v3949
        %v5030 = vunpack.c.h.b16 %v3949
        %v5031 = vunpack.c.l.b16 %v3950
        %v5032 = vunpack.c.h.b16 %v3950
        %v5033 = vunpack.c.l.b16 %v3951
        %v5034 = vunpack.c.h.b16 %v3951
        %v5035 = vunpack.c.l.b16 %v3952
        %v5036 = vunpack.c.h.b16 %v3952
        %v5037 = vunpack.c.l.b16 %v3953
        %v5038 = vunpack.c.h.b16 %v3953
        %v5039 = vunpack.c.l.b16 %v3954
        %v5040 = vunpack.c.h.b16 %v3954
        %v5041 = vunpack.c.l.b16 %v3955
        %v5042 = vunpack.c.h.b16 %v3955
        %v5043 = vunpack.c.l.b16 %v3956
        %v5044 = vunpack.c.h.b16 %v3956
        %v5045 = vunpack.c.l.b16 %v3957
        %v5046 = vunpack.c.h.b16 %v3957
        %v5047 = vunpack.c.l.b16 %v3958
        %v5048 = vunpack.c.h.b16 %v3958
        %v5049 = vunpack.c.l.b16 %v3959
        %v5050 = vunpack.c.h.b16 %v3959
        %v5051 = vunpack.c.l.b16 %v3960
        %v5052 = vunpack.c.h.b16 %v3960
        %v5053 = vunpack.c.l.b16 %v3961
        %v5054 = vunpack.c.h.b16 %v3961
        %v5055 = vunpack.c.l.b16 %v3962
        %v5056 = vunpack.c.h.b16 %v3962
        %v5057 = vunpack.c.l.b16 %v3963
        %v5058 = vunpack.c.h.b16 %v3963
        %v5059 = vunpack.c.l.b16 %v3964
        %v5060 = vunpack.c.h.b16 %v3964
        %v5061 = vunpack.c.l.b16 %v3965
        %v5062 = vunpack.c.h.b16 %v3965
        %v5063 = vunpack.c.l.b16 %v3966
        %v5064 = vunpack.c.h.b16 %v3966
        %v5065 = vunpack.c.l.b16 %v3967
        %v5066 = vunpack.c.h.b16 %v3967
        %v5067 = vunpack.c.l.b16 %v3968
        %v5068 = vunpack.c.h.b16 %v3968
        %v5069 = vunpack.c.l.b16 %v3969
        %v5070 = vunpack.c.h.b16 %v3969
        %v5071 = vunpack.c.l.b16 %v3970
        %v5072 = vunpack.c.h.b16 %v3970
        %v5073 = vunpack.c.l.b16 %v3971
        %v5074 = vunpack.c.h.b16 %v3971
        %v5075 = vunpack.c.l.b16 %v3972
        %v5076 = vunpack.c.h.b16 %v3972
        %v5077 = vunpack.c.l.b16 %v3973
        %v5078 = vunpack.c.h.b16 %v3973
        %v5079 = vunpack.c.l.b16 %v3974
        %v5080 = vunpack.c.h.b16 %v3974
        %v5081 = vunpack.c.l.b16 %v3975
        %v5082 = vunpack.c.h.b16 %v3975
        %v5083 = vunpack.c.l.b16 %v3976
        %v5084 = vunpack.c.h.b16 %v3976
        %v5085 = vunpack.c.l.b16 %v3977
        %v5086 = vunpack.c.h.b16 %v3977
        %v5087 = vunpack.c.l.b16 %v3978
        %v5088 = vunpack.c.h.b16 %v3978
        %v5089 = vunpack.c.l.b16 %v3979
        %v5090 = vunpack.c.h.b16 %v3979
        %v5091 = vunpack.c.l.b16 %v3980
        %v5092 = vunpack.c.h.b16 %v3980
        %v5093 = vunpack.c.l.b16 %v3981
        %v5094 = vunpack.c.h.b16 %v3981
        %v5095 = vunpack.c.l.b16 %v3982
        %v5096 = vunpack.c.h.b16 %v3982
        %v5097 = vunpack.c.l.b16 %v3983
        %v5098 = vunpack.c.h.b16 %v3983
        %v5099 = vunpack.c.l.b16 %v3984
        %v5100 = vunpack.c.h.b16 %v3984
        %v5101 = vunpack.c.l.b16 %v3985
        %v5102 = vunpack.c.h.b16 %v3985
        %v5103 = vunpack.c.l.b16 %v3986
        %v5104 = vunpack.c.h.b16 %v3986
        %v5105 = vunpack.c.l.b16 %v3987
        %v5106 = vunpack.c.h.b16 %v3987
        %v5107 = vunpack.c.l.b16 %v3988
        %v5108 = vunpack.c.h.b16 %v3988
        %v5109 = vunpack.c.l.b16 %v3989
        %v5110 = vunpack.c.h.b16 %v3989
        %v5111 = vunpack.c.l.b16 %v3990
        %v5112 = vunpack.c.h.b16 %v3990
        %v5113 = vunpack.c.l.b16 %v3991
        %v5114 = vunpack.c.h.b16 %v3991
        %v5115 = vunpack.c.l.b16 %v3992
        %v5116 = vunpack.c.h.b16 %v3992
        %v5117 = vunpack.c.l.b16 %v3993
        %v5118 = vunpack.c.h.b16 %v3993
        %v5119 = vunpack.c.l.b16 %v3994
        %v5120 = vunpack.c.h.b16 %v3994
        %v5121 = vunpack.c.l.b16 %v3995
        %v5122 = vunpack.c.h.b16 %v3995
        %v5123 = vunpack.c.l.b16 %v3996
        %v5124 = vunpack.c.h.b16 %v3996
        %v5125 = vunpack.c.l.b16 %v3997
        %v5126 = vunpack.c.h.b16 %v3997
        %v5127 = vunpack.c.l.b16 %v3998
        %v5128 = vunpack.c.h.b16 %v3998
        %v5129 = vunpack.c.l.b16 %v3999
        %v5130 = vunpack.c.h.b16 %v3999
        %v5131 = vunpack.c.l.b16 %v4000
        %v5132 = vunpack.c.h.b16 %v4000
        %v5133 = vunpack.c.l.b16 %v4001
        %v5134 = vunpack.c.h.b16 %v4001
        %v5135 = vunpack.c.l.b16 %v4002
        %v5136 = vunpack.c.h.b16 %v4002
        %v5137 = vunpack.c.l.b16 %v4003
        %v5138 = vunpack.c.h.b16 %v4003
        %v5139 = vunpack.c.l.b16 %v4004
        %v5140 = vunpack.c.h.b16 %v4004
        %v5141 = vunpack.c.l.b16 %v4005
        %v5142 = vunpack.c.h.b16 %v4005
        %v5143 = vunpack.c.l.b16 %v4006
        %v5144 = vunpack.c.h.b16 %v4006
        %v5145 = vunpack.c.l.b16 %v4007
        %v5146 = vunpack.c.h.b16 %v4007
        %v5147 = vunpack.c.l.b16 %v4008
        %v5148 = vunpack.c.h.b16 %v4008
        %v5149 = vunpack.c.l.b16 %v4009
        %v5150 = vunpack.c.h.b16 %v4009
        %v5151 = vunpack.c.l.b16 %v4010
        %v5152 = vunpack.c.h.b16 %v4010
        %v5153 = vunpack.c.l.b16 %v4011
        %v5154 = vunpack.c.h.b16 %v4011
        %v5155 = vunpack.c.l.b16 %v4012
        %v5156 = vunpack.c.h.b16 %v4012
        %v5157 = vunpack.c.l.b16 %v4013
        %v5158 = vunpack.c.h.b16 %v4013
        %v5159 = vunpack.c.l.b16 %v4014
        %v5160 = vunpack.c.h.b16 %v4014
        %v5161 = vunpack.c.l.b16 %v4015
        %v5162 = vunpack.c.h.b16 %v4015
        %v5163 = vunpack.c.l.b16 %v4016
        %v5164 = vunpack.c.h.b16 %v4016
        %v5165 = vunpack.c.l.b16 %v4017
        %v5166 = vunpack.c.h.b16 %v4017
        %v5167 = vunpack.c.l.b16 %v4018
        %v5168 = vunpack.c.h.b16 %v4018
        %v5169 = vunpack.c.l.b16 %v4019
        %v5170 = vunpack.c.h.b16 %v4019
        %v5171 = vunpack.c.l.b16 %v4020
        %v5172 = vunpack.c.h.b16 %v4020
        %v5173 = vunpack.c.l.b16 %v4021
        %v5174 = vunpack.c.h.b16 %v4021
        %v5175 = vunpack.c.l.b16 %v4022
        %v5176 = vunpack.c.h.b16 %v4022
        %v5177 = vunpack.c.l.b16 %v4023
        %v5178 = vunpack.c.h.b16 %v4023
        %v5179 = vunpack.c.l.b16 %v4024
        %v5180 = vunpack.c.h.b16 %v4024
        %v5181 = vunpack.c.l.b16 %v4025
        %v5182 = vunpack.c.h.b16 %v4025
        %v5183 = vunpack.c.l.b16 %v4026
        %v5184 = vunpack.c.h.b16 %v4026
        %v5185 = vunpack.c.l.b16 %v4027
        %v5186 = vunpack.c.h.b16 %v4027
        %v5187 = vunpack.c.l.b16 %v4028
        %v5188 = vunpack.c.h.b16 %v4028
        %v5189 = vunpack.c.l.b16 %v4029
        %v5190 = vunpack.c.h.b16 %v4029
        %v5191 = vunpack.c.l.b16 %v4030
        %v5192 = vunpack.c.h.b16 %v4030
        %v5193 = vunpack.c.l.b16 %v4031
        %v5194 = vunpack.c.h.b16 %v4031
        %v5195 = vunpack.c.l.b16 %v4032
        %v5196 = vunpack.c.h.b16 %v4032
        %v5197 = vunpack.c.l.b16 %v4033
        %v5198 = vunpack.c.h.b16 %v4033
        %v5199 = vunpack.c.l.b16 %v4034
        %v5200 = vunpack.c.h.b16 %v4034
        %v5201 = vunpack.c.l.b16 %v4035
        %v5202 = vunpack.c.h.b16 %v4035
        %v5203 = vunpack.c.l.b16 %v4036
        %v5204 = vunpack.c.h.b16 %v4036
        %v5205 = vunpack.c.l.b16 %v4037
        %v5206 = vunpack.c.h.b16 %v4037
        %v5207 = vunpack.c.l.b16 %v4038
        %v5208 = vunpack.c.h.b16 %v4038
        %v5209 = vunpack.c.l.b16 %v4039
        %v5210 = vunpack.c.h.b16 %v4039
        %v5211 = vunpack.c.l.b16 %v4040
        %v5212 = vunpack.c.h.b16 %v4040
        %v5213 = vunpack.c.l.b16 %v4041
        %v5214 = vunpack.c.h.b16 %v4041
        %v5215 = vunpack.c.l.b16 %v4042
        %v5216 = vunpack.c.h.b16 %v4042
        %v5217 = vunpack.c.l.b16 %v4043
        %v5218 = vunpack.c.h.b16 %v4043
        %v5219 = vunpack.c.l.b16 %v4044
        %v5220 = vunpack.c.h.b16 %v4044
        %v5221 = vunpack.c.l.b16 %v4045
        %v5222 = vunpack.c.h.b16 %v4045
        %v5223 = vunpack.c.l.b16 %v4046
        %v5224 = vunpack.c.h.b16 %v4046
        %v5225 = vunpack.c.l.b16 %v4047
        %v5226 = vunpack.c.h.b16 %v4047
        %v5227 = vunpack.c.l.b16 %v4048
        %v5228 = vunpack.c.h.b16 %v4048
        %v5229 = vunpack.c.l.b16 %v4049
        %v5230 = vunpack.c.h.b16 %v4049
        %v5231 = vunpack.c.l.b16 %v4050
        %v5232 = vunpack.c.h.b16 %v4050
        %v5233 = vunpack.c.l.b16 %v4051
        %v5234 = vunpack.c.h.b16 %v4051
        %v5235 = vunpack.c.l.b16 %v4052
        %v5236 = vunpack.c.h.b16 %v4052
        %v5237 = vunpack.c.l.b16 %v4053
        %v5238 = vunpack.c.h.b16 %v4053
        %v5239 = vunpack.c.l.b16 %v4054
        %v5240 = vunpack.c.h.b16 %v4054
        %v5241 = vunpack.c.l.b16 %v4055
        %v5242 = vunpack.c.h.b16 %v4055
        %v5243 = vunpack.c.l.b16 %v4056
        %v5244 = vunpack.c.h.b16 %v4056
        %v5245 = vunpack.c.l.b16 %v4057
        %v5246 = vunpack.c.h.b16 %v4057
        %v5247 = vunpack.c.l.b16 %v4058
        %v5248 = vunpack.c.h.b16 %v4058
        %v5249 = vunpack.c.l.b16 %v4059
        %v5250 = vunpack.c.h.b16 %v4059
        %v5251 = vunpack.c.l.b16 %v4060
        %v5252 = vunpack.c.h.b16 %v4060
        %v5253 = vunpack.c.l.b16 %v4061
        %v5254 = vunpack.c.h.b16 %v4061
        %v5255 = vunpack.c.l.b16 %v4062
        %v5256 = vunpack.c.h.b16 %v4062
        %v5257 = vunpack.c.l.b16 %v4063
        %v5258 = vunpack.c.h.b16 %v4063
        %v5259 = vunpack.c.l.b16 %v4064
        %v5260 = vunpack.c.h.b16 %v4064
        %v5261 = vunpack.c.l.b16 %v4065
        %v5262 = vunpack.c.h.b16 %v4065
        %v5263 = vunpack.c.l.b16 %v4066
        %v5264 = vunpack.c.h.b16 %v4066
        %v5265 = vunpack.c.l.b16 %v4067
        %v5266 = vunpack.c.h.b16 %v4067
        %v5267 = vunpack.c.l.b16 %v4068
        %v5268 = vunpack.c.h.b16 %v4068
        %v5269 = vunpack.c.l.b16 %v4069
        %v5270 = vunpack.c.h.b16 %v4069
        %v5271 = vunpack.c.l.b16 %v4070
        %v5272 = vunpack.c.h.b16 %v4070
        %v5273 = vunpack.c.l.b16 %v4071
        %v5274 = vunpack.c.h.b16 %v4071
        %v5275 = vunpack.c.l.b16 %v4072
        %v5276 = vunpack.c.h.b16 %v4072
        %v5277 = vunpack.c.l.b16 %v4073
        %v5278 = vunpack.c.h.b16 %v4073
        %v5279 = vunpack.c.l.b16 %v4074
        %v5280 = vunpack.c.h.b16 %v4074
        %v5281 = vunpack.c.l.b16 %v4075
        %v5282 = vunpack.c.h.b16 %v4075
        %v5283 = vunpack.c.l.b16 %v4076
        %v5284 = vunpack.c.h.b16 %v4076
        %v5285 = vunpack.c.l.b16 %v4077
        %v5286 = vunpack.c.h.b16 %v4077
        %v5287 = vunpack.c.l.b16 %v4078
        %v5288 = vunpack.c.h.b16 %v4078
        %v5289 = vunpack.c.l.b16 %v4079
        %v5290 = vunpack.c.h.b16 %v4079
        %v5291 = vunpack.c.l.b16 %v4080
        %v5292 = vunpack.c.h.b16 %v4080
        %v5293 = vunpack.c.l.b16 %v4081
        %v5294 = vunpack.c.h.b16 %v4081
        %v5295 = vunpack.c.l.b16 %v4082
        %v5296 = vunpack.c.h.b16 %v4082
        %v5297 = vunpack.c.l.b16 %v4083
        %v5298 = vunpack.c.h.b16 %v4083
        %v5299 = vunpack.c.l.b16 %v4084
        %v5300 = vunpack.c.h.b16 %v4084
        %v5301 = vunpack.c.l.b16 %v4085
        %v5302 = vunpack.c.h.b16 %v4085
        %v5303 = vunpack.c.l.b16 %v4086
        %v5304 = vunpack.c.h.b16 %v4086
        %v5305 = vunpack.c.l.b16 %v4087
        %v5306 = vunpack.c.h.b16 %v4087
        %v5307 = vunpack.c.l.b16 %v4088
        %v5308 = vunpack.c.h.b16 %v4088
        %v5309 = vunpack.c.l.b16 %v4089
        %v5310 = vunpack.c.h.b16 %v4089
        %v5311 = vunpack.c.l.b16 %v4090
        %v5312 = vunpack.c.h.b16 %v4090
        %v5313 = vunpack.c.l.b16 %v4091
        %v5314 = vunpack.c.h.b16 %v4091
        %v5315 = vunpack.c.l.b16 %v4092
        %v5316 = vunpack.c.h.b16 %v4092
        %v5317 = vunpack.c.l.b16 %v4093
        %v5318 = vunpack.c.h.b16 %v4093
        %v5319 = vunpack.c.l.b16 %v4094
        %v5320 = vunpack.c.h.b16 %v4094
        %v5321 = vunpack.c.l.b16 %v4095
        %v5322 = vunpack.c.h.b16 %v4095
        %v5323 = vunpack.c.l.b16 %v4096
        %v5324 = vunpack.c.h.b16 %v4096
        %v5325 = vunpack.c.l.b16 %v4097
        %v5326 = vunpack.c.h.b16 %v4097
        %v5327 = vunpack.c.l.b16 %v4098
        %v5328 = vunpack.c.h.b16 %v4098
        %v5329 = vunpack.c.l.b16 %v4099
        %v5330 = vunpack.c.h.b16 %v4099
        %v5331 = vunpack.c.l.b16 %v4100
        %v5332 = vunpack.c.h.b16 %v4100
        %v5333 = vunpack.c.l.b16 %v4101
        %v5334 = vunpack.c.h.b16 %v4101
        %v5335 = vunpack.c.l.b16 %v4102
        %v5336 = vunpack.c.h.b16 %v4102
        %v5337 = vunpack.c.l.b16 %v4103
        %v5338 = vunpack.c.h.b16 %v4103
        %v5339 = vunpack.c.l.b16 %v4104
        %v5340 = vunpack.c.h.b16 %v4104
        %v5341 = vunpack.c.l.b16 %v4105
        %v5342 = vunpack.c.h.b16 %v4105
        %v5343 = vunpack.c.l.b16 %v4106
        %v5344 = vunpack.c.h.b16 %v4106
        %v5345 = vunpack.c.l.b16 %v4107
        %v5346 = vunpack.c.h.b16 %v4107
        %v5347 = vunpack.c.l.b16 %v4108
        %v5348 = vunpack.c.h.b16 %v4108
        %v5349 = vunpack.c.l.b16 %v4109
        %v5350 = vunpack.c.h.b16 %v4109
        %v5351 = vunpack.c.l.b16 %v4110
        %v5352 = vunpack.c.h.b16 %v4110
        %v5353 = vunpack.c.l.b16 %v4111
        %v5354 = vunpack.c.h.b16 %v4111
        %v5355 = vunpack.c.l.b16 %v4112
        %v5356 = vunpack.c.h.b16 %v4112
        %v5357 = vunpack.c.l.b16 %v4113
        %v5358 = vunpack.c.h.b16 %v4113
        %v5359 = vunpack.c.l.b16 %v4114
        %v5360 = vunpack.c.h.b16 %v4114
        %v5361 = vunpack.c.l.b16 %v4115
        %v5362 = vunpack.c.h.b16 %v4115
        %v5363 = vunpack.c.l.b16 %v4116
        %v5364 = vunpack.c.h.b16 %v4116
        %v5365 = vunpack.c.l.b16 %v4117
        %v5366 = vunpack.c.h.b16 %v4117
        %v5367 = vunpack.c.l.b16 %v4118
        %v5368 = vunpack.c.h.b16 %v4118
        %v5369 = vunpack.c.l.b16 %v4119
        %v5370 = vunpack.c.h.b16 %v4119
        %v5371 = vunpack.c.l.b16 %v4120
        %v5372 = vunpack.c.h.b16 %v4120
        %v5373 = vunpack.c.l.b16 %v4121
        %v5374 = vunpack.c.h.b16 %v4121
        %v5375 = vunpack.c.l.b16 %v4122
        %v5376 = vunpack.c.h.b16 %v4122
        %v5377 = vunpack.c.l.b16 %v4123
        %v5378 = vunpack.c.h.b16 %v4123
        %v5379 = vunpack.c.l.b16 %v4124
        %v5380 = vunpack.c.h.b16 %v4124
        %v5381 = vunpack.c.l.b16 %v4125
        %v5382 = vunpack.c.h.b16 %v4125
        %v5383 = vunpack.c.l.b16 %v4126
        %v5384 = vunpack.c.h.b16 %v4126
        %v5385 = vunpack.c.l.b16 %v4127
        %v5386 = vunpack.c.h.b16 %v4127
        %v5387 = vunpack.c.l.b16 %v4128
        %v5388 = vunpack.c.h.b16 %v4128
        %v5389 = vunpack.c.l.b16 %v4129
        %v5390 = vunpack.c.h.b16 %v4129
        %v5391 = vunpack.c.l.b16 %v4130
        %v5392 = vunpack.c.h.b16 %v4130
        %v5393 = vunpack.c.l.b16 %v4131
        %v5394 = vunpack.c.h.b16 %v4131
        %v5395 = vunpack.c.l.b16 %v4132
        %v5396 = vunpack.c.h.b16 %v4132
        %v5397 = vunpack.c.l.b16 %v4133
        %v5398 = vunpack.c.h.b16 %v4133
        %v5399 = vunpack.c.l.b16 %v4134
        %v5400 = vunpack.c.h.b16 %v4134
        %v5401 = vunpack.c.l.b16 %v4135
        %v5402 = vunpack.c.h.b16 %v4135
        %v5403 = vunpack.c.l.b16 %v4136
        %v5404 = vunpack.c.h.b16 %v4136
        %v5405 = vunpack.c.l.b16 %v4137
        %v5406 = vunpack.c.h.b16 %v4137
        %v5407 = vunpack.c.l.b16 %v4138
        %v5408 = vunpack.c.h.b16 %v4138
        %v5409 = vunpack.c.l.b16 %v4139
        %v5410 = vunpack.c.h.b16 %v4139
        %v5411 = vunpack.c.l.b16 %v4140
        %v5412 = vunpack.c.h.b16 %v4140
        %v5413 = vunpack.c.l.b16 %v4141
        %v5414 = vunpack.c.h.b16 %v4141
        %v5415 = vunpack.c.l.b16 %v4142
        %v5416 = vunpack.c.h.b16 %v4142
        %v5417 = vunpack.c.l.b16 %v4143
        %v5418 = vunpack.c.h.b16 %v4143
        %v5419 = vunpack.c.l.b16 %v4144
        %v5420 = vunpack.c.h.b16 %v4144
        %v5421 = vunpack.c.l.b16 %v4145
        %v5422 = vunpack.c.h.b16 %v4145
        %v5423 = vunpack.c.l.b16 %v4146
        %v5424 = vunpack.c.h.b16 %v4146
        %v5425 = vunpack.c.l.b16 %v4147
        %v5426 = vunpack.c.h.b16 %v4147
        %v5427 = vunpack.c.l.b16 %v4148
        %v5428 = vunpack.c.h.b16 %v4148
        %v5429 = vunpack.c.l.b16 %v4149
        %v5430 = vunpack.c.h.b16 %v4149
        %v5431 = vunpack.c.l.b16 %v4150
        %v5432 = vunpack.c.h.b16 %v4150
        %v5433 = vunpack.c.l.b16 %v4151
        %v5434 = vunpack.c.h.b16 %v4151
        %v5435 = vunpack.c.l.b16 %v4152
        %v5436 = vunpack.c.h.b16 %v4152
        %v5437 = vunpack.c.l.b16 %v4153
        %v5438 = vunpack.c.h.b16 %v4153
        %v5439 = vunpack.c.l.b16 %v4154
        %v5440 = vunpack.c.h.b16 %v4154
        %v5441 = vunpack.c.l.b16 %v4155
        %v5442 = vunpack.c.h.b16 %v4155
        %v5443 = vunpack.c.l.b16 %v4156
        %v5444 = vunpack.c.h.b16 %v4156
        %v5445 = vunpack.c.l.b16 %v4157
        %v5446 = vunpack.c.h.b16 %v4157
        %v5447 = vunpack.c.l.b16 %v4158
        %v5448 = vunpack.c.h.b16 %v4158
        %v5449 = vunpack.c.l.b16 %v4159
        %v5450 = vunpack.c.h.b16 %v4159
        %v5451 = vunpack.c.l.b16 %v4160
        %v5452 = vunpack.c.h.b16 %v4160
        %v5453 = vunpack.c.l.b16 %v4161
        %v5454 = vunpack.c.h.b16 %v4161
        %v5455 = vunpack.c.l.b16 %v4162
        %v5456 = vunpack.c.h.b16 %v4162
        %v5457 = vunpack.c.l.b16 %v4163
        %v5458 = vunpack.c.h.b16 %v4163
        %v5459 = vunpack.c.l.b16 %v4164
        %v5460 = vunpack.c.h.b16 %v4164
        %v5461 = vunpack.c.l.b16 %v4165
        %v5462 = vunpack.c.h.b16 %v4165
        %v5463 = vunpack.c.l.b16 %v4166
        %v5464 = vunpack.c.h.b16 %v4166
        %v5465 = vunpack.c.l.b16 %v4167
        %v5466 = vunpack.c.h.b16 %v4167
        %v5467 = vunpack.c.l.b16 %v4168
        %v5468 = vunpack.c.h.b16 %v4168
        %v5469 = vunpack.c.l.b16 %v4169
        %v5470 = vunpack.c.h.b16 %v4169
        %v5471 = vunpack.c.l.b16 %v4170
        %v5472 = vunpack.c.h.b16 %v4170
        %v5473 = vunpack.c.l.b16 %v4171
        %v5474 = vunpack.c.h.b16 %v4171
        %v5475 = vunpack.c.l.b16 %v4172
        %v5476 = vunpack.c.h.b16 %v4172
        %v5477 = vunpack.c.l.b16 %v4173
        %v5478 = vunpack.c.h.b16 %v4173
        %v5479 = vunpack.c.l.b16 %v4174
        %v5480 = vunpack.c.h.b16 %v4174
        %v5481 = vunpack.c.l.b16 %v4175
        %v5482 = vunpack.c.h.b16 %v4175
        %v5483 = vunpack.c.l.b16 %v4176
        %v5484 = vunpack.c.h.b16 %v4176
        %v5485 = vunpack.c.l.b16 %v4177
        %v5486 = vunpack.c.h.b16 %v4177
        %v5487 = vunpack.c.l.b16 %v4178
        %v5488 = vunpack.c.h.b16 %v4178
        %v5489 = vunpack.c.l.b16 %v4179
        %v5490 = vunpack.c.h.b16 %v4179
        %v5491 = vunpack.c.l.b16 %v4180
        %v5492 = vunpack.c.h.b16 %v4180
        %v5493 = vunpack.c.l.b16 %v4181
        %v5494 = vunpack.c.h.b16 %v4181
        %v5495 = vunpack.c.l.b16 %v4182
        %v5496 = vunpack.c.h.b16 %v4182
        %v5497 = vunpack.c.l.b16 %v4183
        %v5498 = vunpack.c.h.b16 %v4183
        %v5499 = vunpack.c.l.b16 %v4184
        %v5500 = vunpack.c.h.b16 %v4184
        %v5501 = vunpack.c.l.b16 %v4185
        %v5502 = vunpack.c.h.b16 %v4185
        %v5503 = vunpack.c.l.b16 %v4186
        %v5504 = vunpack.c.h.b16 %v4186
        %v5505 = vunpack.c.l.b16 %v4187
        %v5506 = vunpack.c.h.b16 %v4187
        %v5507 = vunpack.c.l.b16 %v4188
        %v5508 = vunpack.c.h.b16 %v4188
        %v5509 = vunpack.c.l.b16 %v4189
        %v5510 = vunpack.c.h.b16 %v4189
        %v5511 = vunpack.c.l.b16 %v4190
        %v5512 = vunpack.c.h.b16 %v4190
        %v5513 = vunpack.c.l.b16 %v4191
        %v5514 = vunpack.c.h.b16 %v4191
        %v5515 = vunpack.c.l.b16 %v4192
        %v5516 = vunpack.c.h.b16 %v4192
        %v5517 = vunpack.c.l.b16 %v4193
        %v5518 = vunpack.c.h.b16 %v4193
        %v5519 = vunpack.c.l.b16 %v4194
        %v5520 = vunpack.c.h.b16 %v4194
        %v5521 = vunpack.c.l.b16 %v4195
        %v5522 = vunpack.c.h.b16 %v4195
        %v5523 = vunpack.c.l.b16 %v4196
        %v5524 = vunpack.c.h.b16 %v4196
        %v5525 = vunpack.c.l.b16 %v4197
        %v5526 = vunpack.c.h.b16 %v4197
        %v5527 = vunpack.c.l.b16 %v4198
        %v5528 = vunpack.c.h.b16 %v4198
        %v5529 = vunpack.c.l.b16 %v4199
        %v5530 = vunpack.c.h.b16 %v4199
        %v5531 = vunpack.c.l.b16 %v4200
        %v5532 = vunpack.c.h.b16 %v4200
        %v5533 = vunpack.c.l.b16 %v4201
        %v5534 = vunpack.c.h.b16 %v4201
        %v5535 = vunpack.c.l.b16 %v4202
        %v5536 = vunpack.c.h.b16 %v4202
        %v5537 = vunpack.c.l.b16 %v4203
        %v5538 = vunpack.c.h.b16 %v4203
        %v5539 = vunpack.c.l.b16 %v4204
        %v5540 = vunpack.c.h.b16 %v4204
        %v5541 = vunpack.c.l.b16 %v4205
        %v5542 = vunpack.c.h.b16 %v4205
        %v5543 = vunpack.c.l.b16 %v4206
        %v5544 = vunpack.c.h.b16 %v4206
        %v5545 = vunpack.c.l.b16 %v4207
        %v5546 = vunpack.c.h.b16 %v4207
        %v5547 = vunpack.c.l.b16 %v4208
        %v5548 = vunpack.c.h.b16 %v4208
        %v5549 = vunpack.c.l.b16 %v4209
        %v5550 = vunpack.c.h.b16 %v4209
        %v5551 = vunpack.c.l.b16 %v4210
        %v5552 = vunpack.c.h.b16 %v4210
        %v5553 = vunpack.c.l.b16 %v4211
        %v5554 = vunpack.c.h.b16 %v4211
        %v5555 = vunpack.c.l.b16 %v4212
        %v5556 = vunpack.c.h.b16 %v4212
        %v5557 = vunpack.c.l.b16 %v4213
        %v5558 = vunpack.c.h.b16 %v4213
        %v5559 = vunpack.c.l.b16 %v4214
        %v5560 = vunpack.c.h.b16 %v4214
        %v5561 = vunpack.c.l.b16 %v4215
        %v5562 = vunpack.c.h.b16 %v4215
        %v5563 = vunpack.c.l.b16 %v4216
        %v5564 = vunpack.c.h.b16 %v4216
        %v5565 = vunpack.c.l.b16 %v4217
        %v5566 = vunpack.c.h.b16 %v4217
        %v5567 = vunpack.c.l.b16 %v4218
        %v5568 = vunpack.c.h.b16 %v4218
        %v5569 = vunpack.c.l.b16 %v4219
        %v5570 = vunpack.c.h.b16 %v4219
        %v5571 = vunpack.c.l.b16 %v4220
        %v5572 = vunpack.c.h.b16 %v4220
        %v5573 = vunpack.c.l.b16 %v4221
        %v5574 = vunpack.c.h.b16 %v4221
        %v5575 = vunpack.c.l.b16 %v4222
        %v5576 = vunpack.c.h.b16 %v4222
        %v5577 = vunpack.c.l.b16 %v4223
        %v5578 = vunpack.c.h.b16 %v4223
        %v5579 = vunpack.c.l.b16 %v4224
        %v5580 = vunpack.c.h.b16 %v4224
        %v5581 = vunpack.c.l.b16 %v4225
        %v5582 = vunpack.c.h.b16 %v4225
        %v5583 = vunpack.c.l.b16 %v4226
        %v5584 = vunpack.c.h.b16 %v4226
        %v5585 = vunpack.c.l.b16 %v4227
        %v5586 = vunpack.c.h.b16 %v4227
        %v5587 = vunpack.c.l.b16 %v4228
        %v5588 = vunpack.c.h.b16 %v4228
        %v5589 = vunpack.c.l.b16 %v4229
        %v5590 = vunpack.c.h.b16 %v4229
        %v5591 = vunpack.c.l.b16 %v4230
        %v5592 = vunpack.c.h.b16 %v4230
        %v5593 = vunpack.c.l.b16 %v4231
        %v5594 = vunpack.c.h.b16 %v4231
        %v5595 = vunpack.c.l.b16 %v4232
        %v5596 = vunpack.c.h.b16 %v4232
        %v5597 = vunpack.c.l.b16 %v4233
        %v5598 = vunpack.c.h.b16 %v4233
        %v5599 = vunpack.c.l.b16 %v4234
        %v5600 = vunpack.c.h.b16 %v4234
        %v5601 = vunpack.c.l.b16 %v4235
        %v5602 = vunpack.c.h.b16 %v4235
        %v5603 = vunpack.c.l.b16 %v4236
        %v5604 = vunpack.c.h.b16 %v4236
        %v5605 = vunpack.c.l.b16 %v4237
        %v5606 = vunpack.c.h.b16 %v4237
        %v5607 = vunpack.c.l.b16 %v4238
        %v5608 = vunpack.c.h.b16 %v4238
        %v5609 = vunpack.c.l.b16 %v4239
        %v5610 = vunpack.c.h.b16 %v4239
        %v5611 = vunpack.c.l.b16 %v4240
        %v5612 = vunpack.c.h.b16 %v4240
        %v5613 = vunpack.c.l.b16 %v4241
        %v5614 = vunpack.c.h.b16 %v4241
        %v5615 = vunpack.c.l.b16 %v4242
        %v5616 = vunpack.c.h.b16 %v4242
        %v5617 = vunpack.c.l.b16 %v4243
        %v5618 = vunpack.c.h.b16 %v4243
        %v5619 = vunpack.c.l.b16 %v4244
        %v5620 = vunpack.c.h.b16 %v4244
        %v5621 = vunpack.c.l.b16 %v4245
        %v5622 = vunpack.c.h.b16 %v4245
        %v5623 = vunpack.c.l.b16 %v4246
        %v5624 = vunpack.c.h.b16 %v4246
        %v5625 = vunpack.c.l.b16 %v4247
        %v5626 = vunpack.c.h.b16 %v4247
        %v5627 = vunpack.c.l.b16 %v4248
        %v5628 = vunpack.c.h.b16 %v4248
        %v5629 = vunpack.c.l.b16 %v4249
        %v5630 = vunpack.c.h.b16 %v4249
        %v5631 = vunpack.c.l.b16 %v4250
        %v5632 = vunpack.c.h.b16 %v4250
        %v5633 = vunpack.c.l.b16 %v4251
        %v5634 = vunpack.c.h.b16 %v4251
        %v5635 = vunpack.c.l.b16 %v4252
        %v5636 = vunpack.c.h.b16 %v4252
        %v5637 = vunpack.c.l.b16 %v4253
        %v5638 = vunpack.c.h.b16 %v4253
        %v5639 = vunpack.c.l.b16 %v4254
        %v5640 = vunpack.c.h.b16 %v4254
        %v5641 = vunpack.c.l.b16 %v4255
        %v5642 = vunpack.c.h.b16 %v4255
        %v5643 = vunpack.c.l.b16 %v4256
        %v5644 = vunpack.c.h.b16 %v4256
        %v5645 = vunpack.c.l.b16 %v4257
        %v5646 = vunpack.c.h.b16 %v4257
        %v5647 = vunpack.c.l.b16 %v4258
        %v5648 = vunpack.c.h.b16 %v4258
        %v5649 = vunpack.c.l.b16 %v4259
        %v5650 = vunpack.c.h.b16 %v4259
        %v5651 = vunpack.c.l.b16 %v4260
        %v5652 = vunpack.c.h.b16 %v4260
        %v5653 = vunpack.c.l.b16 %v4261
        %v5654 = vunpack.c.h.b16 %v4261
        %v5655 = vunpack.c.l.b16 %v4262
        %v5656 = vunpack.c.h.b16 %v4262
        %v5657 = vunpack.c.l.b16 %v4263
        %v5658 = vunpack.c.h.b16 %v4263
        %v5659 = vunpack.c.l.b16 %v4264
        %v5660 = vunpack.c.h.b16 %v4264
        %v5661 = vunpack.c.l.b16 %v4265
        %v5662 = vunpack.c.h.b16 %v4265
        %v5663 = vunpack.c.l.b16 %v4266
        %v5664 = vunpack.c.h.b16 %v4266
        %v5665 = vunpack.c.l.b16 %v4267
        %v5666 = vunpack.c.h.b16 %v4267
        %v5667 = vunpack.c.l.b16 %v4268
        %v5668 = vunpack.c.h.b16 %v4268
        %v5669 = vunpack.c.l.b16 %v4269
        %v5670 = vunpack.c.h.b16 %v4269
        %v5671 = vunpack.c.l.b16 %v4270
        %v5672 = vunpack.c.h.b16 %v4270
        %v5673 = vunpack.c.l.b16 %v4271
        %v5674 = vunpack.c.h.b16 %v4271
        %v5675 = vunpack.c.l.b16 %v4272
        %v5676 = vunpack.c.h.b16 %v4272
        %v5677 = vunpack.c.l.b16 %v4273
        %v5678 = vunpack.c.h.b16 %v4273
        %v5679 = vunpack.c.l.b16 %v4274
        %v5680 = vunpack.c.h.b16 %v4274
        %v5681 = vunpack.c.l.b16 %v4275
        %v5682 = vunpack.c.h.b16 %v4275
        %v5683 = vunpack.c.l.b16 %v4276
        %v5684 = vunpack.c.h.b16 %v4276
        %v5685 = vunpack.c.l.b16 %v4277
        %v5686 = vunpack.c.h.b16 %v4277
        %v5687 = vunpack.c.l.b16 %v4278
        %v5688 = vunpack.c.h.b16 %v4278
        %v5689 = vunpack.c.l.b16 %v4279
        %v5690 = vunpack.c.h.b16 %v4279
        %v5691 = vunpack.c.l.b16 %v4280
        %v5692 = vunpack.c.h.b16 %v4280
        %v5693 = vunpack.c.l.b16 %v4281
        %v5694 = vunpack.c.h.b16 %v4281
        %v5695 = vunpack.c.l.b16 %v4282
        %v5696 = vunpack.c.h.b16 %v4282
        %v5697 = vunpack.c.l.b16 %v4283
        %v5698 = vunpack.c.h.b16 %v4283
        %v5699 = vunpack.c.l.b16 %v4284
        %v5700 = vunpack.c.h.b16 %v4284
        %v5701 = vunpack.c.l.b16 %v4285
        %v5702 = vunpack.c.h.b16 %v4285
        %v5703 = vunpack.c.l.b16 %v4286
        %v5704 = vunpack.c.h.b16 %v4286
        %v5705 = vunpack.c.l.b16 %v4287
        %v5706 = vunpack.c.h.b16 %v4287
        %v5707 = vunpack.c.l.b16 %v4288
        %v5708 = vunpack.c.h.b16 %v4288
        %v5709 = vunpack.c.l.b16 %v4289
        %v5710 = vunpack.c.h.b16 %v4289
        %v5711 = vunpack.c.l.b16 %v4290
        %v5712 = vunpack.c.h.b16 %v4290
        %v5713 = vunpack.c.l.b16 %v4291
        %v5714 = vunpack.c.h.b16 %v4291
        %v5715 = vunpack.c.l.b16 %v4292
        %v5716 = vunpack.c.h.b16 %v4292
        %v5717 = vunpack.c.l.b16 %v4293
        %v5718 = vunpack.c.h.b16 %v4293
        %v5719 = vunpack.c.l.b16 %v4294
        %v5720 = vunpack.c.h.b16 %v4294
        %v5721 = vunpack.c.l.b16 %v4295
        %v5722 = vunpack.c.h.b16 %v4295
        %v5723 = vunpack.c.l.b16 %v4296
        %v5724 = vunpack.c.h.b16 %v4296
        %v5725 = vunpack.c.l.b16 %v4297
        %v5726 = vunpack.c.h.b16 %v4297
        %v5727 = vunpack.c.l.b16 %v4298
        %v5728 = vunpack.c.h.b16 %v4298
        %v5729 = vunpack.c.l.b16 %v4299
        %v5730 = vunpack.c.h.b16 %v4299
        %v5731 = vunpack.c.l.b16 %v4300
        %v5732 = vunpack.c.h.b16 %v4300
        %v5733 = vunpack.c.l.b16 %v4301
        %v5734 = vunpack.c.h.b16 %v4301
        %v5735 = vunpack.c.l.b16 %v4302
        %v5736 = vunpack.c.h.b16 %v4302
        %v5737 = vunpack.c.l.b16 %v4303
        %v5738 = vunpack.c.h.b16 %v4303
        %v5739 = vunpack.c.l.b16 %v4304
        %v5740 = vunpack.c.h.b16 %v4304
        %v5741 = vunpack.c.l.b16 %v4305
        %v5742 = vunpack.c.h.b16 %v4305
        %v5743 = vunpack.c.l.b16 %v4306
        %v5744 = vunpack.c.h.b16 %v4306
        %v5745 = vunpack.c.l.b16 %v4307
        %v5746 = vunpack.c.h.b16 %v4307
        %v5747 = vunpack.c.l.b16 %v4308
        %v5748 = vunpack.c.h.b16 %v4308
        %v5749 = vunpack.c.l.b16 %v4309
        %v5750 = vunpack.c.h.b16 %v4309
        %v5751 = vunpack.c.l.b16 %v4310
        %v5752 = vunpack.c.h.b16 %v4310
        %v5753 = vunpack.c.l.b16 %v4311
        %v5754 = vunpack.c.h.b16 %v4311
        %v5755 = vunpack.c.l.b16 %v4312
        %v5756 = vunpack.c.h.b16 %v4312
        %v5757 = vunpack.c.l.b16 %v4313
        %v5758 = vunpack.c.h.b16 %v4313
        %v5759 = vunpack.c.l.b16 %v4314
        %v5760 = vunpack.c.h.b16 %v4314
        %v5761 = vunpack.c.l.b16 %v4315
        %v5762 = vunpack.c.h.b16 %v4315
        %v5763 = vunpack.c.l.b16 %v4316
        %v5764 = vunpack.c.h.b16 %v4316
        %v5765 = vunpack.c.l.b16 %v4317
        %v5766 = vunpack.c.h.b16 %v4317
        %v5767 = vunpack.c.l.b16 %v4318
        %v5768 = vunpack.c.h.b16 %v4318
        %v5769 = vunpack.c.l.b16 %v4319
        %v5770 = vunpack.c.h.b16 %v4319
        %v5771 = vunpack.c.l.b16 %v4320
        %v5772 = vunpack.c.h.b16 %v4320
        %v5773 = vunpack.c.l.b16 %v4321
        %v5774 = vunpack.c.h.b16 %v4321
        %v5775 = vunpack.c.l.b16 %v4322
        %v5776 = vunpack.c.h.b16 %v4322
        %v5777 = vunpack.c.l.b16 %v4323
        %v5778 = vunpack.c.h.b16 %v4323
        %v5779 = vunpack.c.l.b16 %v4324
        %v5780 = vunpack.c.h.b16 %v4324
        %v5781 = vunpack.c.l.b16 %v4325
        %v5782 = vunpack.c.h.b16 %v4325
        %v5783 = vunpack.c.l.b16 %v4326
        %v5784 = vunpack.c.h.b16 %v4326
        %v5785 = vunpack.c.l.b16 %v4327
        %v5786 = vunpack.c.h.b16 %v4327
        %v5787 = vunpack.c.l.b16 %v4328
        %v5788 = vunpack.c.h.b16 %v4328
        %v5789 = vunpack.c.l.b16 %v4329
        %v5790 = vunpack.c.h.b16 %v4329
        %v5791 = vunpack.c.l.b16 %v4330
        %v5792 = vunpack.c.h.b16 %v4330
        %v5793 = vunpack.c.l.b16 %v4331
        %v5794 = vunpack.c.h.b16 %v4331
        %v5795 = vunpack.c.l.b16 %v4332
        %v5796 = vunpack.c.h.b16 %v4332
        %v5797 = vunpack.c.l.b16 %v4333
        %v5798 = vunpack.c.h.b16 %v4333
        %v5799 = vunpack.c.l.b16 %v4334
        %v5800 = vunpack.c.h.b16 %v4334
        %v5801 = vunpack.c.l.b16 %v4335
        %v5802 = vunpack.c.h.b16 %v4335
        %v5803 = vunpack.c.l.b16 %v4336
        %v5804 = vunpack.c.h.b16 %v4336
        %v5805 = vunpack.c.l.b16 %v4337
        %v5806 = vunpack.c.h.b16 %v4337
        %v5807 = vunpack.c.l.b16 %v4338
        %v5808 = vunpack.c.h.b16 %v4338
        %v5809 = vunpack.c.l.b16 %v4339
        %v5810 = vunpack.c.h.b16 %v4339
        %v5811 = vunpack.c.l.b16 %v4340
        %v5812 = vunpack.c.h.b16 %v4340
        %v5813 = vunpack.c.l.b16 %v4341
        %v5814 = vunpack.c.h.b16 %v4341
        %v5815 = vunpack.c.l.b16 %v4342
        %v5816 = vunpack.c.h.b16 %v4342
        %v5817 = vunpack.c.l.b16 %v4343
        %v5818 = vunpack.c.h.b16 %v4343
        %v5819 = vunpack.c.l.b16 %v4344
        %v5820 = vunpack.c.h.b16 %v4344
        %v5821 = vunpack.c.l.b16 %v4345
        %v5822 = vunpack.c.h.b16 %v4345
        %v5823 = vunpack.c.l.b16 %v4346
        %v5824 = vunpack.c.h.b16 %v4346
        %v5825 = vunpack.c.l.b16 %v4347
        %v5826 = vunpack.c.h.b16 %v4347
        %v5827 = vunpack.c.l.b16 %v4348
        %v5828 = vunpack.c.h.b16 %v4348
        %v5829 = vunpack.c.l.b16 %v4349
        %v5830 = vunpack.c.h.b16 %v4349
        %v5831 = vunpack.c.l.b16 %v4350
        %v5832 = vunpack.c.h.b16 %v4350
        %v5833 = vunpack.c.l.b16 %v4351
        %v5834 = vunpack.c.h.b16 %v4351
        %v5835 = vunpack.c.l.b16 %v4352
        %v5836 = vunpack.c.h.b16 %v4352
        %v5837 = vunpack.c.l.b16 %v4353
        %v5838 = vunpack.c.h.b16 %v4353
        %v5839 = vunpack.c.l.b16 %v4354
        %v5840 = vunpack.c.h.b16 %v4354
        %v5841 = vunpack.c.l.b16 %v4355
        %v5842 = vunpack.c.h.b16 %v4355
        %v5843 = vunpack.c.l.b16 %v4356
        %v5844 = vunpack.c.h.b16 %v4356
        %v5845 = vunpack.c.l.b16 %v4357
        %v5846 = vunpack.c.h.b16 %v4357
        %v5847 = vunpack.c.l.b16 %v4358
        %v5848 = vunpack.c.h.b16 %v4358
        %v5849 = vunpack.c.l.b16 %v4359
        %v5850 = vunpack.c.h.b16 %v4359
        %v5851 = vunpack.c.l.b16 %v4360
        %v5852 = vunpack.c.h.b16 %v4360
        %v5853 = vunpack.c.l.b16 %v4361
        %v5854 = vunpack.c.h.b16 %v4361
        %v5855 = vunpack.c.l.b16 %v4362
        %v5856 = vunpack.c.h.b16 %v4362
        %v5857 = vunpack.c.l.b16 %v4363
        %v5858 = vunpack.c.h.b16 %v4363
        %v5859 = vunpack.c.l.b16 %v4364
        %v5860 = vunpack.c.h.b16 %v4364
        %v5861 = vunpack.c.l.b16 %v4365
        %v5862 = vunpack.c.h.b16 %v4365
        %v5863 = vunpack.c.l.b16 %v4366
        %v5864 = vunpack.c.h.b16 %v4366
        %v5865 = vunpack.c.l.b16 %v4367
        %v5866 = vunpack.c.h.b16 %v4367
        %v5867 = vunpack.c.l.b16 %v4368
        %v5868 = vunpack.c.h.b16 %v4368
        %v5869 = vunpack.c.l.b16 %v4369
        %v5870 = vunpack.c.h.b16 %v4369
        %v5871 = vunpack.c.l.b16 %v4370
        %v5872 = vunpack.c.h.b16 %v4370
        %v5873 = vunpack.c.l.b16 %v4371
        %v5874 = vunpack.c.h.b16 %v4371
        %v5875 = vunpack.c.l.b16 %v4372
        %v5876 = vunpack.c.h.b16 %v4372
        %v5877 = vunpack.c.l.b16 %v4373
        %v5878 = vunpack.c.h.b16 %v4373
        %v5879 = vunpack.c.l.b16 %v4374
        %v5880 = vunpack.c.h.b16 %v4374
        %v5881 = vunpack.c.l.b16 %v4375
        %v5882 = vunpack.c.h.b16 %v4375
        %v5883 = vunpack.c.l.b16 %v4376
        %v5884 = vunpack.c.h.b16 %v4376
        %v5885 = vunpack.c.l.b16 %v4377
        %v5886 = vunpack.c.h.b16 %v4377
        %v5887 = vunpack.c.l.b16 %v4378
        %v5888 = vunpack.c.h.b16 %v4378
        %v5889 = vunpack.c.l.b16 %v4379
        %v5890 = vunpack.c.h.b16 %v4379
        %v5891 = vunpack.c.l.b16 %v4380
        %v5892 = vunpack.c.h.b16 %v4380
        %v5893 = vunpack.c.l.b16 %v4381
        %v5894 = vunpack.c.h.b16 %v4381
        %v5895 = vunpack.c.l.b16 %v4382
        %v5896 = vunpack.c.h.b16 %v4382
        %v5897 = vunpack.c.l.b16 %v4383
        %v5898 = vunpack.c.h.b16 %v4383
        %v5899 = vunpack.c.l.b16 %v4384
        %v5900 = vunpack.c.h.b16 %v4384
        %v5901 = vunpack.c.l.b16 %v4385
        %v5902 = vunpack.c.h.b16 %v4385
        %v5903 = vunpack.c.l.b16 %v4386
        %v5904 = vunpack.c.h.b16 %v4386
        %v5905 = vunpack.c.l.b16 %v4387
        %v5906 = vunpack.c.h.b16 %v4387
        %v5907 = vunpack.c.l.b16 %v4388
        %v5908 = vunpack.c.h.b16 %v4388
        %v5909 = vunpack.c.l.b16 %v4389
        %v5910 = vunpack.c.h.b16 %v4389
        %v5911 = vunpack.c.l.b16 %v4390
        %v5912 = vunpack.c.h.b16 %v4390
        %v5913 = vunpack.c.l.b16 %v4391
        %v5914 = vunpack.c.h.b16 %v4391
        %v5915 = vunpack.c.l.b16 %v4392
        %v5916 = vunpack.c.h.b16 %v4392
        %v5917 = vunpack.c.l.b16 %v4393
        %v5918 = vunpack.c.h.b16 %v4393
        %v5919 = vunpack.c.l.b16 %v4394
        %v5920 = vunpack.c.h.b16 %v4394
        %v5921 = vunpack.c.l.b16 %v4395
        %v5922 = vunpack.c.h.b16 %v4395
        %v5923 = vunpack.c.l.b16 %v4396
        %v5924 = vunpack.c.h.b16 %v4396
        %v5925 = vunpack.c.l.b16 %v4397
        %v5926 = vunpack.c.h.b16 %v4397
        %v5927 = vunpack.c.l.b16 %v4398
        %v5928 = vunpack.c.h.b16 %v4398
        %v5929 = vunpack.c.l.b16 %v4399
        %v5930 = vunpack.c.h.b16 %v4399
        %v5931 = vunpack.c.l.b16 %v4400
        %v5932 = vunpack.c.h.b16 %v4400
        %v5933 = vunpack.c.l.b16 %v4401
        %v5934 = vunpack.c.h.b16 %v4401
        %v5935 = vunpack.c.l.b16 %v4402
        %v5936 = vunpack.c.h.b16 %v4402
        %v5937 = vpack.c.b16 %v5007, %v5001
        %v5938 = vpack.c.b16 %v5008, %v5002
        %v5939 = vpack.c.b16 %v5009, %v5003
        %v5940 = vpack.c.b16 %v5010, %v5004
        %v5941 = vpack.c.b16 %v5011, %v5005
        %v5942 = vpack.c.b16 %v5012, %v5006
        %v5943 = vpack.c.b16 %v5019, %v5013
        %v5944 = vpack.c.b16 %v5020, %v5014
        %v5945 = vpack.c.b16 %v5021, %v5015
        %v5946 = vpack.c.b16 %v5022, %v5016
        %v5947 = vpack.c.b16 %v5023, %v5017
        %v5948 = vpack.c.b16 %v5024, %v5018
        %v5949 = vpack.c.b16 %v5031, %v5025
        %v5950 = vpack.c.b16 %v5032, %v5026
        %v5951 = vpack.c.b16 %v5033, %v5027
        %v5952 = vpack.c.b16 %v5034, %v5028
        %v5953 = vpack.c.b16 %v5035, %v5029
        %v5954 = vpack.c.b16 %v5036, %v5030
        %v5955 = vpack.c.b16 %v5043, %v5037
        %v5956 = vpack.c.b16 %v5044, %v5038
        %v5957 = vpack.c.b16 %v5045, %v5039
        %v5958 = vpack.c.b16 %v5046, %v5040
        %v5959 = vpack.c.b16 %v5047, %v5041
        %v5960 = vpack.c.b16 %v5048, %v5042
        %v5961 = vpack.c.b16 %v5055, %v5049
        %v5962 = vpack.c.b16 %v5056, %v5050
        %v5963 = vpack.c.b16 %v5057, %v5051
        %v5964 = vpack.c.b16 %v5058, %v5052
        %v5965 = vpack.c.b16 %v5059, %v5053
        %v5966 = vpack.c.b16 %v5060, %v5054
        %v5967 = vpack.c.b16 %v5067, %v5061
        %v5968 = vpack.c.b16 %v5068, %v5062
        %v5969 = vpack.c.b16 %v5069, %v5063
        %v5970 = vpack.c.b16 %v5070, %v5064
        %v5971 = vpack.c.b16 %v5071, %v5065
        %v5972 = vpack.c.b16 %v5072, %v5066
        %v5973 = vpack.c.b16 %v5079, %v5073
        %v5974 = vpack.c.b16 %v5080, %v5074
        %v5975 = vpack.c.b16 %v5081, %v5075
        %v5976 = vpack.c.b16 %v5082, %v5076
        %v5977 = vpack.c.b16 %v5083, %v5077
        %v5978 = vpack.c.b16 %v5084, %v5078
        %v5979 = vpack.c.b16 %v5091, %v5085
        %v5980 = vpack.c.b16 %v5092, %v5086
        %v5981 = vpack.c.b16 %v5093, %v5087
        %v5982 = vpack.c.b16 %v5094, %v5088
        %v5983 = vpack.c.b16 %v5095, %v5089
        %v5984 = vpack.c.b16 %v5096, %v5090
        %v5985 = vpack.c.b16 %v5103, %v5097
        %v5986 = vpack.c.b16 %v5104, %v5098
        %v5987 = vpack.c.b16 %v5105, %v5099
        %v5988 = vpack.c.b16 %v5106, %v5100
        %v5989 = vpack.c.b16 %v5107, %v5101
        %v5990 = vpack.c.b16 %v5108, %v5102
        %v5991 = vpack.c.b16 %v5115, %v5109
        %v5992 = vpack.c.b16 %v5116, %v5110
        %v5993 = vpack.c.b16 %v5117, %v5111
        %v5994 = vpack.c.b16 %v5118, %v5112
        %v5995 = vpack.c.b16 %v5119, %v5113
        %v5996 = vpack.c.b16 %v5120, %v5114
        %v5997 = vpack.c.b16 %v5127, %v5121
        %v5998 = vpack.c.b16 %v5128, %v5122
        %v5999 = vpack.c.b16 %v5129, %v5123
        %v6000 = vpack.c.b16 %v5130, %v5124
        %v6001 = vpack.c.b16 %v5131, %v5125
        %v6002 = vpack.c.b16 %v5132, %v5126
        %v6003 = vpack.c.b16 %v5139, %v5133
        %v6004 = vpack.c.b16 %v5140, %v5134
        %v6005 = vpack.c.b16 %v5141, %v5135
        %v6006 = vpack.c.b16 %v5142, %v5136
        %v6007 = vpack.c.b16 %v5143, %v5137
        %v6008 = vpack.c.b16 %v5144, %v5138
        %v6009 = vpack.c.b16 %v5151, %v5145
        %v6010 = vpack.c.b16 %v5152, %v5146
        %v6011 = vpack.c.b16 %v5153, %v5147
        %v6012 = vpack.c.b16 %v5154, %v5148
        %v6013 = vpack.c.b16 %v5155, %v5149
        %v6014 = vpack.c.b16 %v5156, %v5150
        %v6015 = vpack.c.b16 %v5163, %v5157
        %v6016 = vpack.c.b16 %v5164, %v5158
        %v6017 = vpack.c.b16 %v5165, %v5159
        %v6018 = vpack.c.b16 %v5166, %v5160
        %v6019 = vpack.c.b16 %v5167, %v5161
        %v6020 = vpack.c.b16 %v5168, %v5162
        %v6021 = vpack.c.b16 %v5175, %v5169
        %v6022 = vpack.c.b16 %v5176, %v5170
        %v6023 = vpack.c.b16 %v5177, %v5171
        %v6024 = vpack.c.b16 %v5178, %v5172
        %v6025 = vpack.c.b16 %v5179, %v5173
        %v6026 = vpack.c.b16 %v5180, %v5174
        %v6027 = vpack.c.b16 %v5187, %v5181
        %v6028 = vpack.c.b16 %v5188, %v5182
        %v6029 = vpack.c.b16 %v5189, %v5183
        %v6030 = vpack.c.b16 %v5190, %v5184
        %v6031 = vpack.c.b16 %v5191, %v5185
        %v6032 = vpack.c.b16 %v5192, %v5186
        %v6033 = vpack.c.b16 %v5199, %v5193
        %v6034 = vpack.c.b16 %v5200, %v5194
        %v6035 = vpack.c.b16 %v5201, %v5195
        %v6036 = vpack.c.b16 %v5202, %v5196
        %v6037 = vpack.c.b16 %v5203, %v5197
        %v6038 = vpack.c.b16 %v5204, %v5198
        %v6039 = vpack.c.b16 %v5211, %v5205
        %v6040 = vpack.c.b16 %v5212, %v5206
        %v6041 = vpack.c.b16 %v5213, %v5207
        %v6042 = vpack.c.b16 %v5214, %v5208
        %v6043 = vpack.c.b16 %v5215, %v5209
        %v6044 = vpack.c.b16 %v5216, %v5210
        %v6045 = vpack.c.b16 %v5223, %v5217
        %v6046 = vpack.c.b16 %v5224, %v5218
        %v6047 = vpack.c.b16 %v5225, %v5219
        %v6048 = vpack.c.b16 %v5226, %v5220
        %v6049 = vpack.c.b16 %v5227, %v5221
        %v6050 = vpack.c.b16 %v5228, %v5222
        %v6051 = vpack.c.b16 %v5235, %v5229
        %v6052 = vpack.c.b16 %v5236, %v5230
        %v6053 = vpack.c.b16 %v5237, %v5231
        %v6054 = vpack.c.b16 %v5238, %v5232
        %v6055 = vpack.c.b16 %v5239, %v5233
        %v6056 = vpack.c.b16 %v5240, %v5234
        %v6057 = vpack.c.b16 %v5247, %v5241
        %v6058 = vpack.c.b16 %v5248, %v5242
        %v6059 = vpack.c.b16 %v5249, %v5243
        %v6060 = vpack.c.b16 %v5250, %v5244
        %v6061 = vpack.c.b16 %v5251, %v5245
        %v6062 = vpack.c.b16 %v5252, %v5246
        %v6063 = vpack.c.b16 %v5259, %v5253
        %v6064 = vpack.c.b16 %v5260, %v5254
        %v6065 = vpack.c.b16 %v5261, %v5255
        %v6066 = vpack.c.b16 %v5262, %v5256
        %v6067 = vpack.c.b16 %v5263, %v5257
        %v6068 = vpack.c.b16 %v5264, %v5258
        %v6069 = vpack.c.b16 %v5271, %v5265
        %v6070 = vpack.c.b16 %v5272, %v5266
        %v6071 = vpack.c.b16 %v5273, %v5267
        %v6072 = vpack.c.b16 %v5274, %v5268
        %v6073 = vpack.c.b16 %v5275, %v5269
        %v6074 = vpack.c.b16 %v5276, %v5270
        %v6075 = vpack.c.b16 %v5283, %v5277
        %v6076 = vpack.c.b16 %v5284, %v5278
        %v6077 = vpack.c.b16 %v5285, %v5279
        %v6078 = vpack.c.b16 %v5286, %v5280
        %v6079 = vpack.c.b16 %v5287, %v5281
        %v6080 = vpack.c.b16 %v5288, %v5282
        %v6081 = vpack.c.b16 %v5295, %v5289
        %v6082 = vpack.c.b16 %v5296, %v5290
        %v6083 = vpack.c.b16 %v5297, %v5291
        %v6084 = vpack.c.b16 %v5298, %v5292
        %v6085 = vpack.c.b16 %v5299, %v5293
        %v6086 = vpack.c.b16 %v5300, %v5294
        %v6087 = vpack.c.b16 %v5307, %v5301
        %v6088 = vpack.c.b16 %v5308, %v5302
        %v6089 = vpack.c.b16 %v5309, %v5303
        %v6090 = vpack.c.b16 %v5310, %v5304
        %v6091 = vpack.c.b16 %v5311, %v5305
        %v6092 = vpack.c.b16 %v5312, %v5306
        %v6093 = vpack.c.b16 %v5319, %v5313
        %v6094 = vpack.c.b16 %v5320, %v5314
        %v6095 = vpack.c.b16 %v5321, %v5315
        %v6096 = vpack.c.b16 %v5322, %v5316
        %v6097 = vpack.c.b16 %v5323, %v5317
        %v6098 = vpack.c.b16 %v5324, %v5318
        %v6099 = vpack.c.b16 %v5331, %v5325
        %v6100 = vpack.c.b16 %v5332, %v5326
        %v6101 = vpack.c.b16 %v5333, %v5327
        %v6102 = vpack.c.b16 %v5334, %v5328
        %v6103 = vpack.c.b16 %v5335, %v5329
        %v6104 = vpack.c.b16 %v5336, %v5330
        %v6105 = vpack.c.b16 %v5343, %v5337
        %v6106 = vpack.c.b16 %v5344, %v5338
        %v6107 = vpack.c.b16 %v5345, %v5339
        %v6108 = vpack.c.b16 %v5346, %v5340
        %v6109 = vpack.c.b16 %v5347, %v5341
        %v6110 = vpack.c.b16 %v5348, %v5342
        %v6111 = vpack.c.b16 %v5355, %v5349
        %v6112 = vpack.c.b16 %v5356, %v5350
        %v6113 = vpack.c.b16 %v5357, %v5351
        %v6114 = vpack.c.b16 %v5358, %v5352
        %v6115 = vpack.c.b16 %v5359, %v5353
        %v6116 = vpack.c.b16 %v5360, %v5354
        %v6117 = vpack.c.b16 %v5367, %v5361
        %v6118 = vpack.c.b16 %v5368, %v5362
        %v6119 = vpack.c.b16 %v5369, %v5363
        %v6120 = vpack.c.b16 %v5370, %v5364
        %v6121 = vpack.c.b16 %v5371, %v5365
        %v6122 = vpack.c.b16 %v5372, %v5366
        %v6123 = vpack.c.b16 %v5379, %v5373
        %v6124 = vpack.c.b16 %v5380, %v5374
        %v6125 = vpack.c.b16 %v5381, %v5375
        %v6126 = vpack.c.b16 %v5382, %v5376
        %v6127 = vpack.c.b16 %v5383, %v5377
        %v6128 = vpack.c.b16 %v5384, %v5378
        %v6129 = vpack.c.b16 %v5391, %v5385
        %v6130 = vpack.c.b16 %v5392, %v5386
        %v6131 = vpack.c.b16 %v5393, %v5387
        %v6132 = vpack.c.b16 %v5394, %v5388
        %v6133 = vpack.c.b16 %v5395, %v5389
        %v6134 = vpack.c.b16 %v5396, %v5390
        %v6135 = vpack.c.b16 %v5403, %v5397
        %v6136 = vpack.c.b16 %v5404, %v5398
        %v6137 = vpack.c.b16 %v5405, %v5399
        %v6138 = vpack.c.b16 %v5406, %v5400
        %v6139 = vpack.c.b16 %v5407, %v5401
        %v6140 = vpack.c.b16 %v5408, %v5402
        %v6141 = vpack.c.b16 %v5415, %v5409
        %v6142 = vpack.c.b16 %v5416, %v5410
        %v6143 = vpack.c.b16 %v5417, %v5411
        %v6144 = vpack.c.b16 %v5418, %v5412
        %v6145 = vpack.c.b16 %v5419, %v5413
        %v6146 = vpack.c.b16 %v5420, %v5414
        %v6147 = vpack.c.b16 %v5427, %v5421
        %v6148 = vpack.c.b16 %v5428, %v5422
        %v6149 = vpack.c.b16 %v5429, %v5423
        %v6150 = vpack.c.b16 %v5430, %v5424
        %v6151 = vpack.c.b16 %v5431, %v5425
        %v6152 = vpack.c.b16 %v5432, %v5426
        %v6153 = vpack.c.b16 %v5439, %v5433
        %v6154 = vpack.c.b16 %v5440, %v5434
        %v6155 = vpack.c.b16 %v5441, %v5435
        %v6156 = vpack.c.b16 %v5442, %v5436
        %v6157 = vpack.c.b16 %v5443, %v5437
        %v6158 = vpack.c.b16 %v5444, %v5438
        %v6159 = vpack.c.b16 %v5451, %v5445
        %v6160 = vpack.c.b16 %v5452, %v5446
        %v6161 = vpack.c.b16 %v5453, %v5447
        %v6162 = vpack.c.b16 %v5454, %v5448
        %v6163 = vpack.c.b16 %v5455, %v5449
        %v6164 = vpack.c.b16 %v5456, %v5450
        %v6165 = vpack.c.b16 %v5463, %v5457
        %v6166 = vpack.c.b16 %v5464, %v5458
        %v6167 = vpack.c.b16 %v5465, %v5459
        %v6168 = vpack.c.b16 %v5466, %v5460
        %v6169 = vpack.c.b16 %v5467, %v5461
        %v6170 = vpack.c.b16 %v5468, %v5462
        %v6171 = vpack.c.b16 %v5475, %v5469
        %v6172 = vpack.c.b16 %v5476, %v5470
        %v6173 = vpack.c.b16 %v5477, %v5471
        %v6174 = vpack.c.b16 %v5478, %v5472
        %v6175 = vpack.c.b16 %v5479, %v5473
        %v6176 = vpack.c.b16 %v5480, %v5474
        %v6177 = vpack.c.b16 %v5487, %v5481
        %v6178 = vpack.c.b16 %v5488, %v5482
        %v6179 = vpack.c.b16 %v5489, %v5483
        %v6180 = vpack.c.b16 %v5490, %v5484
        %v6181 = vpack.c.b16 %v5491, %v5485
        %v6182 = vpack.c.b16 %v5492, %v5486
        %v6183 = vpack.c.b16 %v5499, %v5493
        %v6184 = vpack.c.b16 %v5500, %v5494
        %v6185 = vpack.c.b16 %v5501, %v5495
        %v6186 = vpack.c.b16 %v5502, %v5496
        %v6187 = vpack.c.b16 %v5503, %v5497
        %v6188 = vpack.c.b16 %v5504, %v5498
        %v6189 = vpack.c.b16 %v5511, %v5505
        %v6190 = vpack.c.b16 %v5512, %v5506
        %v6191 = vpack.c.b16 %v5513, %v5507
        %v6192 = vpack.c.b16 %v5514, %v5508
        %v6193 = vpack.c.b16 %v5515, %v5509
        %v6194 = vpack.c.b16 %v5516, %v5510
        %v6195 = vpack.c.b16 %v5523, %v5517
        %v6196 = vpack.c.b16 %v5524, %v5518
        %v6197 = vpack.c.b16 %v5525, %v5519
        %v6198 = vpack.c.b16 %v5526, %v5520
        %v6199 = vpack.c.b16 %v5527, %v5521
        %v6200 = vpack.c.b16 %v5528, %v5522
        %v6201 = vpack.c.b16 %v5535, %v5529
        %v6202 = vpack.c.b16 %v5536, %v5530
        %v6203 = vpack.c.b16 %v5537, %v5531
        %v6204 = vpack.c.b16 %v5538, %v5532
        %v6205 = vpack.c.b16 %v5539, %v5533
        %v6206 = vpack.c.b16 %v5540, %v5534
        %v6207 = vpack.c.b16 %v5547, %v5541
        %v6208 = vpack.c.b16 %v5548, %v5542
        %v6209 = vpack.c.b16 %v5549, %v5543
        %v6210 = vpack.c.b16 %v5550, %v5544
        %v6211 = vpack.c.b16 %v5551, %v5545
        %v6212 = vpack.c.b16 %v5552, %v5546
        %v6213 = vpack.c.b16 %v5559, %v5553
        %v6214 = vpack.c.b16 %v5560, %v5554
        %v6215 = vpack.c.b16 %v5561, %v5555
        %v6216 = vpack.c.b16 %v5562, %v5556
        %v6217 = vpack.c.b16 %v5563, %v5557
        %v6218 = vpack.c.b16 %v5564, %v5558
        %v6219 = vpack.c.b16 %v5571, %v5565
        %v6220 = vpack.c.b16 %v5572, %v5566
        %v6221 = vpack.c.b16 %v5573, %v5567
        %v6222 = vpack.c.b16 %v5574, %v5568
        %v6223 = vpack.c.b16 %v5575, %v5569
        %v6224 = vpack.c.b16 %v5576, %v5570
        %v6225 = vpack.c.b16 %v5583, %v5577
        %v6226 = vpack.c.b16 %v5584, %v5578
        %v6227 = vpack.c.b16 %v5585, %v5579
        %v6228 = vpack.c.b16 %v5586, %v5580
        %v6229 = vpack.c.b16 %v5587, %v5581
        %v6230 = vpack.c.b16 %v5588, %v5582
        %v6231 = vpack.c.b16 %v5595, %v5589
        %v6232 = vpack.c.b16 %v5596, %v5590
        %v6233 = vpack.c.b16 %v5597, %v5591
        %v6234 = vpack.c.b16 %v5598, %v5592
        %v6235 = vpack.c.b16 %v5599, %v5593
        %v6236 = vpack.c.b16 %v5600, %v5594
        %v6237 = vpack.c.b16 %v5607, %v5601
        %v6238 = vpack.c.b16 %v5608, %v5602
        %v6239 = vpack.c.b16 %v5609, %v5603
        %v6240 = vpack.c.b16 %v5610, %v5604
        %v6241 = vpack.c.b16 %v5611, %v5605
        %v6242 = vpack.c.b16 %v5612, %v5606
        %v6243 = vpack.c.b16 %v5619, %v5613
        %v6244 = vpack.c.b16 %v5620, %v5614
        %v6245 = vpack.c.b16 %v5621, %v5615
        %v6246 = vpack.c.b16 %v5622, %v5616
        %v6247 = vpack.c.b16 %v5623, %v5617
        %v6248 = vpack.c.b16 %v5624, %v5618
        %v6249 = vpack.c.b16 %v5631, %v5625
        %v6250 = vpack.c.b16 %v5632, %v5626
        %v6251 = vpack.c.b16 %v5633, %v5627
        %v6252 = vpack.c.b16 %v5634, %v5628
        %v6253 = vpack.c.b16 %v5635, %v5629
        %v6254 = vpack.c.b16 %v5636, %v5630
        %v6255 = vpack.c.b16 %v5643, %v5637
        %v6256 = vpack.c.b16 %v5644, %v5638
        %v6257 = vpack.c.b16 %v5645, %v5639
        %v6258 = vpack.c.b16 %v5646, %v5640
        %v6259 = vpack.c.b16 %v5647, %v5641
        %v6260 = vpack.c.b16 %v5648, %v5642
        %v6261 = vpack.c.b16 %v5655, %v5649
        %v6262 = vpack.c.b16 %v5656, %v5650
        %v6263 = vpack.c.b16 %v5657, %v5651
        %v6264 = vpack.c.b16 %v5658, %v5652
        %v6265 = vpack.c.b16 %v5659, %v5653
        %v6266 = vpack.c.b16 %v5660, %v5654
        %v6267 = vpack.c.b16 %v5667, %v5661
        %v6268 = vpack.c.b16 %v5668, %v5662
        %v6269 = vpack.c.b16 %v5669, %v5663
        %v6270 = vpack.c.b16 %v5670, %v5664
        %v6271 = vpack.c.b16 %v5671, %v5665
        %v6272 = vpack.c.b16 %v5672, %v5666
        %v6273 = vpack.c.b16 %v5679, %v5673
        %v6274 = vpack.c.b16 %v5680, %v5674
        %v6275 = vpack.c.b16 %v5681, %v5675
        %v6276 = vpack.c.b16 %v5682, %v5676
        %v6277 = vpack.c.b16 %v5683, %v5677
        %v6278 = vpack.c.b16 %v5684, %v5678
        %v6279 = vpack.c.b16 %v5691, %v5685
        %v6280 = vpack.c.b16 %v5692, %v5686
        %v6281 = vpack.c.b16 %v5693, %v5687
        %v6282 = vpack.c.b16 %v5694, %v5688
        %v6283 = vpack.c.b16 %v5695, %v5689
        %v6284 = vpack.c.b16 %v5696, %v5690
        %v6285 = vpack.c.b16 %v5703, %v5697
        %v6286 = vpack.c.b16 %v5704, %v5698
        %v6287 = vpack.c.b16 %v5705, %v5699
        %v6288 = vpack.c.b16 %v5706, %v5700
        %v6289 = vpack.c.b16 %v5707, %v5701
        %v6290 = vpack.c.b16 %v5708, %v5702
        %v6291 = vpack.c.b16 %v5715, %v5709
        %v6292 = vpack.c.b16 %v5716, %v5710
        %v6293 = vpack.c.b16 %v5717, %v5711
        %v6294 = vpack.c.b16 %v5718, %v5712
        %v6295 = vpack.c.b16 %v5719, %v5713
        %v6296 = vpack.c.b16 %v5720, %v5714
        %v6297 = vpack.c.b16 %v5727, %v5721
        %v6298 = vpack.c.b16 %v5728, %v5722
        %v6299 = vpack.c.b16 %v5729, %v5723
        %v6300 = vpack.c.b16 %v5730, %v5724
        %v6301 = vpack.c.b16 %v5731, %v5725
        %v6302 = vpack.c.b16 %v5732, %v5726
        %v6303 = vpack.c.b16 %v5739, %v5733
        %v6304 = vpack.c.b16 %v5740, %v5734
        %v6305 = vpack.c.b16 %v5741, %v5735
        %v6306 = vpack.c.b16 %v5742, %v5736
        %v6307 = vpack.c.b16 %v5743, %v5737
        %v6308 = vpack.c.b16 %v5744, %v5738
        %v6309 = vpack.c.b16 %v5751, %v5745
        %v6310 = vpack.c.b16 %v5752, %v5746
        %v6311 = vpack.c.b16 %v5753, %v5747
        %v6312 = vpack.c.b16 %v5754, %v5748
        %v6313 = vpack.c.b16 %v5755, %v5749
        %v6314 = vpack.c.b16 %v5756, %v5750
        %v6315 = vpack.c.b16 %v5763, %v5757
        %v6316 = vpack.c.b16 %v5764, %v5758
        %v6317 = vpack.c.b16 %v5765, %v5759
        %v6318 = vpack.c.b16 %v5766, %v5760
        %v6319 = vpack.c.b16 %v5767, %v5761
        %v6320 = vpack.c.b16 %v5768, %v5762
        %v6321 = vpack.c.b16 %v5775, %v5769
        %v6322 = vpack.c.b16 %v5776, %v5770
        %v6323 = vpack.c.b16 %v5777, %v5771
        %v6324 = vpack.c.b16 %v5778, %v5772
        %v6325 = vpack.c.b16 %v5779, %v5773
        %v6326 = vpack.c.b16 %v5780, %v5774
        %v6327 = vpack.c.b16 %v5787, %v5781
        %v6328 = vpack.c.b16 %v5788, %v5782
        %v6329 = vpack.c.b16 %v5789, %v5783
        %v6330 = vpack.c.b16 %v5790, %v5784
        %v6331 = vpack.c.b16 %v5791, %v5785
        %v6332 = vpack.c.b16 %v5792, %v5786
        %v6333 = vpack.c.b16 %v5799, %v5793
        %v6334 = vpack.c.b16 %v5800, %v5794
        %v6335 = vpack.c.b16 %v5801, %v5795
        %v6336 = vpack.c.b16 %v5802, %v5796
        %v6337 = vpack.c.b16 %v5803, %v5797
        %v6338 = vpack.c.b16 %v5804, %v5798
        %v6339 = vpack.c.b16 %v5811, %v5805
        %v6340 = vpack.c.b16 %v5812, %v5806
        %v6341 = vpack.c.b16 %v5813, %v5807
        %v6342 = vpack.c.b16 %v5814, %v5808
        %v6343 = vpack.c.b16 %v5815, %v5809
        %v6344 = vpack.c.b16 %v5816, %v5810
        %v6345 = vpack.c.b16 %v5823, %v5817
        %v6346 = vpack.c.b16 %v5824, %v5818
        %v6347 = vpack.c.b16 %v5825, %v5819
        %v6348 = vpack.c.b16 %v5826, %v5820
        %v6349 = vpack.c.b16 %v5827, %v5821
        %v6350 = vpack.c.b16 %v5828, %v5822
        %v6351 = vpack.c.b16 %v5835, %v5829
        %v6352 = vpack.c.b16 %v5836, %v5830
        %v6353 = vpack.c.b16 %v5837, %v5831
        %v6354 = vpack.c.b16 %v5838, %v5832
        %v6355 = vpack.c.b16 %v5839, %v5833
        %v6356 = vpack.c.b16 %v5840, %v5834
        %v6357 = vpack.c.b16 %v5847, %v5841
        %v6358 = vpack.c.b16 %v5848, %v5842
        %v6359 = vpack.c.b16 %v5849, %v5843
        %v6360 = vpack.c.b16 %v5850, %v5844
        %v6361 = vpack.c.b16 %v5851, %v5845
        %v6362 = vpack.c.b16 %v5852, %v5846
        %v6363 = vpack.c.b16 %v5859, %v5853
        %v6364 = vpack.c.b16 %v5860, %v5854
        %v6365 = vpack.c.b16 %v5861, %v5855
        %v6366 = vpack.c.b16 %v5862, %v5856
        %v6367 = vpack.c.b16 %v5863, %v5857
        %v6368 = vpack.c.b16 %v5864, %v5858
        %v6369 = vpack.c.b16 %v5871, %v5865
        %v6370 = vpack.c.b16 %v5872, %v5866
        %v6371 = vpack.c.b16 %v5873, %v5867
        %v6372 = vpack.c.b16 %v5874, %v5868
        %v6373 = vpack.c.b16 %v5875, %v5869
        %v6374 = vpack.c.b16 %v5876, %v5870
        %v6375 = vpack.c.b16 %v5883, %v5877
        %v6376 = vpack.c.b16 %v5884, %v5878
        %v6377 = vpack.c.b16 %v5885, %v5879
        %v6378 = vpack.c.b16 %v5886, %v5880
        %v6379 = vpack.c.b16 %v5887, %v5881
        %v6380 = vpack.c.b16 %v5888, %v5882
        %v6381 = vpack.c.b16 %v5895, %v5889
        %v6382 = vpack.c.b16 %v5896, %v5890
        %v6383 = vpack.c.b16 %v5897, %v5891
        %v6384 = vpack.c.b16 %v5898, %v5892
        %v6385 = vpack.c.b16 %v5899, %v5893
        %v6386 = vpack.c.b16 %v5900, %v5894
        %v6387 = vpack.c.b16 %v5907, %v5901
        %v6388 = vpack.c.b16 %v5908, %v5902
        %v6389 = vpack.c.b16 %v5909, %v5903
        %v6390 = vpack.c.b16 %v5910, %v5904
        %v6391 = vpack.c.b16 %v5911, %v5905
        %v6392 = vpack.c.b16 %v5912, %v5906
        %v6393 = vpack.c.b16 %v5919, %v5913
        %v6394 = vpack.c.b16 %v5920, %v5914
        %v6395 = vpack.c.b16 %v5921, %v5915
        %v6396 = vpack.c.b16 %v5922, %v5916
        %v6397 = vpack.c.b16 %v5923, %v5917
        %v6398 = vpack.c.b16 %v5924, %v5918
        %v6399 = vpack.c.b16 %v5931, %v5925
        %v6400 = vpack.c.b16 %v5932, %v5926
        %v6401 = vpack.c.b16 %v5933, %v5927
        %v6402 = vpack.c.b16 %v5934, %v5928
        %v6403 = vpack.c.b16 %v5935, %v5929
        %v6404 = vpack.c.b16 %v5936, %v5930
        %vm6873 = vcmask 785408
        %v6875 = vsel %vm6873, %v4504, 0
        %v6878 = vsel %vm6873, %v4514, 0
        %6880 = vmatprep.subr.bf16.mxu0 %v5980
        %6881 = vmatpush1.bf16.msra.mxu0 %v5979
        %6882 = vmatprep.subr.bf16.mxu0 %v5974
        %6883 = vmatpush1.bf16.msra.mxu0 %v5973
        %6884 = vmatprep.subr.bf16.mxu0 %v5968
        %6885 = vmatpush1.bf16.msra.mxu0 %v5967
        %6886 = vmatprep.subr.bf16.mxu0 %v5962
        %6887 = vmatpush1.bf16.msra.mxu0 %v5961
        %6888 = vmatprep.subr.bf16.mxu0 %v5956
        %6889 = vmatpush1.bf16.msra.mxu0 %v5955
        %6890 = vmatprep.subr.bf16.mxu0 %v5950
        %6891 = vmatpush1.bf16.msra.mxu0 %v5949
        %6892 = vmatprep.subr.bf16.mxu0 %v5944
        %6893 = vmatpush1.bf16.msra.mxu0 %v5943
        %6894 = vmatprep.subr.bf16.mxu0 %v5938
        %6895 = vmatpush1.bf16.msra.mxu0 %v5937
        %6896 = vmatprep.subr.bf16.mxu0 %v6028
        %6897 = vmatpush2.bf16.msra.mxu0 %v6027
        %6898 = vmatprep.subr.bf16.mxu0 %v6022
        %6899 = vmatpush2.bf16.msra.mxu0 %v6021
        %6900 = vmatprep.subr.bf16.mxu0 %v6016
        %6901 = vmatpush2.bf16.msra.mxu0 %v6015
        %6902 = vmatprep.subr.bf16.mxu0 %v6010
        %6903 = vmatpush2.bf16.msra.mxu0 %v6009
        %6904 = vmatprep.subr.bf16.mxu0 %v6004
        %6905 = vmatpush2.bf16.msra.mxu0 %v6003
        %6906 = vmatprep.subr.bf16.mxu0 %v5998
        %6907 = vmatpush2.bf16.msra.mxu0 %v5997
        %6908 = vmatprep.subr.bf16.mxu0 %v5992
        %6909 = vmatpush2.bf16.msra.mxu0 %v5991
        %6910 = vmatprep.subr.bf16.mxu0 %v5986
        %6911 = vmatpush2.bf16.msra.mxu0 %v5985
        %6912 = vmatprep.mubr.bf16.mxu0 %v4496
        %6913 = vmatmul.mubr.bf16.gmra.mxu0 %v4495
        %v6914 = vpop.f32.mrf.mxu0
        %v6915 = vadd.f32 %v4408, %v6914
        %v6916 = vpop.f32.mrf.mxu0
        %v6917 = vadd.f32 %v4412, %v6916
        %v6918 = vpop.f32.mrf.mxu0
        %v6919 = vadd.f32 %v4408, %v6918
        %v6920 = vpop.f32.mrf.mxu0
        %v6921 = vadd.f32 %v4412, %v6920
        %6922 = vmatprep.mubr.bf16.mxu0 %v4506
        %6923 = vmatmul.mubr.bf16.gmra.mxu0 %v4505
        %v6924 = vpop.f32.mrf.mxu0
        %v6925 = vadd.f32 %v4408, %v6924
        %v6926 = vpop.f32.mrf.mxu0
        %v6927 = vadd.f32 %v4412, %v6926
        %v6928 = vpop.f32.mrf.mxu0
        %v6929 = vadd.f32 %v4408, %v6928
        %v6930 = vpop.f32.mrf.mxu0
        %v6931 = vadd.f32 %v4412, %v6930
        %6932 = vdwg.mxu0
        %6933 = vmatprep.subr.bf16.mxu0 %v6076
        %6934 = vmatpush1.bf16.msra.mxu0 %v6075
        %6935 = vmatprep.subr.bf16.mxu0 %v6070
        %6936 = vmatpush1.bf16.msra.mxu0 %v6069
        %6937 = vmatprep.subr.bf16.mxu0 %v6064
        %6938 = vmatpush1.bf16.msra.mxu0 %v6063
        %6939 = vmatprep.subr.bf16.mxu0 %v6058
        %6940 = vmatpush1.bf16.msra.mxu0 %v6057
        %6941 = vmatprep.subr.bf16.mxu0 %v6052
        %6942 = vmatpush1.bf16.msra.mxu0 %v6051
        %6943 = vmatprep.subr.bf16.mxu0 %v6046
        %6944 = vmatpush1.bf16.msra.mxu0 %v6045
        %6945 = vmatprep.subr.bf16.mxu0 %v6040
        %6946 = vmatpush1.bf16.msra.mxu0 %v6039
        %6947 = vmatprep.subr.bf16.mxu0 %v6034
        %6948 = vmatpush1.bf16.msra.mxu0 %v6033
        %6949 = vmatprep.subr.bf16.mxu0 %v6124
        %6950 = vmatpush2.bf16.msra.mxu0 %v6123
        %6951 = vmatprep.subr.bf16.mxu0 %v6118
        %6952 = vmatpush2.bf16.msra.mxu0 %v6117
        %6953 = vmatprep.subr.bf16.mxu0 %v6112
        %6954 = vmatpush2.bf16.msra.mxu0 %v6111
        %6955 = vmatprep.subr.bf16.mxu0 %v6106
        %6956 = vmatpush2.bf16.msra.mxu0 %v6105
        %6957 = vmatprep.subr.bf16.mxu0 %v6100
        %6958 = vmatpush2.bf16.msra.mxu0 %v6099
        %6959 = vmatprep.subr.bf16.mxu0 %v6094
        %6960 = vmatpush2.bf16.msra.mxu0 %v6093
        %6961 = vmatprep.subr.bf16.mxu0 %v6088
        %6962 = vmatpush2.bf16.msra.mxu0 %v6087
        %6963 = vmatprep.subr.bf16.mxu0 %v6082
        %6964 = vmatpush2.bf16.msra.mxu0 %v6081
        %6965 = vmatprep.mubr.bf16.mxu0 %v4498
        %6966 = vmatmul.mubr.bf16.gmra.mxu0 %v4497
        %v6967 = vpop.f32.mrf.mxu0
        %v6968 = vadd.f32 %v6915, %v6967
        %v6969 = vpop.f32.mrf.mxu0
        %v6970 = vadd.f32 %v6917, %v6969
        %v6971 = vpop.f32.mrf.mxu0
        %v6972 = vadd.f32 %v6919, %v6971
        %v6973 = vpop.f32.mrf.mxu0
        %v6974 = vadd.f32 %v6921, %v6973
        %6975 = vmatprep.mubr.bf16.mxu0 %v4508
        %6976 = vmatmul.mubr.bf16.gmra.mxu0 %v4507
        %v6977 = vpop.f32.mrf.mxu0
        %v6978 = vadd.f32 %v6925, %v6977
        %v6979 = vpop.f32.mrf.mxu0
        %v6980 = vadd.f32 %v6927, %v6979
        %v6981 = vpop.f32.mrf.mxu0
        %v6982 = vadd.f32 %v6929, %v6981
        %v6983 = vpop.f32.mrf.mxu0
        %v6984 = vadd.f32 %v6931, %v6983
        %6985 = vdwg.mxu0
        %6986 = vmatprep.subr.bf16.mxu0 %v6172
        %6987 = vmatpush1.bf16.msra.mxu0 %v6171
        %6988 = vmatprep.subr.bf16.mxu0 %v6166
        %6989 = vmatpush1.bf16.msra.mxu0 %v6165
        %6990 = vmatprep.subr.bf16.mxu0 %v6160
        %6991 = vmatpush1.bf16.msra.mxu0 %v6159
        %6992 = vmatprep.subr.bf16.mxu0 %v6154
        %6993 = vmatpush1.bf16.msra.mxu0 %v6153
        %6994 = vmatprep.subr.bf16.mxu0 %v6148
        %6995 = vmatpush1.bf16.msra.mxu0 %v6147
        %6996 = vmatprep.subr.bf16.mxu0 %v6142
        %6997 = vmatpush1.bf16.msra.mxu0 %v6141
        %6998 = vmatprep.subr.bf16.mxu0 %v6136
        %6999 = vmatpush1.bf16.msra.mxu0 %v6135
        %7000 = vmatprep.subr.bf16.mxu0 %v6130
        %7001 = vmatpush1.bf16.msra.mxu0 %v6129
        %7002 = vmatprep.subr.bf16.mxu0 %v6220
        %7003 = vmatpush2.bf16.msra.mxu0 %v6219
        %7004 = vmatprep.subr.bf16.mxu0 %v6214
        %7005 = vmatpush2.bf16.msra.mxu0 %v6213
        %7006 = vmatprep.subr.bf16.mxu0 %v6208
        %7007 = vmatpush2.bf16.msra.mxu0 %v6207
        %7008 = vmatprep.subr.bf16.mxu0 %v6202
        %7009 = vmatpush2.bf16.msra.mxu0 %v6201
        %7010 = vmatprep.subr.bf16.mxu0 %v6196
        %7011 = vmatpush2.bf16.msra.mxu0 %v6195
        %7012 = vmatprep.subr.bf16.mxu0 %v6190
        %7013 = vmatpush2.bf16.msra.mxu0 %v6189
        %7014 = vmatprep.subr.bf16.mxu0 %v6184
        %7015 = vmatpush2.bf16.msra.mxu0 %v6183
        %7016 = vmatprep.subr.bf16.mxu0 %v6178
        %7017 = vmatpush2.bf16.msra.mxu0 %v6177
        %7018 = vmatprep.mubr.bf16.mxu0 %v4500
        %7019 = vmatmul.mubr.bf16.gmra.mxu0 %v4499
        %v7020 = vpop.f32.mrf.mxu0
        %v7021 = vadd.f32 %v6968, %v7020
        %v7022 = vpop.f32.mrf.mxu0
        %v7023 = vadd.f32 %v6970, %v7022
        %v7024 = vpop.f32.mrf.mxu0
        %v7025 = vadd.f32 %v6972, %v7024
        %v7026 = vpop.f32.mrf.mxu0
        %v7027 = vadd.f32 %v6974, %v7026
        %7028 = vmatprep.mubr.bf16.mxu0 %v4510
        %7029 = vmatmul.mubr.bf16.gmra.mxu0 %v4509
        %v7030 = vpop.f32.mrf.mxu0
        %v7031 = vadd.f32 %v6978, %v7030
        %v7032 = vpop.f32.mrf.mxu0
        %v7033 = vadd.f32 %v6980, %v7032
        %v7034 = vpop.f32.mrf.mxu0
        %v7035 = vadd.f32 %v6982, %v7034
        %v7036 = vpop.f32.mrf.mxu0
        %v7037 = vadd.f32 %v6984, %v7036
        %7038 = vdwg.mxu0
        %7039 = vmatprep.subr.bf16.mxu0 %v6268
        %7040 = vmatpush1.bf16.msra.mxu0 %v6267
        %7041 = vmatprep.subr.bf16.mxu0 %v6262
        %7042 = vmatpush1.bf16.msra.mxu0 %v6261
        %7043 = vmatprep.subr.bf16.mxu0 %v6256
        %7044 = vmatpush1.bf16.msra.mxu0 %v6255
        %7045 = vmatprep.subr.bf16.mxu0 %v6250
        %7046 = vmatpush1.bf16.msra.mxu0 %v6249
        %7047 = vmatprep.subr.bf16.mxu0 %v6244
        %7048 = vmatpush1.bf16.msra.mxu0 %v6243
        %7049 = vmatprep.subr.bf16.mxu0 %v6238
        %7050 = vmatpush1.bf16.msra.mxu0 %v6237
        %7051 = vmatprep.subr.bf16.mxu0 %v6232
        %7052 = vmatpush1.bf16.msra.mxu0 %v6231
        %7053 = vmatprep.subr.bf16.mxu0 %v6226
        %7054 = vmatpush1.bf16.msra.mxu0 %v6225
        %7055 = vmatprep.subr.bf16.mxu0 %v6316
        %7056 = vmatpush2.bf16.msra.mxu0 %v6315
        %7057 = vmatprep.subr.bf16.mxu0 %v6310
        %7058 = vmatpush2.bf16.msra.mxu0 %v6309
        %7059 = vmatprep.subr.bf16.mxu0 %v6304
        %7060 = vmatpush2.bf16.msra.mxu0 %v6303
        %7061 = vmatprep.subr.bf16.mxu0 %v6298
        %7062 = vmatpush2.bf16.msra.mxu0 %v6297
        %7063 = vmatprep.subr.bf16.mxu0 %v6292
        %7064 = vmatpush2.bf16.msra.mxu0 %v6291
        %7065 = vmatprep.subr.bf16.mxu0 %v6286
        %7066 = vmatpush2.bf16.msra.mxu0 %v6285
        %7067 = vmatprep.subr.bf16.mxu0 %v6280
        %7068 = vmatpush2.bf16.msra.mxu0 %v6279
        %7069 = vmatprep.subr.bf16.mxu0 %v6274
        %7070 = vmatpush2.bf16.msra.mxu0 %v6273
        %7071 = vmatprep.mubr.bf16.mxu0 %v4502
        %7072 = vmatmul.mubr.bf16.gmra.mxu0 %v4501
        %v7073 = vpop.f32.mrf.mxu0
        %v7074 = vadd.f32 %v7021, %v7073
        %v7075 = vpop.f32.mrf.mxu0
        %v7076 = vadd.f32 %v7023, %v7075
        %v7077 = vpop.f32.mrf.mxu0
        %v7078 = vadd.f32 %v7025, %v7077
        %v7079 = vpop.f32.mrf.mxu0
        %v7080 = vadd.f32 %v7027, %v7079
        %7081 = vmatprep.mubr.bf16.mxu0 %v4512
        %7082 = vmatmul.mubr.bf16.gmra.mxu0 %v4511
        %v7083 = vpop.f32.mrf.mxu0
        %v7084 = vadd.f32 %v7031, %v7083
        %v7085 = vpop.f32.mrf.mxu0
        %v7086 = vadd.f32 %v7033, %v7085
        %v7087 = vpop.f32.mrf.mxu0
        %v7088 = vadd.f32 %v7035, %v7087
        %v7089 = vpop.f32.mrf.mxu0
        %v7090 = vadd.f32 %v7037, %v7089
        %7091 = vdwg.mxu0
        %7092 = vmatprep.subr.bf16.mxu0 %v6364
        %7093 = vmatpush1.bf16.msra.mxu0 %v6363
        %7094 = vmatprep.subr.bf16.mxu0 %v6358
        %7095 = vmatpush1.bf16.msra.mxu0 %v6357
        %7096 = vmatprep.subr.bf16.mxu0 %v6352
        %7097 = vmatpush1.bf16.msra.mxu0 %v6351
        %7098 = vmatprep.subr.bf16.mxu0 %v6346
        %7099 = vmatpush1.bf16.msra.mxu0 %v6345
        %7100 = vmatprep.subr.bf16.mxu0 %v6340
        %7101 = vmatpush1.bf16.msra.mxu0 %v6339
        %7102 = vmatprep.subr.bf16.mxu0 %v6334
        %7103 = vmatpush1.bf16.msra.mxu0 %v6333
        %7104 = vmatprep.subr.bf16.mxu0 %v6328
        %7105 = vmatpush1.bf16.msra.mxu0 %v6327
        %7106 = vmatprep.subr.bf16.mxu0 %v6322
        %7107 = vmatpush1.bf16.msra.mxu0 %v6321
        %7108 = vmatprep.subr.bf16.mxu0 0
        %7109 = vmatpush2.bf16.msra.mxu0 0
        %7110 = vmatprep.subr.bf16.mxu0 0
        %7111 = vmatpush2.bf16.msra.mxu0 0
        %7112 = vmatprep.subr.bf16.mxu0 %v6400
        %7113 = vmatpush2.bf16.msra.mxu0 %v6399
        %7114 = vmatprep.subr.bf16.mxu0 %v6394
        %7115 = vmatpush2.bf16.msra.mxu0 %v6393
        %7116 = vmatprep.subr.bf16.mxu0 %v6388
        %7117 = vmatpush2.bf16.msra.mxu0 %v6387
        %7118 = vmatprep.subr.bf16.mxu0 %v6382
        %7119 = vmatpush2.bf16.msra.mxu0 %v6381
        %7120 = vmatprep.subr.bf16.mxu0 %v6376
        %7121 = vmatpush2.bf16.msra.mxu0 %v6375
        %7122 = vmatprep.subr.bf16.mxu0 %v6370
        %7123 = vmatpush2.bf16.msra.mxu0 %v6369
        %7124 = vmatprep.mubr.bf16.mxu0 %v6875
        %7125 = vmatmul.mubr.bf16.gmra.mxu0 %v4503
        %v7126 = vpop.f32.mrf.mxu0
        %v7127 = vadd.f32 %v7074, %v7126
        %v7128 = vpop.f32.mrf.mxu0
        %v7129 = vadd.f32 %v7076, %v7128
        %v7130 = vpop.f32.mrf.mxu0
        %v7131 = vadd.f32 %v7078, %v7130
        %v7132 = vpop.f32.mrf.mxu0
        %v7133 = vadd.f32 %v7080, %v7132
        %7134 = vmatprep.mubr.bf16.mxu0 %v6878
        %7135 = vmatmul.mubr.bf16.gmra.mxu0 %v4513
        %v7136 = vpop.f32.mrf.mxu0
        %v7137 = vadd.f32 %v7084, %v7136
        %v7138 = vpop.f32.mrf.mxu0
        %v7139 = vadd.f32 %v7086, %v7138
        %v7140 = vpop.f32.mrf.mxu0
        %v7141 = vadd.f32 %v7088, %v7140
        %v7142 = vpop.f32.mrf.mxu0
        %v7143 = vadd.f32 %v7090, %v7142
        %7144 = vdwg.mxu0
        %7145 = vmatprep.subr.bf16.mxu0 %v5982
        %7146 = vmatpush1.bf16.msra.mxu0 %v5981
        %7147 = vmatprep.subr.bf16.mxu0 %v5976
        %7148 = vmatpush1.bf16.msra.mxu0 %v5975
        %7149 = vmatprep.subr.bf16.mxu0 %v5970
        %7150 = vmatpush1.bf16.msra.mxu0 %v5969
        %7151 = vmatprep.subr.bf16.mxu0 %v5964
        %7152 = vmatpush1.bf16.msra.mxu0 %v5963
        %7153 = vmatprep.subr.bf16.mxu0 %v5958
        %7154 = vmatpush1.bf16.msra.mxu0 %v5957
        %7155 = vmatprep.subr.bf16.mxu0 %v5952
        %7156 = vmatpush1.bf16.msra.mxu0 %v5951
        %7157 = vmatprep.subr.bf16.mxu0 %v5946
        %7158 = vmatpush1.bf16.msra.mxu0 %v5945
        %7159 = vmatprep.subr.bf16.mxu0 %v5940
        %7160 = vmatpush1.bf16.msra.mxu0 %v5939
        %7161 = vmatprep.subr.bf16.mxu0 %v6030
        %7162 = vmatpush2.bf16.msra.mxu0 %v6029
        %7163 = vmatprep.subr.bf16.mxu0 %v6024
        %7164 = vmatpush2.bf16.msra.mxu0 %v6023
        %7165 = vmatprep.subr.bf16.mxu0 %v6018
        %7166 = vmatpush2.bf16.msra.mxu0 %v6017
        %7167 = vmatprep.subr.bf16.mxu0 %v6012
        %7168 = vmatpush2.bf16.msra.mxu0 %v6011
        %7169 = vmatprep.subr.bf16.mxu0 %v6006
        %7170 = vmatpush2.bf16.msra.mxu0 %v6005
        %7171 = vmatprep.subr.bf16.mxu0 %v6000
        %7172 = vmatpush2.bf16.msra.mxu0 %v5999
        %7173 = vmatprep.subr.bf16.mxu0 %v5994
        %7174 = vmatpush2.bf16.msra.mxu0 %v5993
        %7175 = vmatprep.subr.bf16.mxu0 %v5988
        %7176 = vmatpush2.bf16.msra.mxu0 %v5987
        %7177 = vmatprep.mubr.bf16.mxu0 %v4496
        %7178 = vmatmul.mubr.bf16.gmra.mxu0 %v4495
        %v7179 = vpop.f32.mrf.mxu0
        %v7180 = vadd.f32 %v4416, %v7179
        %v7181 = vpop.f32.mrf.mxu0
        %v7182 = vadd.f32 %v4420, %v7181
        %v7183 = vpop.f32.mrf.mxu0
        %v7184 = vadd.f32 %v4416, %v7183
        %v7185 = vpop.f32.mrf.mxu0
        %v7186 = vadd.f32 %v4420, %v7185
        %7187 = vmatprep.mubr.bf16.mxu0 %v4506
        %7188 = vmatmul.mubr.bf16.gmra.mxu0 %v4505
        %v7189 = vpop.f32.mrf.mxu0
        %v7190 = vadd.f32 %v4416, %v7189
        %v7191 = vpop.f32.mrf.mxu0
        %v7192 = vadd.f32 %v4420, %v7191
        %v7193 = vpop.f32.mrf.mxu0
        %v7194 = vadd.f32 %v4416, %v7193
        %v7195 = vpop.f32.mrf.mxu0
        %v7196 = vadd.f32 %v4420, %v7195
        %7197 = vdwg.mxu0
        %7198 = vmatprep.subr.bf16.mxu0 %v6078
        %7199 = vmatpush1.bf16.msra.mxu0 %v6077
        %7200 = vmatprep.subr.bf16.mxu0 %v6072
        %7201 = vmatpush1.bf16.msra.mxu0 %v6071
        %7202 = vmatprep.subr.bf16.mxu0 %v6066
        %7203 = vmatpush1.bf16.msra.mxu0 %v6065
        %7204 = vmatprep.subr.bf16.mxu0 %v6060
        %7205 = vmatpush1.bf16.msra.mxu0 %v6059
        %7206 = vmatprep.subr.bf16.mxu0 %v6054
        %7207 = vmatpush1.bf16.msra.mxu0 %v6053
        %7208 = vmatprep.subr.bf16.mxu0 %v6048
        %7209 = vmatpush1.bf16.msra.mxu0 %v6047
        %7210 = vmatprep.subr.bf16.mxu0 %v6042
        %7211 = vmatpush1.bf16.msra.mxu0 %v6041
        %7212 = vmatprep.subr.bf16.mxu0 %v6036
        %7213 = vmatpush1.bf16.msra.mxu0 %v6035
        %7214 = vmatprep.subr.bf16.mxu0 %v6126
        %7215 = vmatpush2.bf16.msra.mxu0 %v6125
        %7216 = vmatprep.subr.bf16.mxu0 %v6120
        %7217 = vmatpush2.bf16.msra.mxu0 %v6119
        %7218 = vmatprep.subr.bf16.mxu0 %v6114
        %7219 = vmatpush2.bf16.msra.mxu0 %v6113
        %7220 = vmatprep.subr.bf16.mxu0 %v6108
        %7221 = vmatpush2.bf16.msra.mxu0 %v6107
        %7222 = vmatprep.subr.bf16.mxu0 %v6102
        %7223 = vmatpush2.bf16.msra.mxu0 %v6101
        %7224 = vmatprep.subr.bf16.mxu0 %v6096
        %7225 = vmatpush2.bf16.msra.mxu0 %v6095
        %7226 = vmatprep.subr.bf16.mxu0 %v6090
        %7227 = vmatpush2.bf16.msra.mxu0 %v6089
        %7228 = vmatprep.subr.bf16.mxu0 %v6084
        %7229 = vmatpush2.bf16.msra.mxu0 %v6083
        %7230 = vmatprep.mubr.bf16.mxu0 %v4498
        %7231 = vmatmul.mubr.bf16.gmra.mxu0 %v4497
        %v7232 = vpop.f32.mrf.mxu0
        %v7233 = vadd.f32 %v7180, %v7232
        %v7234 = vpop.f32.mrf.mxu0
        %v7235 = vadd.f32 %v7182, %v7234
        %v7236 = vpop.f32.mrf.mxu0
        %v7237 = vadd.f32 %v7184, %v7236
        %v7238 = vpop.f32.mrf.mxu0
        %v7239 = vadd.f32 %v7186, %v7238
        %7240 = vmatprep.mubr.bf16.mxu0 %v4508
        %7241 = vmatmul.mubr.bf16.gmra.mxu0 %v4507
        %v7242 = vpop.f32.mrf.mxu0
        %v7243 = vadd.f32 %v7190, %v7242
        %v7244 = vpop.f32.mrf.mxu0
        %v7245 = vadd.f32 %v7192, %v7244
        %v7246 = vpop.f32.mrf.mxu0
        %v7247 = vadd.f32 %v7194, %v7246
        %v7248 = vpop.f32.mrf.mxu0
        %v7249 = vadd.f32 %v7196, %v7248
        %7250 = vdwg.mxu0
        %7251 = vmatprep.subr.bf16.mxu0 %v6174
        %7252 = vmatpush1.bf16.msra.mxu0 %v6173
        %7253 = vmatprep.subr.bf16.mxu0 %v6168
        %7254 = vmatpush1.bf16.msra.mxu0 %v6167
        %7255 = vmatprep.subr.bf16.mxu0 %v6162
        %7256 = vmatpush1.bf16.msra.mxu0 %v6161
        %7257 = vmatprep.subr.bf16.mxu0 %v6156
        %7258 = vmatpush1.bf16.msra.mxu0 %v6155
        %7259 = vmatprep.subr.bf16.mxu0 %v6150
        %7260 = vmatpush1.bf16.msra.mxu0 %v6149
        %7261 = vmatprep.subr.bf16.mxu0 %v6144
        %7262 = vmatpush1.bf16.msra.mxu0 %v6143
        %7263 = vmatprep.subr.bf16.mxu0 %v6138
        %7264 = vmatpush1.bf16.msra.mxu0 %v6137
        %7265 = vmatprep.subr.bf16.mxu0 %v6132
        %7266 = vmatpush1.bf16.msra.mxu0 %v6131
        %7267 = vmatprep.subr.bf16.mxu0 %v6222
        %7268 = vmatpush2.bf16.msra.mxu0 %v6221
        %7269 = vmatprep.subr.bf16.mxu0 %v6216
        %7270 = vmatpush2.bf16.msra.mxu0 %v6215
        %7271 = vmatprep.subr.bf16.mxu0 %v6210
        %7272 = vmatpush2.bf16.msra.mxu0 %v6209
        %7273 = vmatprep.subr.bf16.mxu0 %v6204
        %7274 = vmatpush2.bf16.msra.mxu0 %v6203
        %7275 = vmatprep.subr.bf16.mxu0 %v6198
        %7276 = vmatpush2.bf16.msra.mxu0 %v6197
        %7277 = vmatprep.subr.bf16.mxu0 %v6192
        %7278 = vmatpush2.bf16.msra.mxu0 %v6191
        %7279 = vmatprep.subr.bf16.mxu0 %v6186
        %7280 = vmatpush2.bf16.msra.mxu0 %v6185
        %7281 = vmatprep.subr.bf16.mxu0 %v6180
        %7282 = vmatpush2.bf16.msra.mxu0 %v6179
        %7283 = vmatprep.mubr.bf16.mxu0 %v4500
        %7284 = vmatmul.mubr.bf16.gmra.mxu0 %v4499
        %v7285 = vpop.f32.mrf.mxu0
        %v7286 = vadd.f32 %v7233, %v7285
        %v7287 = vpop.f32.mrf.mxu0
        %v7288 = vadd.f32 %v7235, %v7287
        %v7289 = vpop.f32.mrf.mxu0
        %v7290 = vadd.f32 %v7237, %v7289
        %v7291 = vpop.f32.mrf.mxu0
        %v7292 = vadd.f32 %v7239, %v7291
        %7293 = vmatprep.mubr.bf16.mxu0 %v4510
        %7294 = vmatmul.mubr.bf16.gmra.mxu0 %v4509
        %v7295 = vpop.f32.mrf.mxu0
        %v7296 = vadd.f32 %v7243, %v7295
        %v7297 = vpop.f32.mrf.mxu0
        %v7298 = vadd.f32 %v7245, %v7297
        %v7299 = vpop.f32.mrf.mxu0
        %v7300 = vadd.f32 %v7247, %v7299
        %v7301 = vpop.f32.mrf.mxu0
        %v7302 = vadd.f32 %v7249, %v7301
        %7303 = vdwg.mxu0
        %7304 = vmatprep.subr.bf16.mxu0 %v6270
        %7305 = vmatpush1.bf16.msra.mxu0 %v6269
        %7306 = vmatprep.subr.bf16.mxu0 %v6264
        %7307 = vmatpush1.bf16.msra.mxu0 %v6263
        %7308 = vmatprep.subr.bf16.mxu0 %v6258
        %7309 = vmatpush1.bf16.msra.mxu0 %v6257
        %7310 = vmatprep.subr.bf16.mxu0 %v6252
        %7311 = vmatpush1.bf16.msra.mxu0 %v6251
        %7312 = vmatprep.subr.bf16.mxu0 %v6246
        %7313 = vmatpush1.bf16.msra.mxu0 %v6245
        %7314 = vmatprep.subr.bf16.mxu0 %v6240
        %7315 = vmatpush1.bf16.msra.mxu0 %v6239
        %7316 = vmatprep.subr.bf16.mxu0 %v6234
        %7317 = vmatpush1.bf16.msra.mxu0 %v6233
        %7318 = vmatprep.subr.bf16.mxu0 %v6228
        %7319 = vmatpush1.bf16.msra.mxu0 %v6227
        %7320 = vmatprep.subr.bf16.mxu0 %v6318
        %7321 = vmatpush2.bf16.msra.mxu0 %v6317
        %7322 = vmatprep.subr.bf16.mxu0 %v6312
        %7323 = vmatpush2.bf16.msra.mxu0 %v6311
        %7324 = vmatprep.subr.bf16.mxu0 %v6306
        %7325 = vmatpush2.bf16.msra.mxu0 %v6305
        %7326 = vmatprep.subr.bf16.mxu0 %v6300
        %7327 = vmatpush2.bf16.msra.mxu0 %v6299
        %7328 = vmatprep.subr.bf16.mxu0 %v6294
        %7329 = vmatpush2.bf16.msra.mxu0 %v6293
        %7330 = vmatprep.subr.bf16.mxu0 %v6288
        %7331 = vmatpush2.bf16.msra.mxu0 %v6287
        %7332 = vmatprep.subr.bf16.mxu0 %v6282
        %7333 = vmatpush2.bf16.msra.mxu0 %v6281
        %7334 = vmatprep.subr.bf16.mxu0 %v6276
        %7335 = vmatpush2.bf16.msra.mxu0 %v6275
        %7336 = vmatprep.mubr.bf16.mxu0 %v4502
        %7337 = vmatmul.mubr.bf16.gmra.mxu0 %v4501
        %v7338 = vpop.f32.mrf.mxu0
        %v7339 = vadd.f32 %v7286, %v7338
        %v7340 = vpop.f32.mrf.mxu0
        %v7341 = vadd.f32 %v7288, %v7340
        %v7342 = vpop.f32.mrf.mxu0
        %v7343 = vadd.f32 %v7290, %v7342
        %v7344 = vpop.f32.mrf.mxu0
        %v7345 = vadd.f32 %v7292, %v7344
        %7346 = vmatprep.mubr.bf16.mxu0 %v4512
        %7347 = vmatmul.mubr.bf16.gmra.mxu0 %v4511
        %v7348 = vpop.f32.mrf.mxu0
        %v7349 = vadd.f32 %v7296, %v7348
        %v7350 = vpop.f32.mrf.mxu0
        %v7351 = vadd.f32 %v7298, %v7350
        %v7352 = vpop.f32.mrf.mxu0
        %v7353 = vadd.f32 %v7300, %v7352
        %v7354 = vpop.f32.mrf.mxu0
        %v7355 = vadd.f32 %v7302, %v7354
        %7356 = vdwg.mxu0
        %7357 = vmatprep.subr.bf16.mxu0 %v6366
        %7358 = vmatpush1.bf16.msra.mxu0 %v6365
        %7359 = vmatprep.subr.bf16.mxu0 %v6360
        %7360 = vmatpush1.bf16.msra.mxu0 %v6359
        %7361 = vmatprep.subr.bf16.mxu0 %v6354
        %7362 = vmatpush1.bf16.msra.mxu0 %v6353
        %7363 = vmatprep.subr.bf16.mxu0 %v6348
        %7364 = vmatpush1.bf16.msra.mxu0 %v6347
        %7365 = vmatprep.subr.bf16.mxu0 %v6342
        %7366 = vmatpush1.bf16.msra.mxu0 %v6341
        %7367 = vmatprep.subr.bf16.mxu0 %v6336
        %7368 = vmatpush1.bf16.msra.mxu0 %v6335
        %7369 = vmatprep.subr.bf16.mxu0 %v6330
        %7370 = vmatpush1.bf16.msra.mxu0 %v6329
        %7371 = vmatprep.subr.bf16.mxu0 %v6324
        %7372 = vmatpush1.bf16.msra.mxu0 %v6323
        %7373 = vmatprep.subr.bf16.mxu0 0
        %7374 = vmatpush2.bf16.msra.mxu0 0
        %7375 = vmatprep.subr.bf16.mxu0 0
        %7376 = vmatpush2.bf16.msra.mxu0 0
        %7377 = vmatprep.subr.bf16.mxu0 %v6402
        %7378 = vmatpush2.bf16.msra.mxu0 %v6401
        %7379 = vmatprep.subr.bf16.mxu0 %v6396
        %7380 = vmatpush2.bf16.msra.mxu0 %v6395
        %7381 = vmatprep.subr.bf16.mxu0 %v6390
        %7382 = vmatpush2.bf16.msra.mxu0 %v6389
        %7383 = vmatprep.subr.bf16.mxu0 %v6384
        %7384 = vmatpush2.bf16.msra.mxu0 %v6383
        %7385 = vmatprep.subr.bf16.mxu0 %v6378
        %7386 = vmatpush2.bf16.msra.mxu0 %v6377
        %7387 = vmatprep.subr.bf16.mxu0 %v6372
        %7388 = vmatpush2.bf16.msra.mxu0 %v6371
        %7389 = vmatprep.mubr.bf16.mxu0 %v6875
        %7390 = vmatmul.mubr.bf16.gmra.mxu0 %v4503
        %v7391 = vpop.f32.mrf.mxu0
        %v7392 = vadd.f32 %v7339, %v7391
        %v7393 = vpop.f32.mrf.mxu0
        %v7394 = vadd.f32 %v7341, %v7393
        %v7395 = vpop.f32.mrf.mxu0
        %v7396 = vadd.f32 %v7343, %v7395
        %v7397 = vpop.f32.mrf.mxu0
        %v7398 = vadd.f32 %v7345, %v7397
        %7399 = vmatprep.mubr.bf16.mxu0 %v6878
        %7400 = vmatmul.mubr.bf16.gmra.mxu0 %v4513
        %v7401 = vpop.f32.mrf.mxu0
        %v7402 = vadd.f32 %v7349, %v7401
        %v7403 = vpop.f32.mrf.mxu0
        %v7404 = vadd.f32 %v7351, %v7403
        %v7405 = vpop.f32.mrf.mxu0
        %v7406 = vadd.f32 %v7353, %v7405
        %v7407 = vpop.f32.mrf.mxu0
        %v7408 = vadd.f32 %v7355, %v7407
        %7409 = vdwg.mxu0
        %7410 = vmatprep.subr.bf16.mxu0 %v5984
        %7411 = vmatpush1.bf16.msra.mxu0 %v5983
        %7412 = vmatprep.subr.bf16.mxu0 %v5978
        %7413 = vmatpush1.bf16.msra.mxu0 %v5977
        %7414 = vmatprep.subr.bf16.mxu0 %v5972
        %7415 = vmatpush1.bf16.msra.mxu0 %v5971
        %7416 = vmatprep.subr.bf16.mxu0 %v5966
        %7417 = vmatpush1.bf16.msra.mxu0 %v5965
        %7418 = vmatprep.subr.bf16.mxu0 %v5960
        %7419 = vmatpush1.bf16.msra.mxu0 %v5959
        %7420 = vmatprep.subr.bf16.mxu0 %v5954
        %7421 = vmatpush1.bf16.msra.mxu0 %v5953
        %7422 = vmatprep.subr.bf16.mxu0 %v5948
        %7423 = vmatpush1.bf16.msra.mxu0 %v5947
        %7424 = vmatprep.subr.bf16.mxu0 %v5942
        %7425 = vmatpush1.bf16.msra.mxu0 %v5941
        %7426 = vmatprep.subr.bf16.mxu0 %v6032
        %7427 = vmatpush2.bf16.msra.mxu0 %v6031
        %7428 = vmatprep.subr.bf16.mxu0 %v6026
        %7429 = vmatpush2.bf16.msra.mxu0 %v6025
        %7430 = vmatprep.subr.bf16.mxu0 %v6020
        %7431 = vmatpush2.bf16.msra.mxu0 %v6019
        %7432 = vmatprep.subr.bf16.mxu0 %v6014
        %7433 = vmatpush2.bf16.msra.mxu0 %v6013
        %7434 = vmatprep.subr.bf16.mxu0 %v6008
        %7435 = vmatpush2.bf16.msra.mxu0 %v6007
        %7436 = vmatprep.subr.bf16.mxu0 %v6002
        %7437 = vmatpush2.bf16.msra.mxu0 %v6001
        %7438 = vmatprep.subr.bf16.mxu0 %v5996
        %7439 = vmatpush2.bf16.msra.mxu0 %v5995
        %7440 = vmatprep.subr.bf16.mxu0 %v5990
        %7441 = vmatpush2.bf16.msra.mxu0 %v5989
        %7442 = vmatprep.mubr.bf16.mxu0 %v4496
        %7443 = vmatmul.mubr.bf16.gmra.mxu0 %v4495
        %v7444 = vpop.f32.mrf.mxu0
        %v7445 = vadd.f32 %v4424, %v7444
        %v7446 = vpop.f32.mrf.mxu0
        %v7447 = vadd.f32 %v4428, %v7446
        %v7448 = vpop.f32.mrf.mxu0
        %v7449 = vadd.f32 %v4424, %v7448
        %v7450 = vpop.f32.mrf.mxu0
        %v7451 = vadd.f32 %v4428, %v7450
        %7452 = vmatprep.mubr.bf16.mxu0 %v4506
        %7453 = vmatmul.mubr.bf16.gmra.mxu0 %v4505
        %v7454 = vpop.f32.mrf.mxu0
        %v7455 = vadd.f32 %v4424, %v7454
        %v7456 = vpop.f32.mrf.mxu0
        %v7457 = vadd.f32 %v4428, %v7456
        %v7458 = vpop.f32.mrf.mxu0
        %v7459 = vadd.f32 %v4424, %v7458
        %v7460 = vpop.f32.mrf.mxu0
        %v7461 = vadd.f32 %v4428, %v7460
        %7462 = vdwg.mxu0
        %7463 = vmatprep.subr.bf16.mxu0 %v6080
        %7464 = vmatpush1.bf16.msra.mxu0 %v6079
        %7465 = vmatprep.subr.bf16.mxu0 %v6074
        %7466 = vmatpush1.bf16.msra.mxu0 %v6073
        %7467 = vmatprep.subr.bf16.mxu0 %v6068
        %7468 = vmatpush1.bf16.msra.mxu0 %v6067
        %7469 = vmatprep.subr.bf16.mxu0 %v6062
        %7470 = vmatpush1.bf16.msra.mxu0 %v6061
        %7471 = vmatprep.subr.bf16.mxu0 %v6056
        %7472 = vmatpush1.bf16.msra.mxu0 %v6055
        %7473 = vmatprep.subr.bf16.mxu0 %v6050
        %7474 = vmatpush1.bf16.msra.mxu0 %v6049
        %7475 = vmatprep.subr.bf16.mxu0 %v6044
        %7476 = vmatpush1.bf16.msra.mxu0 %v6043
        %7477 = vmatprep.subr.bf16.mxu0 %v6038
        %7478 = vmatpush1.bf16.msra.mxu0 %v6037
        %7479 = vmatprep.subr.bf16.mxu0 %v6128
        %7480 = vmatpush2.bf16.msra.mxu0 %v6127
        %7481 = vmatprep.subr.bf16.mxu0 %v6122
        %7482 = vmatpush2.bf16.msra.mxu0 %v6121
        %7483 = vmatprep.subr.bf16.mxu0 %v6116
        %7484 = vmatpush2.bf16.msra.mxu0 %v6115
        %7485 = vmatprep.subr.bf16.mxu0 %v6110
        %7486 = vmatpush2.bf16.msra.mxu0 %v6109
        %7487 = vmatprep.subr.bf16.mxu0 %v6104
        %7488 = vmatpush2.bf16.msra.mxu0 %v6103
        %7489 = vmatprep.subr.bf16.mxu0 %v6098
        %7490 = vmatpush2.bf16.msra.mxu0 %v6097
        %7491 = vmatprep.subr.bf16.mxu0 %v6092
        %7492 = vmatpush2.bf16.msra.mxu0 %v6091
        %7493 = vmatprep.subr.bf16.mxu0 %v6086
        %7494 = vmatpush2.bf16.msra.mxu0 %v6085
        %7495 = vmatprep.mubr.bf16.mxu0 %v4498
        %7496 = vmatmul.mubr.bf16.gmra.mxu0 %v4497
        %v7497 = vpop.f32.mrf.mxu0
        %v7498 = vadd.f32 %v7445, %v7497
        %v7499 = vpop.f32.mrf.mxu0
        %v7500 = vadd.f32 %v7447, %v7499
        %v7501 = vpop.f32.mrf.mxu0
        %v7502 = vadd.f32 %v7449, %v7501
        %v7503 = vpop.f32.mrf.mxu0
        %v7504 = vadd.f32 %v7451, %v7503
        %7505 = vmatprep.mubr.bf16.mxu0 %v4508
        %7506 = vmatmul.mubr.bf16.gmra.mxu0 %v4507
        %v7507 = vpop.f32.mrf.mxu0
        %v7508 = vadd.f32 %v7455, %v7507
        %v7509 = vpop.f32.mrf.mxu0
        %v7510 = vadd.f32 %v7457, %v7509
        %v7511 = vpop.f32.mrf.mxu0
        %v7512 = vadd.f32 %v7459, %v7511
        %v7513 = vpop.f32.mrf.mxu0
        %v7514 = vadd.f32 %v7461, %v7513
        %7515 = vdwg.mxu0
        %7516 = vmatprep.subr.bf16.mxu0 %v6176
        %7517 = vmatpush1.bf16.msra.mxu0 %v6175
        %7518 = vmatprep.subr.bf16.mxu0 %v6170
        %7519 = vmatpush1.bf16.msra.mxu0 %v6169
        %7520 = vmatprep.subr.bf16.mxu0 %v6164
        %7521 = vmatpush1.bf16.msra.mxu0 %v6163
        %7522 = vmatprep.subr.bf16.mxu0 %v6158
        %7523 = vmatpush1.bf16.msra.mxu0 %v6157
        %7524 = vmatprep.subr.bf16.mxu0 %v6152
        %7525 = vmatpush1.bf16.msra.mxu0 %v6151
        %7526 = vmatprep.subr.bf16.mxu0 %v6146
        %7527 = vmatpush1.bf16.msra.mxu0 %v6145
        %7528 = vmatprep.subr.bf16.mxu0 %v6140
        %7529 = vmatpush1.bf16.msra.mxu0 %v6139
        %7530 = vmatprep.subr.bf16.mxu0 %v6134
        %7531 = vmatpush1.bf16.msra.mxu0 %v6133
        %7532 = vmatprep.subr.bf16.mxu0 %v6224
        %7533 = vmatpush2.bf16.msra.mxu0 %v6223
        %7534 = vmatprep.subr.bf16.mxu0 %v6218
        %7535 = vmatpush2.bf16.msra.mxu0 %v6217
        %7536 = vmatprep.subr.bf16.mxu0 %v6212
        %7537 = vmatpush2.bf16.msra.mxu0 %v6211
        %7538 = vmatprep.subr.bf16.mxu0 %v6206
        %7539 = vmatpush2.bf16.msra.mxu0 %v6205
        %7540 = vmatprep.subr.bf16.mxu0 %v6200
        %7541 = vmatpush2.bf16.msra.mxu0 %v6199
        %7542 = vmatprep.subr.bf16.mxu0 %v6194
        %7543 = vmatpush2.bf16.msra.mxu0 %v6193
        %7544 = vmatprep.subr.bf16.mxu0 %v6188
        %7545 = vmatpush2.bf16.msra.mxu0 %v6187
        %7546 = vmatprep.subr.bf16.mxu0 %v6182
        %7547 = vmatpush2.bf16.msra.mxu0 %v6181
        %7548 = vmatprep.mubr.bf16.mxu0 %v4500
        %7549 = vmatmul.mubr.bf16.gmra.mxu0 %v4499
        %v7550 = vpop.f32.mrf.mxu0
        %v7551 = vadd.f32 %v7498, %v7550
        %v7552 = vpop.f32.mrf.mxu0
        %v7553 = vadd.f32 %v7500, %v7552
        %v7554 = vpop.f32.mrf.mxu0
        %v7555 = vadd.f32 %v7502, %v7554
        %v7556 = vpop.f32.mrf.mxu0
        %v7557 = vadd.f32 %v7504, %v7556
        %7558 = vmatprep.mubr.bf16.mxu0 %v4510
        %7559 = vmatmul.mubr.bf16.gmra.mxu0 %v4509
        %v7560 = vpop.f32.mrf.mxu0
        %v7561 = vadd.f32 %v7508, %v7560
        %v7562 = vpop.f32.mrf.mxu0
        %v7563 = vadd.f32 %v7510, %v7562
        %v7564 = vpop.f32.mrf.mxu0
        %v7565 = vadd.f32 %v7512, %v7564
        %v7566 = vpop.f32.mrf.mxu0
        %v7567 = vadd.f32 %v7514, %v7566
        %7568 = vdwg.mxu0
        %7569 = vmatprep.subr.bf16.mxu0 %v6272
        %7570 = vmatpush1.bf16.msra.mxu0 %v6271
        %7571 = vmatprep.subr.bf16.mxu0 %v6266
        %7572 = vmatpush1.bf16.msra.mxu0 %v6265
        %7573 = vmatprep.subr.bf16.mxu0 %v6260
        %7574 = vmatpush1.bf16.msra.mxu0 %v6259
        %7575 = vmatprep.subr.bf16.mxu0 %v6254
        %7576 = vmatpush1.bf16.msra.mxu0 %v6253
        %7577 = vmatprep.subr.bf16.mxu0 %v6248
        %7578 = vmatpush1.bf16.msra.mxu0 %v6247
        %7579 = vmatprep.subr.bf16.mxu0 %v6242
        %7580 = vmatpush1.bf16.msra.mxu0 %v6241
        %7581 = vmatprep.subr.bf16.mxu0 %v6236
        %7582 = vmatpush1.bf16.msra.mxu0 %v6235
        %7583 = vmatprep.subr.bf16.mxu0 %v6230
        %7584 = vmatpush1.bf16.msra.mxu0 %v6229
        %7585 = vmatprep.subr.bf16.mxu0 %v6320
        %7586 = vmatpush2.bf16.msra.mxu0 %v6319
        %7587 = vmatprep.subr.bf16.mxu0 %v6314
        %7588 = vmatpush2.bf16.msra.mxu0 %v6313
        %7589 = vmatprep.subr.bf16.mxu0 %v6308
        %7590 = vmatpush2.bf16.msra.mxu0 %v6307
        %7591 = vmatprep.subr.bf16.mxu0 %v6302
        %7592 = vmatpush2.bf16.msra.mxu0 %v6301
        %7593 = vmatprep.subr.bf16.mxu0 %v6296
        %7594 = vmatpush2.bf16.msra.mxu0 %v6295
        %7595 = vmatprep.subr.bf16.mxu0 %v6290
        %7596 = vmatpush2.bf16.msra.mxu0 %v6289
        %7597 = vmatprep.subr.bf16.mxu0 %v6284
        %7598 = vmatpush2.bf16.msra.mxu0 %v6283
        %7599 = vmatprep.subr.bf16.mxu0 %v6278
        %7600 = vmatpush2.bf16.msra.mxu0 %v6277
        %7601 = vmatprep.mubr.bf16.mxu0 %v4502
        %7602 = vmatmul.mubr.bf16.gmra.mxu0 %v4501
        %v7603 = vpop.f32.mrf.mxu0
        %v7604 = vadd.f32 %v7551, %v7603
        %v7605 = vpop.f32.mrf.mxu0
        %v7606 = vadd.f32 %v7553, %v7605
        %v7607 = vpop.f32.mrf.mxu0
        %v7608 = vadd.f32 %v7555, %v7607
        %v7609 = vpop.f32.mrf.mxu0
        %v7610 = vadd.f32 %v7557, %v7609
        %7611 = vmatprep.mubr.bf16.mxu0 %v4512
        %7612 = vmatmul.mubr.bf16.gmra.mxu0 %v4511
        %v7613 = vpop.f32.mrf.mxu0
        %v7614 = vadd.f32 %v7561, %v7613
        %v7615 = vpop.f32.mrf.mxu0
        %v7616 = vadd.f32 %v7563, %v7615
        %v7617 = vpop.f32.mrf.mxu0
        %v7618 = vadd.f32 %v7565, %v7617
        %v7619 = vpop.f32.mrf.mxu0
        %v7620 = vadd.f32 %v7567, %v7619
        %7621 = vdwg.mxu0
        %7622 = vmatprep.subr.bf16.mxu0 %v6368
        %7623 = vmatpush1.bf16.msra.mxu0 %v6367
        %7624 = vmatprep.subr.bf16.mxu0 %v6362
        %7625 = vmatpush1.bf16.msra.mxu0 %v6361
        %7626 = vmatprep.subr.bf16.mxu0 %v6356
        %7627 = vmatpush1.bf16.msra.mxu0 %v6355
        %7628 = vmatprep.subr.bf16.mxu0 %v6350
        %7629 = vmatpush1.bf16.msra.mxu0 %v6349
        %7630 = vmatprep.subr.bf16.mxu0 %v6344
        %7631 = vmatpush1.bf16.msra.mxu0 %v6343
        %7632 = vmatprep.subr.bf16.mxu0 %v6338
        %7633 = vmatpush1.bf16.msra.mxu0 %v6337
        %7634 = vmatprep.subr.bf16.mxu0 %v6332
        %7635 = vmatpush1.bf16.msra.mxu0 %v6331
        %7636 = vmatprep.subr.bf16.mxu0 %v6326
        %7637 = vmatpush1.bf16.msra.mxu0 %v6325
        %7638 = vmatprep.subr.bf16.mxu0 0
        %7639 = vmatpush2.bf16.msra.mxu0 0
        %7640 = vmatprep.subr.bf16.mxu0 0
        %7641 = vmatpush2.bf16.msra.mxu0 0
        %7642 = vmatprep.subr.bf16.mxu0 %v6404
        %7643 = vmatpush2.bf16.msra.mxu0 %v6403
        %7644 = vmatprep.subr.bf16.mxu0 %v6398
        %7645 = vmatpush2.bf16.msra.mxu0 %v6397
        %7646 = vmatprep.subr.bf16.mxu0 %v6392
        %7647 = vmatpush2.bf16.msra.mxu0 %v6391
        %7648 = vmatprep.subr.bf16.mxu0 %v6386
        %7649 = vmatpush2.bf16.msra.mxu0 %v6385
        %7650 = vmatprep.subr.bf16.mxu0 %v6380
        %7651 = vmatpush2.bf16.msra.mxu0 %v6379
        %7652 = vmatprep.subr.bf16.mxu0 %v6374
        %7653 = vmatpush2.bf16.msra.mxu0 %v6373
        %7654 = vmatprep.mubr.bf16.mxu0 %v6875
        %7655 = vmatmul.mubr.bf16.gmra.mxu0 %v4503
        %v7656 = vpop.f32.mrf.mxu0
        %v7657 = vadd.f32 %v7604, %v7656
        %v7658 = vpop.f32.mrf.mxu0
        %v7659 = vadd.f32 %v7606, %v7658
        %v7660 = vpop.f32.mrf.mxu0
        %v7661 = vadd.f32 %v7608, %v7660
        %v7662 = vpop.f32.mrf.mxu0
        %v7663 = vadd.f32 %v7610, %v7662
        %7664 = vmatprep.mubr.bf16.mxu0 %v6878
        %7665 = vmatmul.mubr.bf16.gmra.mxu0 %v4513
        %v7666 = vpop.f32.mrf.mxu0
        %v7667 = vadd.f32 %v7614, %v7666
        %v7668 = vpop.f32.mrf.mxu0
        %v7669 = vadd.f32 %v7616, %v7668
        %v7670 = vpop.f32.mrf.mxu0
        %v7671 = vadd.f32 %v7618, %v7670
        %v7672 = vpop.f32.mrf.mxu0
        %v7673 = vadd.f32 %v7620, %v7672
        %7674 = vdwg.mxu0
        %vm7675 = vcmp.gt.f32.partialorder %v7127, 0.0
        %vm7676 = vcmp.gt.f32.partialorder %v7129, 0.0
        %vm7677 = vcmp.gt.f32.partialorder %v7392, 0.0
        %vm7678 = vcmp.gt.f32.partialorder %v7394, 0.0
        %vm7679 = vcmp.gt.f32.partialorder %v7657, 0.0
        %vm7680 = vcmp.gt.f32.partialorder %v7659, 0.0
        %vm7681 = vcmp.gt.f32.partialorder %v7131, 0.0
        %vm7682 = vcmp.gt.f32.partialorder %v7133, 0.0
        %vm7683 = vcmp.gt.f32.partialorder %v7396, 0.0
        %vm7684 = vcmp.gt.f32.partialorder %v7398, 0.0
        %vm7685 = vcmp.gt.f32.partialorder %v7661, 0.0
        %vm7686 = vcmp.gt.f32.partialorder %v7663, 0.0
        %vm7687 = vcmp.gt.f32.partialorder %v7137, 0.0
        %vm7688 = vcmp.gt.f32.partialorder %v7139, 0.0
        %vm7689 = vcmp.gt.f32.partialorder %v7402, 0.0
        %vm7690 = vcmp.gt.f32.partialorder %v7404, 0.0
        %vm7691 = vcmp.gt.f32.partialorder %v7667, 0.0
        %vm7692 = vcmp.gt.f32.partialorder %v7669, 0.0
        %vm7693 = vcmp.gt.f32.partialorder %v7141, 0.0
        %vm7694 = vcmp.gt.f32.partialorder %v7143, 0.0
        %vm7695 = vcmp.gt.f32.partialorder %v7406, 0.0
        %vm7696 = vcmp.gt.f32.partialorder %v7408, 0.0
        %vm7697 = vcmp.gt.f32.partialorder %v7671, 0.0
        %vm7698 = vcmp.gt.f32.partialorder %v7673, 0.0
        %v7699 = vmin.f32 %v7127, 0.0
        %v7700 = vmin.f32 %v7129, 0.0
        %v7701 = vmin.f32 %v7392, 0.0
        %v7702 = vmin.f32 %v7394, 0.0
        %v7703 = vmin.f32 %v7657, 0.0
        %v7704 = vmin.f32 %v7659, 0.0
        %v7705 = vmin.f32 %v7131, 0.0
        %v7706 = vmin.f32 %v7133, 0.0
        %v7707 = vmin.f32 %v7396, 0.0
        %v7708 = vmin.f32 %v7398, 0.0
        %v7709 = vmin.f32 %v7661, 0.0
        %v7710 = vmin.f32 %v7663, 0.0
        %v7711 = vmin.f32 %v7137, 0.0
        %v7712 = vmin.f32 %v7139, 0.0
        %v7713 = vmin.f32 %v7402, 0.0
        %v7714 = vmin.f32 %v7404, 0.0
        %v7715 = vmin.f32 %v7667, 0.0
        %v7716 = vmin.f32 %v7669, 0.0
        %v7717 = vmin.f32 %v7141, 0.0
        %v7718 = vmin.f32 %v7143, 0.0
        %v7719 = vmin.f32 %v7406, 0.0
        %v7720 = vmin.f32 %v7408, 0.0
        %v7721 = vmin.f32 %v7671, 0.0
        %v7722 = vmin.f32 %v7673, 0.0
        %v7723 = vmul.f32 %v7699, 1.442695
        %v7724 = vpow.pop %v7723
        %v7725 = vmul.f32 %v7700, 1.442695
        %v7726 = vpow.pop %v7725
        %v7727 = vmul.f32 %v7701, 1.442695
        %v7728 = vpow.pop %v7727
        %v7729 = vmul.f32 %v7702, 1.442695
        %v7730 = vpow.pop %v7729
        %v7731 = vmul.f32 %v7703, 1.442695
        %v7732 = vpow.pop %v7731
        %v7733 = vmul.f32 %v7704, 1.442695
        %v7734 = vpow.pop %v7733
        %v7735 = vmul.f32 %v7705, 1.442695
        %v7736 = vpow.pop %v7735
        %v7737 = vmul.f32 %v7706, 1.442695
        %v7738 = vpow.pop %v7737
        %v7739 = vmul.f32 %v7707, 1.442695
        %v7740 = vpow.pop %v7739
        %v7741 = vmul.f32 %v7708, 1.442695
        %v7742 = vpow.pop %v7741
        %v7743 = vmul.f32 %v7709, 1.442695
        %v7744 = vpow.pop %v7743
        %v7745 = vmul.f32 %v7710, 1.442695
        %v7746 = vpow.pop %v7745
        %v7747 = vmul.f32 %v7711, 1.442695
        %v7748 = vpow.pop %v7747
        %v7749 = vmul.f32 %v7712, 1.442695
        %v7750 = vpow.pop %v7749
        %v7751 = vmul.f32 %v7713, 1.442695
        %v7752 = vpow.pop %v7751
        %v7753 = vmul.f32 %v7714, 1.442695
        %v7754 = vpow.pop %v7753
        %v7755 = vmul.f32 %v7715, 1.442695
        %v7756 = vpow.pop %v7755
        %v7757 = vmul.f32 %v7716, 1.442695
        %v7758 = vpow.pop %v7757
        %v7759 = vmul.f32 %v7717, 1.442695
        %v7760 = vpow.pop %v7759
        %v7761 = vmul.f32 %v7718, 1.442695
        %v7762 = vpow.pop %v7761
        %v7763 = vmul.f32 %v7719, 1.442695
        %v7764 = vpow.pop %v7763
        %v7765 = vmul.f32 %v7720, 1.442695
        %v7766 = vpow.pop %v7765
        %v7767 = vmul.f32 %v7721, 1.442695
        %v7768 = vpow.pop %v7767
        %v7769 = vmul.f32 %v7722, 1.442695
        %v7770 = vpow.pop %v7769
        %v7771 = vsub.f32 %v7724, 1.0
        %v7772 = vsub.f32 %v7726, 1.0
        %v7773 = vsub.f32 %v7728, 1.0
        %v7774 = vsub.f32 %v7730, 1.0
        %v7775 = vsub.f32 %v7732, 1.0
        %v7776 = vsub.f32 %v7734, 1.0
        %v7777 = vsub.f32 %v7736, 1.0
        %v7778 = vsub.f32 %v7738, 1.0
        %v7779 = vsub.f32 %v7740, 1.0
        %v7780 = vsub.f32 %v7742, 1.0
        %v7781 = vsub.f32 %v7744, 1.0
        %v7782 = vsub.f32 %v7746, 1.0
        %v7783 = vsub.f32 %v7748, 1.0
        %v7784 = vsub.f32 %v7750, 1.0
        %v7785 = vsub.f32 %v7752, 1.0
        %v7786 = vsub.f32 %v7754, 1.0
        %v7787 = vsub.f32 %v7756, 1.0
        %v7788 = vsub.f32 %v7758, 1.0
        %v7789 = vsub.f32 %v7760, 1.0
        %v7790 = vsub.f32 %v7762, 1.0
        %v7791 = vsub.f32 %v7764, 1.0
        %v7792 = vsub.f32 %v7766, 1.0
        %v7793 = vsub.f32 %v7768, 1.0
        %v7794 = vsub.f32 %v7770, 1.0
        %v7795 = vsel %vm7675, %v7127, %v7771
        %v7796 = vsel %vm7676, %v7129, %v7772
        %v7797 = vsel %vm7677, %v7392, %v7773
        %v7798 = vsel %vm7678, %v7394, %v7774
        %v7799 = vsel %vm7679, %v7657, %v7775
        %v7800 = vsel %vm7680, %v7659, %v7776
        %v7801 = vsel %vm7681, %v7131, %v7777
        %v7802 = vsel %vm7682, %v7133, %v7778
        %v7803 = vsel %vm7683, %v7396, %v7779
        %v7804 = vsel %vm7684, %v7398, %v7780
        %v7805 = vsel %vm7685, %v7661, %v7781
        %v7806 = vsel %vm7686, %v7663, %v7782
        %v7807 = vsel %vm7687, %v7137, %v7783
        %v7808 = vsel %vm7688, %v7139, %v7784
        %v7809 = vsel %vm7689, %v7402, %v7785
        %v7810 = vsel %vm7690, %v7404, %v7786
        %v7811 = vsel %vm7691, %v7667, %v7787
        %v7812 = vsel %vm7692, %v7669, %v7788
        %v7813 = vsel %vm7693, %v7141, %v7789
        %v7814 = vsel %vm7694, %v7143, %v7790
        %v7815 = vsel %vm7695, %v7406, %v7791
        %v7816 = vsel %vm7696, %v7408, %v7792
        %v7817 = vsel %vm7697, %v7671, %v7793
        %v7818 = vsel %vm7698, %v7673, %v7794
        %v7819 = vpack.c.bf16 %v7801, %v7795
        %v7820 = vpack.c.bf16 %v7802, %v7796
        %v7821 = vpack.c.bf16 %v7803, %v7797
        %v7822 = vpack.c.bf16 %v7804, %v7798
        %v7823 = vpack.c.bf16 %v7805, %v7799
        %v7824 = vpack.c.bf16 %v7806, %v7800
        %v7825 = vpack.c.bf16 %v7813, %v7807
        %v7826 = vpack.c.bf16 %v7814, %v7808
        %v7827 = vpack.c.bf16 %v7815, %v7809
        %v7828 = vpack.c.bf16 %v7816, %v7810
        %v7829 = vpack.c.bf16 %v7817, %v7811
        %v7830 = vpack.c.bf16 %v7818, %v7812
        %v7831 = vld [vmem:[%s7] sm:$0xff]
        %v7832 = vld [vmem:[%s7 + $0x8] sm:$0xf]
        %v7833 = vld [vmem:[%s7 + $0xc] sm:$0xff]
        %v7834 = vld [vmem:[%s7 + $0x14] sm:$0xf]
        %v7835 = vld [vmem:[%s7 + $0x18] sm:$0xff]
        %v7836 = vld [vmem:[%s7 + $0x20] sm:$0xf]
        %v7837 = vld [vmem:[%s7 + $0x24] sm:$0xff]
        %v7838 = vld [vmem:[%s7 + $0x2c] sm:$0xf]
        %v7839 = vld [vmem:[%s7 + $0x30] sm:$0xff]
        %v7840 = vld [vmem:[%s7 + $0x38] sm:$0xf]
        %v7841 = vld [vmem:[%s7 + $0x3c] sm:$0xff]
        %v7842 = vld [vmem:[%s7 + $0x44] sm:$0xf]
        %v7843 = vld [vmem:[%s7 + $0x48] sm:$0xff]
        %v7844 = vld [vmem:[%s7 + $0x50] sm:$0xf]
        %v7845 = vld [vmem:[%s7 + $0x54] sm:$0xff]
        %v7846 = vld [vmem:[%s7 + $0x5c] sm:$0xf]
        %v7847 = vld [vmem:[%s7 + $0x60] sm:$0xff]
        %v7848 = vld [vmem:[%s7 + $0x68] sm:$0xf]
        %v7849 = vld [vmem:[%s7 + $0x6c] sm:$0xff]
        %v7850 = vld [vmem:[%s7 + $0x74] sm:$0xf]
        %v7851 = vld [vmem:[%s7 + $0x78] sm:$0xff]
        %v7852 = vld [vmem:[%s7 + $0x80] sm:$0xf]
        %v7853 = vld [vmem:[%s7 + $0x84] sm:$0xff]
        %v7854 = vld [vmem:[%s7 + $0x8c] sm:$0xf]
        %v7855 = vld [vmem:[%s7 + $0x90] sm:$0xff]
        %v7856 = vld [vmem:[%s7 + $0x98] sm:$0xf]
        %v7857 = vld [vmem:[%s7 + $0x9c] sm:$0xff]
        %v7858 = vld [vmem:[%s7 + $0xa4] sm:$0xf]
        %v7859 = vld [vmem:[%s7 + $0xa8] sm:$0xff]
        %v7860 = vld [vmem:[%s7 + $0xb0] sm:$0xf]
        %v7861 = vld [vmem:[%s7 + $0xb4] sm:$0xff]
        %v7862 = vld [vmem:[%s7 + $0xbc] sm:$0xf]
        %v7863 = vld [vmem:[%s7 + $0xc0] sm:$0xff]
        %v7864 = vld [vmem:[%s7 + $0xc8] sm:$0xf]
        %v7865 = vld [vmem:[%s7 + $0xcc] sm:$0xff]
        %v7866 = vld [vmem:[%s7 + $0xd4] sm:$0xf]
        %v7867 = vld [vmem:[%s7 + $0xd8] sm:$0xff]
        %v7868 = vld [vmem:[%s7 + $0xe0] sm:$0xf]
        %v7869 = vld [vmem:[%s7 + $0xe4] sm:$0xff]
        %v7870 = vld [vmem:[%s7 + $0xec] sm:$0xf]
        %v7871 = vld [vmem:[%s7 + $0xf0] sm:$0xff]
        %v7872 = vld [vmem:[%s7 + $0xf8] sm:$0xf]
        %v7873 = vld [vmem:[%s7 + $0xfc] sm:$0xff]
        %v7874 = vld [vmem:[%s7 + $0x104] sm:$0xf]
        %v7875 = vld [vmem:[%s7 + $0x108] sm:$0xff]
        %v7876 = vld [vmem:[%s7 + $0x110] sm:$0xf]
        %v7877 = vld [vmem:[%s7 + $0x114] sm:$0xff]
        %v7878 = vld [vmem:[%s7 + $0x11c] sm:$0xf]
        %v7879 = vld [vmem:[%s7 + $0x120] sm:$0xff]
        %v7880 = vld [vmem:[%s7 + $0x128] sm:$0xf]
        %v7881 = vld [vmem:[%s7 + $0x12c] sm:$0xff]
        %v7882 = vld [vmem:[%s7 + $0x134] sm:$0xf]
        %v7883 = vld [vmem:[%s7 + $0x138] sm:$0xff]
        %v7884 = vld [vmem:[%s7 + $0x140] sm:$0xf]
        %v7885 = vld [vmem:[%s7 + $0x144] sm:$0xff]
        %v7886 = vld [vmem:[%s7 + $0x14c] sm:$0xf]
        %v7887 = vld [vmem:[%s7 + $0x150] sm:$0xff]
        %v7888 = vld [vmem:[%s7 + $0x158] sm:$0xf]
        %v7889 = vld [vmem:[%s7 + $0x15c] sm:$0xff]
        %v7890 = vld [vmem:[%s7 + $0x164] sm:$0xf]
        %v7891 = vld [vmem:[%s7 + $0x168] sm:$0xff]
        %v7892 = vld [vmem:[%s7 + $0x170] sm:$0xf]
        %v7893 = vld [vmem:[%s7 + $0x174] sm:$0xff]
        %v7894 = vld [vmem:[%s7 + $0x17c] sm:$0xf]
        %v7895 = vld [vmem:[%s7 + $0x180] sm:$0xff]
        %v7896 = vld [vmem:[%s7 + $0x188] sm:$0xf]
        %v7897 = vld [vmem:[%s7 + $0x18c] sm:$0xff]
        %v7898 = vld [vmem:[%s7 + $0x194] sm:$0xf]
        %v7899 = vld [vmem:[%s7 + $0x198] sm:$0xff]
        %v7900 = vld [vmem:[%s7 + $0x1a0] sm:$0xf]
        %v7901 = vld [vmem:[%s7 + $0x1a4] sm:$0xff]
        %v7902 = vld [vmem:[%s7 + $0x1ac] sm:$0xf]
        %v7903 = vld [vmem:[%s7 + $0x1b0] sm:$0xff]
        %v7904 = vld [vmem:[%s7 + $0x1b8] sm:$0xf]
        %v7905 = vld [vmem:[%s7 + $0x1bc] sm:$0xff]
        %v7906 = vld [vmem:[%s7 + $0x1c4] sm:$0xf]
        %v7907 = vld [vmem:[%s7 + $0x1c8] sm:$0xff]
        %v7908 = vld [vmem:[%s7 + $0x1d0] sm:$0xf]
        %v7909 = vld [vmem:[%s7 + $0x1d4] sm:$0xff]
        %v7910 = vld [vmem:[%s7 + $0x1dc] sm:$0xf]
        %v7911 = vld [vmem:[%s7 + $0x1e0] sm:$0xff]
        %v7912 = vld [vmem:[%s7 + $0x1e8] sm:$0xf]
        %v7913 = vld [vmem:[%s7 + $0x1ec] sm:$0xff]
        %v7914 = vld [vmem:[%s7 + $0x1f4] sm:$0xf]
        %v7915 = vld [vmem:[%s7 + $0x1f8] sm:$0xff]
        %v7916 = vld [vmem:[%s7 + $0x200] sm:$0xf]
        %v7917 = vld [vmem:[%s7 + $0x204] sm:$0xff]
        %v7918 = vld [vmem:[%s7 + $0x20c] sm:$0xf]
        %v7919 = vld [vmem:[%s7 + $0x210] sm:$0xff]
        %v7920 = vld [vmem:[%s7 + $0x218] sm:$0xf]
        %v7921 = vld [vmem:[%s7 + $0x21c] sm:$0xff]
        %v7922 = vld [vmem:[%s7 + $0x224] sm:$0xf]
        %v7923 = vld [vmem:[%s7 + $0x228] sm:$0xff]
        %v7924 = vld [vmem:[%s7 + $0x230] sm:$0xf]
        %v7925 = vld [vmem:[%s7 + $0x234] sm:$0xff]
        %v7926 = vld [vmem:[%s7 + $0x23c] sm:$0xf]
        %v7927 = vld [vmem:[%s7 + $0x240] sm:$0xff]
        %v7928 = vld [vmem:[%s7 + $0x248] sm:$0xf]
        %v7929 = vld [vmem:[%s7 + $0x24c] sm:$0xff]
        %v7930 = vld [vmem:[%s7 + $0x254] sm:$0xf]
        %v7931 = vld [vmem:[%s7 + $0x258] sm:$0xff]
        %v7932 = vld [vmem:[%s7 + $0x260] sm:$0xf]
        %v7933 = vld [vmem:[%s7 + $0x264] sm:$0xff]
        %v7934 = vld [vmem:[%s7 + $0x26c] sm:$0xf]
        %v7935 = vld [vmem:[%s7 + $0x270] sm:$0xff]
        %v7936 = vld [vmem:[%s7 + $0x278] sm:$0xf]
        %v7937 = vld [vmem:[%s7 + $0x27c] sm:$0xff]
        %v7938 = vld [vmem:[%s7 + $0x284] sm:$0xf]
        %v7939 = vld [vmem:[%s7 + $0x288] sm:$0xff]
        %v7940 = vld [vmem:[%s7 + $0x290] sm:$0xf]
        %v7941 = vld [vmem:[%s7 + $0x294] sm:$0xff]
        %v7942 = vld [vmem:[%s7 + $0x29c] sm:$0xf]
        %v7943 = vld [vmem:[%s7 + $0x2a0] sm:$0xff]
        %v7944 = vld [vmem:[%s7 + $0x2a8] sm:$0xf]
        %v7945 = vld [vmem:[%s7 + $0x2ac] sm:$0xff]
        %v7946 = vld [vmem:[%s7 + $0x2b4] sm:$0xf]
        %v7947 = vld [vmem:[%s7 + $0x2b8] sm:$0xff]
        %v7948 = vld [vmem:[%s7 + $0x2c0] sm:$0xf]
        %v7949 = vld [vmem:[%s7 + $0x2c4] sm:$0xff]
        %v7950 = vld [vmem:[%s7 + $0x2cc] sm:$0xf]
        %v7951 = vld [vmem:[%s7 + $0x2d0] sm:$0xff]
        %v7952 = vld [vmem:[%s7 + $0x2d8] sm:$0xf]
        %v7953 = vld [vmem:[%s7 + $0x2dc] sm:$0xff]
        %v7954 = vld [vmem:[%s7 + $0x2e4] sm:$0xf]
        %v7955 = vld [vmem:[%s7 + $0x2e8] sm:$0xff]
        %v7956 = vld [vmem:[%s7 + $0x2f0] sm:$0xf]
        %v7957 = vld [vmem:[%s7 + $0x2f4] sm:$0xff]
        %v7958 = vld [vmem:[%s7 + $0x2fc] sm:$0xf]
        %v7959 = vld [vmem:[%s7 + $0x300] sm:$0xff]
        %v7960 = vld [vmem:[%s7 + $0x308] sm:$0xf]
        %v7961 = vld [vmem:[%s7 + $0x30c] sm:$0xff]
        %v7962 = vld [vmem:[%s7 + $0x314] sm:$0xf]
        %v7963 = vld [vmem:[%s7 + $0x318] sm:$0xff]
        %v7964 = vld [vmem:[%s7 + $0x320] sm:$0xf]
        %v7965 = vld [vmem:[%s7 + $0x324] sm:$0xff]
        %v7966 = vld [vmem:[%s7 + $0x32c] sm:$0xf]
        %v7967 = vld [vmem:[%s7 + $0x330] sm:$0xff]
        %v7968 = vld [vmem:[%s7 + $0x338] sm:$0xf]
        %v7969 = vld [vmem:[%s7 + $0x33c] sm:$0xff]
        %v7970 = vld [vmem:[%s7 + $0x344] sm:$0xf]
        %v7971 = vld [vmem:[%s7 + $0x348] sm:$0xff]
        %v7972 = vld [vmem:[%s7 + $0x350] sm:$0xf]
        %v7973 = vld [vmem:[%s7 + $0x354] sm:$0xff]
        %v7974 = vld [vmem:[%s7 + $0x35c] sm:$0xf]
        %v7975 = vld [vmem:[%s7 + $0x360] sm:$0xff]
        %v7976 = vld [vmem:[%s7 + $0x368] sm:$0xf]
        %v7977 = vld [vmem:[%s7 + $0x36c] sm:$0xff]
        %v7978 = vld [vmem:[%s7 + $0x374] sm:$0xf]
        %v7979 = vld [vmem:[%s7 + $0x378] sm:$0xff]
        %v7980 = vld [vmem:[%s7 + $0x380] sm:$0xf]
        %v7981 = vld [vmem:[%s7 + $0x384] sm:$0xff]
        %v7982 = vld [vmem:[%s7 + $0x38c] sm:$0xf]
        %v7983 = vld [vmem:[%s7 + $0x390] sm:$0xff]
        %v7984 = vld [vmem:[%s7 + $0x398] sm:$0xf]
        %v7985 = vld [vmem:[%s7 + $0x39c] sm:$0xff]
        %v7986 = vld [vmem:[%s7 + $0x3a4] sm:$0xf]
        %v7987 = vld [vmem:[%s7 + $0x3a8] sm:$0xff]
        %v7988 = vld [vmem:[%s7 + $0x3b0] sm:$0xf]
        %v7989 = vld [vmem:[%s7 + $0x3b4] sm:$0xff]
        %v7990 = vld [vmem:[%s7 + $0x3bc] sm:$0xf]
        %v7991 = vld [vmem:[%s7 + $0x3c0] sm:$0xff]
        %v7992 = vld [vmem:[%s7 + $0x3c8] sm:$0xf]
        %v7993 = vld [vmem:[%s7 + $0x3cc] sm:$0xff]
        %v7994 = vld [vmem:[%s7 + $0x3d4] sm:$0xf]
        %v7995 = vld [vmem:[%s7 + $0x3d8] sm:$0xff]
        %v7996 = vld [vmem:[%s7 + $0x3e0] sm:$0xf]
        %v7997 = vld [vmem:[%s7 + $0x3e4] sm:$0xff]
        %v7998 = vld [vmem:[%s7 + $0x3ec] sm:$0xf]
        %v7999 = vld [vmem:[%s7 + $0x3f0] sm:$0xff]
        %v8000 = vld [vmem:[%s7 + $0x3f8] sm:$0xf]
        %v8001 = vld [vmem:[%s7 + $0x3fc] sm:$0xff]
        %v8002 = vld [vmem:[%s7 + $0x404] sm:$0xf]
        %v8003 = vld [vmem:[%s7 + $0x408] sm:$0xff]
        %v8004 = vld [vmem:[%s7 + $0x410] sm:$0xf]
        %v8005 = vld [vmem:[%s7 + $0x414] sm:$0xff]
        %v8006 = vld [vmem:[%s7 + $0x41c] sm:$0xf]
        %v8183 = vunpack.c.l.b16 %v7831
        %v8184 = vunpack.c.h.b16 %v7831
        %v8185 = vunpack.c.l.b16 %v7832
        %v8186 = vunpack.c.l.b16 %v7833
        %v8187 = vunpack.c.h.b16 %v7833
        %v8188 = vunpack.c.l.b16 %v7834
        %v8189 = vunpack.c.l.b16 %v7835
        %v8190 = vunpack.c.h.b16 %v7835
        %v8191 = vunpack.c.l.b16 %v7836
        %v8192 = vunpack.c.l.b16 %v7837
        %v8193 = vunpack.c.h.b16 %v7837
        %v8194 = vunpack.c.l.b16 %v7838
        %v8195 = vunpack.c.l.b16 %v7839
        %v8196 = vunpack.c.h.b16 %v7839
        %v8197 = vunpack.c.l.b16 %v7840
        %v8198 = vunpack.c.l.b16 %v7841
        %v8199 = vunpack.c.h.b16 %v7841
        %v8200 = vunpack.c.l.b16 %v7842
        %v8201 = vunpack.c.l.b16 %v7843
        %v8202 = vunpack.c.h.b16 %v7843
        %v8203 = vunpack.c.l.b16 %v7844
        %v8204 = vunpack.c.l.b16 %v7845
        %v8205 = vunpack.c.h.b16 %v7845
        %v8206 = vunpack.c.l.b16 %v7846
        %v8207 = vunpack.c.l.b16 %v7847
        %v8208 = vunpack.c.h.b16 %v7847
        %v8209 = vunpack.c.l.b16 %v7848
        %v8210 = vunpack.c.l.b16 %v7849
        %v8211 = vunpack.c.h.b16 %v7849
        %v8212 = vunpack.c.l.b16 %v7850
        %v8213 = vunpack.c.l.b16 %v7851
        %v8214 = vunpack.c.h.b16 %v7851
        %v8215 = vunpack.c.l.b16 %v7852
        %v8216 = vunpack.c.l.b16 %v7853
        %v8217 = vunpack.c.h.b16 %v7853
        %v8218 = vunpack.c.l.b16 %v7854
        %v8219 = vunpack.c.l.b16 %v7855
        %v8220 = vunpack.c.h.b16 %v7855
        %v8221 = vunpack.c.l.b16 %v7856
        %v8222 = vunpack.c.l.b16 %v7857
        %v8223 = vunpack.c.h.b16 %v7857
        %v8224 = vunpack.c.l.b16 %v7858
        %v8225 = vunpack.c.l.b16 %v7859
        %v8226 = vunpack.c.h.b16 %v7859
        %v8227 = vunpack.c.l.b16 %v7860
        %v8228 = vunpack.c.l.b16 %v7861
        %v8229 = vunpack.c.h.b16 %v7861
        %v8230 = vunpack.c.l.b16 %v7862
        %v8231 = vunpack.c.l.b16 %v7863
        %v8232 = vunpack.c.h.b16 %v7863
        %v8233 = vunpack.c.l.b16 %v7864
        %v8234 = vunpack.c.l.b16 %v7865
        %v8235 = vunpack.c.h.b16 %v7865
        %v8236 = vunpack.c.l.b16 %v7866
        %v8237 = vunpack.c.l.b16 %v7867
        %v8238 = vunpack.c.h.b16 %v7867
        %v8239 = vunpack.c.l.b16 %v7868
        %v8240 = vunpack.c.l.b16 %v7869
        %v8241 = vunpack.c.h.b16 %v7869
        %v8242 = vunpack.c.l.b16 %v7870
        %v8243 = vunpack.c.l.b16 %v7871
        %v8244 = vunpack.c.h.b16 %v7871
        %v8245 = vunpack.c.l.b16 %v7872
        %v8246 = vunpack.c.l.b16 %v7873
        %v8247 = vunpack.c.h.b16 %v7873
        %v8248 = vunpack.c.l.b16 %v7874
        %v8249 = vunpack.c.l.b16 %v7875
        %v8250 = vunpack.c.h.b16 %v7875
        %v8251 = vunpack.c.l.b16 %v7876
        %v8252 = vunpack.c.l.b16 %v7877
        %v8253 = vunpack.c.h.b16 %v7877
        %v8254 = vunpack.c.l.b16 %v7878
        %v8255 = vunpack.c.l.b16 %v7879
        %v8256 = vunpack.c.h.b16 %v7879
        %v8257 = vunpack.c.l.b16 %v7880
        %v8258 = vunpack.c.l.b16 %v7881
        %v8259 = vunpack.c.h.b16 %v7881
        %v8260 = vunpack.c.l.b16 %v7882
        %v8261 = vunpack.c.l.b16 %v7883
        %v8262 = vunpack.c.h.b16 %v7883
        %v8263 = vunpack.c.l.b16 %v7884
        %v8264 = vunpack.c.l.b16 %v7885
        %v8265 = vunpack.c.h.b16 %v7885
        %v8266 = vunpack.c.l.b16 %v7886
        %v8267 = vunpack.c.l.b16 %v7887
        %v8268 = vunpack.c.h.b16 %v7887
        %v8269 = vunpack.c.l.b16 %v7888
        %v8270 = vunpack.c.l.b16 %v7889
        %v8271 = vunpack.c.h.b16 %v7889
        %v8272 = vunpack.c.l.b16 %v7890
        %v8273 = vunpack.c.l.b16 %v7891
        %v8274 = vunpack.c.h.b16 %v7891
        %v8275 = vunpack.c.l.b16 %v7892
        %v8276 = vunpack.c.l.b16 %v7893
        %v8277 = vunpack.c.h.b16 %v7893
        %v8278 = vunpack.c.l.b16 %v7894
        %v8279 = vunpack.c.l.b16 %v7895
        %v8280 = vunpack.c.h.b16 %v7895
        %v8281 = vunpack.c.l.b16 %v7896
        %v8282 = vunpack.c.l.b16 %v7897
        %v8283 = vunpack.c.h.b16 %v7897
        %v8284 = vunpack.c.l.b16 %v7898
        %v8285 = vunpack.c.l.b16 %v7899
        %v8286 = vunpack.c.h.b16 %v7899
        %v8287 = vunpack.c.l.b16 %v7900
        %v8288 = vunpack.c.l.b16 %v7901
        %v8289 = vunpack.c.h.b16 %v7901
        %v8290 = vunpack.c.l.b16 %v7902
        %v8291 = vunpack.c.l.b16 %v7903
        %v8292 = vunpack.c.h.b16 %v7903
        %v8293 = vunpack.c.l.b16 %v7904
        %v8294 = vunpack.c.l.b16 %v7905
        %v8295 = vunpack.c.h.b16 %v7905
        %v8296 = vunpack.c.l.b16 %v7906
        %v8297 = vunpack.c.l.b16 %v7907
        %v8298 = vunpack.c.h.b16 %v7907
        %v8299 = vunpack.c.l.b16 %v7908
        %v8300 = vunpack.c.l.b16 %v7909
        %v8301 = vunpack.c.h.b16 %v7909
        %v8302 = vunpack.c.l.b16 %v7910
        %v8303 = vunpack.c.l.b16 %v7911
        %v8304 = vunpack.c.h.b16 %v7911
        %v8305 = vunpack.c.l.b16 %v7912
        %v8306 = vunpack.c.l.b16 %v7913
        %v8307 = vunpack.c.h.b16 %v7913
        %v8308 = vunpack.c.l.b16 %v7914
        %v8309 = vunpack.c.l.b16 %v7915
        %v8310 = vunpack.c.h.b16 %v7915
        %v8311 = vunpack.c.l.b16 %v7916
        %v8312 = vunpack.c.l.b16 %v7917
        %v8313 = vunpack.c.h.b16 %v7917
        %v8314 = vunpack.c.l.b16 %v7918
        %v8315 = vunpack.c.l.b16 %v7919
        %v8316 = vunpack.c.h.b16 %v7919
        %v8317 = vunpack.c.l.b16 %v7920
        %v8318 = vunpack.c.l.b16 %v7921
        %v8319 = vunpack.c.h.b16 %v7921
        %v8320 = vunpack.c.l.b16 %v7922
        %v8321 = vunpack.c.l.b16 %v7923
        %v8322 = vunpack.c.h.b16 %v7923
        %v8323 = vunpack.c.l.b16 %v7924
        %v8324 = vunpack.c.l.b16 %v7925
        %v8325 = vunpack.c.h.b16 %v7925
        %v8326 = vunpack.c.l.b16 %v7926
        %v8327 = vunpack.c.l.b16 %v7927
        %v8328 = vunpack.c.h.b16 %v7927
        %v8329 = vunpack.c.l.b16 %v7928
        %v8330 = vunpack.c.l.b16 %v7929
        %v8331 = vunpack.c.h.b16 %v7929
        %v8332 = vunpack.c.l.b16 %v7930
        %v8333 = vunpack.c.l.b16 %v7931
        %v8334 = vunpack.c.h.b16 %v7931
        %v8335 = vunpack.c.l.b16 %v7932
        %v8336 = vunpack.c.l.b16 %v7933
        %v8337 = vunpack.c.h.b16 %v7933
        %v8338 = vunpack.c.l.b16 %v7934
        %v8339 = vunpack.c.l.b16 %v7935
        %v8340 = vunpack.c.h.b16 %v7935
        %v8341 = vunpack.c.l.b16 %v7936
        %v8342 = vunpack.c.l.b16 %v7937
        %v8343 = vunpack.c.h.b16 %v7937
        %v8344 = vunpack.c.l.b16 %v7938
        %v8345 = vunpack.c.l.b16 %v7939
        %v8346 = vunpack.c.h.b16 %v7939
        %v8347 = vunpack.c.l.b16 %v7940
        %v8348 = vunpack.c.l.b16 %v7941
        %v8349 = vunpack.c.h.b16 %v7941
        %v8350 = vunpack.c.l.b16 %v7942
        %v8351 = vunpack.c.l.b16 %v7943
        %v8352 = vunpack.c.h.b16 %v7943
        %v8353 = vunpack.c.l.b16 %v7944
        %v8354 = vunpack.c.l.b16 %v7945
        %v8355 = vunpack.c.h.b16 %v7945
        %v8356 = vunpack.c.l.b16 %v7946
        %v8357 = vunpack.c.l.b16 %v7947
        %v8358 = vunpack.c.h.b16 %v7947
        %v8359 = vunpack.c.l.b16 %v7948
        %v8360 = vunpack.c.l.b16 %v7949
        %v8361 = vunpack.c.h.b16 %v7949
        %v8362 = vunpack.c.l.b16 %v7950
        %v8363 = vunpack.c.l.b16 %v7951
        %v8364 = vunpack.c.h.b16 %v7951
        %v8365 = vunpack.c.l.b16 %v7952
        %v8366 = vunpack.c.l.b16 %v7953
        %v8367 = vunpack.c.h.b16 %v7953
        %v8368 = vunpack.c.l.b16 %v7954
        %v8369 = vunpack.c.l.b16 %v7955
        %v8370 = vunpack.c.h.b16 %v7955
        %v8371 = vunpack.c.l.b16 %v7956
        %v8372 = vunpack.c.l.b16 %v7957
        %v8373 = vunpack.c.h.b16 %v7957
        %v8374 = vunpack.c.l.b16 %v7958
        %v8375 = vunpack.c.l.b16 %v7959
        %v8376 = vunpack.c.h.b16 %v7959
        %v8377 = vunpack.c.l.b16 %v7960
        %v8378 = vunpack.c.l.b16 %v7961
        %v8379 = vunpack.c.h.b16 %v7961
        %v8380 = vunpack.c.l.b16 %v7962
        %v8381 = vunpack.c.l.b16 %v7963
        %v8382 = vunpack.c.h.b16 %v7963
        %v8383 = vunpack.c.l.b16 %v7964
        %v8384 = vunpack.c.l.b16 %v7965
        %v8385 = vunpack.c.h.b16 %v7965
        %v8386 = vunpack.c.l.b16 %v7966
        %v8387 = vunpack.c.l.b16 %v7967
        %v8388 = vunpack.c.h.b16 %v7967
        %v8389 = vunpack.c.l.b16 %v7968
        %v8390 = vunpack.c.l.b16 %v7969
        %v8391 = vunpack.c.h.b16 %v7969
        %v8392 = vunpack.c.l.b16 %v7970
        %v8393 = vunpack.c.l.b16 %v7971
        %v8394 = vunpack.c.h.b16 %v7971
        %v8395 = vunpack.c.l.b16 %v7972
        %v8396 = vunpack.c.l.b16 %v7973
        %v8397 = vunpack.c.h.b16 %v7973
        %v8398 = vunpack.c.l.b16 %v7974
        %v8399 = vunpack.c.l.b16 %v7975
        %v8400 = vunpack.c.h.b16 %v7975
        %v8401 = vunpack.c.l.b16 %v7976
        %v8402 = vunpack.c.l.b16 %v7977
        %v8403 = vunpack.c.h.b16 %v7977
        %v8404 = vunpack.c.l.b16 %v7978
        %v8405 = vunpack.c.l.b16 %v7979
        %v8406 = vunpack.c.h.b16 %v7979
        %v8407 = vunpack.c.l.b16 %v7980
        %v8408 = vunpack.c.l.b16 %v7981
        %v8409 = vunpack.c.h.b16 %v7981
        %v8410 = vunpack.c.l.b16 %v7982
        %v8411 = vunpack.c.l.b16 %v7983
        %v8412 = vunpack.c.h.b16 %v7983
        %v8413 = vunpack.c.l.b16 %v7984
        %v8414 = vunpack.c.l.b16 %v7985
        %v8415 = vunpack.c.h.b16 %v7985
        %v8416 = vunpack.c.l.b16 %v7986
        %v8417 = vunpack.c.l.b16 %v7987
        %v8418 = vunpack.c.h.b16 %v7987
        %v8419 = vunpack.c.l.b16 %v7988
        %v8420 = vunpack.c.l.b16 %v7989
        %v8421 = vunpack.c.h.b16 %v7989
        %v8422 = vunpack.c.l.b16 %v7990
        %v8423 = vunpack.c.l.b16 %v7991
        %v8424 = vunpack.c.h.b16 %v7991
        %v8425 = vunpack.c.l.b16 %v7992
        %v8426 = vunpack.c.l.b16 %v7993
        %v8427 = vunpack.c.h.b16 %v7993
        %v8428 = vunpack.c.l.b16 %v7994
        %v8429 = vunpack.c.l.b16 %v7995
        %v8430 = vunpack.c.h.b16 %v7995
        %v8431 = vunpack.c.l.b16 %v7996
        %v8432 = vunpack.c.l.b16 %v7997
        %v8433 = vunpack.c.h.b16 %v7997
        %v8434 = vunpack.c.l.b16 %v7998
        %v8435 = vunpack.c.l.b16 %v7999
        %v8436 = vunpack.c.h.b16 %v7999
        %v8437 = vunpack.c.l.b16 %v8000
        %v8438 = vunpack.c.l.b16 %v8001
        %v8439 = vunpack.c.h.b16 %v8001
        %v8440 = vunpack.c.l.b16 %v8002
        %v8441 = vunpack.c.l.b16 %v8003
        %v8442 = vunpack.c.h.b16 %v8003
        %v8443 = vunpack.c.l.b16 %v8004
        %v8444 = vunpack.c.l.b16 %v8005
        %v8445 = vunpack.c.h.b16 %v8005
        %v8446 = vunpack.c.l.b16 %v8006
        %v8447 = vpack.c.b16 %v8186, %v8183
        %v8448 = vpack.c.b16 %v8187, %v8184
        %v8449 = vpack.c.b16 %v8188, %v8185
        %v8450 = vpack.c.b16 %v8192, %v8189
        %v8451 = vpack.c.b16 %v8193, %v8190
        %v8452 = vpack.c.b16 %v8194, %v8191
        %v8453 = vpack.c.b16 %v8198, %v8195
        %v8454 = vpack.c.b16 %v8199, %v8196
        %v8455 = vpack.c.b16 %v8200, %v8197
        %v8456 = vpack.c.b16 %v8204, %v8201
        %v8457 = vpack.c.b16 %v8205, %v8202
        %v8458 = vpack.c.b16 %v8206, %v8203
        %v8459 = vpack.c.b16 %v8210, %v8207
        %v8460 = vpack.c.b16 %v8211, %v8208
        %v8461 = vpack.c.b16 %v8212, %v8209
        %v8462 = vpack.c.b16 %v8216, %v8213
        %v8463 = vpack.c.b16 %v8217, %v8214
        %v8464 = vpack.c.b16 %v8218, %v8215
        %v8465 = vpack.c.b16 %v8222, %v8219
        %v8466 = vpack.c.b16 %v8223, %v8220
        %v8467 = vpack.c.b16 %v8224, %v8221
        %v8468 = vpack.c.b16 %v8228, %v8225
        %v8469 = vpack.c.b16 %v8229, %v8226
        %v8470 = vpack.c.b16 %v8230, %v8227
        %v8471 = vpack.c.b16 %v8234, %v8231
        %v8472 = vpack.c.b16 %v8235, %v8232
        %v8473 = vpack.c.b16 %v8236, %v8233
        %v8474 = vpack.c.b16 %v8240, %v8237
        %v8475 = vpack.c.b16 %v8241, %v8238
        %v8476 = vpack.c.b16 %v8242, %v8239
        %v8477 = vpack.c.b16 %v8246, %v8243
        %v8478 = vpack.c.b16 %v8247, %v8244
        %v8479 = vpack.c.b16 %v8248, %v8245
        %v8480 = vpack.c.b16 %v8252, %v8249
        %v8481 = vpack.c.b16 %v8253, %v8250
        %v8482 = vpack.c.b16 %v8254, %v8251
        %v8483 = vpack.c.b16 %v8258, %v8255
        %v8484 = vpack.c.b16 %v8259, %v8256
        %v8485 = vpack.c.b16 %v8260, %v8257
        %v8486 = vpack.c.b16 %v8264, %v8261
        %v8487 = vpack.c.b16 %v8265, %v8262
        %v8488 = vpack.c.b16 %v8266, %v8263
        %v8489 = vpack.c.b16 %v8270, %v8267
        %v8490 = vpack.c.b16 %v8271, %v8268
        %v8491 = vpack.c.b16 %v8272, %v8269
        %v8492 = vpack.c.b16 %v8276, %v8273
        %v8493 = vpack.c.b16 %v8277, %v8274
        %v8494 = vpack.c.b16 %v8278, %v8275
        %v8495 = vpack.c.b16 %v8282, %v8279
        %v8496 = vpack.c.b16 %v8283, %v8280
        %v8497 = vpack.c.b16 %v8284, %v8281
        %v8498 = vpack.c.b16 %v8288, %v8285
        %v8499 = vpack.c.b16 %v8289, %v8286
        %v8500 = vpack.c.b16 %v8290, %v8287
        %v8501 = vpack.c.b16 %v8294, %v8291
        %v8502 = vpack.c.b16 %v8295, %v8292
        %v8503 = vpack.c.b16 %v8296, %v8293
        %v8504 = vpack.c.b16 %v8300, %v8297
        %v8505 = vpack.c.b16 %v8301, %v8298
        %v8506 = vpack.c.b16 %v8302, %v8299
        %v8507 = vpack.c.b16 %v8306, %v8303
        %v8508 = vpack.c.b16 %v8307, %v8304
        %v8509 = vpack.c.b16 %v8308, %v8305
        %v8510 = vpack.c.b16 %v8312, %v8309
        %v8511 = vpack.c.b16 %v8313, %v8310
        %v8512 = vpack.c.b16 %v8314, %v8311
        %v8513 = vpack.c.b16 %v8318, %v8315
        %v8514 = vpack.c.b16 %v8319, %v8316
        %v8515 = vpack.c.b16 %v8320, %v8317
        %v8516 = vpack.c.b16 %v8324, %v8321
        %v8517 = vpack.c.b16 %v8325, %v8322
        %v8518 = vpack.c.b16 %v8326, %v8323
        %v8519 = vpack.c.b16 %v8330, %v8327
        %v8520 = vpack.c.b16 %v8331, %v8328
        %v8521 = vpack.c.b16 %v8332, %v8329
        %v8522 = vpack.c.b16 %v8336, %v8333
        %v8523 = vpack.c.b16 %v8337, %v8334
        %v8524 = vpack.c.b16 %v8338, %v8335
        %v8525 = vpack.c.b16 %v8342, %v8339
        %v8526 = vpack.c.b16 %v8343, %v8340
        %v8527 = vpack.c.b16 %v8344, %v8341
        %v8528 = vpack.c.b16 %v8348, %v8345
        %v8529 = vpack.c.b16 %v8349, %v8346
        %v8530 = vpack.c.b16 %v8350, %v8347
        %v8531 = vpack.c.b16 %v8354, %v8351
        %v8532 = vpack.c.b16 %v8355, %v8352
        %v8533 = vpack.c.b16 %v8356, %v8353
        %v8534 = vpack.c.b16 %v8360, %v8357
        %v8535 = vpack.c.b16 %v8361, %v8358
        %v8536 = vpack.c.b16 %v8362, %v8359
        %v8537 = vpack.c.b16 %v8366, %v8363
        %v8538 = vpack.c.b16 %v8367, %v8364
        %v8539 = vpack.c.b16 %v8368, %v8365
        %v8540 = vpack.c.b16 %v8372, %v8369
        %v8541 = vpack.c.b16 %v8373, %v8370
        %v8542 = vpack.c.b16 %v8374, %v8371
        %v8543 = vpack.c.b16 %v8378, %v8375
        %v8544 = vpack.c.b16 %v8379, %v8376
        %v8545 = vpack.c.b16 %v8380, %v8377
        %v8546 = vpack.c.b16 %v8384, %v8381
        %v8547 = vpack.c.b16 %v8385, %v8382
        %v8548 = vpack.c.b16 %v8386, %v8383
        %v8549 = vpack.c.b16 %v8390, %v8387
        %v8550 = vpack.c.b16 %v8391, %v8388
        %v8551 = vpack.c.b16 %v8392, %v8389
        %v8552 = vpack.c.b16 %v8396, %v8393
        %v8553 = vpack.c.b16 %v8397, %v8394
        %v8554 = vpack.c.b16 %v8398, %v8395
        %v8555 = vpack.c.b16 %v8402, %v8399
        %v8556 = vpack.c.b16 %v8403, %v8400
        %v8557 = vpack.c.b16 %v8404, %v8401
        %v8558 = vpack.c.b16 %v8408, %v8405
        %v8559 = vpack.c.b16 %v8409, %v8406
        %v8560 = vpack.c.b16 %v8410, %v8407
        %v8561 = vpack.c.b16 %v8414, %v8411
        %v8562 = vpack.c.b16 %v8415, %v8412
        %v8563 = vpack.c.b16 %v8416, %v8413
        %v8564 = vpack.c.b16 %v8420, %v8417
        %v8565 = vpack.c.b16 %v8421, %v8418
        %v8566 = vpack.c.b16 %v8422, %v8419
        %v8567 = vpack.c.b16 %v8426, %v8423
        %v8568 = vpack.c.b16 %v8427, %v8424
        %v8569 = vpack.c.b16 %v8428, %v8425
        %v8570 = vpack.c.b16 %v8432, %v8429
        %v8571 = vpack.c.b16 %v8433, %v8430
        %v8572 = vpack.c.b16 %v8434, %v8431
        %v8573 = vpack.c.b16 %v8438, %v8435
        %v8574 = vpack.c.b16 %v8439, %v8436
        %v8575 = vpack.c.b16 %v8440, %v8437
        %v8576 = vpack.c.b16 %v8444, %v8441
        %v8577 = vpack.c.b16 %v8445, %v8442
        %v8578 = vpack.c.b16 %v8446, %v8443
        %v8712 = vsel %vm2794, %v7824, 0
        %v8715 = vsel %vm2794, %v7830, 0
        %8717 = vmatprep.subr.bf16.mxu0 %v8469
        %8718 = vmatpush1.bf16.msra.mxu0 %v8468
        %8719 = vmatprep.subr.bf16.mxu0 %v8466
        %8720 = vmatpush1.bf16.msra.mxu0 %v8465
        %8721 = vmatprep.subr.bf16.mxu0 %v8463
        %8722 = vmatpush1.bf16.msra.mxu0 %v8462
        %8723 = vmatprep.subr.bf16.mxu0 %v8460
        %8724 = vmatpush1.bf16.msra.mxu0 %v8459
        %8725 = vmatprep.subr.bf16.mxu0 %v8457
        %8726 = vmatpush1.bf16.msra.mxu0 %v8456
        %8727 = vmatprep.subr.bf16.mxu0 %v8454
        %8728 = vmatpush1.bf16.msra.mxu0 %v8453
        %8729 = vmatprep.subr.bf16.mxu0 %v8451
        %8730 = vmatpush1.bf16.msra.mxu0 %v8450
        %8731 = vmatprep.subr.bf16.mxu0 %v8448
        %8732 = vmatpush1.bf16.msra.mxu0 %v8447
        %8733 = vmatprep.subr.bf16.mxu0 %v8493
        %8734 = vmatpush2.bf16.msra.mxu0 %v8492
        %8735 = vmatprep.subr.bf16.mxu0 %v8490
        %8736 = vmatpush2.bf16.msra.mxu0 %v8489
        %8737 = vmatprep.subr.bf16.mxu0 %v8487
        %8738 = vmatpush2.bf16.msra.mxu0 %v8486
        %8739 = vmatprep.subr.bf16.mxu0 %v8484
        %8740 = vmatpush2.bf16.msra.mxu0 %v8483
        %8741 = vmatprep.subr.bf16.mxu0 %v8481
        %8742 = vmatpush2.bf16.msra.mxu0 %v8480
        %8743 = vmatprep.subr.bf16.mxu0 %v8478
        %8744 = vmatpush2.bf16.msra.mxu0 %v8477
        %8745 = vmatprep.subr.bf16.mxu0 %v8475
        %8746 = vmatpush2.bf16.msra.mxu0 %v8474
        %8747 = vmatprep.subr.bf16.mxu0 %v8472
        %8748 = vmatpush2.bf16.msra.mxu0 %v8471
        %8749 = vmatprep.mubr.bf16.mxu0 %v7820
        %8750 = vmatmul.mubr.bf16.gmra.mxu0 %v7819
        %v8751 = vpop.f32.mrf.mxu0
        %v8752 = vadd.f32 0.0, %v8751
        %v8753 = vpop.f32.mrf.mxu0
        %v8754 = vadd.f32 0.0, %v8753
        %v8755 = vpop.f32.mrf.mxu0
        %v8756 = vadd.f32 0.0, %v8755
        %v8757 = vpop.f32.mrf.mxu0
        %v8758 = vadd.f32 0.0, %v8757
        %8759 = vmatprep.mubr.bf16.mxu0 %v7826
        %8760 = vmatmul.mubr.bf16.gmra.mxu0 %v7825
        %v8761 = vpop.f32.mrf.mxu0
        %v8762 = vadd.f32 0.0, %v8761
        %v8763 = vpop.f32.mrf.mxu0
        %v8764 = vadd.f32 0.0, %v8763
        %v8765 = vpop.f32.mrf.mxu0
        %v8766 = vadd.f32 0.0, %v8765
        %v8767 = vpop.f32.mrf.mxu0
        %v8768 = vadd.f32 0.0, %v8767
        %8769 = vdwg.mxu0
        %8770 = vmatprep.subr.bf16.mxu0 %v8517
        %8771 = vmatpush1.bf16.msra.mxu0 %v8516
        %8772 = vmatprep.subr.bf16.mxu0 %v8514
        %8773 = vmatpush1.bf16.msra.mxu0 %v8513
        %8774 = vmatprep.subr.bf16.mxu0 %v8511
        %8775 = vmatpush1.bf16.msra.mxu0 %v8510
        %8776 = vmatprep.subr.bf16.mxu0 %v8508
        %8777 = vmatpush1.bf16.msra.mxu0 %v8507
        %8778 = vmatprep.subr.bf16.mxu0 %v8505
        %8779 = vmatpush1.bf16.msra.mxu0 %v8504
        %8780 = vmatprep.subr.bf16.mxu0 %v8502
        %8781 = vmatpush1.bf16.msra.mxu0 %v8501
        %8782 = vmatprep.subr.bf16.mxu0 %v8499
        %8783 = vmatpush1.bf16.msra.mxu0 %v8498
        %8784 = vmatprep.subr.bf16.mxu0 %v8496
        %8785 = vmatpush1.bf16.msra.mxu0 %v8495
        %8786 = vmatprep.subr.bf16.mxu0 %v8541
        %8787 = vmatpush2.bf16.msra.mxu0 %v8540
        %8788 = vmatprep.subr.bf16.mxu0 %v8538
        %8789 = vmatpush2.bf16.msra.mxu0 %v8537
        %8790 = vmatprep.subr.bf16.mxu0 %v8535
        %8791 = vmatpush2.bf16.msra.mxu0 %v8534
        %8792 = vmatprep.subr.bf16.mxu0 %v8532
        %8793 = vmatpush2.bf16.msra.mxu0 %v8531
        %8794 = vmatprep.subr.bf16.mxu0 %v8529
        %8795 = vmatpush2.bf16.msra.mxu0 %v8528
        %8796 = vmatprep.subr.bf16.mxu0 %v8526
        %8797 = vmatpush2.bf16.msra.mxu0 %v8525
        %8798 = vmatprep.subr.bf16.mxu0 %v8523
        %8799 = vmatpush2.bf16.msra.mxu0 %v8522
        %8800 = vmatprep.subr.bf16.mxu0 %v8520
        %8801 = vmatpush2.bf16.msra.mxu0 %v8519
        %8802 = vmatprep.mubr.bf16.mxu0 %v7822
        %8803 = vmatmul.mubr.bf16.gmra.mxu0 %v7821
        %v8804 = vpop.f32.mrf.mxu0
        %v8805 = vadd.f32 %v8752, %v8804
        %v8806 = vpop.f32.mrf.mxu0
        %v8807 = vadd.f32 %v8754, %v8806
        %v8808 = vpop.f32.mrf.mxu0
        %v8809 = vadd.f32 %v8756, %v8808
        %v8810 = vpop.f32.mrf.mxu0
        %v8811 = vadd.f32 %v8758, %v8810
        %8812 = vmatprep.mubr.bf16.mxu0 %v7828
        %8813 = vmatmul.mubr.bf16.gmra.mxu0 %v7827
        %v8814 = vpop.f32.mrf.mxu0
        %v8815 = vadd.f32 %v8762, %v8814
        %v8816 = vpop.f32.mrf.mxu0
        %v8817 = vadd.f32 %v8764, %v8816
        %v8818 = vpop.f32.mrf.mxu0
        %v8819 = vadd.f32 %v8766, %v8818
        %v8820 = vpop.f32.mrf.mxu0
        %v8821 = vadd.f32 %v8768, %v8820
        %8822 = vdwg.mxu0
        %8823 = vmatprep.subr.bf16.mxu0 %v8565
        %8824 = vmatpush1.bf16.msra.mxu0 %v8564
        %8825 = vmatprep.subr.bf16.mxu0 %v8562
        %8826 = vmatpush1.bf16.msra.mxu0 %v8561
        %8827 = vmatprep.subr.bf16.mxu0 %v8559
        %8828 = vmatpush1.bf16.msra.mxu0 %v8558
        %8829 = vmatprep.subr.bf16.mxu0 %v8556
        %8830 = vmatpush1.bf16.msra.mxu0 %v8555
        %8831 = vmatprep.subr.bf16.mxu0 %v8553
        %8832 = vmatpush1.bf16.msra.mxu0 %v8552
        %8833 = vmatprep.subr.bf16.mxu0 %v8550
        %8834 = vmatpush1.bf16.msra.mxu0 %v8549
        %8835 = vmatprep.subr.bf16.mxu0 %v8547
        %8836 = vmatpush1.bf16.msra.mxu0 %v8546
        %8837 = vmatprep.subr.bf16.mxu0 %v8544
        %8838 = vmatpush1.bf16.msra.mxu0 %v8543
        %8839 = vmatprep.subr.bf16.mxu0 0
        %8840 = vmatpush2.bf16.msra.mxu0 0
        %8841 = vmatprep.subr.bf16.mxu0 0
        %8842 = vmatpush2.bf16.msra.mxu0 0
        %8843 = vmatprep.subr.bf16.mxu0 0
        %8844 = vmatpush2.bf16.msra.mxu0 0
        %8845 = vmatprep.subr.bf16.mxu0 0
        %8846 = vmatpush2.bf16.msra.mxu0 0
        %8847 = vmatprep.subr.bf16.mxu0 %v8577
        %8848 = vmatpush2.bf16.msra.mxu0 %v8576
        %8849 = vmatprep.subr.bf16.mxu0 %v8574
        %8850 = vmatpush2.bf16.msra.mxu0 %v8573
        %8851 = vmatprep.subr.bf16.mxu0 %v8571
        %8852 = vmatpush2.bf16.msra.mxu0 %v8570
        %8853 = vmatprep.subr.bf16.mxu0 %v8568
        %8854 = vmatpush2.bf16.msra.mxu0 %v8567
        %8855 = vmatprep.mubr.bf16.mxu0 %v8712
        %8856 = vmatmul.mubr.bf16.gmra.mxu0 %v7823
        %v8857 = vpop.f32.mrf.mxu0
        %v8858 = vadd.f32 %v8805, %v8857
        %v8859 = vpop.f32.mrf.mxu0
        %v8860 = vadd.f32 %v8807, %v8859
        %v8861 = vpop.f32.mrf.mxu0
        %v8862 = vadd.f32 %v8809, %v8861
        %v8863 = vpop.f32.mrf.mxu0
        %v8864 = vadd.f32 %v8811, %v8863
        %8865 = vmatprep.mubr.bf16.mxu0 %v8715
        %8866 = vmatmul.mubr.bf16.gmra.mxu0 %v7829
        %v8867 = vpop.f32.mrf.mxu0
        %v8868 = vadd.f32 %v8815, %v8867
        %v8869 = vpop.f32.mrf.mxu0
        %v8870 = vadd.f32 %v8817, %v8869
        %v8871 = vpop.f32.mrf.mxu0
        %v8872 = vadd.f32 %v8819, %v8871
        %v8873 = vpop.f32.mrf.mxu0
        %v8874 = vadd.f32 %v8821, %v8873
        %8875 = vdwg.mxu0
        %8876 = vmatprep.subr.bf16.mxu0 0
        %8877 = vmatpush1.bf16.msra.mxu0 %v8470
        %8878 = vmatprep.subr.bf16.mxu0 0
        %8879 = vmatpush1.bf16.msra.mxu0 %v8467
        %8880 = vmatprep.subr.bf16.mxu0 0
        %8881 = vmatpush1.bf16.msra.mxu0 %v8464
        %8882 = vmatprep.subr.bf16.mxu0 0
        %8883 = vmatpush1.bf16.msra.mxu0 %v8461
        %8884 = vmatprep.subr.bf16.mxu0 0
        %8885 = vmatpush1.bf16.msra.mxu0 %v8458
        %8886 = vmatprep.subr.bf16.mxu0 0
        %8887 = vmatpush1.bf16.msra.mxu0 %v8455
        %8888 = vmatprep.subr.bf16.mxu0 0
        %8889 = vmatpush1.bf16.msra.mxu0 %v8452
        %8890 = vmatprep.subr.bf16.mxu0 0
        %8891 = vmatpush1.bf16.msra.mxu0 %v8449
        %8892 = vmatprep.subr.bf16.mxu0 0
        %8893 = vmatpush2.bf16.msra.mxu0 %v8494
        %8894 = vmatprep.subr.bf16.mxu0 0
        %8895 = vmatpush2.bf16.msra.mxu0 %v8491
        %8896 = vmatprep.subr.bf16.mxu0 0
        %8897 = vmatpush2.bf16.msra.mxu0 %v8488
        %8898 = vmatprep.subr.bf16.mxu0 0
        %8899 = vmatpush2.bf16.msra.mxu0 %v8485
        %8900 = vmatprep.subr.bf16.mxu0 0
        %8901 = vmatpush2.bf16.msra.mxu0 %v8482
        %8902 = vmatprep.subr.bf16.mxu0 0
        %8903 = vmatpush2.bf16.msra.mxu0 %v8479
        %8904 = vmatprep.subr.bf16.mxu0 0
        %8905 = vmatpush2.bf16.msra.mxu0 %v8476
        %8906 = vmatprep.subr.bf16.mxu0 0
        %8907 = vmatpush2.bf16.msra.mxu0 %v8473
        %8908 = vmatprep.mubr.bf16.mxu0 %v7820
        %8909 = vmatmul.mubr.bf16.gmra.mxu0 %v7819
        %v8910 = vpop.f32.mrf.mxu0
        %v8911 = vadd.f32 0.0, %v8910
        %v8912 = vpop.f32.mrf.mxu0
        %v8913 = vpop.f32.mrf.mxu0
        %v8914 = vadd.f32 0.0, %v8913
        %v8915 = vpop.f32.mrf.mxu0
        %8916 = vmatprep.mubr.bf16.mxu0 %v7826
        %8917 = vmatmul.mubr.bf16.gmra.mxu0 %v7825
        %v8918 = vpop.f32.mrf.mxu0
        %v8919 = vadd.f32 0.0, %v8918
        %v8920 = vpop.f32.mrf.mxu0
        %v8921 = vpop.f32.mrf.mxu0
        %v8922 = vadd.f32 0.0, %v8921
        %v8923 = vpop.f32.mrf.mxu0
        %8924 = vdwg.mxu0
        %8925 = vmatprep.subr.bf16.mxu0 0
        %8926 = vmatpush1.bf16.msra.mxu0 %v8518
        %8927 = vmatprep.subr.bf16.mxu0 0
        %8928 = vmatpush1.bf16.msra.mxu0 %v8515
        %8929 = vmatprep.subr.bf16.mxu0 0
        %8930 = vmatpush1.bf16.msra.mxu0 %v8512
        %8931 = vmatprep.subr.bf16.mxu0 0
        %8932 = vmatpush1.bf16.msra.mxu0 %v8509
        %8933 = vmatprep.subr.bf16.mxu0 0
        %8934 = vmatpush1.bf16.msra.mxu0 %v8506
        %8935 = vmatprep.subr.bf16.mxu0 0
        %8936 = vmatpush1.bf16.msra.mxu0 %v8503
        %8937 = vmatprep.subr.bf16.mxu0 0
        %8938 = vmatpush1.bf16.msra.mxu0 %v8500
        %8939 = vmatprep.subr.bf16.mxu0 0
        %8940 = vmatpush1.bf16.msra.mxu0 %v8497
        %8941 = vmatprep.subr.bf16.mxu0 0
        %8942 = vmatpush2.bf16.msra.mxu0 %v8542
        %8943 = vmatprep.subr.bf16.mxu0 0
        %8944 = vmatpush2.bf16.msra.mxu0 %v8539
        %8945 = vmatprep.subr.bf16.mxu0 0
        %8946 = vmatpush2.bf16.msra.mxu0 %v8536
        %8947 = vmatprep.subr.bf16.mxu0 0
        %8948 = vmatpush2.bf16.msra.mxu0 %v8533
        %8949 = vmatprep.subr.bf16.mxu0 0
        %8950 = vmatpush2.bf16.msra.mxu0 %v8530
        %8951 = vmatprep.subr.bf16.mxu0 0
        %8952 = vmatpush2.bf16.msra.mxu0 %v8527
        %8953 = vmatprep.subr.bf16.mxu0 0
        %8954 = vmatpush2.bf16.msra.mxu0 %v8524
        %8955 = vmatprep.subr.bf16.mxu0 0
        %8956 = vmatpush2.bf16.msra.mxu0 %v8521
        %8957 = vmatprep.mubr.bf16.mxu0 %v7822
        %8958 = vmatmul.mubr.bf16.gmra.mxu0 %v7821
        %v8959 = vpop.f32.mrf.mxu0
        %v8960 = vadd.f32 %v8911, %v8959
        %v8961 = vpop.f32.mrf.mxu0
        %v8962 = vpop.f32.mrf.mxu0
        %v8963 = vadd.f32 %v8914, %v8962
        %v8964 = vpop.f32.mrf.mxu0
        %8965 = vmatprep.mubr.bf16.mxu0 %v7828
        %8966 = vmatmul.mubr.bf16.gmra.mxu0 %v7827
        %v8967 = vpop.f32.mrf.mxu0
        %v8968 = vadd.f32 %v8919, %v8967
        %v8969 = vpop.f32.mrf.mxu0
        %v8970 = vpop.f32.mrf.mxu0
        %v8971 = vadd.f32 %v8922, %v8970
        %v8972 = vpop.f32.mrf.mxu0
        %8973 = vdwg.mxu0
        %8974 = vmatprep.subr.bf16.mxu0 0
        %8975 = vmatpush1.bf16.msra.mxu0 %v8566
        %8976 = vmatprep.subr.bf16.mxu0 0
        %8977 = vmatpush1.bf16.msra.mxu0 %v8563
        %8978 = vmatprep.subr.bf16.mxu0 0
        %8979 = vmatpush1.bf16.msra.mxu0 %v8560
        %8980 = vmatprep.subr.bf16.mxu0 0
        %8981 = vmatpush1.bf16.msra.mxu0 %v8557
        %8982 = vmatprep.subr.bf16.mxu0 0
        %8983 = vmatpush1.bf16.msra.mxu0 %v8554
        %8984 = vmatprep.subr.bf16.mxu0 0
        %8985 = vmatpush1.bf16.msra.mxu0 %v8551
        %8986 = vmatprep.subr.bf16.mxu0 0
        %8987 = vmatpush1.bf16.msra.mxu0 %v8548
        %8988 = vmatprep.subr.bf16.mxu0 0
        %8989 = vmatpush1.bf16.msra.mxu0 %v8545
        %8990 = vmatprep.subr.bf16.mxu0 0
        %8991 = vmatpush2.bf16.msra.mxu0 0
        %8992 = vmatprep.subr.bf16.mxu0 0
        %8993 = vmatpush2.bf16.msra.mxu0 0
        %8994 = vmatprep.subr.bf16.mxu0 0
        %8995 = vmatpush2.bf16.msra.mxu0 0
        %8996 = vmatprep.subr.bf16.mxu0 0
        %8997 = vmatpush2.bf16.msra.mxu0 0
        %8998 = vmatprep.subr.bf16.mxu0 0
        %8999 = vmatpush2.bf16.msra.mxu0 %v8578
        %9000 = vmatprep.subr.bf16.mxu0 0
        %9001 = vmatpush2.bf16.msra.mxu0 %v8575
        %9002 = vmatprep.subr.bf16.mxu0 0
        %9003 = vmatpush2.bf16.msra.mxu0 %v8572
        %9004 = vmatprep.subr.bf16.mxu0 0
        %9005 = vmatpush2.bf16.msra.mxu0 %v8569
        %9006 = vmatprep.mubr.bf16.mxu0 %v8712
        %9007 = vmatmul.mubr.bf16.gmra.mxu0 %v7823
        %v9008 = vpop.f32.mrf.mxu0
        %v9009 = vadd.f32 %v8960, %v9008
        %v9010 = vpop.f32.mrf.mxu0
        %v9011 = vpop.f32.mrf.mxu0
        %v9012 = vadd.f32 %v8963, %v9011
        %v9013 = vpop.f32.mrf.mxu0
        %9014 = vmatprep.mubr.bf16.mxu0 %v8715
        %9015 = vmatmul.mubr.bf16.gmra.mxu0 %v7829
        %v9016 = vpop.f32.mrf.mxu0
        %v9017 = vadd.f32 %v8968, %v9016
        %v9018 = vpop.f32.mrf.mxu0
        %v9019 = vpop.f32.mrf.mxu0
        %v9020 = vadd.f32 %v8971, %v9019
        %v9021 = vpop.f32.mrf.mxu0
        %9022 = vdwg.mxu0
        %v9023 = vld [vmem:[%s8] sm:$0xf]
        %v9024 = vld [vmem:[%s8 + $0x4] sm:$0x1]
        %v9025 = vpack.c.bf16 %v8862, %v8858
        %v9026 = vpack.c.bf16 %v8864, %v8860
        %v9027 = vpack.c.bf16 %v9012, %v9009
        %v9028 = vpack.c.bf16 %v8872, %v8868
        %v9029 = vpack.c.bf16 %v8874, %v8870
        %v9030 = vpack.c.bf16 %v9020, %v9017
        %v9033 = vunpack.c.l.b16 %v9023
        %v9034 = vunpack.c.l.b16 %v9024
        %v9035 = vpack.c.b16 %v9034, %v9033
        %vm9036 = vcmask 261120
        %v9038 = vsel %vm9036, %v9035, 0
        %9040 = vmatprep.subr.bf16.mxu0 0
        %9041 = vmatpush1.bf16.msra.mxu0 0
        %9042 = vmatprep.subr.bf16.mxu0 0
        %9043 = vmatpush1.bf16.msra.mxu0 0
        %9044 = vmatprep.subr.bf16.mxu0 0
        %9045 = vmatpush1.bf16.msra.mxu0 0
        %9046 = vmatprep.subr.bf16.mxu0 0
        %9047 = vmatpush1.bf16.msra.mxu0 0
        %9048 = vmatprep.subr.bf16.mxu0 0
        %9049 = vmatpush1.bf16.msra.mxu0 0
        %9050 = vmatprep.subr.bf16.mxu0 0
        %9051 = vmatpush1.bf16.msra.mxu0 0
        %9052 = vmatprep.subr.bf16.mxu0 %v9029
        %9053 = vmatpush1.bf16.msra.mxu0 %v9028
        %9054 = vmatprep.subr.bf16.mxu0 %v9026
        %9055 = vmatpush1.bf16.msra.mxu0 %v9025
        %9056 = vmatprep.subr.bf16.mxu0 0
        %9057 = vmatpush2.bf16.msra.mxu0 0
        %9058 = vmatprep.subr.bf16.mxu0 0
        %9059 = vmatpush2.bf16.msra.mxu0 0
        %9060 = vmatprep.subr.bf16.mxu0 0
        %9061 = vmatpush2.bf16.msra.mxu0 0
        %9062 = vmatprep.subr.bf16.mxu0 0
        %9063 = vmatpush2.bf16.msra.mxu0 0
        %9064 = vmatprep.subr.bf16.mxu0 0
        %9065 = vmatpush2.bf16.msra.mxu0 0
        %9066 = vmatprep.subr.bf16.mxu0 0
        %9067 = vmatpush2.bf16.msra.mxu0 0
        %9068 = vmatprep.subr.bf16.mxu0 0
        %9069 = vmatpush2.bf16.msra.mxu0 0
        %9070 = vmatprep.subr.bf16.mxu0 0
        %9071 = vmatpush2.bf16.msra.mxu0 0
        %9072 = vmatprep.mubr.bf16.mxu0 0
        %9073 = vmatmul.mubr.bf16.gmra.mxu0 %v9038
        %v9074 = vpop.f32.mrf.mxu0
        %v9075 = vadd.f32 0.0, %v9074
        %v9076 = vpop.f32.mrf.mxu0
        %v9077 = vadd.f32 0.0, %v9076
        %v9078 = vpop.f32.mrf.mxu0
        %v9079 = vadd.f32 0.0, %v9078
        %v9080 = vpop.f32.mrf.mxu0
        %v9081 = vadd.f32 0.0, %v9080
        %9082 = vdwg.mxu0
        %9083 = vmatprep.subr.bf16.mxu0 0
        %9084 = vmatpush1.bf16.msra.mxu0 0
        %9085 = vmatprep.subr.bf16.mxu0 0
        %9086 = vmatpush1.bf16.msra.mxu0 0
        %9087 = vmatprep.subr.bf16.mxu0 0
        %9088 = vmatpush1.bf16.msra.mxu0 0
        %9089 = vmatprep.subr.bf16.mxu0 0
        %9090 = vmatpush1.bf16.msra.mxu0 0
        %9091 = vmatprep.subr.bf16.mxu0 0
        %9092 = vmatpush1.bf16.msra.mxu0 0
        %9093 = vmatprep.subr.bf16.mxu0 0
        %9094 = vmatpush1.bf16.msra.mxu0 0
        %9095 = vmatprep.subr.bf16.mxu0 0
        %9096 = vmatpush1.bf16.msra.mxu0 %v9030
        %9097 = vmatprep.subr.bf16.mxu0 0
        %9098 = vmatpush1.bf16.msra.mxu0 %v9027
        %9099 = vmatprep.subr.bf16.mxu0 0
        %9100 = vmatpush2.bf16.msra.mxu0 0
        %9101 = vmatprep.subr.bf16.mxu0 0
        %9102 = vmatpush2.bf16.msra.mxu0 0
        %9103 = vmatprep.subr.bf16.mxu0 0
        %9104 = vmatpush2.bf16.msra.mxu0 0
        %9105 = vmatprep.subr.bf16.mxu0 0
        %9106 = vmatpush2.bf16.msra.mxu0 0
        %9107 = vmatprep.subr.bf16.mxu0 0
        %9108 = vmatpush2.bf16.msra.mxu0 0
        %9109 = vmatprep.subr.bf16.mxu0 0
        %9110 = vmatpush2.bf16.msra.mxu0 0
        %9111 = vmatprep.subr.bf16.mxu0 0
        %9112 = vmatpush2.bf16.msra.mxu0 0
        %9113 = vmatprep.subr.bf16.mxu0 0
        %9114 = vmatpush2.bf16.msra.mxu0 0
        %9115 = vmatprep.mubr.bf16.mxu0 0
        %9116 = vmatmul.mubr.bf16.gmra.mxu0 %v9038
        %v9117 = vpop.f32.mrf.mxu0
        %v9118 = vadd.f32 0.0, %v9117
        %v9119 = vpop.f32.mrf.mxu0
        %v9120 = vpop.f32.mrf.mxu0
        %v9121 = vadd.f32 0.0, %v9120
        %v9122 = vpop.f32.mrf.mxu0
        %9123 = vdwg.mxu0
        %v9124 = vpack.c.bf16 %v9079, %v9075
        %v9125 = vpack.c.bf16 %v9081, %v9077
        %v9126 = vpack.c.bf16 %v9121, %v9118
        %v9130 = vcombine.low %v9124, %v9125
        %v9132 = vunpack.c.l.s4 1966171168
        %v9133 = vunpack.c.0.s8 %v9132
        %v9134 = vlaneseq
        %v9135 = vshrl.u32 %v9134, 7
        %v9136 = vsub.s32 %v9133, %v9135
        %v9137 = vrot.slane %v9130, %v9136
        %v9139 = vunpack.c.l.s4 1966171168
        %v9140 = vunpack.c.0.s8 %v9139
        %v9141 = vlaneseq
        %v9142 = vshrl.u32 %v9141, 7
        %v9143 = vsub.s32 %v9140, %v9142
        %v9144 = vrot.slane %v9126, %v9143
        %v9145 = vcombine.low %v9137, %v9144
        %v9147 = vunpack.c.l.s4 1966171168
        %v9148 = vunpack.c.0.s8 %v9147
        %v9149 = vlaneseq
        %v9150 = vshrl.u32 %v9149, 7
        %v9151 = vsub.s32 %v9148, %v9150
        %v9152 = vrot.slane %v9145, %v9151
        %vm9154 = vcmask 1040384
        %vm9155 = vcmask 1041409
        %vm9156 = vmor %vm9155, %vm9154
        %vm9157 = vcmask 518146
        %vm9158 = vmor %vm9157, %vm9156
        %9159 = vst.msk [vmem:[#allocation4] sm:$0x7] %vm9158, %v9152
        %v9160 = vcombine.high %v9137, %v9144
        %v9162 = vunpack.c.l.s4 1966171168
        %v9163 = vunpack.c.0.s8 %v9162
        %v9164 = vlaneseq
        %v9165 = vshrl.u32 %v9164, 7
        %v9166 = vsub.s32 %v9163, %v9165
        %v9167 = vrot.slane %v9160, %v9166
        %9168 = vrot.lane.b32.xlu0 %v9167, 64
        %v9169 = vpop.permute.xlu0 %9168
        %v9170 = vrot.slane %v9169, 7
        %v9171 = vsel %vm3882, %v9170, %v9169
        %vm9173 = vcmask 1040896
        %vm9174 = vmor %vm9155, %vm9173
        %vm9175 = vcmask 1042434
        %vm9176 = vmor %vm9175, %vm9174
        %9177 = vst.msk [vmem:[#allocation4 + $0x2] sm:$0x7] %vm9176, %v9171
        %v9178 = vcombine.high %v9152, %v9152
        %9180 = vst.msk [vmem:[#allocation4 + $0x5] sm:$0x7] %vm9158, %v9178
        %v9181 = vcombine.high %v9167, %v9167
        %9182 = vrot.lane.b32.xlu0 %v9181, 64
        %v9183 = vpop.permute.xlu0 %9182
        %v9184 = vrot.slane %v9183, 7
        %v9185 = vsel %vm3882, %v9184, %v9183
        %9187 = vst.msk [vmem:[#allocation4 + $0x7] sm:$0x7] %vm9176, %v9185
        %v9188 = vcombine.high %v9124, %v9125
        %v9189 = vcombine.high %v9126, %v9126
        %v9191 = vunpack.c.l.s4 1966171168
        %v9192 = vunpack.c.0.s8 %v9191
        %v9193 = vlaneseq
        %v9194 = vshrl.u32 %v9193, 7
        %v9195 = vsub.s32 %v9192, %v9194
        %v9196 = vrot.slane %v9188, %v9195
        %v9198 = vunpack.c.l.s4 1966171168
        %v9199 = vunpack.c.0.s8 %v9198
        %v9200 = vlaneseq
        %v9201 = vshrl.u32 %v9200, 7
        %v9202 = vsub.s32 %v9199, %v9201
        %v9203 = vrot.slane %v9189, %v9202
        %v9204 = vcombine.low %v9196, %v9203
        %v9206 = vunpack.c.l.s4 1966171168
        %v9207 = vunpack.c.0.s8 %v9206
        %v9208 = vlaneseq
        %v9209 = vshrl.u32 %v9208, 7
        %v9210 = vsub.s32 %v9207, %v9209
        %v9211 = vrot.slane %v9204, %v9210
        %9213 = vst.msk [vmem:[#allocation4 + $0xa] sm:$0x7] %vm9158, %v9211
        %v9214 = vld [vmem:[#allocation4] sm:$0xff]
        %v9215 = vld [vmem:[#allocation4 + $0x8] sm:$0x1f]
        %v9216 = vld [vmem:[%s9] sm:$0xff]
        %v9217 = vld [vmem:[%s9 + $0x8] sm:$0xff]
        %v9218 = vld [vmem:[%s9 + $0x10] sm:$0xff]
        %v9219 = vld [vmem:[%s9 + $0x18] sm:$0xff]
        %v9220 = vld [vmem:[%s9 + $0x20] sm:$0xff]
        %v9221 = vld [vmem:[%s9 + $0x28] sm:$0xff]
        %v9222 = vld [vmem:[%s9 + $0x30] sm:$0xff]
        %v9223 = vld [vmem:[%s9 + $0x38] sm:$0xff]
        %v9224 = vld [vmem:[%s9 + $0x40] sm:$0xff]
        %v9225 = vld [vmem:[%s9 + $0x48] sm:$0xff]
        %v9226 = vld [vmem:[%s9 + $0x50] sm:$0xff]
        %v9227 = vld [vmem:[%s9 + $0x58] sm:$0xff]
        %v9228 = vld [vmem:[%s9 + $0x60] sm:$0xff]
        %v9229 = vld [vmem:[%s9 + $0x68] sm:$0xff]
        %v9230 = vld [vmem:[%s9 + $0x70] sm:$0xff]
        %v9231 = vld [vmem:[%s9 + $0x78] sm:$0xff]
        %v9232 = vld [vmem:[%s9 + $0x80] sm:$0xff]
        %v9233 = vld [vmem:[%s9 + $0x88] sm:$0xff]
        %v9234 = vld [vmem:[%s9 + $0x90] sm:$0xff]
        %v9235 = vld [vmem:[%s9 + $0x98] sm:$0xff]
        %v9236 = vld [vmem:[%s9 + $0xa0] sm:$0xff]
        %v9237 = vld [vmem:[%s9 + $0xa8] sm:$0xff]
        %v9238 = vld [vmem:[%s9 + $0xb0] sm:$0xff]
        %v9239 = vld [vmem:[%s9 + $0xb8] sm:$0xff]
        %v9240 = vld [vmem:[%s9 + $0xc0] sm:$0xff]
        %v9241 = vld [vmem:[%s9 + $0xc8] sm:$0xff]
        %v9242 = vld [vmem:[%s9 + $0xd0] sm:$0xff]
        %v9243 = vld [vmem:[%s9 + $0xd8] sm:$0xff]
        %v9244 = vld [vmem:[%s9 + $0xe0] sm:$0xff]
        %v9245 = vld [vmem:[%s9 + $0xe8] sm:$0xff]
        %v9246 = vld [vmem:[%s9 + $0xf0] sm:$0xff]
        %v9247 = vld [vmem:[%s9 + $0xf8] sm:$0xff]
        %v9248 = vld [vmem:[%s9 + $0x100] sm:$0xff]
        %v9249 = vld [vmem:[%s9 + $0x108] sm:$0xff]
        %v9250 = vld [vmem:[%s9 + $0x110] sm:$0xff]
        %v9251 = vld [vmem:[%s9 + $0x118] sm:$0xff]
        %v9252 = vld [vmem:[%s9 + $0x120] sm:$0xff]
        %v9253 = vld [vmem:[%s9 + $0x128] sm:$0xff]
        %v9254 = vld [vmem:[%s9 + $0x130] sm:$0xff]
        %v9255 = vld [vmem:[%s9 + $0x138] sm:$0xff]
        %v9256 = vld [vmem:[%s9 + $0x140] sm:$0xff]
        %v9257 = vld [vmem:[%s9 + $0x148] sm:$0xff]
        %v9258 = vld [vmem:[%s9 + $0x150] sm:$0xff]
        %v9259 = vld [vmem:[%s9 + $0x158] sm:$0xff]
        %v9260 = vld [vmem:[%s9 + $0x160] sm:$0xff]
        %v9261 = vld [vmem:[%s9 + $0x168] sm:$0xff]
        %v9262 = vld [vmem:[%s9 + $0x170] sm:$0xff]
        %v9263 = vld [vmem:[%s9 + $0x178] sm:$0xff]
        %v9264 = vld [vmem:[%s9 + $0x180] sm:$0xff]
        %v9265 = vld [vmem:[%s9 + $0x188] sm:$0xff]
        %v9266 = vld [vmem:[%s9 + $0x190] sm:$0xff]
        %v9267 = vld [vmem:[%s9 + $0x198] sm:$0xff]
        %v9268 = vld [vmem:[%s9 + $0x1a0] sm:$0xff]
        %v9269 = vld [vmem:[%s9 + $0x1a8] sm:$0xff]
        %v9270 = vld [vmem:[%s9 + $0x1b0] sm:$0xff]
        %v9271 = vld [vmem:[%s9 + $0x1b8] sm:$0xff]
        %v9272 = vld [vmem:[%s9 + $0x1c0] sm:$0xff]
        %v9273 = vld [vmem:[%s9 + $0x1c8] sm:$0xff]
        %v9274 = vld [vmem:[%s9 + $0x1d0] sm:$0xff]
        %v9275 = vld [vmem:[%s9 + $0x1d8] sm:$0xff]
        %v9276 = vld [vmem:[%s9 + $0x1e0] sm:$0xff]
        %v9277 = vld [vmem:[%s9 + $0x1e8] sm:$0xff]
        %v9278 = vld [vmem:[%s9 + $0x1f0] sm:$0xff]
        %v9279 = vld [vmem:[%s9 + $0x1f8] sm:$0xff]
        %v9280 = vld [vmem:[%s9 + $0x200] sm:$0xff]
        %v9281 = vld [vmem:[%s9 + $0x208] sm:$0xff]
        %v9282 = vld [vmem:[%s9 + $0x210] sm:$0xff]
        %v9283 = vld [vmem:[%s9 + $0x218] sm:$0xff]
        %v9284 = vld [vmem:[%s9 + $0x220] sm:$0xff]
        %v9285 = vld [vmem:[%s9 + $0x228] sm:$0xff]
        %v9286 = vld [vmem:[%s9 + $0x230] sm:$0xff]
        %v9287 = vld [vmem:[%s9 + $0x238] sm:$0xff]
        %v9288 = vld [vmem:[%s9 + $0x240] sm:$0xff]
        %v9289 = vld [vmem:[%s9 + $0x248] sm:$0xff]
        %v9290 = vld [vmem:[%s9 + $0x250] sm:$0xff]
        %v9291 = vld [vmem:[%s9 + $0x258] sm:$0xff]
        %v9292 = vld [vmem:[%s9 + $0x260] sm:$0xff]
        %v9293 = vld [vmem:[%s9 + $0x268] sm:$0xff]
        %v9294 = vld [vmem:[%s9 + $0x270] sm:$0xff]
        %v9295 = vld [vmem:[%s9 + $0x278] sm:$0xff]
        %v9296 = vld [vmem:[%s9 + $0x280] sm:$0xff]
        %v9297 = vld [vmem:[%s9 + $0x288] sm:$0xff]
        %v9298 = vld [vmem:[%s9 + $0x290] sm:$0xff]
        %v9299 = vld [vmem:[%s9 + $0x298] sm:$0xff]
        %v9300 = vld [vmem:[%s9 + $0x2a0] sm:$0xff]
        %v9301 = vld [vmem:[%s9 + $0x2a8] sm:$0xff]
        %v9302 = vld [vmem:[%s9 + $0x2b0] sm:$0xff]
        %v9303 = vld [vmem:[%s9 + $0x2b8] sm:$0xff]
        %v9304 = vld [vmem:[%s9 + $0x2c0] sm:$0xff]
        %v9305 = vld [vmem:[%s9 + $0x2c8] sm:$0xff]
        %v9306 = vld [vmem:[%s9 + $0x2d0] sm:$0xff]
        %v9307 = vld [vmem:[%s9 + $0x2d8] sm:$0xff]
        %v9308 = vld [vmem:[%s9 + $0x2e0] sm:$0xff]
        %v9309 = vld [vmem:[%s9 + $0x2e8] sm:$0xff]
        %v9310 = vld [vmem:[%s9 + $0x2f0] sm:$0xff]
        %v9311 = vld [vmem:[%s9 + $0x2f8] sm:$0xff]
        %v9312 = vld [vmem:[%s9 + $0x300] sm:$0xff]
        %v9313 = vld [vmem:[%s9 + $0x308] sm:$0xff]
        %v9314 = vld [vmem:[%s9 + $0x310] sm:$0xff]
        %v9315 = vld [vmem:[%s9 + $0x318] sm:$0xff]
        %v9316 = vld [vmem:[%s9 + $0x320] sm:$0xff]
        %v9317 = vld [vmem:[%s9 + $0x328] sm:$0xff]
        %v9318 = vld [vmem:[%s9 + $0x330] sm:$0xff]
        %v9319 = vld [vmem:[%s9 + $0x338] sm:$0xff]
        %v9320 = vld [vmem:[%s9 + $0x340] sm:$0xff]
        %v9321 = vld [vmem:[%s9 + $0x348] sm:$0xff]
        %v9322 = vld [vmem:[%s9 + $0x350] sm:$0xff]
        %v9323 = vld [vmem:[%s9 + $0x358] sm:$0xff]
        %v9324 = vld [vmem:[%s9 + $0x360] sm:$0xff]
        %v9325 = vld [vmem:[%s9 + $0x368] sm:$0xff]
        %v9326 = vld [vmem:[%s9 + $0x370] sm:$0xff]
        %v9327 = vld [vmem:[%s9 + $0x378] sm:$0xff]
        %v9328 = vld [vmem:[%s9 + $0x380] sm:$0xff]
        %v9329 = vld [vmem:[%s9 + $0x388] sm:$0xff]
        %v9330 = vld [vmem:[%s9 + $0x390] sm:$0xff]
        %v9331 = vld [vmem:[%s9 + $0x398] sm:$0xff]
        %v9332 = vld [vmem:[%s9 + $0x3a0] sm:$0xff]
        %v9333 = vld [vmem:[%s9 + $0x3a8] sm:$0xff]
        %v9334 = vld [vmem:[%s9 + $0x3b0] sm:$0xff]
        %v9335 = vld [vmem:[%s9 + $0x3b8] sm:$0xff]
        %v9336 = vld [vmem:[%s9 + $0x3c0] sm:$0xff]
        %v9337 = vld [vmem:[%s9 + $0x3c8] sm:$0xff]
        %v9338 = vld [vmem:[%s9 + $0x3d0] sm:$0xff]
        %v9339 = vld [vmem:[%s9 + $0x3d8] sm:$0xff]
        %v9340 = vld [vmem:[%s9 + $0x3e0] sm:$0xff]
        %v9341 = vld [vmem:[%s9 + $0x3e8] sm:$0xff]
        %v9342 = vld [vmem:[%s9 + $0x3f0] sm:$0xff]
        %v9343 = vld [vmem:[%s9 + $0x3f8] sm:$0xff]
        %v9344 = vld [vmem:[%s9 + $0x400] sm:$0xff]
        %v9345 = vld [vmem:[%s9 + $0x408] sm:$0xff]
        %v9346 = vld [vmem:[%s9 + $0x410] sm:$0xff]
        %v9347 = vld [vmem:[%s9 + $0x418] sm:$0xff]
        %v9348 = vld [vmem:[%s9 + $0x420] sm:$0xff]
        %v9349 = vld [vmem:[%s9 + $0x428] sm:$0xff]
        %v9350 = vld [vmem:[%s9 + $0x430] sm:$0xff]
        %v9351 = vld [vmem:[%s9 + $0x438] sm:$0xff]
        %v9352 = vld [vmem:[%s9 + $0x440] sm:$0xff]
        %v9353 = vld [vmem:[%s9 + $0x448] sm:$0xff]
        %v9354 = vld [vmem:[%s9 + $0x450] sm:$0xff]
        %v9355 = vld [vmem:[%s9 + $0x458] sm:$0xff]
        %v9356 = vld [vmem:[%s9 + $0x460] sm:$0xff]
        %v9357 = vld [vmem:[%s9 + $0x468] sm:$0xff]
        %v9358 = vld [vmem:[%s9 + $0x470] sm:$0xff]
        %v9359 = vld [vmem:[%s9 + $0x478] sm:$0xff]
        %v9360 = vld [vmem:[%s9 + $0x480] sm:$0xff]
        %v9361 = vld [vmem:[%s9 + $0x488] sm:$0xff]
        %v9362 = vld [vmem:[%s9 + $0x490] sm:$0xff]
        %v9363 = vld [vmem:[%s9 + $0x498] sm:$0xff]
        %v9364 = vld [vmem:[%s9 + $0x4a0] sm:$0xff]
        %v9365 = vld [vmem:[%s9 + $0x4a8] sm:$0xff]
        %v9366 = vld [vmem:[%s9 + $0x4b0] sm:$0xff]
        %v9367 = vld [vmem:[%s9 + $0x4b8] sm:$0xff]
        %v9368 = vld [vmem:[%s9 + $0x4c0] sm:$0xff]
        %v9369 = vld [vmem:[%s9 + $0x4c8] sm:$0xff]
        %v9370 = vld [vmem:[%s9 + $0x4d0] sm:$0xff]
        %v9371 = vld [vmem:[%s9 + $0x4d8] sm:$0xff]
        %v9372 = vld [vmem:[%s9 + $0x4e0] sm:$0xff]
        %v9373 = vld [vmem:[%s9 + $0x4e8] sm:$0xff]
        %v9374 = vld [vmem:[%s9 + $0x4f0] sm:$0xff]
        %v9375 = vld [vmem:[%s9 + $0x4f8] sm:$0xff]
        %v9376 = vld [vmem:[%s9 + $0x500] sm:$0xff]
        %v9377 = vld [vmem:[%s9 + $0x508] sm:$0xff]
        %v9378 = vld [vmem:[%s9 + $0x510] sm:$0xff]
        %v9379 = vld [vmem:[%s9 + $0x518] sm:$0xff]
        %v9380 = vld [vmem:[%s9 + $0x520] sm:$0xff]
        %v9381 = vld [vmem:[%s9 + $0x528] sm:$0xff]
        %v9382 = vld [vmem:[%s9 + $0x530] sm:$0xff]
        %v9383 = vld [vmem:[%s9 + $0x538] sm:$0xff]
        %v9384 = vld [vmem:[%s9 + $0x540] sm:$0xff]
        %v9385 = vld [vmem:[%s9 + $0x548] sm:$0xff]
        %v9386 = vld [vmem:[%s9 + $0x550] sm:$0xff]
        %v9387 = vld [vmem:[%s9 + $0x558] sm:$0xff]
        %v9388 = vld [vmem:[%s9 + $0x560] sm:$0xff]
        %v9389 = vld [vmem:[%s9 + $0x568] sm:$0xff]
        %v9390 = vld [vmem:[%s9 + $0x570] sm:$0xff]
        %v9391 = vld [vmem:[%s9 + $0x578] sm:$0xff]
        %v9392 = vld [vmem:[%s9 + $0x580] sm:$0xff]
        %v9393 = vld [vmem:[%s9 + $0x588] sm:$0xff]
        %v9394 = vld [vmem:[%s9 + $0x590] sm:$0xff]
        %v9395 = vld [vmem:[%s9 + $0x598] sm:$0xff]
        %v9396 = vld [vmem:[%s9 + $0x5a0] sm:$0xff]
        %v9397 = vld [vmem:[%s9 + $0x5a8] sm:$0xff]
        %v9398 = vld [vmem:[%s9 + $0x5b0] sm:$0xff]
        %v9399 = vld [vmem:[%s9 + $0x5b8] sm:$0xff]
        %v9400 = vld [vmem:[%s9 + $0x5c0] sm:$0xff]
        %v9401 = vld [vmem:[%s9 + $0x5c8] sm:$0xff]
        %v9402 = vld [vmem:[%s9 + $0x5d0] sm:$0xff]
        %v9403 = vld [vmem:[%s9 + $0x5d8] sm:$0xff]
        %v9404 = vld [vmem:[%s9 + $0x5e0] sm:$0xff]
        %v9405 = vld [vmem:[%s9 + $0x5e8] sm:$0xff]
        %v9406 = vld [vmem:[%s9 + $0x5f0] sm:$0xff]
        %v9407 = vld [vmem:[%s9 + $0x5f8] sm:$0xff]
        %v9408 = vld [vmem:[%s9 + $0x600] sm:$0xff]
        %v9409 = vld [vmem:[%s9 + $0x608] sm:$0xff]
        %v9410 = vld [vmem:[%s9 + $0x610] sm:$0xff]
        %v9411 = vld [vmem:[%s9 + $0x618] sm:$0xff]
        %v9412 = vld [vmem:[%s9 + $0x620] sm:$0xff]
        %v9413 = vld [vmem:[%s9 + $0x628] sm:$0xff]
        %v9414 = vld [vmem:[%s9 + $0x630] sm:$0xff]
        %v9415 = vld [vmem:[%s9 + $0x638] sm:$0xff]
        %v9416 = vld [vmem:[%s10] sm:$0x3]
        %v9418 = vlaneseq
        %v9419 = vshrl.u32 %v9418, 7
        %v9420 = vsub.s32 0, %v9419
        %v9421 = vrot.slane %v9416, %v9420
        %v9422 = vlaneseq
        %v9423 = vshrl.u32 %v9422, 7
        %v9424 = vsub.s32 1, %v9423
        %v9425 = vrot.slane %v9416, %v9424
        %v9430 = vcombine.high %v9214, %v9214
        %v9432 = vunpack.c.l.s4 1966171168
        %v9433 = vunpack.c.0.s8 %v9432
        %v9434 = vlaneseq
        %v9435 = vshrl.u32 %v9434, 7
        %v9436 = vsub.s32 %v9433, %v9435
        %v9437 = vrot.slane %v9214, %v9436
        %v9439 = vunpack.c.l.s4 1966171168
        %v9440 = vunpack.c.0.s8 %v9439
        %v9441 = vlaneseq
        %v9442 = vshrl.u32 %v9441, 7
        %v9443 = vsub.s32 %v9440, %v9442
        %v9444 = vrot.slane %v9430, %v9443
        %v9445 = vcombine.high %v9437, %v9437
        %v9446 = vcombine.high %v9444, %v9444
        %v9448 = vunpack.c.l.s4 1966171168
        %v9449 = vunpack.c.0.s8 %v9448
        %v9450 = vlaneseq
        %v9451 = vshrl.u32 %v9450, 7
        %v9452 = vsub.s32 %v9449, %v9451
        %v9453 = vrot.slane %v9437, %v9452
        %v9455 = vunpack.c.l.s4 1966171168
        %v9456 = vunpack.c.0.s8 %v9455
        %v9457 = vlaneseq
        %v9458 = vshrl.u32 %v9457, 7
        %v9459 = vsub.s32 %v9456, %v9458
        %v9460 = vrot.slane %v9444, %v9459
        %v9462 = vunpack.c.l.s4 1966171168
        %v9463 = vunpack.c.0.s8 %v9462
        %v9464 = vlaneseq
        %v9465 = vshrl.u32 %v9464, 7
        %v9466 = vsub.s32 %v9463, %v9465
        %v9467 = vrot.slane %v9445, %v9466
        %v9469 = vunpack.c.l.s4 1966171168
        %v9470 = vunpack.c.0.s8 %v9469
        %v9471 = vlaneseq
        %v9472 = vshrl.u32 %v9471, 7
        %v9473 = vsub.s32 %v9470, %v9472
        %v9474 = vrot.slane %v9446, %v9473
        %v9475 = vcombine.high %v9453, %v9453
        %v9476 = vcombine.high %v9460, %v9460
        %v9477 = vcombine.high %v9467, %v9467
        %v9478 = vcombine.high %v9474, %v9474
        %v9479 = vcombine.high %v9215, %v9215
        %v9481 = vunpack.c.l.s4 1966171168
        %v9482 = vunpack.c.0.s8 %v9481
        %v9483 = vlaneseq
        %v9484 = vshrl.u32 %v9483, 7
        %v9485 = vsub.s32 %v9482, %v9484
        %v9486 = vrot.slane %v9215, %v9485
        %v9488 = vunpack.c.l.s4 1966171168
        %v9489 = vunpack.c.0.s8 %v9488
        %v9490 = vlaneseq
        %v9491 = vshrl.u32 %v9490, 7
        %v9492 = vsub.s32 %v9489, %v9491
        %v9493 = vrot.slane %v9479, %v9492
        %v9494 = vcombine.high %v9486, %v9486
        %v9496 = vunpack.c.l.s4 1966171168
        %v9497 = vunpack.c.0.s8 %v9496
        %v9498 = vlaneseq
        %v9499 = vshrl.u32 %v9498, 7
        %v9500 = vsub.s32 %v9497, %v9499
        %v9501 = vrot.slane %v9486, %v9500
        %v9503 = vunpack.c.l.s4 1966171168
        %v9504 = vunpack.c.0.s8 %v9503
        %v9505 = vlaneseq
        %v9506 = vshrl.u32 %v9505, 7
        %v9507 = vsub.s32 %v9504, %v9506
        %v9508 = vrot.slane %v9493, %v9507
        %v9510 = vunpack.c.l.s4 1966171168
        %v9511 = vunpack.c.0.s8 %v9510
        %v9512 = vlaneseq
        %v9513 = vshrl.u32 %v9512, 7
        %v9514 = vsub.s32 %v9511, %v9513
        %v9515 = vrot.slane %v9494, %v9514
        %v9516 = vcombine.high %v9501, %v9501
        %v9517 = vcombine.high %v9515, %v9515
        %v9730 = vunpack.c.l.b16 %v9216
        %v9731 = vunpack.c.h.b16 %v9216
        %v9732 = vunpack.c.l.b16 %v9217
        %v9733 = vunpack.c.h.b16 %v9217
        %v9734 = vunpack.c.l.b16 %v9218
        %v9735 = vunpack.c.h.b16 %v9218
        %v9736 = vunpack.c.l.b16 %v9219
        %v9737 = vunpack.c.h.b16 %v9219
        %v9738 = vunpack.c.l.b16 %v9220
        %v9739 = vunpack.c.h.b16 %v9220
        %v9740 = vunpack.c.l.b16 %v9221
        %v9741 = vunpack.c.h.b16 %v9221
        %v9742 = vunpack.c.l.b16 %v9222
        %v9743 = vunpack.c.h.b16 %v9222
        %v9744 = vunpack.c.l.b16 %v9223
        %v9745 = vunpack.c.h.b16 %v9223
        %v9746 = vunpack.c.l.b16 %v9224
        %v9747 = vunpack.c.h.b16 %v9224
        %v9748 = vunpack.c.l.b16 %v9225
        %v9749 = vunpack.c.h.b16 %v9225
        %v9750 = vunpack.c.l.b16 %v9226
        %v9751 = vunpack.c.h.b16 %v9226
        %v9752 = vunpack.c.l.b16 %v9227
        %v9753 = vunpack.c.h.b16 %v9227
        %v9754 = vunpack.c.l.b16 %v9228
        %v9755 = vunpack.c.h.b16 %v9228
        %v9756 = vunpack.c.l.b16 %v9229
        %v9757 = vunpack.c.h.b16 %v9229
        %v9758 = vunpack.c.l.b16 %v9230
        %v9759 = vunpack.c.h.b16 %v9230
        %v9760 = vunpack.c.l.b16 %v9231
        %v9761 = vunpack.c.h.b16 %v9231
        %v9762 = vunpack.c.l.b16 %v9232
        %v9763 = vunpack.c.h.b16 %v9232
        %v9764 = vunpack.c.l.b16 %v9233
        %v9765 = vunpack.c.h.b16 %v9233
        %v9766 = vunpack.c.l.b16 %v9234
        %v9767 = vunpack.c.h.b16 %v9234
        %v9768 = vunpack.c.l.b16 %v9235
        %v9769 = vunpack.c.h.b16 %v9235
        %v9770 = vunpack.c.l.b16 %v9236
        %v9771 = vunpack.c.h.b16 %v9236
        %v9772 = vunpack.c.l.b16 %v9237
        %v9773 = vunpack.c.h.b16 %v9237
        %v9774 = vunpack.c.l.b16 %v9238
        %v9775 = vunpack.c.h.b16 %v9238
        %v9776 = vunpack.c.l.b16 %v9239
        %v9777 = vunpack.c.h.b16 %v9239
        %v9778 = vunpack.c.l.b16 %v9240
        %v9779 = vunpack.c.h.b16 %v9240
        %v9780 = vunpack.c.l.b16 %v9241
        %v9781 = vunpack.c.h.b16 %v9241
        %v9782 = vunpack.c.l.b16 %v9242
        %v9783 = vunpack.c.h.b16 %v9242
        %v9784 = vunpack.c.l.b16 %v9243
        %v9785 = vunpack.c.h.b16 %v9243
        %v9786 = vunpack.c.l.b16 %v9244
        %v9787 = vunpack.c.h.b16 %v9244
        %v9788 = vunpack.c.l.b16 %v9245
        %v9789 = vunpack.c.h.b16 %v9245
        %v9790 = vunpack.c.l.b16 %v9246
        %v9791 = vunpack.c.h.b16 %v9246
        %v9792 = vunpack.c.l.b16 %v9247
        %v9793 = vunpack.c.h.b16 %v9247
        %v9794 = vunpack.c.l.b16 %v9248
        %v9795 = vunpack.c.h.b16 %v9248
        %v9796 = vunpack.c.l.b16 %v9249
        %v9797 = vunpack.c.h.b16 %v9249
        %v9798 = vunpack.c.l.b16 %v9250
        %v9799 = vunpack.c.h.b16 %v9250
        %v9800 = vunpack.c.l.b16 %v9251
        %v9801 = vunpack.c.h.b16 %v9251
        %v9802 = vunpack.c.l.b16 %v9252
        %v9803 = vunpack.c.h.b16 %v9252
        %v9804 = vunpack.c.l.b16 %v9253
        %v9805 = vunpack.c.h.b16 %v9253
        %v9806 = vunpack.c.l.b16 %v9254
        %v9807 = vunpack.c.h.b16 %v9254
        %v9808 = vunpack.c.l.b16 %v9255
        %v9809 = vunpack.c.h.b16 %v9255
        %v9810 = vunpack.c.l.b16 %v9256
        %v9811 = vunpack.c.h.b16 %v9256
        %v9812 = vunpack.c.l.b16 %v9257
        %v9813 = vunpack.c.h.b16 %v9257
        %v9814 = vunpack.c.l.b16 %v9258
        %v9815 = vunpack.c.h.b16 %v9258
        %v9816 = vunpack.c.l.b16 %v9259
        %v9817 = vunpack.c.h.b16 %v9259
        %v9818 = vunpack.c.l.b16 %v9260
        %v9819 = vunpack.c.h.b16 %v9260
        %v9820 = vunpack.c.l.b16 %v9261
        %v9821 = vunpack.c.h.b16 %v9261
        %v9822 = vunpack.c.l.b16 %v9262
        %v9823 = vunpack.c.h.b16 %v9262
        %v9824 = vunpack.c.l.b16 %v9263
        %v9825 = vunpack.c.h.b16 %v9263
        %v9826 = vunpack.c.l.b16 %v9264
        %v9827 = vunpack.c.h.b16 %v9264
        %v9828 = vunpack.c.l.b16 %v9265
        %v9829 = vunpack.c.h.b16 %v9265
        %v9830 = vunpack.c.l.b16 %v9266
        %v9831 = vunpack.c.h.b16 %v9266
        %v9832 = vunpack.c.l.b16 %v9267
        %v9833 = vunpack.c.h.b16 %v9267
        %v9834 = vunpack.c.l.b16 %v9268
        %v9835 = vunpack.c.h.b16 %v9268
        %v9836 = vunpack.c.l.b16 %v9269
        %v9837 = vunpack.c.h.b16 %v9269
        %v9838 = vunpack.c.l.b16 %v9270
        %v9839 = vunpack.c.h.b16 %v9270
        %v9840 = vunpack.c.l.b16 %v9271
        %v9841 = vunpack.c.h.b16 %v9271
        %v9842 = vunpack.c.l.b16 %v9272
        %v9843 = vunpack.c.h.b16 %v9272
        %v9844 = vunpack.c.l.b16 %v9273
        %v9845 = vunpack.c.h.b16 %v9273
        %v9846 = vunpack.c.l.b16 %v9274
        %v9847 = vunpack.c.h.b16 %v9274
        %v9848 = vunpack.c.l.b16 %v9275
        %v9849 = vunpack.c.h.b16 %v9275
        %v9850 = vunpack.c.l.b16 %v9276
        %v9851 = vunpack.c.h.b16 %v9276
        %v9852 = vunpack.c.l.b16 %v9277
        %v9853 = vunpack.c.h.b16 %v9277
        %v9854 = vunpack.c.l.b16 %v9278
        %v9855 = vunpack.c.h.b16 %v9278
        %v9856 = vunpack.c.l.b16 %v9279
        %v9857 = vunpack.c.h.b16 %v9279
        %v9858 = vunpack.c.l.b16 %v9280
        %v9859 = vunpack.c.h.b16 %v9280
        %v9860 = vunpack.c.l.b16 %v9281
        %v9861 = vunpack.c.h.b16 %v9281
        %v9862 = vunpack.c.l.b16 %v9282
        %v9863 = vunpack.c.h.b16 %v9282
        %v9864 = vunpack.c.l.b16 %v9283
        %v9865 = vunpack.c.h.b16 %v9283
        %v9866 = vunpack.c.l.b16 %v9284
        %v9867 = vunpack.c.h.b16 %v9284
        %v9868 = vunpack.c.l.b16 %v9285
        %v9869 = vunpack.c.h.b16 %v9285
        %v9870 = vunpack.c.l.b16 %v9286
        %v9871 = vunpack.c.h.b16 %v9286
        %v9872 = vunpack.c.l.b16 %v9287
        %v9873 = vunpack.c.h.b16 %v9287
        %v9874 = vunpack.c.l.b16 %v9288
        %v9875 = vunpack.c.h.b16 %v9288
        %v9876 = vunpack.c.l.b16 %v9289
        %v9877 = vunpack.c.h.b16 %v9289
        %v9878 = vunpack.c.l.b16 %v9290
        %v9879 = vunpack.c.h.b16 %v9290
        %v9880 = vunpack.c.l.b16 %v9291
        %v9881 = vunpack.c.h.b16 %v9291
        %v9882 = vunpack.c.l.b16 %v9292
        %v9883 = vunpack.c.h.b16 %v9292
        %v9884 = vunpack.c.l.b16 %v9293
        %v9885 = vunpack.c.h.b16 %v9293
        %v9886 = vunpack.c.l.b16 %v9294
        %v9887 = vunpack.c.h.b16 %v9294
        %v9888 = vunpack.c.l.b16 %v9295
        %v9889 = vunpack.c.h.b16 %v9295
        %v9890 = vunpack.c.l.b16 %v9296
        %v9891 = vunpack.c.h.b16 %v9296
        %v9892 = vunpack.c.l.b16 %v9297
        %v9893 = vunpack.c.h.b16 %v9297
        %v9894 = vunpack.c.l.b16 %v9298
        %v9895 = vunpack.c.h.b16 %v9298
        %v9896 = vunpack.c.l.b16 %v9299
        %v9897 = vunpack.c.h.b16 %v9299
        %v9898 = vunpack.c.l.b16 %v9300
        %v9899 = vunpack.c.h.b16 %v9300
        %v9900 = vunpack.c.l.b16 %v9301
        %v9901 = vunpack.c.h.b16 %v9301
        %v9902 = vunpack.c.l.b16 %v9302
        %v9903 = vunpack.c.h.b16 %v9302
        %v9904 = vunpack.c.l.b16 %v9303
        %v9905 = vunpack.c.h.b16 %v9303
        %v9906 = vunpack.c.l.b16 %v9304
        %v9907 = vunpack.c.h.b16 %v9304
        %v9908 = vunpack.c.l.b16 %v9305
        %v9909 = vunpack.c.h.b16 %v9305
        %v9910 = vunpack.c.l.b16 %v9306
        %v9911 = vunpack.c.h.b16 %v9306
        %v9912 = vunpack.c.l.b16 %v9307
        %v9913 = vunpack.c.h.b16 %v9307
        %v9914 = vunpack.c.l.b16 %v9308
        %v9915 = vunpack.c.h.b16 %v9308
        %v9916 = vunpack.c.l.b16 %v9309
        %v9917 = vunpack.c.h.b16 %v9309
        %v9918 = vunpack.c.l.b16 %v9310
        %v9919 = vunpack.c.h.b16 %v9310
        %v9920 = vunpack.c.l.b16 %v9311
        %v9921 = vunpack.c.h.b16 %v9311
        %v9922 = vunpack.c.l.b16 %v9312
        %v9923 = vunpack.c.h.b16 %v9312
        %v9924 = vunpack.c.l.b16 %v9313
        %v9925 = vunpack.c.h.b16 %v9313
        %v9926 = vunpack.c.l.b16 %v9314
        %v9927 = vunpack.c.h.b16 %v9314
        %v9928 = vunpack.c.l.b16 %v9315
        %v9929 = vunpack.c.h.b16 %v9315
        %v9930 = vunpack.c.l.b16 %v9316
        %v9931 = vunpack.c.h.b16 %v9316
        %v9932 = vunpack.c.l.b16 %v9317
        %v9933 = vunpack.c.h.b16 %v9317
        %v9934 = vunpack.c.l.b16 %v9318
        %v9935 = vunpack.c.h.b16 %v9318
        %v9936 = vunpack.c.l.b16 %v9319
        %v9937 = vunpack.c.h.b16 %v9319
        %v9938 = vunpack.c.l.b16 %v9320
        %v9939 = vunpack.c.h.b16 %v9320
        %v9940 = vunpack.c.l.b16 %v9321
        %v9941 = vunpack.c.h.b16 %v9321
        %v9942 = vunpack.c.l.b16 %v9322
        %v9943 = vunpack.c.h.b16 %v9322
        %v9944 = vunpack.c.l.b16 %v9323
        %v9945 = vunpack.c.h.b16 %v9323
        %v9946 = vunpack.c.l.b16 %v9324
        %v9947 = vunpack.c.h.b16 %v9324
        %v9948 = vunpack.c.l.b16 %v9325
        %v9949 = vunpack.c.h.b16 %v9325
        %v9950 = vunpack.c.l.b16 %v9326
        %v9951 = vunpack.c.h.b16 %v9326
        %v9952 = vunpack.c.l.b16 %v9327
        %v9953 = vunpack.c.h.b16 %v9327
        %v9954 = vunpack.c.l.b16 %v9328
        %v9955 = vunpack.c.h.b16 %v9328
        %v9956 = vunpack.c.l.b16 %v9329
        %v9957 = vunpack.c.h.b16 %v9329
        %v9958 = vunpack.c.l.b16 %v9330
        %v9959 = vunpack.c.h.b16 %v9330
        %v9960 = vunpack.c.l.b16 %v9331
        %v9961 = vunpack.c.h.b16 %v9331
        %v9962 = vunpack.c.l.b16 %v9332
        %v9963 = vunpack.c.h.b16 %v9332
        %v9964 = vunpack.c.l.b16 %v9333
        %v9965 = vunpack.c.h.b16 %v9333
        %v9966 = vunpack.c.l.b16 %v9334
        %v9967 = vunpack.c.h.b16 %v9334
        %v9968 = vunpack.c.l.b16 %v9335
        %v9969 = vunpack.c.h.b16 %v9335
        %v9970 = vunpack.c.l.b16 %v9336
        %v9971 = vunpack.c.h.b16 %v9336
        %v9972 = vunpack.c.l.b16 %v9337
        %v9973 = vunpack.c.h.b16 %v9337
        %v9974 = vunpack.c.l.b16 %v9338
        %v9975 = vunpack.c.h.b16 %v9338
        %v9976 = vunpack.c.l.b16 %v9339
        %v9977 = vunpack.c.h.b16 %v9339
        %v9978 = vunpack.c.l.b16 %v9340
        %v9979 = vunpack.c.h.b16 %v9340
        %v9980 = vunpack.c.l.b16 %v9341
        %v9981 = vunpack.c.h.b16 %v9341
        %v9982 = vunpack.c.l.b16 %v9342
        %v9983 = vunpack.c.h.b16 %v9342
        %v9984 = vunpack.c.l.b16 %v9343
        %v9985 = vunpack.c.h.b16 %v9343
        %v9986 = vunpack.c.l.b16 %v9344
        %v9987 = vunpack.c.h.b16 %v9344
        %v9988 = vunpack.c.l.b16 %v9345
        %v9989 = vunpack.c.h.b16 %v9345
        %v9990 = vunpack.c.l.b16 %v9346
        %v9991 = vunpack.c.h.b16 %v9346
        %v9992 = vunpack.c.l.b16 %v9347
        %v9993 = vunpack.c.h.b16 %v9347
        %v9994 = vunpack.c.l.b16 %v9348
        %v9995 = vunpack.c.h.b16 %v9348
        %v9996 = vunpack.c.l.b16 %v9349
        %v9997 = vunpack.c.h.b16 %v9349
        %v9998 = vunpack.c.l.b16 %v9350
        %v9999 = vunpack.c.h.b16 %v9350
        %v10000 = vunpack.c.l.b16 %v9351
        %v10001 = vunpack.c.h.b16 %v9351
        %v10002 = vunpack.c.l.b16 %v9352
        %v10003 = vunpack.c.h.b16 %v9352
        %v10004 = vunpack.c.l.b16 %v9353
        %v10005 = vunpack.c.h.b16 %v9353
        %v10006 = vunpack.c.l.b16 %v9354
        %v10007 = vunpack.c.h.b16 %v9354
        %v10008 = vunpack.c.l.b16 %v9355
        %v10009 = vunpack.c.h.b16 %v9355
        %v10010 = vunpack.c.l.b16 %v9356
        %v10011 = vunpack.c.h.b16 %v9356
        %v10012 = vunpack.c.l.b16 %v9357
        %v10013 = vunpack.c.h.b16 %v9357
        %v10014 = vunpack.c.l.b16 %v9358
        %v10015 = vunpack.c.h.b16 %v9358
        %v10016 = vunpack.c.l.b16 %v9359
        %v10017 = vunpack.c.h.b16 %v9359
        %v10018 = vunpack.c.l.b16 %v9360
        %v10019 = vunpack.c.h.b16 %v9360
        %v10020 = vunpack.c.l.b16 %v9361
        %v10021 = vunpack.c.h.b16 %v9361
        %v10022 = vunpack.c.l.b16 %v9362
        %v10023 = vunpack.c.h.b16 %v9362
        %v10024 = vunpack.c.l.b16 %v9363
        %v10025 = vunpack.c.h.b16 %v9363
        %v10026 = vunpack.c.l.b16 %v9364
        %v10027 = vunpack.c.h.b16 %v9364
        %v10028 = vunpack.c.l.b16 %v9365
        %v10029 = vunpack.c.h.b16 %v9365
        %v10030 = vunpack.c.l.b16 %v9366
        %v10031 = vunpack.c.h.b16 %v9366
        %v10032 = vunpack.c.l.b16 %v9367
        %v10033 = vunpack.c.h.b16 %v9367
        %v10034 = vunpack.c.l.b16 %v9368
        %v10035 = vunpack.c.h.b16 %v9368
        %v10036 = vunpack.c.l.b16 %v9369
        %v10037 = vunpack.c.h.b16 %v9369
        %v10038 = vunpack.c.l.b16 %v9370
        %v10039 = vunpack.c.h.b16 %v9370
        %v10040 = vunpack.c.l.b16 %v9371
        %v10041 = vunpack.c.h.b16 %v9371
        %v10042 = vunpack.c.l.b16 %v9372
        %v10043 = vunpack.c.h.b16 %v9372
        %v10044 = vunpack.c.l.b16 %v9373
        %v10045 = vunpack.c.h.b16 %v9373
        %v10046 = vunpack.c.l.b16 %v9374
        %v10047 = vunpack.c.h.b16 %v9374
        %v10048 = vunpack.c.l.b16 %v9375
        %v10049 = vunpack.c.h.b16 %v9375
        %v10050 = vunpack.c.l.b16 %v9376
        %v10051 = vunpack.c.h.b16 %v9376
        %v10052 = vunpack.c.l.b16 %v9377
        %v10053 = vunpack.c.h.b16 %v9377
        %v10054 = vunpack.c.l.b16 %v9378
        %v10055 = vunpack.c.h.b16 %v9378
        %v10056 = vunpack.c.l.b16 %v9379
        %v10057 = vunpack.c.h.b16 %v9379
        %v10058 = vunpack.c.l.b16 %v9380
        %v10059 = vunpack.c.h.b16 %v9380
        %v10060 = vunpack.c.l.b16 %v9381
        %v10061 = vunpack.c.h.b16 %v9381
        %v10062 = vunpack.c.l.b16 %v9382
        %v10063 = vunpack.c.h.b16 %v9382
        %v10064 = vunpack.c.l.b16 %v9383
        %v10065 = vunpack.c.h.b16 %v9383
        %v10066 = vunpack.c.l.b16 %v9384
        %v10067 = vunpack.c.h.b16 %v9384
        %v10068 = vunpack.c.l.b16 %v9385
        %v10069 = vunpack.c.h.b16 %v9385
        %v10070 = vunpack.c.l.b16 %v9386
        %v10071 = vunpack.c.h.b16 %v9386
        %v10072 = vunpack.c.l.b16 %v9387
        %v10073 = vunpack.c.h.b16 %v9387
        %v10074 = vunpack.c.l.b16 %v9388
        %v10075 = vunpack.c.h.b16 %v9388
        %v10076 = vunpack.c.l.b16 %v9389
        %v10077 = vunpack.c.h.b16 %v9389
        %v10078 = vunpack.c.l.b16 %v9390
        %v10079 = vunpack.c.h.b16 %v9390
        %v10080 = vunpack.c.l.b16 %v9391
        %v10081 = vunpack.c.h.b16 %v9391
        %v10082 = vunpack.c.l.b16 %v9392
        %v10083 = vunpack.c.h.b16 %v9392
        %v10084 = vunpack.c.l.b16 %v9393
        %v10085 = vunpack.c.h.b16 %v9393
        %v10086 = vunpack.c.l.b16 %v9394
        %v10087 = vunpack.c.h.b16 %v9394
        %v10088 = vunpack.c.l.b16 %v9395
        %v10089 = vunpack.c.h.b16 %v9395
        %v10090 = vunpack.c.l.b16 %v9396
        %v10091 = vunpack.c.h.b16 %v9396
        %v10092 = vunpack.c.l.b16 %v9397
        %v10093 = vunpack.c.h.b16 %v9397
        %v10094 = vunpack.c.l.b16 %v9398
        %v10095 = vunpack.c.h.b16 %v9398
        %v10096 = vunpack.c.l.b16 %v9399
        %v10097 = vunpack.c.h.b16 %v9399
        %v10098 = vunpack.c.l.b16 %v9400
        %v10099 = vunpack.c.h.b16 %v9400
        %v10100 = vunpack.c.l.b16 %v9401
        %v10101 = vunpack.c.h.b16 %v9401
        %v10102 = vunpack.c.l.b16 %v9402
        %v10103 = vunpack.c.h.b16 %v9402
        %v10104 = vunpack.c.l.b16 %v9403
        %v10105 = vunpack.c.h.b16 %v9403
        %v10106 = vunpack.c.l.b16 %v9404
        %v10107 = vunpack.c.h.b16 %v9404
        %v10108 = vunpack.c.l.b16 %v9405
        %v10109 = vunpack.c.h.b16 %v9405
        %v10110 = vunpack.c.l.b16 %v9406
        %v10111 = vunpack.c.h.b16 %v9406
        %v10112 = vunpack.c.l.b16 %v9407
        %v10113 = vunpack.c.h.b16 %v9407
        %v10114 = vunpack.c.l.b16 %v9408
        %v10115 = vunpack.c.h.b16 %v9408
        %v10116 = vunpack.c.l.b16 %v9409
        %v10117 = vunpack.c.h.b16 %v9409
        %v10118 = vunpack.c.l.b16 %v9410
        %v10119 = vunpack.c.h.b16 %v9410
        %v10120 = vunpack.c.l.b16 %v9411
        %v10121 = vunpack.c.h.b16 %v9411
        %v10122 = vunpack.c.l.b16 %v9412
        %v10123 = vunpack.c.h.b16 %v9412
        %v10124 = vunpack.c.l.b16 %v9413
        %v10125 = vunpack.c.h.b16 %v9413
        %v10126 = vunpack.c.l.b16 %v9414
        %v10127 = vunpack.c.h.b16 %v9414
        %v10128 = vunpack.c.l.b16 %v9415
        %v10129 = vunpack.c.h.b16 %v9415
        %v10130 = vpack.c.b16 %v9732, %v9730
        %v10131 = vpack.c.b16 %v9733, %v9731
        %v10132 = vpack.c.b16 %v9736, %v9734
        %v10133 = vpack.c.b16 %v9737, %v9735
        %v10134 = vpack.c.b16 %v9740, %v9738
        %v10135 = vpack.c.b16 %v9741, %v9739
        %v10136 = vpack.c.b16 %v9744, %v9742
        %v10137 = vpack.c.b16 %v9745, %v9743
        %v10138 = vpack.c.b16 %v9748, %v9746
        %v10139 = vpack.c.b16 %v9749, %v9747
        %v10140 = vpack.c.b16 %v9752, %v9750
        %v10141 = vpack.c.b16 %v9753, %v9751
        %v10142 = vpack.c.b16 %v9756, %v9754
        %v10143 = vpack.c.b16 %v9757, %v9755
        %v10144 = vpack.c.b16 %v9760, %v9758
        %v10145 = vpack.c.b16 %v9761, %v9759
        %v10146 = vpack.c.b16 %v9764, %v9762
        %v10147 = vpack.c.b16 %v9765, %v9763
        %v10148 = vpack.c.b16 %v9768, %v9766
        %v10149 = vpack.c.b16 %v9769, %v9767
        %v10150 = vpack.c.b16 %v9772, %v9770
        %v10151 = vpack.c.b16 %v9773, %v9771
        %v10152 = vpack.c.b16 %v9776, %v9774
        %v10153 = vpack.c.b16 %v9777, %v9775
        %v10154 = vpack.c.b16 %v9780, %v9778
        %v10155 = vpack.c.b16 %v9781, %v9779
        %v10156 = vpack.c.b16 %v9784, %v9782
        %v10157 = vpack.c.b16 %v9785, %v9783
        %v10158 = vpack.c.b16 %v9788, %v9786
        %v10159 = vpack.c.b16 %v9789, %v9787
        %v10160 = vpack.c.b16 %v9792, %v9790
        %v10161 = vpack.c.b16 %v9793, %v9791
        %v10162 = vpack.c.b16 %v9796, %v9794
        %v10163 = vpack.c.b16 %v9797, %v9795
        %v10164 = vpack.c.b16 %v9800, %v9798
        %v10165 = vpack.c.b16 %v9801, %v9799
        %v10166 = vpack.c.b16 %v9804, %v9802
        %v10167 = vpack.c.b16 %v9805, %v9803
        %v10168 = vpack.c.b16 %v9808, %v9806
        %v10169 = vpack.c.b16 %v9809, %v9807
        %v10170 = vpack.c.b16 %v9812, %v9810
        %v10171 = vpack.c.b16 %v9813, %v9811
        %v10172 = vpack.c.b16 %v9816, %v9814
        %v10173 = vpack.c.b16 %v9817, %v9815
        %v10174 = vpack.c.b16 %v9820, %v9818
        %v10175 = vpack.c.b16 %v9821, %v9819
        %v10176 = vpack.c.b16 %v9824, %v9822
        %v10177 = vpack.c.b16 %v9825, %v9823
        %v10178 = vpack.c.b16 %v9828, %v9826
        %v10179 = vpack.c.b16 %v9829, %v9827
        %v10180 = vpack.c.b16 %v9832, %v9830
        %v10181 = vpack.c.b16 %v9833, %v9831
        %v10182 = vpack.c.b16 %v9836, %v9834
        %v10183 = vpack.c.b16 %v9837, %v9835
        %v10184 = vpack.c.b16 %v9840, %v9838
        %v10185 = vpack.c.b16 %v9841, %v9839
        %v10186 = vpack.c.b16 %v9844, %v9842
        %v10187 = vpack.c.b16 %v9845, %v9843
        %v10188 = vpack.c.b16 %v9848, %v9846
        %v10189 = vpack.c.b16 %v9849, %v9847
        %v10190 = vpack.c.b16 %v9852, %v9850
        %v10191 = vpack.c.b16 %v9853, %v9851
        %v10192 = vpack.c.b16 %v9856, %v9854
        %v10193 = vpack.c.b16 %v9857, %v9855
        %v10194 = vpack.c.b16 %v9860, %v9858
        %v10195 = vpack.c.b16 %v9861, %v9859
        %v10196 = vpack.c.b16 %v9864, %v9862
        %v10197 = vpack.c.b16 %v9865, %v9863
        %v10198 = vpack.c.b16 %v9868, %v9866
        %v10199 = vpack.c.b16 %v9869, %v9867
        %v10200 = vpack.c.b16 %v9872, %v9870
        %v10201 = vpack.c.b16 %v9873, %v9871
        %v10202 = vpack.c.b16 %v9876, %v9874
        %v10203 = vpack.c.b16 %v9877, %v9875
        %v10204 = vpack.c.b16 %v9880, %v9878
        %v10205 = vpack.c.b16 %v9881, %v9879
        %v10206 = vpack.c.b16 %v9884, %v9882
        %v10207 = vpack.c.b16 %v9885, %v9883
        %v10208 = vpack.c.b16 %v9888, %v9886
        %v10209 = vpack.c.b16 %v9889, %v9887
        %v10210 = vpack.c.b16 %v9892, %v9890
        %v10211 = vpack.c.b16 %v9893, %v9891
        %v10212 = vpack.c.b16 %v9896, %v9894
        %v10213 = vpack.c.b16 %v9897, %v9895
        %v10214 = vpack.c.b16 %v9900, %v9898
        %v10215 = vpack.c.b16 %v9901, %v9899
        %v10216 = vpack.c.b16 %v9904, %v9902
        %v10217 = vpack.c.b16 %v9905, %v9903
        %v10218 = vpack.c.b16 %v9908, %v9906
        %v10219 = vpack.c.b16 %v9909, %v9907
        %v10220 = vpack.c.b16 %v9912, %v9910
        %v10221 = vpack.c.b16 %v9913, %v9911
        %v10222 = vpack.c.b16 %v9916, %v9914
        %v10223 = vpack.c.b16 %v9917, %v9915
        %v10224 = vpack.c.b16 %v9920, %v9918
        %v10225 = vpack.c.b16 %v9921, %v9919
        %v10226 = vpack.c.b16 %v9924, %v9922
        %v10227 = vpack.c.b16 %v9925, %v9923
        %v10228 = vpack.c.b16 %v9928, %v9926
        %v10229 = vpack.c.b16 %v9929, %v9927
        %v10230 = vpack.c.b16 %v9932, %v9930
        %v10231 = vpack.c.b16 %v9933, %v9931
        %v10232 = vpack.c.b16 %v9936, %v9934
        %v10233 = vpack.c.b16 %v9937, %v9935
        %v10234 = vpack.c.b16 %v9940, %v9938
        %v10235 = vpack.c.b16 %v9941, %v9939
        %v10236 = vpack.c.b16 %v9944, %v9942
        %v10237 = vpack.c.b16 %v9945, %v9943
        %v10238 = vpack.c.b16 %v9948, %v9946
        %v10239 = vpack.c.b16 %v9949, %v9947
        %v10240 = vpack.c.b16 %v9952, %v9950
        %v10241 = vpack.c.b16 %v9953, %v9951
        %v10242 = vpack.c.b16 %v9956, %v9954
        %v10243 = vpack.c.b16 %v9957, %v9955
        %v10244 = vpack.c.b16 %v9960, %v9958
        %v10245 = vpack.c.b16 %v9961, %v9959
        %v10246 = vpack.c.b16 %v9964, %v9962
        %v10247 = vpack.c.b16 %v9965, %v9963
        %v10248 = vpack.c.b16 %v9968, %v9966
        %v10249 = vpack.c.b16 %v9969, %v9967
        %v10250 = vpack.c.b16 %v9972, %v9970
        %v10251 = vpack.c.b16 %v9973, %v9971
        %v10252 = vpack.c.b16 %v9976, %v9974
        %v10253 = vpack.c.b16 %v9977, %v9975
        %v10254 = vpack.c.b16 %v9980, %v9978
        %v10255 = vpack.c.b16 %v9981, %v9979
        %v10256 = vpack.c.b16 %v9984, %v9982
        %v10257 = vpack.c.b16 %v9985, %v9983
        %v10258 = vpack.c.b16 %v9988, %v9986
        %v10259 = vpack.c.b16 %v9989, %v9987
        %v10260 = vpack.c.b16 %v9992, %v9990
        %v10261 = vpack.c.b16 %v9993, %v9991
        %v10262 = vpack.c.b16 %v9996, %v9994
        %v10263 = vpack.c.b16 %v9997, %v9995
        %v10264 = vpack.c.b16 %v10000, %v9998
        %v10265 = vpack.c.b16 %v10001, %v9999
        %v10266 = vpack.c.b16 %v10004, %v10002
        %v10267 = vpack.c.b16 %v10005, %v10003
        %v10268 = vpack.c.b16 %v10008, %v10006
        %v10269 = vpack.c.b16 %v10009, %v10007
        %v10270 = vpack.c.b16 %v10012, %v10010
        %v10271 = vpack.c.b16 %v10013, %v10011
        %v10272 = vpack.c.b16 %v10016, %v10014
        %v10273 = vpack.c.b16 %v10017, %v10015
        %v10274 = vpack.c.b16 %v10020, %v10018
        %v10275 = vpack.c.b16 %v10021, %v10019
        %v10276 = vpack.c.b16 %v10024, %v10022
        %v10277 = vpack.c.b16 %v10025, %v10023
        %v10278 = vpack.c.b16 %v10028, %v10026
        %v10279 = vpack.c.b16 %v10029, %v10027
        %v10280 = vpack.c.b16 %v10032, %v10030
        %v10281 = vpack.c.b16 %v10033, %v10031
        %v10282 = vpack.c.b16 %v10036, %v10034
        %v10283 = vpack.c.b16 %v10037, %v10035
        %v10284 = vpack.c.b16 %v10040, %v10038
        %v10285 = vpack.c.b16 %v10041, %v10039
        %v10286 = vpack.c.b16 %v10044, %v10042
        %v10287 = vpack.c.b16 %v10045, %v10043
        %v10288 = vpack.c.b16 %v10048, %v10046
        %v10289 = vpack.c.b16 %v10049, %v10047
        %v10290 = vpack.c.b16 %v10052, %v10050
        %v10291 = vpack.c.b16 %v10053, %v10051
        %v10292 = vpack.c.b16 %v10056, %v10054
        %v10293 = vpack.c.b16 %v10057, %v10055
        %v10294 = vpack.c.b16 %v10060, %v10058
        %v10295 = vpack.c.b16 %v10061, %v10059
        %v10296 = vpack.c.b16 %v10064, %v10062
        %v10297 = vpack.c.b16 %v10065, %v10063
        %v10298 = vpack.c.b16 %v10068, %v10066
        %v10299 = vpack.c.b16 %v10069, %v10067
        %v10300 = vpack.c.b16 %v10072, %v10070
        %v10301 = vpack.c.b16 %v10073, %v10071
        %v10302 = vpack.c.b16 %v10076, %v10074
        %v10303 = vpack.c.b16 %v10077, %v10075
        %v10304 = vpack.c.b16 %v10080, %v10078
        %v10305 = vpack.c.b16 %v10081, %v10079
        %v10306 = vpack.c.b16 %v10084, %v10082
        %v10307 = vpack.c.b16 %v10085, %v10083
        %v10308 = vpack.c.b16 %v10088, %v10086
        %v10309 = vpack.c.b16 %v10089, %v10087
        %v10310 = vpack.c.b16 %v10092, %v10090
        %v10311 = vpack.c.b16 %v10093, %v10091
        %v10312 = vpack.c.b16 %v10096, %v10094
        %v10313 = vpack.c.b16 %v10097, %v10095
        %v10314 = vpack.c.b16 %v10100, %v10098
        %v10315 = vpack.c.b16 %v10101, %v10099
        %v10316 = vpack.c.b16 %v10104, %v10102
        %v10317 = vpack.c.b16 %v10105, %v10103
        %v10318 = vpack.c.b16 %v10108, %v10106
        %v10319 = vpack.c.b16 %v10109, %v10107
        %v10320 = vpack.c.b16 %v10112, %v10110
        %v10321 = vpack.c.b16 %v10113, %v10111
        %v10322 = vpack.c.b16 %v10116, %v10114
        %v10323 = vpack.c.b16 %v10117, %v10115
        %v10324 = vpack.c.b16 %v10120, %v10118
        %v10325 = vpack.c.b16 %v10121, %v10119
        %v10326 = vpack.c.b16 %v10124, %v10122
        %v10327 = vpack.c.b16 %v10125, %v10123
        %v10328 = vpack.c.b16 %v10128, %v10126
        %v10329 = vpack.c.b16 %v10129, %v10127
        %v10531 = vsel %vm2794, %v9508, 0
        %10533 = vmatprep.subr.bf16.mxu0 %v10145
        %10534 = vmatpush1.bf16.msra.mxu0 %v10144
        %10535 = vmatprep.subr.bf16.mxu0 %v10143
        %10536 = vmatpush1.bf16.msra.mxu0 %v10142
        %10537 = vmatprep.subr.bf16.mxu0 %v10141
        %10538 = vmatpush1.bf16.msra.mxu0 %v10140
        %10539 = vmatprep.subr.bf16.mxu0 %v10139
        %10540 = vmatpush1.bf16.msra.mxu0 %v10138
        %10541 = vmatprep.subr.bf16.mxu0 %v10137
        %10542 = vmatpush1.bf16.msra.mxu0 %v10136
        %10543 = vmatprep.subr.bf16.mxu0 %v10135
        %10544 = vmatpush1.bf16.msra.mxu0 %v10134
        %10545 = vmatprep.subr.bf16.mxu0 %v10133
        %10546 = vmatpush1.bf16.msra.mxu0 %v10132
        %10547 = vmatprep.subr.bf16.mxu0 %v10131
        %10548 = vmatpush1.bf16.msra.mxu0 %v10130
        %10549 = vmatprep.subr.bf16.mxu0 %v10161
        %10550 = vmatpush2.bf16.msra.mxu0 %v10160
        %10551 = vmatprep.subr.bf16.mxu0 %v10159
        %10552 = vmatpush2.bf16.msra.mxu0 %v10158
        %10553 = vmatprep.subr.bf16.mxu0 %v10157
        %10554 = vmatpush2.bf16.msra.mxu0 %v10156
        %10555 = vmatprep.subr.bf16.mxu0 %v10155
        %10556 = vmatpush2.bf16.msra.mxu0 %v10154
        %10557 = vmatprep.subr.bf16.mxu0 %v10153
        %10558 = vmatpush2.bf16.msra.mxu0 %v10152
        %10559 = vmatprep.subr.bf16.mxu0 %v10151
        %10560 = vmatpush2.bf16.msra.mxu0 %v10150
        %10561 = vmatprep.subr.bf16.mxu0 %v10149
        %10562 = vmatpush2.bf16.msra.mxu0 %v10148
        %10563 = vmatprep.subr.bf16.mxu0 %v10147
        %10564 = vmatpush2.bf16.msra.mxu0 %v10146
        %10565 = vmatprep.mubr.bf16.mxu0 %v9467
        %10566 = vmatmul.mubr.bf16.gmra.mxu0 %v9453
        %v10567 = vpop.f32.mrf.mxu0
        %v10568 = vadd.f32 %v9421, %v10567
        %v10569 = vpop.f32.mrf.mxu0
        %v10570 = vadd.f32 %v9425, %v10569
        %v10571 = vpop.f32.mrf.mxu0
        %v10572 = vpop.f32.mrf.mxu0
        %10573 = vdwg.mxu0
        %10574 = vmatprep.subr.bf16.mxu0 %v10177
        %10575 = vmatpush1.bf16.msra.mxu0 %v10176
        %10576 = vmatprep.subr.bf16.mxu0 %v10175
        %10577 = vmatpush1.bf16.msra.mxu0 %v10174
        %10578 = vmatprep.subr.bf16.mxu0 %v10173
        %10579 = vmatpush1.bf16.msra.mxu0 %v10172
        %10580 = vmatprep.subr.bf16.mxu0 %v10171
        %10581 = vmatpush1.bf16.msra.mxu0 %v10170
        %10582 = vmatprep.subr.bf16.mxu0 %v10169
        %10583 = vmatpush1.bf16.msra.mxu0 %v10168
        %10584 = vmatprep.subr.bf16.mxu0 %v10167
        %10585 = vmatpush1.bf16.msra.mxu0 %v10166
        %10586 = vmatprep.subr.bf16.mxu0 %v10165
        %10587 = vmatpush1.bf16.msra.mxu0 %v10164
        %10588 = vmatprep.subr.bf16.mxu0 %v10163
        %10589 = vmatpush1.bf16.msra.mxu0 %v10162
        %10590 = vmatprep.subr.bf16.mxu0 %v10193
        %10591 = vmatpush2.bf16.msra.mxu0 %v10192
        %10592 = vmatprep.subr.bf16.mxu0 %v10191
        %10593 = vmatpush2.bf16.msra.mxu0 %v10190
        %10594 = vmatprep.subr.bf16.mxu0 %v10189
        %10595 = vmatpush2.bf16.msra.mxu0 %v10188
        %10596 = vmatprep.subr.bf16.mxu0 %v10187
        %10597 = vmatpush2.bf16.msra.mxu0 %v10186
        %10598 = vmatprep.subr.bf16.mxu0 %v10185
        %10599 = vmatpush2.bf16.msra.mxu0 %v10184
        %10600 = vmatprep.subr.bf16.mxu0 %v10183
        %10601 = vmatpush2.bf16.msra.mxu0 %v10182
        %10602 = vmatprep.subr.bf16.mxu0 %v10181
        %10603 = vmatpush2.bf16.msra.mxu0 %v10180
        %10604 = vmatprep.subr.bf16.mxu0 %v10179
        %10605 = vmatpush2.bf16.msra.mxu0 %v10178
        %10606 = vmatprep.mubr.bf16.mxu0 %v9477
        %10607 = vmatmul.mubr.bf16.gmra.mxu0 %v9475
        %v10608 = vpop.f32.mrf.mxu0
        %v10609 = vadd.f32 %v10568, %v10608
        %v10610 = vpop.f32.mrf.mxu0
        %v10611 = vadd.f32 %v10570, %v10610
        %v10612 = vpop.f32.mrf.mxu0
        %v10613 = vpop.f32.mrf.mxu0
        %10614 = vdwg.mxu0
        %10615 = vmatprep.subr.bf16.mxu0 %v10209
        %10616 = vmatpush1.bf16.msra.mxu0 %v10208
        %10617 = vmatprep.subr.bf16.mxu0 %v10207
        %10618 = vmatpush1.bf16.msra.mxu0 %v10206
        %10619 = vmatprep.subr.bf16.mxu0 %v10205
        %10620 = vmatpush1.bf16.msra.mxu0 %v10204
        %10621 = vmatprep.subr.bf16.mxu0 %v10203
        %10622 = vmatpush1.bf16.msra.mxu0 %v10202
        %10623 = vmatprep.subr.bf16.mxu0 %v10201
        %10624 = vmatpush1.bf16.msra.mxu0 %v10200
        %10625 = vmatprep.subr.bf16.mxu0 %v10199
        %10626 = vmatpush1.bf16.msra.mxu0 %v10198
        %10627 = vmatprep.subr.bf16.mxu0 %v10197
        %10628 = vmatpush1.bf16.msra.mxu0 %v10196
        %10629 = vmatprep.subr.bf16.mxu0 %v10195
        %10630 = vmatpush1.bf16.msra.mxu0 %v10194
        %10631 = vmatprep.subr.bf16.mxu0 %v10225
        %10632 = vmatpush2.bf16.msra.mxu0 %v10224
        %10633 = vmatprep.subr.bf16.mxu0 %v10223
        %10634 = vmatpush2.bf16.msra.mxu0 %v10222
        %10635 = vmatprep.subr.bf16.mxu0 %v10221
        %10636 = vmatpush2.bf16.msra.mxu0 %v10220
        %10637 = vmatprep.subr.bf16.mxu0 %v10219
        %10638 = vmatpush2.bf16.msra.mxu0 %v10218
        %10639 = vmatprep.subr.bf16.mxu0 %v10217
        %10640 = vmatpush2.bf16.msra.mxu0 %v10216
        %10641 = vmatprep.subr.bf16.mxu0 %v10215
        %10642 = vmatpush2.bf16.msra.mxu0 %v10214
        %10643 = vmatprep.subr.bf16.mxu0 %v10213
        %10644 = vmatpush2.bf16.msra.mxu0 %v10212
        %10645 = vmatprep.subr.bf16.mxu0 %v10211
        %10646 = vmatpush2.bf16.msra.mxu0 %v10210
        %10647 = vmatprep.mubr.bf16.mxu0 %v9474
        %10648 = vmatmul.mubr.bf16.gmra.mxu0 %v9460
        %v10649 = vpop.f32.mrf.mxu0
        %v10650 = vadd.f32 %v10609, %v10649
        %v10651 = vpop.f32.mrf.mxu0
        %v10652 = vadd.f32 %v10611, %v10651
        %v10653 = vpop.f32.mrf.mxu0
        %v10654 = vpop.f32.mrf.mxu0
        %10655 = vdwg.mxu0
        %10656 = vmatprep.subr.bf16.mxu0 %v10241
        %10657 = vmatpush1.bf16.msra.mxu0 %v10240
        %10658 = vmatprep.subr.bf16.mxu0 %v10239
        %10659 = vmatpush1.bf16.msra.mxu0 %v10238
        %10660 = vmatprep.subr.bf16.mxu0 %v10237
        %10661 = vmatpush1.bf16.msra.mxu0 %v10236
        %10662 = vmatprep.subr.bf16.mxu0 %v10235
        %10663 = vmatpush1.bf16.msra.mxu0 %v10234
        %10664 = vmatprep.subr.bf16.mxu0 %v10233
        %10665 = vmatpush1.bf16.msra.mxu0 %v10232
        %10666 = vmatprep.subr.bf16.mxu0 %v10231
        %10667 = vmatpush1.bf16.msra.mxu0 %v10230
        %10668 = vmatprep.subr.bf16.mxu0 %v10229
        %10669 = vmatpush1.bf16.msra.mxu0 %v10228
        %10670 = vmatprep.subr.bf16.mxu0 %v10227
        %10671 = vmatpush1.bf16.msra.mxu0 %v10226
        %10672 = vmatprep.subr.bf16.mxu0 %v10257
        %10673 = vmatpush2.bf16.msra.mxu0 %v10256
        %10674 = vmatprep.subr.bf16.mxu0 %v10255
        %10675 = vmatpush2.bf16.msra.mxu0 %v10254
        %10676 = vmatprep.subr.bf16.mxu0 %v10253
        %10677 = vmatpush2.bf16.msra.mxu0 %v10252
        %10678 = vmatprep.subr.bf16.mxu0 %v10251
        %10679 = vmatpush2.bf16.msra.mxu0 %v10250
        %10680 = vmatprep.subr.bf16.mxu0 %v10249
        %10681 = vmatpush2.bf16.msra.mxu0 %v10248
        %10682 = vmatprep.subr.bf16.mxu0 %v10247
        %10683 = vmatpush2.bf16.msra.mxu0 %v10246
        %10684 = vmatprep.subr.bf16.mxu0 %v10245
        %10685 = vmatpush2.bf16.msra.mxu0 %v10244
        %10686 = vmatprep.subr.bf16.mxu0 %v10243
        %10687 = vmatpush2.bf16.msra.mxu0 %v10242
        %10688 = vmatprep.mubr.bf16.mxu0 %v9478
        %10689 = vmatmul.mubr.bf16.gmra.mxu0 %v9476
        %v10690 = vpop.f32.mrf.mxu0
        %v10691 = vadd.f32 %v10650, %v10690
        %v10692 = vpop.f32.mrf.mxu0
        %v10693 = vadd.f32 %v10652, %v10692
        %v10694 = vpop.f32.mrf.mxu0
        %v10695 = vpop.f32.mrf.mxu0
        %10696 = vdwg.mxu0
        %10697 = vmatprep.subr.bf16.mxu0 %v10273
        %10698 = vmatpush1.bf16.msra.mxu0 %v10272
        %10699 = vmatprep.subr.bf16.mxu0 %v10271
        %10700 = vmatpush1.bf16.msra.mxu0 %v10270
        %10701 = vmatprep.subr.bf16.mxu0 %v10269
        %10702 = vmatpush1.bf16.msra.mxu0 %v10268
        %10703 = vmatprep.subr.bf16.mxu0 %v10267
        %10704 = vmatpush1.bf16.msra.mxu0 %v10266
        %10705 = vmatprep.subr.bf16.mxu0 %v10265
        %10706 = vmatpush1.bf16.msra.mxu0 %v10264
        %10707 = vmatprep.subr.bf16.mxu0 %v10263
        %10708 = vmatpush1.bf16.msra.mxu0 %v10262
        %10709 = vmatprep.subr.bf16.mxu0 %v10261
        %10710 = vmatpush1.bf16.msra.mxu0 %v10260
        %10711 = vmatprep.subr.bf16.mxu0 %v10259
        %10712 = vmatpush1.bf16.msra.mxu0 %v10258
        %10713 = vmatprep.subr.bf16.mxu0 %v10289
        %10714 = vmatpush2.bf16.msra.mxu0 %v10288
        %10715 = vmatprep.subr.bf16.mxu0 %v10287
        %10716 = vmatpush2.bf16.msra.mxu0 %v10286
        %10717 = vmatprep.subr.bf16.mxu0 %v10285
        %10718 = vmatpush2.bf16.msra.mxu0 %v10284
        %10719 = vmatprep.subr.bf16.mxu0 %v10283
        %10720 = vmatpush2.bf16.msra.mxu0 %v10282
        %10721 = vmatprep.subr.bf16.mxu0 %v10281
        %10722 = vmatpush2.bf16.msra.mxu0 %v10280
        %10723 = vmatprep.subr.bf16.mxu0 %v10279
        %10724 = vmatpush2.bf16.msra.mxu0 %v10278
        %10725 = vmatprep.subr.bf16.mxu0 %v10277
        %10726 = vmatpush2.bf16.msra.mxu0 %v10276
        %10727 = vmatprep.subr.bf16.mxu0 %v10275
        %10728 = vmatpush2.bf16.msra.mxu0 %v10274
        %10729 = vmatprep.mubr.bf16.mxu0 %v9515
        %10730 = vmatmul.mubr.bf16.gmra.mxu0 %v9501
        %v10731 = vpop.f32.mrf.mxu0
        %v10732 = vadd.f32 %v10691, %v10731
        %v10733 = vpop.f32.mrf.mxu0
        %v10734 = vadd.f32 %v10693, %v10733
        %v10735 = vpop.f32.mrf.mxu0
        %v10736 = vpop.f32.mrf.mxu0
        %10737 = vdwg.mxu0
        %10738 = vmatprep.subr.bf16.mxu0 %v10305
        %10739 = vmatpush1.bf16.msra.mxu0 %v10304
        %10740 = vmatprep.subr.bf16.mxu0 %v10303
        %10741 = vmatpush1.bf16.msra.mxu0 %v10302
        %10742 = vmatprep.subr.bf16.mxu0 %v10301
        %10743 = vmatpush1.bf16.msra.mxu0 %v10300
        %10744 = vmatprep.subr.bf16.mxu0 %v10299
        %10745 = vmatpush1.bf16.msra.mxu0 %v10298
        %10746 = vmatprep.subr.bf16.mxu0 %v10297
        %10747 = vmatpush1.bf16.msra.mxu0 %v10296
        %10748 = vmatprep.subr.bf16.mxu0 %v10295
        %10749 = vmatpush1.bf16.msra.mxu0 %v10294
        %10750 = vmatprep.subr.bf16.mxu0 %v10293
        %10751 = vmatpush1.bf16.msra.mxu0 %v10292
        %10752 = vmatprep.subr.bf16.mxu0 %v10291
        %10753 = vmatpush1.bf16.msra.mxu0 %v10290
        %10754 = vmatprep.subr.bf16.mxu0 %v10321
        %10755 = vmatpush2.bf16.msra.mxu0 %v10320
        %10756 = vmatprep.subr.bf16.mxu0 %v10319
        %10757 = vmatpush2.bf16.msra.mxu0 %v10318
        %10758 = vmatprep.subr.bf16.mxu0 %v10317
        %10759 = vmatpush2.bf16.msra.mxu0 %v10316
        %10760 = vmatprep.subr.bf16.mxu0 %v10315
        %10761 = vmatpush2.bf16.msra.mxu0 %v10314
        %10762 = vmatprep.subr.bf16.mxu0 %v10313
        %10763 = vmatpush2.bf16.msra.mxu0 %v10312
        %10764 = vmatprep.subr.bf16.mxu0 %v10311
        %10765 = vmatpush2.bf16.msra.mxu0 %v10310
        %10766 = vmatprep.subr.bf16.mxu0 %v10309
        %10767 = vmatpush2.bf16.msra.mxu0 %v10308
        %10768 = vmatprep.subr.bf16.mxu0 %v10307
        %10769 = vmatpush2.bf16.msra.mxu0 %v10306
        %10770 = vmatprep.mubr.bf16.mxu0 %v9517
        %10771 = vmatmul.mubr.bf16.gmra.mxu0 %v9516
        %v10772 = vpop.f32.mrf.mxu0
        %v10773 = vadd.f32 %v10732, %v10772
        %v10774 = vpop.f32.mrf.mxu0
        %v10775 = vadd.f32 %v10734, %v10774
        %v10776 = vpop.f32.mrf.mxu0
        %v10777 = vpop.f32.mrf.mxu0
        %10778 = vdwg.mxu0
        %10779 = vmatprep.subr.bf16.mxu0 0
        %10780 = vmatpush1.bf16.msra.mxu0 0
        %10781 = vmatprep.subr.bf16.mxu0 0
        %10782 = vmatpush1.bf16.msra.mxu0 0
        %10783 = vmatprep.subr.bf16.mxu0 0
        %10784 = vmatpush1.bf16.msra.mxu0 0
        %10785 = vmatprep.subr.bf16.mxu0 0
        %10786 = vmatpush1.bf16.msra.mxu0 0
        %10787 = vmatprep.subr.bf16.mxu0 %v10329
        %10788 = vmatpush1.bf16.msra.mxu0 %v10328
        %10789 = vmatprep.subr.bf16.mxu0 %v10327
        %10790 = vmatpush1.bf16.msra.mxu0 %v10326
        %10791 = vmatprep.subr.bf16.mxu0 %v10325
        %10792 = vmatpush1.bf16.msra.mxu0 %v10324
        %10793 = vmatprep.subr.bf16.mxu0 %v10323
        %10794 = vmatpush1.bf16.msra.mxu0 %v10322
        %10795 = vmatprep.subr.bf16.mxu0 0
        %10796 = vmatpush2.bf16.msra.mxu0 0
        %10797 = vmatprep.subr.bf16.mxu0 0
        %10798 = vmatpush2.bf16.msra.mxu0 0
        %10799 = vmatprep.subr.bf16.mxu0 0
        %10800 = vmatpush2.bf16.msra.mxu0 0
        %10801 = vmatprep.subr.bf16.mxu0 0
        %10802 = vmatpush2.bf16.msra.mxu0 0
        %10803 = vmatprep.subr.bf16.mxu0 0
        %10804 = vmatpush2.bf16.msra.mxu0 0
        %10805 = vmatprep.subr.bf16.mxu0 0
        %10806 = vmatpush2.bf16.msra.mxu0 0
        %10807 = vmatprep.subr.bf16.mxu0 0
        %10808 = vmatpush2.bf16.msra.mxu0 0
        %10809 = vmatprep.subr.bf16.mxu0 0
        %10810 = vmatpush2.bf16.msra.mxu0 0
        %10811 = vmatprep.mubr.bf16.mxu0 0
        %10812 = vmatmul.mubr.bf16.gmra.mxu0 %v10531
        %v10813 = vpop.f32.mrf.mxu0
        %v10814 = vadd.f32 %v10773, %v10813
        %v10815 = vpop.f32.mrf.mxu0
        %v10816 = vadd.f32 %v10775, %v10815
        %v10817 = vpop.f32.mrf.mxu0
        %v10818 = vpop.f32.mrf.mxu0
        %10819 = vdwg.mxu0
        %vm10820 = vcmp.gt.f32.partialorder %v10814, 0.0
        %vm10821 = vcmp.gt.f32.partialorder %v10816, 0.0
        %v10822 = vmin.f32 %v10814, 0.0
        %v10823 = vmin.f32 %v10816, 0.0
        %v10824 = vmul.f32 %v10822, 1.442695
        %v10825 = vpow.pop %v10824
        %v10826 = vmul.f32 %v10823, 1.442695
        %v10827 = vpow.pop %v10826
        %v10828 = vsub.f32 %v10825, 1.0
        %v10829 = vsub.f32 %v10827, 1.0
        %v10830 = vsel %vm10820, %v10814, %v10828
        %v10831 = vsel %vm10821, %v10816, %v10829
        %v10832 = vpack.c.bf16 %v10830, %v10830
        %v10833 = vpack.c.bf16 %v10831, %v10831
        %v10834 = vld [vmem:[%s11] sm:$0xff]
        %v10835 = vld [vmem:[%s11 + $0x8] sm:$0xff]
        %v10836 = vld [vmem:[%s11 + $0x10] sm:$0xff]
        %v10837 = vld [vmem:[%s11 + $0x18] sm:$0xff]
        %v10838 = vld [vmem:[%s11 + $0x20] sm:$0xff]
        %v10839 = vld [vmem:[%s11 + $0x28] sm:$0xff]
        %v10840 = vld [vmem:[%s11 + $0x30] sm:$0xff]
        %v10841 = vld [vmem:[%s11 + $0x38] sm:$0xff]
        %v10842 = vld [vmem:[%s11 + $0x40] sm:$0xff]
        %v10843 = vld [vmem:[%s11 + $0x48] sm:$0xff]
        %v10844 = vld [vmem:[%s11 + $0x50] sm:$0xff]
        %v10845 = vld [vmem:[%s11 + $0x58] sm:$0xff]
        %v10846 = vld [vmem:[%s11 + $0x60] sm:$0xff]
        %v10847 = vld [vmem:[%s11 + $0x68] sm:$0xff]
        %v10848 = vld [vmem:[%s11 + $0x70] sm:$0xff]
        %v10849 = vld [vmem:[%s11 + $0x78] sm:$0xff]
        %v10850 = vld [vmem:[%s11 + $0x80] sm:$0xff]
        %v10851 = vld [vmem:[%s11 + $0x88] sm:$0xff]
        %v10852 = vld [vmem:[%s11 + $0x90] sm:$0xff]
        %v10853 = vld [vmem:[%s11 + $0x98] sm:$0xff]
        %v10854 = vld [vmem:[%s11 + $0xa0] sm:$0xff]
        %v10855 = vld [vmem:[%s11 + $0xa8] sm:$0xff]
        %v10856 = vld [vmem:[%s11 + $0xb0] sm:$0xff]
        %v10857 = vld [vmem:[%s11 + $0xb8] sm:$0xff]
        %v10858 = vld [vmem:[%s11 + $0xc0] sm:$0xff]
        %v10859 = vld [vmem:[%s11 + $0xc8] sm:$0xff]
        %v10860 = vld [vmem:[%s11 + $0xd0] sm:$0xff]
        %v10861 = vld [vmem:[%s11 + $0xd8] sm:$0xff]
        %v10862 = vld [vmem:[%s11 + $0xe0] sm:$0xff]
        %v10863 = vld [vmem:[%s11 + $0xe8] sm:$0xff]
        %v10864 = vld [vmem:[%s11 + $0xf0] sm:$0xff]
        %v10865 = vld [vmem:[%s11 + $0xf8] sm:$0xff]
        %v10866 = vld [vmem:[%s12] sm:$0x3]
        %v10868 = vlaneseq
        %v10869 = vshrl.u32 %v10868, 7
        %v10870 = vsub.s32 0, %v10869
        %v10871 = vrot.slane %v10866, %v10870
        %v10872 = vlaneseq
        %v10873 = vshrl.u32 %v10872, 7
        %v10874 = vsub.s32 1, %v10873
        %v10875 = vrot.slane %v10866, %v10874
        %v10910 = vunpack.c.l.b16 %v10834
        %v10911 = vunpack.c.h.b16 %v10834
        %v10912 = vunpack.c.l.b16 %v10835
        %v10913 = vunpack.c.h.b16 %v10835
        %v10914 = vunpack.c.l.b16 %v10836
        %v10915 = vunpack.c.h.b16 %v10836
        %v10916 = vunpack.c.l.b16 %v10837
        %v10917 = vunpack.c.h.b16 %v10837
        %v10918 = vunpack.c.l.b16 %v10838
        %v10919 = vunpack.c.h.b16 %v10838
        %v10920 = vunpack.c.l.b16 %v10839
        %v10921 = vunpack.c.h.b16 %v10839
        %v10922 = vunpack.c.l.b16 %v10840
        %v10923 = vunpack.c.h.b16 %v10840
        %v10924 = vunpack.c.l.b16 %v10841
        %v10925 = vunpack.c.h.b16 %v10841
        %v10926 = vunpack.c.l.b16 %v10842
        %v10927 = vunpack.c.h.b16 %v10842
        %v10928 = vunpack.c.l.b16 %v10843
        %v10929 = vunpack.c.h.b16 %v10843
        %v10930 = vunpack.c.l.b16 %v10844
        %v10931 = vunpack.c.h.b16 %v10844
        %v10932 = vunpack.c.l.b16 %v10845
        %v10933 = vunpack.c.h.b16 %v10845
        %v10934 = vunpack.c.l.b16 %v10846
        %v10935 = vunpack.c.h.b16 %v10846
        %v10936 = vunpack.c.l.b16 %v10847
        %v10937 = vunpack.c.h.b16 %v10847
        %v10938 = vunpack.c.l.b16 %v10848
        %v10939 = vunpack.c.h.b16 %v10848
        %v10940 = vunpack.c.l.b16 %v10849
        %v10941 = vunpack.c.h.b16 %v10849
        %v10942 = vunpack.c.l.b16 %v10850
        %v10943 = vunpack.c.h.b16 %v10850
        %v10944 = vunpack.c.l.b16 %v10851
        %v10945 = vunpack.c.h.b16 %v10851
        %v10946 = vunpack.c.l.b16 %v10852
        %v10947 = vunpack.c.h.b16 %v10852
        %v10948 = vunpack.c.l.b16 %v10853
        %v10949 = vunpack.c.h.b16 %v10853
        %v10950 = vunpack.c.l.b16 %v10854
        %v10951 = vunpack.c.h.b16 %v10854
        %v10952 = vunpack.c.l.b16 %v10855
        %v10953 = vunpack.c.h.b16 %v10855
        %v10954 = vunpack.c.l.b16 %v10856
        %v10955 = vunpack.c.h.b16 %v10856
        %v10956 = vunpack.c.l.b16 %v10857
        %v10957 = vunpack.c.h.b16 %v10857
        %v10958 = vunpack.c.l.b16 %v10858
        %v10959 = vunpack.c.h.b16 %v10858
        %v10960 = vunpack.c.l.b16 %v10859
        %v10961 = vunpack.c.h.b16 %v10859
        %v10962 = vunpack.c.l.b16 %v10860
        %v10963 = vunpack.c.h.b16 %v10860
        %v10964 = vunpack.c.l.b16 %v10861
        %v10965 = vunpack.c.h.b16 %v10861
        %v10966 = vunpack.c.l.b16 %v10862
        %v10967 = vunpack.c.h.b16 %v10862
        %v10968 = vunpack.c.l.b16 %v10863
        %v10969 = vunpack.c.h.b16 %v10863
        %v10970 = vunpack.c.l.b16 %v10864
        %v10971 = vunpack.c.h.b16 %v10864
        %v10972 = vunpack.c.l.b16 %v10865
        %v10973 = vunpack.c.h.b16 %v10865
        %v10974 = vpack.c.b16 %v10912, %v10910
        %v10975 = vpack.c.b16 %v10913, %v10911
        %v10976 = vpack.c.b16 %v10916, %v10914
        %v10977 = vpack.c.b16 %v10917, %v10915
        %v10978 = vpack.c.b16 %v10920, %v10918
        %v10979 = vpack.c.b16 %v10921, %v10919
        %v10980 = vpack.c.b16 %v10924, %v10922
        %v10981 = vpack.c.b16 %v10925, %v10923
        %v10982 = vpack.c.b16 %v10928, %v10926
        %v10983 = vpack.c.b16 %v10929, %v10927
        %v10984 = vpack.c.b16 %v10932, %v10930
        %v10985 = vpack.c.b16 %v10933, %v10931
        %v10986 = vpack.c.b16 %v10936, %v10934
        %v10987 = vpack.c.b16 %v10937, %v10935
        %v10988 = vpack.c.b16 %v10940, %v10938
        %v10989 = vpack.c.b16 %v10941, %v10939
        %v10990 = vpack.c.b16 %v10944, %v10942
        %v10991 = vpack.c.b16 %v10945, %v10943
        %v10992 = vpack.c.b16 %v10948, %v10946
        %v10993 = vpack.c.b16 %v10949, %v10947
        %v10994 = vpack.c.b16 %v10952, %v10950
        %v10995 = vpack.c.b16 %v10953, %v10951
        %v10996 = vpack.c.b16 %v10956, %v10954
        %v10997 = vpack.c.b16 %v10957, %v10955
        %v10998 = vpack.c.b16 %v10960, %v10958
        %v10999 = vpack.c.b16 %v10961, %v10959
        %v11000 = vpack.c.b16 %v10964, %v10962
        %v11001 = vpack.c.b16 %v10965, %v10963
        %v11002 = vpack.c.b16 %v10968, %v10966
        %v11003 = vpack.c.b16 %v10969, %v10967
        %v11004 = vpack.c.b16 %v10972, %v10970
        %v11005 = vpack.c.b16 %v10973, %v10971
        %11038 = vmatprep.subr.bf16.mxu0 %v10989
        %11039 = vmatpush1.bf16.msra.mxu0 %v10988
        %11040 = vmatprep.subr.bf16.mxu0 %v10987
        %11041 = vmatpush1.bf16.msra.mxu0 %v10986
        %11042 = vmatprep.subr.bf16.mxu0 %v10985
        %11043 = vmatpush1.bf16.msra.mxu0 %v10984
        %11044 = vmatprep.subr.bf16.mxu0 %v10983
        %11045 = vmatpush1.bf16.msra.mxu0 %v10982
        %11046 = vmatprep.subr.bf16.mxu0 %v10981
        %11047 = vmatpush1.bf16.msra.mxu0 %v10980
        %11048 = vmatprep.subr.bf16.mxu0 %v10979
        %11049 = vmatpush1.bf16.msra.mxu0 %v10978
        %11050 = vmatprep.subr.bf16.mxu0 %v10977
        %11051 = vmatpush1.bf16.msra.mxu0 %v10976
        %11052 = vmatprep.subr.bf16.mxu0 %v10975
        %11053 = vmatpush1.bf16.msra.mxu0 %v10974
        %11054 = vmatprep.subr.bf16.mxu0 %v11005
        %11055 = vmatpush2.bf16.msra.mxu0 %v11004
        %11056 = vmatprep.subr.bf16.mxu0 %v11003
        %11057 = vmatpush2.bf16.msra.mxu0 %v11002
        %11058 = vmatprep.subr.bf16.mxu0 %v11001
        %11059 = vmatpush2.bf16.msra.mxu0 %v11000
        %11060 = vmatprep.subr.bf16.mxu0 %v10999
        %11061 = vmatpush2.bf16.msra.mxu0 %v10998
        %11062 = vmatprep.subr.bf16.mxu0 %v10997
        %11063 = vmatpush2.bf16.msra.mxu0 %v10996
        %11064 = vmatprep.subr.bf16.mxu0 %v10995
        %11065 = vmatpush2.bf16.msra.mxu0 %v10994
        %11066 = vmatprep.subr.bf16.mxu0 %v10993
        %11067 = vmatpush2.bf16.msra.mxu0 %v10992
        %11068 = vmatprep.subr.bf16.mxu0 %v10991
        %11069 = vmatpush2.bf16.msra.mxu0 %v10990
        %11070 = vmatprep.mubr.bf16.mxu0 %v10833
        %11071 = vmatmul.mubr.bf16.gmra.mxu0 %v10832
        %v11072 = vpop.f32.mrf.mxu0
        %v11073 = vadd.f32 %v10871, %v11072
        %v11074 = vpop.f32.mrf.mxu0
        %v11075 = vadd.f32 %v10875, %v11074
        %v11076 = vpop.f32.mrf.mxu0
        %v11077 = vpop.f32.mrf.mxu0
        %11078 = vdwg.mxu0
        %11079 = vst [vmem:[%s538] sm:$0x3] %v11073
        %11080 = vst [vmem:[%s545] sm:$0x3] %v11075
        %v11081 = vmul.f32 %v11075, 1.442695
        %v11082 = vpow.pop %v11081
        %v11083 = vld [vmem:[%s554] sm:$0x3]
        %v11084 = vmul.f32 %v11082, %v11083
        %v11085 = vadd.f32 %v11073, %v11084
        %11086 = vst [vmem:[%s531] sm:$0x3] %v11085
        %s11087 = sand.u32 %s346, 1
        %s11088 = scalar_lea.sflag [#allocation6], %s11087
        %s11089 = sand.u32 %s346, 1
        %s11090 = smul.addr %s11089, 2
        %s11091 = scalar_lea.vmem [#allocation5], %s11090
        %s11092 = sand.u32 %s34, 1
        %s11093 = scalar_lea.sflag [#allocation8], %s11092
        %s11094 = sand.u32 %s372, 1
        %s11095 = smul.addr %s11094, 2
        %s11096 = scalar_lea.vmem [#allocation7], %s11095
        %s11097 = sand.u32 %s34, 1
        %s11098 = scalar_lea.sflag [#allocation8], %s11097
        %s11099 = sand.u32 %s398, 1
        %s11100 = smul.addr %s11099, 2
        %s11101 = scalar_lea.vmem [#allocation9], %s11100
        // Predicated region
        $region77: #{_lambda_.1} parent=75 // pred_check
          %p11102 = pneg %p356
        $region78: #{_lambda_.1} parent=75 // pred_check_branch
          %11104 = sbr.rel (%p11102) target = $region80
        $region79: #{_lambda_.1} parent=75 // pred_region
          %s11106 = ssub.s32 32, 32
          %11107 = vsyncadd %s11088, %s11106
          %s11108 = smul.addr %s34, 32
          %s11109 = scalar_lea.hbm %s14, %s11108
          %s11111 = sshll.u32 %s11091, 4
          %s11112 = int_to_ptr.vmem [resolvable:$true] %s11111
          %11114 = dma.vmem_to_hbm [thread:$0]  %s11112, 32, %s11109, %s11088
        $region80: #{_lambda_.1} parent=75 // pred_fallthru
          _
        // Predicated region
        $region81: #{_lambda_.1} parent=75 // pred_check
          %p11115 = pneg %p382
        $region82: #{_lambda_.1} parent=75 // pred_check_branch
          %11117 = sbr.rel (%p11115) target = $region84
        $region83: #{_lambda_.1} parent=75 // pred_region
          %s11119 = ssub.s32 32, 32
          %11120 = vsyncadd %s11093, %s11119
          %s11121 = smul.addr %s34, 32
          %s11122 = scalar_lea.hbm %s15, %s11121
          %s11124 = sshll.u32 %s11096, 4
          %s11125 = int_to_ptr.vmem [resolvable:$true] %s11124
          %11127 = dma.vmem_to_hbm [thread:$0]  %s11125, 32, %s11122, %s11093
        $region84: #{_lambda_.1} parent=75 // pred_fallthru
          _
        // Predicated region
        $region85: #{_lambda_.1} parent=75 // pred_check
          %p11128 = pneg %p408
        $region86: #{_lambda_.1} parent=75 // pred_check_branch
          %11130 = sbr.rel (%p11128) target = $region88
        $region87: #{_lambda_.1} parent=75 // pred_region
          %s11132 = ssub.s32 32, 32
          %11133 = vsyncadd %s11098, %s11132
          %s11134 = smul.addr %s34, 32
          %s11135 = scalar_lea.hbm %s16, %s11134
          %s11137 = sshll.u32 %s11101, 4
          %s11138 = int_to_ptr.vmem [resolvable:$true] %s11137
          %11140 = dma.vmem_to_hbm [thread:$0]  %s11138, 32, %s11135, %s11098
        $region88: #{_lambda_.1} parent=75 // pred_fallthru
          _
      $region76: #{_lambda_.1} parent=5 // pred_fallthru
        _
      %p11141 = scmp.le.s32.totalorder 2, %s29
      // Predicated region
      $region89: #{_lambda_.1} parent=5 // pred_check
        %p11142 = pneg %p11141
      $region90: #{_lambda_.1} parent=5 // pred_check_branch
        %11144 = sbr.rel (%p11142) target = $region92
      $region91: #{_lambda_.1} parent=5 // pred_region
        %s11145 = ssub.s32 %s29, 2
        // Predicated region
        $region93: #{_lambda_.1} parent=91 // pred_check
          %p11146 = pneg %p362
        $region94: #{_lambda_.1} parent=91 // pred_check_branch
          %11148 = sbr.rel (%p11146) target = $region96
        $region95: #{_lambda_.1} parent=91 // pred_region
          %s11149 = sand.u32 %s347, 1
          %s11150 = scalar_lea.sflag [#allocation6], %s11149
          %s11151 = sand.u32 %s347, 1
          %s11152 = smul.addr %s11151, 2
          %s11153 = scalar_lea.vmem [#allocation5], %s11152
          %11154 = dma.done %s11150, 32
        $region96: #{_lambda_.1} parent=91 // pred_fallthru
          _
        // Predicated region
        $region97: #{_lambda_.1} parent=91 // pred_check
          %p11155 = pneg %p388
        $region98: #{_lambda_.1} parent=91 // pred_check_branch
          %11157 = sbr.rel (%p11155) target = $region100
        $region99: #{_lambda_.1} parent=91 // pred_region
          %s11158 = sand.u32 %s35, 1
          %s11159 = scalar_lea.sflag [#allocation8], %s11158
          %s11160 = sand.u32 %s373, 1
          %s11161 = smul.addr %s11160, 2
          %s11162 = scalar_lea.vmem [#allocation7], %s11161
          %11163 = dma.done %s11159, 32
        $region100: #{_lambda_.1} parent=91 // pred_fallthru
          _
        // Predicated region
        $region101: #{_lambda_.1} parent=91 // pred_check
          %p11164 = pneg %p414
        $region102: #{_lambda_.1} parent=91 // pred_check_branch
          %11166 = sbr.rel (%p11164) target = $region104
        $region103: #{_lambda_.1} parent=91 // pred_region
          %s11167 = sand.u32 %s35, 1
          %s11168 = scalar_lea.sflag [#allocation8], %s11167
          %s11169 = sand.u32 %s399, 1
          %s11170 = smul.addr %s11169, 2
          %s11171 = scalar_lea.vmem [#allocation9], %s11170
          %11172 = dma.done %s11168, 32
        $region104: #{_lambda_.1} parent=91 // pred_fallthru
          _
      $region92: #{_lambda_.1} parent=5 // pred_fallthru
        _
    $region6: #{_lambda_.1} parent=1 // loop_footer
      %s33 = sadd.s32 1, %s29
    $region7: #{_lambda_.1} parent=1 // loop_footer_branch
      %28 = sbr.rel target = $region3
    $region8: #{_lambda_.1} parent=1 // loop_exit
      _
    %11173 = vsyncpa [#allocation6], 1
    %s11174 = scalar_lea.sflag [#allocation6], 1
    %11175 = vsyncpa %s11174, 1
    %11176 = vsyncpa [#allocation8], 1
    %s11177 = scalar_lea.sflag [#allocation8], 1
    %11178 = vsyncpa %s11177, 1

</llo_original>
